<compile_context>
chip_gen: v7x
topology: tpu7x:2x2x1
jax: 0.10.0
libtpu: 0.0.40
codegen_flags: <defaults>
</compile_context>

<pallas_src>
import jax
import jax.numpy as jnp
from jax import lax
from jax.experimental import pallas as pl
from jax.experimental.pallas import tpu as pltpu

N = 128            # memory rows
M = 20             # memory width / read-vector size
C = 100            # sz_controller
S = 8 + 2          # sz_sequence_vector + 2
C_PAD = 128        # controller hidden padded to full lane width
HEAD_W = 128       # fused head projection width (100 used lanes + zero pad)
W_DTYPE = jnp.bfloat16     # in-chain GEMM weights (f32 accumulation)
EPS = 1e-8                 # torch.nn.functional.cosine_similarity default eps

# Head lane layout: erase/add first (so the fused outer-product result slices land at
# 8-aligned sublane offsets), then everything else grouped by activation family.
E_OFF = 0                      # erase      sigmoid   lanes [0, 20)
A_OFF = 24                     # add        tanh      lanes [24, 44)   (4 pad lanes between)
KW_OFF = 48                    # write key  tanh      lanes [48, 68)
KR_OFF = 68                    # read key   tanh      lanes [68, 88)
BW_OFF, BR_OFF = 88, 89        # betas      softplus
GW_OFF, GR_OFF = 90, 91        # gates      sigmoid
GMW_OFF, GMR_OFF = 92, 93      # gammas     1 + softplus
SHW_OFF, SHR_OFF = 94, 97      # shifts     softmax over 3 lanes each


def _address(k, beta, g, shift, gamma, w_prev, mem_t):
    """Standard NTM addressing on transposed memory.
    k:(1,M) beta/g/gamma:(1,1) shift:(1,3) w_prev:(1,N) mem_t:(M,N) -> (1,N)."""
    # content addressing: cosine similarity against every memory row, lane-dense
    numer = jnp.dot(k, mem_t, preferred_element_type=jnp.float32)          # (1, N)
    k_sq = jnp.sum(k * k, axis=-1, keepdims=True)                          # (1, 1)
    mem_sq = jnp.sum(mem_t * mem_t, axis=0, keepdims=True)                 # (1, N)
    # fused rsqrt, torch-style per-norm eps clamp: max(||x||, eps) == sqrt(max(x.x, eps^2))
    inv_den = lax.rsqrt(jnp.maximum(mem_sq, EPS * EPS) * jnp.maximum(k_sq, EPS * EPS))
    z = beta * (numer * inv_den)
    e = jnp.exp(z - jnp.max(z, axis=-1, keepdims=True))
    w_c = e / jnp.sum(e, axis=-1, keepdims=True)                           # exact division
    # interpolation gate
    w_g = g * w_c + (1.0 - g) * w_prev
    # circular convolution over shift offsets (-1, 0, +1)
    # TODO(synk): ReadHead/WriteHead source not provided; shift ordering follows the
    # standard pytorch-ntm _convolve convention.
    w_s = (shift[:, 0:1] * pltpu.roll(w_g, 1, axis=1)
           + shift[:, 1:2] * w_g
           + shift[:, 2:3] * pltpu.roll(w_g, N - 1, axis=1))
    # sharpening, exact normalization (approx reciprocal error would recycle for T steps)
    w_pow = jnp.power(w_s + 1e-16, gamma)
    return w_pow / jnp.sum(w_pow, axis=-1, keepdims=True)


def ntm_kernel(seq_ref, wcs_ref, wcr_ref, bc_ref, wh_ref, bh_ref, wrs_ref, brs_ref,
               sout_ref, ww_ref, rw_ref, aout_ref, rout_ref, pre_ref):
    T = seq_ref.shape[0]

    wcr = wcr_ref[...]     # (M, C_PAD)       bf16
    wh = wh_ref[...]       # (C_PAD, HEAD_W)  bf16
    bh = bh_ref[...]       # (1, HEAD_W)      f32

    # ---- prologue (off the recurrent chain): batched sequence-side controller GEMM ----
    pre_ref[...] = (jnp.dot(seq_ref[...], wcs_ref[...],
                            preferred_element_type=jnp.float32) + bc_ref[...])

    # initial recurrent state; memory stored TRANSPOSED (M, N) so every op is lane-dense
    mem0 = jnp.full((M, N), 1e-6, jnp.float32)                    # memory_bias
    lane = lax.broadcasted_iota(jnp.int32, (1, N), 1)
    w0 = (lane == N // 2).astype(jnp.float32)                     # weight_bias one-hot
    r0 = jnp.full((1, M), 1e-6, jnp.float32)                      # read_bias
    ea_mask = lax.broadcasted_iota(jnp.int32, (1, HEAD_W), 1) < A_OFF   # hoisted

    def step(t, carry):
        mem_t, ww_prev, rw_prev, r_prev = carry

        # controller: h = sigmoid(pre[t] + r_prev @ Wc_r)
        h = jax.nn.sigmoid(
            pre_ref[pl.ds(t, 1), :]
            + jnp.dot(r_prev.astype(wcr.dtype), wcr,
                      preferred_element_type=jnp.float32))

        # fused head projections: one lane-dense (1,128)@(128,128) bf16 MXU matmul
        head = jnp.dot(h.astype(wh.dtype), wh,
                       preferred_element_type=jnp.float32) + bh          # (1, HEAD_W)

        # grouped activations: one whole-row EUP pass per family, then static slices
        tanh_h = jnp.tanh(head)
        sig_h = jax.nn.sigmoid(head)
        sp_h = jax.nn.softplus(head)

        k_w = tanh_h[:, KW_OFF:KW_OFF + M]
        k_r = tanh_h[:, KR_OFF:KR_OFF + M]
        a_w = tanh_h[:, A_OFF:A_OFF + M]
        beta_w = sp_h[:, BW_OFF:BW_OFF + 1]
        beta_r = sp_h[:, BR_OFF:BR_OFF + 1]
        g_w = sig_h[:, GW_OFF:GW_OFF + 1]
        g_r = sig_h[:, GR_OFF:GR_OFF + 1]
        gm_w = 1.0 + sp_h[:, GMW_OFF:GMW_OFF + 1]
        gm_r = 1.0 + sp_h[:, GMR_OFF:GMR_OFF + 1]
        # both 3-lane shift softmaxes share one exp pass (same constant per group)
        sh = head[:, SHW_OFF:SHW_OFF + 6]
        sh_e = jnp.exp(sh - jnp.max(sh, axis=-1, keepdims=True))
        sh_w = sh_e[:, 0:3] / jnp.sum(sh_e[:, 0:3], axis=-1, keepdims=True)
        sh_r = sh_e[:, 3:6] / jnp.sum(sh_e[:, 3:6], axis=-1, keepdims=True)

        # write: address, then a single fused (erase | add) K=1 outer product on the MXU
        ww = _address(k_w, beta_w, g_w, sh_w, gm_w, ww_prev, mem_t)      # (1, N)
        ea = jnp.where(ea_mask, sig_h, tanh_h)[:, 0:2 * A_OFF]           # (1, 48)
        fused = lax.dot_general(ea, ww, (((0,), (0,)), ((), ())),
                                preferred_element_type=jnp.float32)      # (48, N)
        erase = fused[E_OFF:E_OFF + M, :]                                # 8-aligned rows
        add = fused[A_OFF:A_OFF + M, :]
        mem_new = mem_t * (1.0 - erase) + add

        # read
        rw = _address(k_r, beta_r, g_r, sh_r, gm_r, rw_prev, mem_new)    # (1, N)
        r_new = lax.dot_general(rw, mem_new, (((1,), (1,)), ((), ())),
                                preferred_element_type=jnp.float32)      # (1, M)

        ww_ref[pl.ds(t, 1), :] = ww
        rw_ref[pl.ds(t, 1), :] = rw
        aout_ref[pl.ds(t, 1), :] = a_w
        rout_ref[pl.ds(t, 1), :] = r_new
        return (mem_new, ww, rw, r_new)

    unroll = True if T <= 32 else 4
    lax.fori_loop(0, T, step, (mem0, w0, w0, r0), unroll=unroll)

    # ---- epilogue (off the recurrent chain): s_out = clamp(r_to_s(r_t), 0, 1) ----
    r_all = rout_ref[...]                                                # (T, M)
    sout_ref[...] = jnp.clip(
        jnp.dot(r_all, wrs_ref[...], preferred_element_type=jnp.float32)
        + brs_ref[...], 0.0, 1.0)


def init_params(key):
    """PyTorch-Linear-style init (uniform +/- 1/sqrt(fan_in)), packed host-side into
    the fused lane-dense buffers the kernel expects."""
    def linear(k, fan_in, fan_out):
        k1, k2 = jax.random.split(k)
        bound = 1.0 / float(fan_in) ** 0.5
        w = jax.random.uniform(k1, (fan_in, fan_out), jnp.float32, -bound, bound)
        b = jax.random.uniform(k2, (fan_out,), jnp.float32, -bound, bound)
        return w, b

    keys = jax.random.split(key, 16)
    # controller: Linear(S + M, C) acting on concat(s, r); split into seq / read halves
    wc, bc = linear(keys[0], S + M, C)
    # heads: write(k, beta, g, shift, gamma, erase, add) + read(k, beta, g, shift, gamma)
    head_quant = [  # (lane offset, width)
        (KW_OFF, M), (BW_OFF, 1), (GW_OFF, 1), (SHW_OFF, 3), (GMW_OFF, 1),
        (E_OFF, M), (A_OFF, M),
        (KR_OFF, M), (BR_OFF, 1), (GR_OFF, 1), (SHR_OFF, 3), (GMR_OFF, 1),
    ]
    wh_p = jnp.zeros((C_PAD, HEAD_W), jnp.float32)
    bh_p = jnp.zeros((1, HEAD_W), jnp.float32)
    for i, (off, width) in enumerate(head_quant):
        w, b = linear(keys[1 + i], C, width)
        wh_p = wh_p.at[:C, off:off + width].set(w)
        bh_p = bh_p.at[0, off:off + width].set(b)
    # r_to_s: Linear(M, S)
    wrs, brs = linear(keys[13], M, S)

    wcs = jnp.zeros((S, C_PAD), jnp.float32).at[:, :C].set(wc[:S])        # f32 (prologue)
    wcr = jnp.zeros((M, C_PAD), jnp.float32).at[:, :C].set(wc[S:]).astype(W_DTYPE)
    bc_p = jnp.zeros((1, C_PAD), jnp.float32).at[0, :C].set(bc)
    return (wcs, wcr, bc_p, wh_p.astype(W_DTYPE), bh_p, wrs, brs.reshape(1, S))


@jax.jit
def ntm_forward(sequence, params):
    T = sequence.shape[0]
    seq = sequence.reshape(T, S).astype(jnp.float32)
    wcs, wcr, bc, wh, bh, wrs, brs = params

    inputs = (seq, wcs, wcr, bc, wh, bh, wrs, brs)
    in_specs = [pl.BlockSpec(x.shape, lambda i: (0, 0)) for x in inputs]

    out_shape = (
        jax.ShapeDtypeStruct((T, S), jnp.float32),   # sequence_out
        jax.ShapeDtypeStruct((T, N), jnp.float32),   # ww
        jax.ShapeDtypeStruct((T, N), jnp.float32),   # rw
        jax.ShapeDtypeStruct((T, M), jnp.float32),   # a
        jax.ShapeDtypeStruct((T, M), jnp.float32),   # r
    )
    out_specs = tuple(pl.BlockSpec(s.shape, lambda i: (0, 0)) for s in out_shape)

    seq_out, ww_all, rw_all, a_all, r_all = pl.pallas_call(
        ntm_kernel,
        grid=(1,),                       # single invocation; time loop is in-kernel
        in_specs=in_specs,
        out_specs=out_specs,
        out_shape=out_shape,
        scratch_shapes=[pltpu.VMEM((T, C_PAD), jnp.float32)],   # hoisted controller pre
        compiler_params=pltpu.CompilerParams(dimension_semantics=("arbitrary",)),
    )(*inputs)

    return seq_out, [ww_all, rw_all, a_all, r_all]


if __name__ == "__main__":
    key = jax.random.PRNGKey(0)
    kp, kx = jax.random.split(key)
    params = init_params(kp)

    T = 8  # sequence length
    sequence = jax.random.uniform(kx, (T, S), jnp.float32)  # (seq_len, sz_sequence_vector+2)

    seq_out, aux = ntm_forward(sequence, params)
    ww_list, rw_list, a_list, r_list = aux

    jax.block_until_ready((seq_out, ww_list, rw_list, a_list, r_list))
    assert seq_out.shape == (T, S)
    assert ww_list.shape == (T, N) and rw_list.shape == (T, N)
    assert a_list.shape == (T, M) and r_list.shape == (T, M)
    assert bool(jnp.all(jnp.isfinite(seq_out)))
    print("KERNEL_OK")
</pallas_src>

<mosaic_0001>
module attributes {stable_mosaic.version = 11 : i64} {
  func.func @ntm_kernel(%arg0: i32, %arg1: memref<8x10xf32, #tpu.memory_space<vmem>>, %arg2: memref<10x128xf32, #tpu.memory_space<vmem>>, %arg3: memref<20x128xbf16, #tpu.memory_space<vmem>>, %arg4: memref<1x128xf32, #tpu.memory_space<vmem>>, %arg5: memref<128x128xbf16, #tpu.memory_space<vmem>>, %arg6: memref<1x128xf32, #tpu.memory_space<vmem>>, %arg7: memref<20x10xf32, #tpu.memory_space<vmem>>, %arg8: memref<1x10xf32, #tpu.memory_space<vmem>>, %arg9: memref<8x10xf32, #tpu.memory_space<vmem>>, %arg10: memref<8x128xf32, #tpu.memory_space<vmem>>, %arg11: memref<8x128xf32, #tpu.memory_space<vmem>>, %arg12: memref<8x20xf32, #tpu.memory_space<vmem>>, %arg13: memref<8x20xf32, #tpu.memory_space<vmem>>, %arg14: memref<8x128xf32, #tpu.memory_space<vmem>>) attributes {dimension_semantics = [#tpu.dimension_semantics<arbitrary>], iteration_bounds = array<i64: 1>, scalar_prefetch = 0 : i64, scratch_operands = 1 : i64, tpu.core_type = #tpu.core_type<tc>, window_params = [{pipeline_mode = #tpu.pipeline_mode<synchronous>, transform_indices = @transform_0, window_bounds = array<i64: 8, 10>}, {pipeline_mode = #tpu.pipeline_mode<synchronous>, transform_indices = @transform_1, window_bounds = array<i64: 10, 128>}, {pipeline_mode = #tpu.pipeline_mode<synchronous>, transform_indices = @transform_2, window_bounds = array<i64: 20, 128>}, {pipeline_mode = #tpu.pipeline_mode<synchronous>, transform_indices = @transform_3, window_bounds = array<i64: 1, 128>}, {pipeline_mode = #tpu.pipeline_mode<synchronous>, transform_indices = @transform_4, window_bounds = array<i64: 128, 128>}, {pipeline_mode = #tpu.pipeline_mode<synchronous>, transform_indices = @transform_5, window_bounds = array<i64: 1, 128>}, {pipeline_mode = #tpu.pipeline_mode<synchronous>, transform_indices = @transform_6, window_bounds = array<i64: 20, 10>}, {pipeline_mode = #tpu.pipeline_mode<synchronous>, transform_indices = @transform_7, window_bounds = array<i64: 1, 10>}, {pipeline_mode = #tpu.pipeline_mode<synchronous>, transform_indices = @transform_8, window_bounds = array<i64: 8, 10>}, {pipeline_mode = #tpu.pipeline_mode<synchronous>, transform_indices = @transform_9, window_bounds = array<i64: 8, 128>}, {pipeline_mode = #tpu.pipeline_mode<synchronous>, transform_indices = @transform_10, window_bounds = array<i64: 8, 128>}, {pipeline_mode = #tpu.pipeline_mode<synchronous>, transform_indices = @transform_11, window_bounds = array<i64: 8, 20>}, {pipeline_mode = #tpu.pipeline_mode<synchronous>, transform_indices = @transform_12, window_bounds = array<i64: 8, 20>}]} {
    %c0 = arith.constant 0 : index
    %c0_0 = arith.constant 0 : index
    %0 = vector.load %arg3[%c0, %c0_0] : memref<20x128xbf16, #tpu.memory_space<vmem>>, vector<20x128xbf16>
    %c0_1 = arith.constant 0 : index
    %c0_2 = arith.constant 0 : index
    %1 = vector.load %arg5[%c0_1, %c0_2] : memref<128x128xbf16, #tpu.memory_space<vmem>>, vector<128x128xbf16>
    %c0_3 = arith.constant 0 : index
    %c0_4 = arith.constant 0 : index
    %2 = vector.load %arg6[%c0_3, %c0_4] : memref<1x128xf32, #tpu.memory_space<vmem>>, vector<1x128xf32>
    %c0_5 = arith.constant 0 : index
    %c0_6 = arith.constant 0 : index
    %3 = vector.load %arg1[%c0_5, %c0_6] : memref<8x10xf32, #tpu.memory_space<vmem>>, vector<8x10xf32>
    %c0_7 = arith.constant 0 : index
    %c0_8 = arith.constant 0 : index
    %4 = vector.load %arg2[%c0_7, %c0_8] : memref<10x128xf32, #tpu.memory_space<vmem>>, vector<10x128xf32>
    %cst = arith.constant dense<0.000000e+00> : vector<8x128xf32>
    %5 = tpu.matmul %3, %4, %cst {dimension_numbers = #tpu.dot_dimension_numbers<[1], [0], [0], [1], [0, 0, 1, 1], [], []>} : vector<8x10xf32>, vector<10x128xf32>, vector<8x128xf32> -> vector<8x128xf32>
    %c0_9 = arith.constant 0 : index
    %c0_10 = arith.constant 0 : index
    %6 = vector.load %arg4[%c0_9, %c0_10] : memref<1x128xf32, #tpu.memory_space<vmem>>, vector<1x128xf32>
    %7 = vector.broadcast %6 : vector<1x128xf32> to vector<8x128xf32>
    %8 = arith.addf %5, %7 : vector<8x128xf32>
    %c0_11 = arith.constant 0 : index
    %c0_12 = arith.constant 0 : index
    %9 = vector.load %arg14[%c0_11, %c0_12] : memref<8x128xf32, #tpu.memory_space<vmem>>, vector<8x128xf32>
    tpu.vector_store %arg14[%c0_11, %c0_12], %8 {strides = array<i32>} : memref<8x128xf32, #tpu.memory_space<vmem>>, vector<8x128xf32>,
    %cst_13 = arith.constant 9.99999997E-7 : f32
    %10 = vector.broadcast %cst_13 : f32 to vector<20x128xf32>
    %11 = tpu.iota {dimensions = array<i32: 1>} : vector<1x128xi32>
    %c64_i32 = arith.constant 64 : i32
    %12 = vector.broadcast %c64_i32 : i32 to vector<1x128xi32>
    %13 = arith.cmpi eq, %11, %12 : vector<1x128xi32>
    %14 = arith.extui %13 : vector<1x128xi1> to vector<1x128xi32>
    %15 = arith.sitofp %14 : vector<1x128xi32> to vector<1x128xf32>
    %cst_14 = arith.constant 9.99999997E-7 : f32
    %16 = vector.broadcast %cst_14 : f32 to vector<1x20xf32>
    %17 = tpu.iota {dimensions = array<i32: 1>} : vector<1x128xi32>
    %c24_i32 = arith.constant 24 : i32
    %18 = vector.broadcast %c24_i32 : i32 to vector<1x128xi32>
    %19 = arith.cmpi slt, %17, %18 : vector<1x128xi32>
    %c0_i32 = arith.constant 0 : i32
    %20 = arith.index_cast %c0_i32 : i32 to index
    %c0_15 = arith.constant 0 : index
    %21 = vector.load %arg14[%20, %c0_15] : memref<8x128xf32, #tpu.memory_space<vmem>>, vector<1x128xf32>
    %22 = arith.truncf %16 : vector<1x20xf32> to vector<1x20xbf16>
    %cst_16 = arith.constant dense<0.000000e+00> : vector<1x128xf32>
    %23 = tpu.matmul %22, %0, %cst_16 {dimension_numbers = #tpu.dot_dimension_numbers<[1], [0], [0], [1], [0, 0, 1, 1], [], []>} : vector<1x20xbf16>, vector<20x128xbf16>, vector<1x128xf32> -> vector<1x128xf32>
    %24 = arith.addf %21, %23 : vector<1x128xf32>
    %25 = arith.negf %24 : vector<1x128xf32>
    %26 = math.exp %25 : vector<1x128xf32>
    %cst_17 = arith.constant 1.000000e+00 : f32
    %27 = vector.broadcast %cst_17 : f32 to vector<1x128xf32>
    %28 = arith.addf %27, %26 : vector<1x128xf32>
    %29 = arith.divf %27, %28 : vector<1x128xf32>
    %30 = arith.truncf %29 : vector<1x128xf32> to vector<1x128xbf16>
    %cst_18 = arith.constant dense<0.000000e+00> : vector<1x128xf32>
    %31 = tpu.matmul %30, %1, %cst_18 {dimension_numbers = #tpu.dot_dimension_numbers<[1], [0], [0], [1], [0, 0, 1, 1], [], []>} : vector<1x128xbf16>, vector<128x128xbf16>, vector<1x128xf32> -> vector<1x128xf32>
    %32 = arith.addf %31, %2 : vector<1x128xf32>
    %33 = math.tanh %32 : vector<1x128xf32>
    %34 = arith.negf %32 : vector<1x128xf32>
    %35 = math.exp %34 : vector<1x128xf32>
    %cst_19 = arith.constant 1.000000e+00 : f32
    %36 = vector.broadcast %cst_19 : f32 to vector<1x128xf32>
    %37 = arith.addf %36, %35 : vector<1x128xf32>
    %38 = arith.divf %36, %37 : vector<1x128xf32>
    %cst_20 = arith.constant 0.000000e+00 : f32
    %39 = vector.broadcast %cst_20 : f32 to vector<1x128xf32>
    %40 = arith.maximumf %32, %39 : vector<1x128xf32>
    %41 = vector.broadcast %cst_20 : f32 to vector<1x128xf32>
    %42 = arith.subf %32, %41 : vector<1x128xf32>
    %43 = arith.cmpf one, %42, %42 : vector<1x128xf32>
    %44 = vector.broadcast %cst_20 : f32 to vector<1x128xf32>
    %45 = arith.addf %32, %44 : vector<1x128xf32>
    %46 = math.absf %42 : vector<1x128xf32>
    %cst_21 = arith.constant 0.000000e+00 : f32
    %47 = vector.broadcast %cst_21 : f32 to vector<1x128xf32>
    %48 = arith.subf %47, %46 : vector<1x128xf32>
    %49 = math.exp %48 : vector<1x128xf32>
    %50 = math.log1p %49 : vector<1x128xf32>
    %51 = arith.addf %40, %50 : vector<1x128xf32>
    %52 = arith.select %43, %45, %51 : vector<1x128xi1>, vector<1x128xf32>
    %53 = vector.extract_strided_slice %33 {offsets = [0, 48], sizes = [1, 20], strides = [1, 1]} : vector<1x128xf32> to vector<1x20xf32>
    %54 = vector.extract_strided_slice %33 {offsets = [0, 68], sizes = [1, 20], strides = [1, 1]} : vector<1x128xf32> to vector<1x20xf32>
    %55 = vector.extract_strided_slice %33 {offsets = [0, 24], sizes = [1, 20], strides = [1, 1]} : vector<1x128xf32> to vector<1x20xf32>
    %56 = vector.extract_strided_slice %52 {offsets = [0, 88], sizes = [1, 1], strides = [1, 1]} : vector<1x128xf32> to vector<1x1xf32>
    %57 = vector.extract_strided_slice %52 {offsets = [0, 89], sizes = [1, 1], strides = [1, 1]} : vector<1x128xf32> to vector<1x1xf32>
    %58 = vector.extract_strided_slice %38 {offsets = [0, 90], sizes = [1, 1], strides = [1, 1]} : vector<1x128xf32> to vector<1x1xf32>
    %59 = vector.extract_strided_slice %38 {offsets = [0, 91], sizes = [1, 1], strides = [1, 1]} : vector<1x128xf32> to vector<1x1xf32>
    %60 = vector.extract_strided_slice %52 {offsets = [0, 92], sizes = [1, 1], strides = [1, 1]} : vector<1x128xf32> to vector<1x1xf32>
    %cst_22 = arith.constant 1.000000e+00 : f32
    %61 = vector.broadcast %cst_22 : f32 to vector<1x1xf32>
    %62 = arith.addf %61, %60 : vector<1x1xf32>
    %63 = vector.extract_strided_slice %52 {offsets = [0, 93], sizes = [1, 1], strides = [1, 1]} : vector<1x128xf32> to vector<1x1xf32>
    %cst_23 = arith.constant 1.000000e+00 : f32
    %64 = vector.broadcast %cst_23 : f32 to vector<1x1xf32>
    %65 = arith.addf %64, %63 : vector<1x1xf32>
    %66 = vector.extract_strided_slice %32 {offsets = [0, 94], sizes = [1, 6], strides = [1, 1]} : vector<1x128xf32> to vector<1x6xf32>
    %cst_24 = arith.constant dense<0xFF800000> : vector<1xf32>
    %67 = vector.multi_reduction <maximumf>, %66, %cst_24 [1] : vector<1x6xf32> to vector<1xf32>
    %68 = vector.shape_cast %67 : vector<1xf32> to vector<1x1xf32>
    %69 = vector.broadcast %68 : vector<1x1xf32> to vector<1x6xf32>
    %70 = arith.subf %66, %69 : vector<1x6xf32>
    %71 = math.exp %70 : vector<1x6xf32>
    %72 = vector.extract_strided_slice %71 {offsets = [0, 0], sizes = [1, 3], strides = [1, 1]} : vector<1x6xf32> to vector<1x3xf32>
    %73 = vector.extract_strided_slice %71 {offsets = [0, 0], sizes = [1, 3], strides = [1, 1]} : vector<1x6xf32> to vector<1x3xf32>
    %cst_25 = arith.constant dense<0.000000e+00> : vector<1xf32>
    %74 = vector.multi_reduction <add>, %73, %cst_25 [1] : vector<1x3xf32> to vector<1xf32>
    %75 = vector.shape_cast %74 : vector<1xf32> to vector<1x1xf32>
    %76 = vector.broadcast %75 : vector<1x1xf32> to vector<1x3xf32>
    %77 = arith.divf %72, %76 : vector<1x3xf32>
    %78 = vector.extract_strided_slice %71 {offsets = [0, 3], sizes = [1, 3], strides = [1, 1]} : vector<1x6xf32> to vector<1x3xf32>
    %79 = vector.extract_strided_slice %71 {offsets = [0, 3], sizes = [1, 3], strides = [1, 1]} : vector<1x6xf32> to vector<1x3xf32>
    %cst_26 = arith.constant dense<0.000000e+00> : vector<1xf32>
    %80 = vector.multi_reduction <add>, %79, %cst_26 [1] : vector<1x3xf32> to vector<1xf32>
    %81 = vector.shape_cast %80 : vector<1xf32> to vector<1x1xf32>
    %82 = vector.broadcast %81 : vector<1x1xf32> to vector<1x3xf32>
    %83 = arith.divf %78, %82 : vector<1x3xf32>
    %cst_27 = arith.constant dense<0.000000e+00> : vector<1x128xf32>
    %84 = tpu.matmul %53, %10, %cst_27 {dimension_numbers = #tpu.dot_dimension_numbers<[1], [0], [0], [1], [0, 0, 1, 1], [], []>} : vector<1x20xf32>, vector<20x128xf32>, vector<1x128xf32> -> vector<1x128xf32>
    %85 = arith.mulf %53, %53 : vector<1x20xf32>
    %cst_28 = arith.constant dense<0.000000e+00> : vector<1xf32>
    %86 = vector.multi_reduction <add>, %85, %cst_28 [1] : vector<1x20xf32> to vector<1xf32>
    %87 = vector.shape_cast %86 : vector<1xf32> to vector<1x1xf32>
    %88 = arith.mulf %10, %10 : vector<20x128xf32>
    %cst_29 = arith.constant dense<0.000000e+00> : vector<128xf32>
    %89 = vector.multi_reduction <add>, %88, %cst_29 [0] : vector<20x128xf32> to vector<128xf32>
    %90 = vector.shape_cast %89 : vector<128xf32> to vector<1x128xf32>
    %cst_30 = arith.constant 1.000000e-16 : f32
    %91 = vector.broadcast %cst_30 : f32 to vector<1x128xf32>
    %92 = arith.maximumf %90, %91 : vector<1x128xf32>
    %cst_31 = arith.constant 1.000000e-16 : f32
    %93 = vector.broadcast %cst_31 : f32 to vector<1x1xf32>
    %94 = arith.maximumf %87, %93 : vector<1x1xf32>
    %95 = vector.broadcast %94 : vector<1x1xf32> to vector<1x128xf32>
    %96 = arith.mulf %92, %95 : vector<1x128xf32>
    %97 = math.rsqrt %96 : vector<1x128xf32>
    %98 = arith.mulf %84, %97 : vector<1x128xf32>
    %99 = vector.broadcast %56 : vector<1x1xf32> to vector<1x128xf32>
    %100 = arith.mulf %99, %98 : vector<1x128xf32>
    %cst_32 = arith.constant dense<0xFF800000> : vector<1xf32>
    %101 = vector.multi_reduction <maximumf>, %100, %cst_32 [1] : vector<1x128xf32> to vector<1xf32>
    %102 = vector.shape_cast %101 : vector<1xf32> to vector<1x1xf32>
    %103 = vector.broadcast %102 : vector<1x1xf32> to vector<1x128xf32>
    %104 = arith.subf %100, %103 : vector<1x128xf32>
    %105 = math.exp %104 : vector<1x128xf32>
    %cst_33 = arith.constant dense<0.000000e+00> : vector<1xf32>
    %106 = vector.multi_reduction <add>, %105, %cst_33 [1] : vector<1x128xf32> to vector<1xf32>
    %107 = vector.shape_cast %106 : vector<1xf32> to vector<1x1xf32>
    %108 = vector.broadcast %107 : vector<1x1xf32> to vector<1x128xf32>
    %109 = arith.divf %105, %108 : vector<1x128xf32>
    %110 = vector.broadcast %58 : vector<1x1xf32> to vector<1x128xf32>
    %111 = arith.mulf %110, %109 : vector<1x128xf32>
    %cst_34 = arith.constant 1.000000e+00 : f32
    %112 = vector.broadcast %cst_34 : f32 to vector<1x1xf32>
    %113 = arith.subf %112, %58 : vector<1x1xf32>
    %114 = vector.broadcast %113 : vector<1x1xf32> to vector<1x128xf32>
    %115 = arith.mulf %114, %15 : vector<1x128xf32>
    %116 = arith.addf %111, %115 : vector<1x128xf32>
    %117 = vector.extract_strided_slice %77 {offsets = [0, 0], sizes = [1, 1], strides = [1, 1]} : vector<1x3xf32> to vector<1x1xf32>
    %c1_i32 = arith.constant 1 : i32
    %118 = tpu.dynamic_rotate %116 by %c1_i32 dim 1 : vector<1x128xf32>, i32 -> vector<1x128xf32>
    %119 = vector.broadcast %117 : vector<1x1xf32> to vector<1x128xf32>
    %120 = arith.mulf %119, %118 : vector<1x128xf32>
    %121 = vector.extract_strided_slice %77 {offsets = [0, 1], sizes = [1, 1], strides = [1, 1]} : vector<1x3xf32> to vector<1x1xf32>
    %122 = vector.broadcast %121 : vector<1x1xf32> to vector<1x128xf32>
    %123 = arith.mulf %122, %116 : vector<1x128xf32>
    %124 = arith.addf %120, %123 : vector<1x128xf32>
    %125 = vector.extract_strided_slice %77 {offsets = [0, 2], sizes = [1, 1], strides = [1, 1]} : vector<1x3xf32> to vector<1x1xf32>
    %c127_i32 = arith.constant 127 : i32
    %126 = tpu.dynamic_rotate %116 by %c127_i32 dim 1 : vector<1x128xf32>, i32 -> vector<1x128xf32>
    %127 = vector.broadcast %125 : vector<1x1xf32> to vector<1x128xf32>
    %128 = arith.mulf %127, %126 : vector<1x128xf32>
    %129 = arith.addf %124, %128 : vector<1x128xf32>
    %cst_35 = arith.constant 1.000000e-16 : f32
    %130 = vector.broadcast %cst_35 : f32 to vector<1x128xf32>
    %131 = arith.addf %129, %130 : vector<1x128xf32>
    %132 = vector.broadcast %62 : vector<1x1xf32> to vector<1x128xf32>
    %133 = math.powf %131, %132 : vector<1x128xf32>
    %cst_36 = arith.constant dense<0.000000e+00> : vector<1xf32>
    %134 = vector.multi_reduction <add>, %133, %cst_36 [1] : vector<1x128xf32> to vector<1xf32>
    %135 = vector.shape_cast %134 : vector<1xf32> to vector<1x1xf32>
    %136 = vector.broadcast %135 : vector<1x1xf32> to vector<1x128xf32>
    %137 = arith.divf %133, %136 : vector<1x128xf32>
    %138 = arith.select %19, %38, %33 : vector<1x128xi1>, vector<1x128xf32>
    %139 = vector.extract_strided_slice %138 {offsets = [0, 0], sizes = [1, 48], strides = [1, 1]} : vector<1x128xf32> to vector<1x48xf32>
    %cst_37 = arith.constant dense<0.000000e+00> : vector<48x128xf32>
    %140 = tpu.matmul %139, %137, %cst_37 {dimension_numbers = #tpu.dot_dimension_numbers<[0], [0], [1], [1], [0, 1, 1, 1], [], []>} : vector<1x48xf32>, vector<1x128xf32>, vector<48x128xf32> -> vector<48x128xf32>
    %141 = vector.extract_strided_slice %140 {offsets = [0, 0], sizes = [20, 128], strides = [1, 1]} : vector<48x128xf32> to vector<20x128xf32>
    %142 = vector.extract_strided_slice %140 {offsets = [24, 0], sizes = [20, 128], strides = [1, 1]} : vector<48x128xf32> to vector<20x128xf32>
    %cst_38 = arith.constant 1.000000e+00 : f32
    %143 = vector.broadcast %cst_38 : f32 to vector<20x128xf32>
    %144 = arith.subf %143, %141 : vector<20x128xf32>
    %145 = arith.mulf %10, %144 : vector<20x128xf32>
    %146 = arith.addf %145, %142 : vector<20x128xf32>
    %cst_39 = arith.constant dense<0.000000e+00> : vector<1x128xf32>
    %147 = tpu.matmul %54, %146, %cst_39 {dimension_numbers = #tpu.dot_dimension_numbers<[1], [0], [0], [1], [0, 0, 1, 1], [], []>} : vector<1x20xf32>, vector<20x128xf32>, vector<1x128xf32> -> vector<1x128xf32>
    %148 = arith.mulf %54, %54 : vector<1x20xf32>
    %cst_40 = arith.constant dense<0.000000e+00> : vector<1xf32>
    %149 = vector.multi_reduction <add>, %148, %cst_40 [1] : vector<1x20xf32> to vector<1xf32>
    %150 = vector.shape_cast %149 : vector<1xf32> to vector<1x1xf32>
    %151 = arith.mulf %146, %146 : vector<20x128xf32>
    %cst_41 = arith.constant dense<0.000000e+00> : vector<128xf32>
    %152 = vector.multi_reduction <add>, %151, %cst_41 [0] : vector<20x128xf32> to vector<128xf32>
    %153 = vector.shape_cast %152 : vector<128xf32> to vector<1x128xf32>
    %cst_42 = arith.constant 1.000000e-16 : f32
    %154 = vector.broadcast %cst_42 : f32 to vector<1x128xf32>
    %155 = arith.maximumf %153, %154 : vector<1x128xf32>
    %cst_43 = arith.constant 1.000000e-16 : f32
    %156 = vector.broadcast %cst_43 : f32 to vector<1x1xf32>
    %157 = arith.maximumf %150, %156 : vector<1x1xf32>
    %158 = vector.broadcast %157 : vector<1x1xf32> to vector<1x128xf32>
    %159 = arith.mulf %155, %158 : vector<1x128xf32>
    %160 = math.rsqrt %159 : vector<1x128xf32>
    %161 = arith.mulf %147, %160 : vector<1x128xf32>
    %162 = vector.broadcast %57 : vector<1x1xf32> to vector<1x128xf32>
    %163 = arith.mulf %162, %161 : vector<1x128xf32>
    %cst_44 = arith.constant dense<0xFF800000> : vector<1xf32>
    %164 = vector.multi_reduction <maximumf>, %163, %cst_44 [1] : vector<1x128xf32> to vector<1xf32>
    %165 = vector.shape_cast %164 : vector<1xf32> to vector<1x1xf32>
    %166 = vector.broadcast %165 : vector<1x1xf32> to vector<1x128xf32>
    %167 = arith.subf %163, %166 : vector<1x128xf32>
    %168 = math.exp %167 : vector<1x128xf32>
    %cst_45 = arith.constant dense<0.000000e+00> : vector<1xf32>
    %169 = vector.multi_reduction <add>, %168, %cst_45 [1] : vector<1x128xf32> to vector<1xf32>
    %170 = vector.shape_cast %169 : vector<1xf32> to vector<1x1xf32>
    %171 = vector.broadcast %170 : vector<1x1xf32> to vector<1x128xf32>
    %172 = arith.divf %168, %171 : vector<1x128xf32>
    %173 = vector.broadcast %59 : vector<1x1xf32> to vector<1x128xf32>
    %174 = arith.mulf %173, %172 : vector<1x128xf32>
    %cst_46 = arith.constant 1.000000e+00 : f32
    %175 = vector.broadcast %cst_46 : f32 to vector<1x1xf32>
    %176 = arith.subf %175, %59 : vector<1x1xf32>
    %177 = vector.broadcast %176 : vector<1x1xf32> to vector<1x128xf32>
    %178 = arith.mulf %177, %15 : vector<1x128xf32>
    %179 = arith.addf %174, %178 : vector<1x128xf32>
    %180 = vector.extract_strided_slice %83 {offsets = [0, 0], sizes = [1, 1], strides = [1, 1]} : vector<1x3xf32> to vector<1x1xf32>
    %c1_i32_47 = arith.constant 1 : i32
    %181 = tpu.dynamic_rotate %179 by %c1_i32_47 dim 1 : vector<1x128xf32>, i32 -> vector<1x128xf32>
    %182 = vector.broadcast %180 : vector<1x1xf32> to vector<1x128xf32>
    %183 = arith.mulf %182, %181 : vector<1x128xf32>
    %184 = vector.extract_strided_slice %83 {offsets = [0, 1], sizes = [1, 1], strides = [1, 1]} : vector<1x3xf32> to vector<1x1xf32>
    %185 = vector.broadcast %184 : vector<1x1xf32> to vector<1x128xf32>
    %186 = arith.mulf %185, %179 : vector<1x128xf32>
    %187 = arith.addf %183, %186 : vector<1x128xf32>
    %188 = vector.extract_strided_slice %83 {offsets = [0, 2], sizes = [1, 1], strides = [1, 1]} : vector<1x3xf32> to vector<1x1xf32>
    %c127_i32_48 = arith.constant 127 : i32
    %189 = tpu.dynamic_rotate %179 by %c127_i32_48 dim 1 : vector<1x128xf32>, i32 -> vector<1x128xf32>
    %190 = vector.broadcast %188 : vector<1x1xf32> to vector<1x128xf32>
    %191 = arith.mulf %190, %189 : vector<1x128xf32>
    %192 = arith.addf %187, %191 : vector<1x128xf32>
    %cst_49 = arith.constant 1.000000e-16 : f32
    %193 = vector.broadcast %cst_49 : f32 to vector<1x128xf32>
    %194 = arith.addf %192, %193 : vector<1x128xf32>
    %195 = vector.broadcast %65 : vector<1x1xf32> to vector<1x128xf32>
    %196 = math.powf %194, %195 : vector<1x128xf32>
    %cst_50 = arith.constant dense<0.000000e+00> : vector<1xf32>
    %197 = vector.multi_reduction <add>, %196, %cst_50 [1] : vector<1x128xf32> to vector<1xf32>
    %198 = vector.shape_cast %197 : vector<1xf32> to vector<1x1xf32>
    %199 = vector.broadcast %198 : vector<1x1xf32> to vector<1x128xf32>
    %200 = arith.divf %196, %199 : vector<1x128xf32>
    %cst_51 = arith.constant dense<0.000000e+00> : vector<1x20xf32>
    %201 = tpu.matmul %200, %146, %cst_51 {dimension_numbers = #tpu.dot_dimension_numbers<[1], [1], [0], [0], [0, 0, 1, 0], [], []>} : vector<1x128xf32>, vector<20x128xf32>, vector<1x20xf32> -> vector<1x20xf32>
    %202 = arith.index_cast %c0_i32 : i32 to index
    %c0_52 = arith.constant 0 : index
    %203 = vector.load %arg10[%202, %c0_52] : memref<8x128xf32, #tpu.memory_space<vmem>>, vector<1x128xf32>
    tpu.vector_store %arg10[%202, %c0_52], %137 {strides = array<i32>} : memref<8x128xf32, #tpu.memory_space<vmem>>, vector<1x128xf32>,
    %204 = arith.index_cast %c0_i32 : i32 to index
    %c0_53 = arith.constant 0 : index
    %205 = vector.load %arg11[%204, %c0_53] : memref<8x128xf32, #tpu.memory_space<vmem>>, vector<1x128xf32>
    tpu.vector_store %arg11[%204, %c0_53], %200 {strides = array<i32>} : memref<8x128xf32, #tpu.memory_space<vmem>>, vector<1x128xf32>,
    %206 = arith.index_cast %c0_i32 : i32 to index
    %c0_54 = arith.constant 0 : index
    %207 = vector.load %arg12[%206, %c0_54] : memref<8x20xf32, #tpu.memory_space<vmem>>, vector<1x20xf32>
    tpu.vector_store %arg12[%206, %c0_54], %55 {strides = array<i32>} : memref<8x20xf32, #tpu.memory_space<vmem>>, vector<1x20xf32>,
    %208 = arith.index_cast %c0_i32 : i32 to index
    %c0_55 = arith.constant 0 : index
    %209 = vector.load %arg13[%208, %c0_55] : memref<8x20xf32, #tpu.memory_space<vmem>>, vector<1x20xf32>
    tpu.vector_store %arg13[%208, %c0_55], %201 {strides = array<i32>} : memref<8x20xf32, #tpu.memory_space<vmem>>, vector<1x20xf32>,
    %c1_i32_56 = arith.constant 1 : i32
    %210 = arith.index_cast %c1_i32_56 : i32 to index
    %c0_57 = arith.constant 0 : index
    %211 = vector.load %arg14[%210, %c0_57] : memref<8x128xf32, #tpu.memory_space<vmem>>, vector<1x128xf32>
    %212 = arith.truncf %201 : vector<1x20xf32> to vector<1x20xbf16>
    %cst_58 = arith.constant dense<0.000000e+00> : vector<1x128xf32>
    %213 = tpu.matmul %212, %0, %cst_58 {dimension_numbers = #tpu.dot_dimension_numbers<[1], [0], [0], [1], [0, 0, 1, 1], [], []>} : vector<1x20xbf16>, vector<20x128xbf16>, vector<1x128xf32> -> vector<1x128xf32>
    %214 = arith.addf %211, %213 : vector<1x128xf32>
    %215 = arith.negf %214 : vector<1x128xf32>
    %216 = math.exp %215 : vector<1x128xf32>
    %cst_59 = arith.constant 1.000000e+00 : f32
    %217 = vector.broadcast %cst_59 : f32 to vector<1x128xf32>
    %218 = arith.addf %217, %216 : vector<1x128xf32>
    %219 = arith.divf %217, %218 : vector<1x128xf32>
    %220 = arith.truncf %219 : vector<1x128xf32> to vector<1x128xbf16>
    %cst_60 = arith.constant dense<0.000000e+00> : vector<1x128xf32>
    %221 = tpu.matmul %220, %1, %cst_60 {dimension_numbers = #tpu.dot_dimension_numbers<[1], [0], [0], [1], [0, 0, 1, 1], [], []>} : vector<1x128xbf16>, vector<128x128xbf16>, vector<1x128xf32> -> vector<1x128xf32>
    %222 = arith.addf %221, %2 : vector<1x128xf32>
    %223 = math.tanh %222 : vector<1x128xf32>
    %224 = arith.negf %222 : vector<1x128xf32>
    %225 = math.exp %224 : vector<1x128xf32>
    %cst_61 = arith.constant 1.000000e+00 : f32
    %226 = vector.broadcast %cst_61 : f32 to vector<1x128xf32>
    %227 = arith.addf %226, %225 : vector<1x128xf32>
    %228 = arith.divf %226, %227 : vector<1x128xf32>
    %cst_62 = arith.constant 0.000000e+00 : f32
    %229 = vector.broadcast %cst_62 : f32 to vector<1x128xf32>
    %230 = arith.maximumf %222, %229 : vector<1x128xf32>
    %231 = vector.broadcast %cst_62 : f32 to vector<1x128xf32>
    %232 = arith.subf %222, %231 : vector<1x128xf32>
    %233 = arith.cmpf one, %232, %232 : vector<1x128xf32>
    %234 = vector.broadcast %cst_62 : f32 to vector<1x128xf32>
    %235 = arith.addf %222, %234 : vector<1x128xf32>
    %236 = math.absf %232 : vector<1x128xf32>
    %cst_63 = arith.constant 0.000000e+00 : f32
    %237 = vector.broadcast %cst_63 : f32 to vector<1x128xf32>
    %238 = arith.subf %237, %236 : vector<1x128xf32>
    %239 = math.exp %238 : vector<1x128xf32>
    %240 = math.log1p %239 : vector<1x128xf32>
    %241 = arith.addf %230, %240 : vector<1x128xf32>
    %242 = arith.select %233, %235, %241 : vector<1x128xi1>, vector<1x128xf32>
    %243 = vector.extract_strided_slice %223 {offsets = [0, 48], sizes = [1, 20], strides = [1, 1]} : vector<1x128xf32> to vector<1x20xf32>
    %244 = vector.extract_strided_slice %223 {offsets = [0, 68], sizes = [1, 20], strides = [1, 1]} : vector<1x128xf32> to vector<1x20xf32>
    %245 = vector.extract_strided_slice %223 {offsets = [0, 24], sizes = [1, 20], strides = [1, 1]} : vector<1x128xf32> to vector<1x20xf32>
    %246 = vector.extract_strided_slice %242 {offsets = [0, 88], sizes = [1, 1], strides = [1, 1]} : vector<1x128xf32> to vector<1x1xf32>
    %247 = vector.extract_strided_slice %242 {offsets = [0, 89], sizes = [1, 1], strides = [1, 1]} : vector<1x128xf32> to vector<1x1xf32>
    %248 = vector.extract_strided_slice %228 {offsets = [0, 90], sizes = [1, 1], strides = [1, 1]} : vector<1x128xf32> to vector<1x1xf32>
    %249 = vector.extract_strided_slice %228 {offsets = [0, 91], sizes = [1, 1], strides = [1, 1]} : vector<1x128xf32> to vector<1x1xf32>
    %250 = vector.extract_strided_slice %242 {offsets = [0, 92], sizes = [1, 1], strides = [1, 1]} : vector<1x128xf32> to vector<1x1xf32>
    %cst_64 = arith.constant 1.000000e+00 : f32
    %251 = vector.broadcast %cst_64 : f32 to vector<1x1xf32>
    %252 = arith.addf %251, %250 : vector<1x1xf32>
    %253 = vector.extract_strided_slice %242 {offsets = [0, 93], sizes = [1, 1], strides = [1, 1]} : vector<1x128xf32> to vector<1x1xf32>
    %cst_65 = arith.constant 1.000000e+00 : f32
    %254 = vector.broadcast %cst_65 : f32 to vector<1x1xf32>
    %255 = arith.addf %254, %253 : vector<1x1xf32>
    %256 = vector.extract_strided_slice %222 {offsets = [0, 94], sizes = [1, 6], strides = [1, 1]} : vector<1x128xf32> to vector<1x6xf32>
    %cst_66 = arith.constant dense<0xFF800000> : vector<1xf32>
    %257 = vector.multi_reduction <maximumf>, %256, %cst_66 [1] : vector<1x6xf32> to vector<1xf32>
    %258 = vector.shape_cast %257 : vector<1xf32> to vector<1x1xf32>
    %259 = vector.broadcast %258 : vector<1x1xf32> to vector<1x6xf32>
    %260 = arith.subf %256, %259 : vector<1x6xf32>
    %261 = math.exp %260 : vector<1x6xf32>
    %262 = vector.extract_strided_slice %261 {offsets = [0, 0], sizes = [1, 3], strides = [1, 1]} : vector<1x6xf32> to vector<1x3xf32>
    %263 = vector.extract_strided_slice %261 {offsets = [0, 0], sizes = [1, 3], strides = [1, 1]} : vector<1x6xf32> to vector<1x3xf32>
    %cst_67 = arith.constant dense<0.000000e+00> : vector<1xf32>
    %264 = vector.multi_reduction <add>, %263, %cst_67 [1] : vector<1x3xf32> to vector<1xf32>
    %265 = vector.shape_cast %264 : vector<1xf32> to vector<1x1xf32>
    %266 = vector.broadcast %265 : vector<1x1xf32> to vector<1x3xf32>
    %267 = arith.divf %262, %266 : vector<1x3xf32>
    %268 = vector.extract_strided_slice %261 {offsets = [0, 3], sizes = [1, 3], strides = [1, 1]} : vector<1x6xf32> to vector<1x3xf32>
    %269 = vector.extract_strided_slice %261 {offsets = [0, 3], sizes = [1, 3], strides = [1, 1]} : vector<1x6xf32> to vector<1x3xf32>
    %cst_68 = arith.constant dense<0.000000e+00> : vector<1xf32>
    %270 = vector.multi_reduction <add>, %269, %cst_68 [1] : vector<1x3xf32> to vector<1xf32>
    %271 = vector.shape_cast %270 : vector<1xf32> to vector<1x1xf32>
    %272 = vector.broadcast %271 : vector<1x1xf32> to vector<1x3xf32>
    %273 = arith.divf %268, %272 : vector<1x3xf32>
    %cst_69 = arith.constant dense<0.000000e+00> : vector<1x128xf32>
    %274 = tpu.matmul %243, %146, %cst_69 {dimension_numbers = #tpu.dot_dimension_numbers<[1], [0], [0], [1], [0, 0, 1, 1], [], []>} : vector<1x20xf32>, vector<20x128xf32>, vector<1x128xf32> -> vector<1x128xf32>
    %275 = arith.mulf %243, %243 : vector<1x20xf32>
    %cst_70 = arith.constant dense<0.000000e+00> : vector<1xf32>
    %276 = vector.multi_reduction <add>, %275, %cst_70 [1] : vector<1x20xf32> to vector<1xf32>
    %277 = vector.shape_cast %276 : vector<1xf32> to vector<1x1xf32>
    %278 = arith.mulf %146, %146 : vector<20x128xf32>
    %cst_71 = arith.constant dense<0.000000e+00> : vector<128xf32>
    %279 = vector.multi_reduction <add>, %278, %cst_71 [0] : vector<20x128xf32> to vector<128xf32>
    %280 = vector.shape_cast %279 : vector<128xf32> to vector<1x128xf32>
    %cst_72 = arith.constant 1.000000e-16 : f32
    %281 = vector.broadcast %cst_72 : f32 to vector<1x128xf32>
    %282 = arith.maximumf %280, %281 : vector<1x128xf32>
    %cst_73 = arith.constant 1.000000e-16 : f32
    %283 = vector.broadcast %cst_73 : f32 to vector<1x1xf32>
    %284 = arith.maximumf %277, %283 : vector<1x1xf32>
    %285 = vector.broadcast %284 : vector<1x1xf32> to vector<1x128xf32>
    %286 = arith.mulf %282, %285 : vector<1x128xf32>
    %287 = math.rsqrt %286 : vector<1x128xf32>
    %288 = arith.mulf %274, %287 : vector<1x128xf32>
    %289 = vector.broadcast %246 : vector<1x1xf32> to vector<1x128xf32>
    %290 = arith.mulf %289, %288 : vector<1x128xf32>
    %cst_74 = arith.constant dense<0xFF800000> : vector<1xf32>
    %291 = vector.multi_reduction <maximumf>, %290, %cst_74 [1] : vector<1x128xf32> to vector<1xf32>
    %292 = vector.shape_cast %291 : vector<1xf32> to vector<1x1xf32>
    %293 = vector.broadcast %292 : vector<1x1xf32> to vector<1x128xf32>
    %294 = arith.subf %290, %293 : vector<1x128xf32>
    %295 = math.exp %294 : vector<1x128xf32>
    %cst_75 = arith.constant dense<0.000000e+00> : vector<1xf32>
    %296 = vector.multi_reduction <add>, %295, %cst_75 [1] : vector<1x128xf32> to vector<1xf32>
    %297 = vector.shape_cast %296 : vector<1xf32> to vector<1x1xf32>
    %298 = vector.broadcast %297 : vector<1x1xf32> to vector<1x128xf32>
    %299 = arith.divf %295, %298 : vector<1x128xf32>
    %300 = vector.broadcast %248 : vector<1x1xf32> to vector<1x128xf32>
    %301 = arith.mulf %300, %299 : vector<1x128xf32>
    %cst_76 = arith.constant 1.000000e+00 : f32
    %302 = vector.broadcast %cst_76 : f32 to vector<1x1xf32>
    %303 = arith.subf %302, %248 : vector<1x1xf32>
    %304 = vector.broadcast %303 : vector<1x1xf32> to vector<1x128xf32>
    %305 = arith.mulf %304, %137 : vector<1x128xf32>
    %306 = arith.addf %301, %305 : vector<1x128xf32>
    %307 = vector.extract_strided_slice %267 {offsets = [0, 0], sizes = [1, 1], strides = [1, 1]} : vector<1x3xf32> to vector<1x1xf32>
    %c1_i32_77 = arith.constant 1 : i32
    %308 = tpu.dynamic_rotate %306 by %c1_i32_77 dim 1 : vector<1x128xf32>, i32 -> vector<1x128xf32>
    %309 = vector.broadcast %307 : vector<1x1xf32> to vector<1x128xf32>
    %310 = arith.mulf %309, %308 : vector<1x128xf32>
    %311 = vector.extract_strided_slice %267 {offsets = [0, 1], sizes = [1, 1], strides = [1, 1]} : vector<1x3xf32> to vector<1x1xf32>
    %312 = vector.broadcast %311 : vector<1x1xf32> to vector<1x128xf32>
    %313 = arith.mulf %312, %306 : vector<1x128xf32>
    %314 = arith.addf %310, %313 : vector<1x128xf32>
    %315 = vector.extract_strided_slice %267 {offsets = [0, 2], sizes = [1, 1], strides = [1, 1]} : vector<1x3xf32> to vector<1x1xf32>
    %c127_i32_78 = arith.constant 127 : i32
    %316 = tpu.dynamic_rotate %306 by %c127_i32_78 dim 1 : vector<1x128xf32>, i32 -> vector<1x128xf32>
    %317 = vector.broadcast %315 : vector<1x1xf32> to vector<1x128xf32>
    %318 = arith.mulf %317, %316 : vector<1x128xf32>
    %319 = arith.addf %314, %318 : vector<1x128xf32>
    %cst_79 = arith.constant 1.000000e-16 : f32
    %320 = vector.broadcast %cst_79 : f32 to vector<1x128xf32>
    %321 = arith.addf %319, %320 : vector<1x128xf32>
    %322 = vector.broadcast %252 : vector<1x1xf32> to vector<1x128xf32>
    %323 = math.powf %321, %322 : vector<1x128xf32>
    %cst_80 = arith.constant dense<0.000000e+00> : vector<1xf32>
    %324 = vector.multi_reduction <add>, %323, %cst_80 [1] : vector<1x128xf32> to vector<1xf32>
    %325 = vector.shape_cast %324 : vector<1xf32> to vector<1x1xf32>
    %326 = vector.broadcast %325 : vector<1x1xf32> to vector<1x128xf32>
    %327 = arith.divf %323, %326 : vector<1x128xf32>
    %328 = arith.select %19, %228, %223 : vector<1x128xi1>, vector<1x128xf32>
    %329 = vector.extract_strided_slice %328 {offsets = [0, 0], sizes = [1, 48], strides = [1, 1]} : vector<1x128xf32> to vector<1x48xf32>
    %cst_81 = arith.constant dense<0.000000e+00> : vector<48x128xf32>
    %330 = tpu.matmul %329, %327, %cst_81 {dimension_numbers = #tpu.dot_dimension_numbers<[0], [0], [1], [1], [0, 1, 1, 1], [], []>} : vector<1x48xf32>, vector<1x128xf32>, vector<48x128xf32> -> vector<48x128xf32>
    %331 = vector.extract_strided_slice %330 {offsets = [0, 0], sizes = [20, 128], strides = [1, 1]} : vector<48x128xf32> to vector<20x128xf32>
    %332 = vector.extract_strided_slice %330 {offsets = [24, 0], sizes = [20, 128], strides = [1, 1]} : vector<48x128xf32> to vector<20x128xf32>
    %cst_82 = arith.constant 1.000000e+00 : f32
    %333 = vector.broadcast %cst_82 : f32 to vector<20x128xf32>
    %334 = arith.subf %333, %331 : vector<20x128xf32>
    %335 = arith.mulf %146, %334 : vector<20x128xf32>
    %336 = arith.addf %335, %332 : vector<20x128xf32>
    %cst_83 = arith.constant dense<0.000000e+00> : vector<1x128xf32>
    %337 = tpu.matmul %244, %336, %cst_83 {dimension_numbers = #tpu.dot_dimension_numbers<[1], [0], [0], [1], [0, 0, 1, 1], [], []>} : vector<1x20xf32>, vector<20x128xf32>, vector<1x128xf32> -> vector<1x128xf32>
    %338 = arith.mulf %244, %244 : vector<1x20xf32>
    %cst_84 = arith.constant dense<0.000000e+00> : vector<1xf32>
    %339 = vector.multi_reduction <add>, %338, %cst_84 [1] : vector<1x20xf32> to vector<1xf32>
    %340 = vector.shape_cast %339 : vector<1xf32> to vector<1x1xf32>
    %341 = arith.mulf %336, %336 : vector<20x128xf32>
    %cst_85 = arith.constant dense<0.000000e+00> : vector<128xf32>
    %342 = vector.multi_reduction <add>, %341, %cst_85 [0] : vector<20x128xf32> to vector<128xf32>
    %343 = vector.shape_cast %342 : vector<128xf32> to vector<1x128xf32>
    %cst_86 = arith.constant 1.000000e-16 : f32
    %344 = vector.broadcast %cst_86 : f32 to vector<1x128xf32>
    %345 = arith.maximumf %343, %344 : vector<1x128xf32>
    %cst_87 = arith.constant 1.000000e-16 : f32
    %346 = vector.broadcast %cst_87 : f32 to vector<1x1xf32>
    %347 = arith.maximumf %340, %346 : vector<1x1xf32>
    %348 = vector.broadcast %347 : vector<1x1xf32> to vector<1x128xf32>
    %349 = arith.mulf %345, %348 : vector<1x128xf32>
    %350 = math.rsqrt %349 : vector<1x128xf32>
    %351 = arith.mulf %337, %350 : vector<1x128xf32>
    %352 = vector.broadcast %247 : vector<1x1xf32> to vector<1x128xf32>
    %353 = arith.mulf %352, %351 : vector<1x128xf32>
    %cst_88 = arith.constant dense<0xFF800000> : vector<1xf32>
    %354 = vector.multi_reduction <maximumf>, %353, %cst_88 [1] : vector<1x128xf32> to vector<1xf32>
    %355 = vector.shape_cast %354 : vector<1xf32> to vector<1x1xf32>
    %356 = vector.broadcast %355 : vector<1x1xf32> to vector<1x128xf32>
    %357 = arith.subf %353, %356 : vector<1x128xf32>
    %358 = math.exp %357 : vector<1x128xf32>
    %cst_89 = arith.constant dense<0.000000e+00> : vector<1xf32>
    %359 = vector.multi_reduction <add>, %358, %cst_89 [1] : vector<1x128xf32> to vector<1xf32>
    %360 = vector.shape_cast %359 : vector<1xf32> to vector<1x1xf32>
    %361 = vector.broadcast %360 : vector<1x1xf32> to vector<1x128xf32>
    %362 = arith.divf %358, %361 : vector<1x128xf32>
    %363 = vector.broadcast %249 : vector<1x1xf32> to vector<1x128xf32>
    %364 = arith.mulf %363, %362 : vector<1x128xf32>
    %cst_90 = arith.constant 1.000000e+00 : f32
    %365 = vector.broadcast %cst_90 : f32 to vector<1x1xf32>
    %366 = arith.subf %365, %249 : vector<1x1xf32>
    %367 = vector.broadcast %366 : vector<1x1xf32> to vector<1x128xf32>
    %368 = arith.mulf %367, %200 : vector<1x128xf32>
    %369 = arith.addf %364, %368 : vector<1x128xf32>
    %370 = vector.extract_strided_slice %273 {offsets = [0, 0], sizes = [1, 1], strides = [1, 1]} : vector<1x3xf32> to vector<1x1xf32>
    %c1_i32_91 = arith.constant 1 : i32
    %371 = tpu.dynamic_rotate %369 by %c1_i32_91 dim 1 : vector<1x128xf32>, i32 -> vector<1x128xf32>
    %372 = vector.broadcast %370 : vector<1x1xf32> to vector<1x128xf32>
    %373 = arith.mulf %372, %371 : vector<1x128xf32>
    %374 = vector.extract_strided_slice %273 {offsets = [0, 1], sizes = [1, 1], strides = [1, 1]} : vector<1x3xf32> to vector<1x1xf32>
    %375 = vector.broadcast %374 : vector<1x1xf32> to vector<1x128xf32>
    %376 = arith.mulf %375, %369 : vector<1x128xf32>
    %377 = arith.addf %373, %376 : vector<1x128xf32>
    %378 = vector.extract_strided_slice %273 {offsets = [0, 2], sizes = [1, 1], strides = [1, 1]} : vector<1x3xf32> to vector<1x1xf32>
    %c127_i32_92 = arith.constant 127 : i32
    %379 = tpu.dynamic_rotate %369 by %c127_i32_92 dim 1 : vector<1x128xf32>, i32 -> vector<1x128xf32>
    %380 = vector.broadcast %378 : vector<1x1xf32> to vector<1x128xf32>
    %381 = arith.mulf %380, %379 : vector<1x128xf32>
    %382 = arith.addf %377, %381 : vector<1x128xf32>
    %cst_93 = arith.constant 1.000000e-16 : f32
    %383 = vector.broadcast %cst_93 : f32 to vector<1x128xf32>
    %384 = arith.addf %382, %383 : vector<1x128xf32>
    %385 = vector.broadcast %255 : vector<1x1xf32> to vector<1x128xf32>
    %386 = math.powf %384, %385 : vector<1x128xf32>
    %cst_94 = arith.constant dense<0.000000e+00> : vector<1xf32>
    %387 = vector.multi_reduction <add>, %386, %cst_94 [1] : vector<1x128xf32> to vector<1xf32>
    %388 = vector.shape_cast %387 : vector<1xf32> to vector<1x1xf32>
    %389 = vector.broadcast %388 : vector<1x1xf32> to vector<1x128xf32>
    %390 = arith.divf %386, %389 : vector<1x128xf32>
    %cst_95 = arith.constant dense<0.000000e+00> : vector<1x20xf32>
    %391 = tpu.matmul %390, %336, %cst_95 {dimension_numbers = #tpu.dot_dimension_numbers<[1], [1], [0], [0], [0, 0, 1, 0], [], []>} : vector<1x128xf32>, vector<20x128xf32>, vector<1x20xf32> -> vector<1x20xf32>
    %392 = arith.index_cast %c1_i32_56 : i32 to index
    %c0_96 = arith.constant 0 : index
    %393 = vector.load %arg10[%392, %c0_96] : memref<8x128xf32, #tpu.memory_space<vmem>>, vector<1x128xf32>
    tpu.vector_store %arg10[%392, %c0_96], %327 {strides = array<i32>} : memref<8x128xf32, #tpu.memory_space<vmem>>, vector<1x128xf32>,
    %394 = arith.index_cast %c1_i32_56 : i32 to index
    %c0_97 = arith.constant 0 : index
    %395 = vector.load %arg11[%394, %c0_97] : memref<8x128xf32, #tpu.memory_space<vmem>>, vector<1x128xf32>
    tpu.vector_store %arg11[%394, %c0_97], %390 {strides = array<i32>} : memref<8x128xf32, #tpu.memory_space<vmem>>, vector<1x128xf32>,
    %396 = arith.index_cast %c1_i32_56 : i32 to index
    %c0_98 = arith.constant 0 : index
    %397 = vector.load %arg12[%396, %c0_98] : memref<8x20xf32, #tpu.memory_space<vmem>>, vector<1x20xf32>
    tpu.vector_store %arg12[%396, %c0_98], %245 {strides = array<i32>} : memref<8x20xf32, #tpu.memory_space<vmem>>, vector<1x20xf32>,
    %398 = arith.index_cast %c1_i32_56 : i32 to index
    %c0_99 = arith.constant 0 : index
    %399 = vector.load %arg13[%398, %c0_99] : memref<8x20xf32, #tpu.memory_space<vmem>>, vector<1x20xf32>
    tpu.vector_store %arg13[%398, %c0_99], %391 {strides = array<i32>} : memref<8x20xf32, #tpu.memory_space<vmem>>, vector<1x20xf32>,
    %c2_i32 = arith.constant 2 : i32
    %400 = arith.index_cast %c2_i32 : i32 to index
    %c0_100 = arith.constant 0 : index
    %401 = vector.load %arg14[%400, %c0_100] : memref<8x128xf32, #tpu.memory_space<vmem>>, vector<1x128xf32>
    %402 = arith.truncf %391 : vector<1x20xf32> to vector<1x20xbf16>
    %cst_101 = arith.constant dense<0.000000e+00> : vector<1x128xf32>
    %403 = tpu.matmul %402, %0, %cst_101 {dimension_numbers = #tpu.dot_dimension_numbers<[1], [0], [0], [1], [0, 0, 1, 1], [], []>} : vector<1x20xbf16>, vector<20x128xbf16>, vector<1x128xf32> -> vector<1x128xf32>
    %404 = arith.addf %401, %403 : vector<1x128xf32>
    %405 = arith.negf %404 : vector<1x128xf32>
    %406 = math.exp %405 : vector<1x128xf32>
    %cst_102 = arith.constant 1.000000e+00 : f32
    %407 = vector.broadcast %cst_102 : f32 to vector<1x128xf32>
    %408 = arith.addf %407, %406 : vector<1x128xf32>
    %409 = arith.divf %407, %408 : vector<1x128xf32>
    %410 = arith.truncf %409 : vector<1x128xf32> to vector<1x128xbf16>
    %cst_103 = arith.constant dense<0.000000e+00> : vector<1x128xf32>
    %411 = tpu.matmul %410, %1, %cst_103 {dimension_numbers = #tpu.dot_dimension_numbers<[1], [0], [0], [1], [0, 0, 1, 1], [], []>} : vector<1x128xbf16>, vector<128x128xbf16>, vector<1x128xf32> -> vector<1x128xf32>
    %412 = arith.addf %411, %2 : vector<1x128xf32>
    %413 = math.tanh %412 : vector<1x128xf32>
    %414 = arith.negf %412 : vector<1x128xf32>
    %415 = math.exp %414 : vector<1x128xf32>
    %cst_104 = arith.constant 1.000000e+00 : f32
    %416 = vector.broadcast %cst_104 : f32 to vector<1x128xf32>
    %417 = arith.addf %416, %415 : vector<1x128xf32>
    %418 = arith.divf %416, %417 : vector<1x128xf32>
    %cst_105 = arith.constant 0.000000e+00 : f32
    %419 = vector.broadcast %cst_105 : f32 to vector<1x128xf32>
    %420 = arith.maximumf %412, %419 : vector<1x128xf32>
    %421 = vector.broadcast %cst_105 : f32 to vector<1x128xf32>
    %422 = arith.subf %412, %421 : vector<1x128xf32>
    %423 = arith.cmpf one, %422, %422 : vector<1x128xf32>
    %424 = vector.broadcast %cst_105 : f32 to vector<1x128xf32>
    %425 = arith.addf %412, %424 : vector<1x128xf32>
    %426 = math.absf %422 : vector<1x128xf32>
    %cst_106 = arith.constant 0.000000e+00 : f32
    %427 = vector.broadcast %cst_106 : f32 to vector<1x128xf32>
    %428 = arith.subf %427, %426 : vector<1x128xf32>
    %429 = math.exp %428 : vector<1x128xf32>
    %430 = math.log1p %429 : vector<1x128xf32>
    %431 = arith.addf %420, %430 : vector<1x128xf32>
    %432 = arith.select %423, %425, %431 : vector<1x128xi1>, vector<1x128xf32>
    %433 = vector.extract_strided_slice %413 {offsets = [0, 48], sizes = [1, 20], strides = [1, 1]} : vector<1x128xf32> to vector<1x20xf32>
    %434 = vector.extract_strided_slice %413 {offsets = [0, 68], sizes = [1, 20], strides = [1, 1]} : vector<1x128xf32> to vector<1x20xf32>
    %435 = vector.extract_strided_slice %413 {offsets = [0, 24], sizes = [1, 20], strides = [1, 1]} : vector<1x128xf32> to vector<1x20xf32>
    %436 = vector.extract_strided_slice %432 {offsets = [0, 88], sizes = [1, 1], strides = [1, 1]} : vector<1x128xf32> to vector<1x1xf32>
    %437 = vector.extract_strided_slice %432 {offsets = [0, 89], sizes = [1, 1], strides = [1, 1]} : vector<1x128xf32> to vector<1x1xf32>
    %438 = vector.extract_strided_slice %418 {offsets = [0, 90], sizes = [1, 1], strides = [1, 1]} : vector<1x128xf32> to vector<1x1xf32>
    %439 = vector.extract_strided_slice %418 {offsets = [0, 91], sizes = [1, 1], strides = [1, 1]} : vector<1x128xf32> to vector<1x1xf32>
    %440 = vector.extract_strided_slice %432 {offsets = [0, 92], sizes = [1, 1], strides = [1, 1]} : vector<1x128xf32> to vector<1x1xf32>
    %cst_107 = arith.constant 1.000000e+00 : f32
    %441 = vector.broadcast %cst_107 : f32 to vector<1x1xf32>
    %442 = arith.addf %441, %440 : vector<1x1xf32>
    %443 = vector.extract_strided_slice %432 {offsets = [0, 93], sizes = [1, 1], strides = [1, 1]} : vector<1x128xf32> to vector<1x1xf32>
    %cst_108 = arith.constant 1.000000e+00 : f32
    %444 = vector.broadcast %cst_108 : f32 to vector<1x1xf32>
    %445 = arith.addf %444, %443 : vector<1x1xf32>
    %446 = vector.extract_strided_slice %412 {offsets = [0, 94], sizes = [1, 6], strides = [1, 1]} : vector<1x128xf32> to vector<1x6xf32>
    %cst_109 = arith.constant dense<0xFF800000> : vector<1xf32>
    %447 = vector.multi_reduction <maximumf>, %446, %cst_109 [1] : vector<1x6xf32> to vector<1xf32>
    %448 = vector.shape_cast %447 : vector<1xf32> to vector<1x1xf32>
    %449 = vector.broadcast %448 : vector<1x1xf32> to vector<1x6xf32>
    %450 = arith.subf %446, %449 : vector<1x6xf32>
    %451 = math.exp %450 : vector<1x6xf32>
    %452 = vector.extract_strided_slice %451 {offsets = [0, 0], sizes = [1, 3], strides = [1, 1]} : vector<1x6xf32> to vector<1x3xf32>
    %453 = vector.extract_strided_slice %451 {offsets = [0, 0], sizes = [1, 3], strides = [1, 1]} : vector<1x6xf32> to vector<1x3xf32>
    %cst_110 = arith.constant dense<0.000000e+00> : vector<1xf32>
    %454 = vector.multi_reduction <add>, %453, %cst_110 [1] : vector<1x3xf32> to vector<1xf32>
    %455 = vector.shape_cast %454 : vector<1xf32> to vector<1x1xf32>
    %456 = vector.broadcast %455 : vector<1x1xf32> to vector<1x3xf32>
    %457 = arith.divf %452, %456 : vector<1x3xf32>
    %458 = vector.extract_strided_slice %451 {offsets = [0, 3], sizes = [1, 3], strides = [1, 1]} : vector<1x6xf32> to vector<1x3xf32>
    %459 = vector.extract_strided_slice %451 {offsets = [0, 3], sizes = [1, 3], strides = [1, 1]} : vector<1x6xf32> to vector<1x3xf32>
    %cst_111 = arith.constant dense<0.000000e+00> : vector<1xf32>
    %460 = vector.multi_reduction <add>, %459, %cst_111 [1] : vector<1x3xf32> to vector<1xf32>
    %461 = vector.shape_cast %460 : vector<1xf32> to vector<1x1xf32>
    %462 = vector.broadcast %461 : vector<1x1xf32> to vector<1x3xf32>
    %463 = arith.divf %458, %462 : vector<1x3xf32>
    %cst_112 = arith.constant dense<0.000000e+00> : vector<1x128xf32>
    %464 = tpu.matmul %433, %336, %cst_112 {dimension_numbers = #tpu.dot_dimension_numbers<[1], [0], [0], [1], [0, 0, 1, 1], [], []>} : vector<1x20xf32>, vector<20x128xf32>, vector<1x128xf32> -> vector<1x128xf32>
    %465 = arith.mulf %433, %433 : vector<1x20xf32>
    %cst_113 = arith.constant dense<0.000000e+00> : vector<1xf32>
    %466 = vector.multi_reduction <add>, %465, %cst_113 [1] : vector<1x20xf32> to vector<1xf32>
    %467 = vector.shape_cast %466 : vector<1xf32> to vector<1x1xf32>
    %468 = arith.mulf %336, %336 : vector<20x128xf32>
    %cst_114 = arith.constant dense<0.000000e+00> : vector<128xf32>
    %469 = vector.multi_reduction <add>, %468, %cst_114 [0] : vector<20x128xf32> to vector<128xf32>
    %470 = vector.shape_cast %469 : vector<128xf32> to vector<1x128xf32>
    %cst_115 = arith.constant 1.000000e-16 : f32
    %471 = vector.broadcast %cst_115 : f32 to vector<1x128xf32>
    %472 = arith.maximumf %470, %471 : vector<1x128xf32>
    %cst_116 = arith.constant 1.000000e-16 : f32
    %473 = vector.broadcast %cst_116 : f32 to vector<1x1xf32>
    %474 = arith.maximumf %467, %473 : vector<1x1xf32>
    %475 = vector.broadcast %474 : vector<1x1xf32> to vector<1x128xf32>
    %476 = arith.mulf %472, %475 : vector<1x128xf32>
    %477 = math.rsqrt %476 : vector<1x128xf32>
    %478 = arith.mulf %464, %477 : vector<1x128xf32>
    %479 = vector.broadcast %436 : vector<1x1xf32> to vector<1x128xf32>
    %480 = arith.mulf %479, %478 : vector<1x128xf32>
    %cst_117 = arith.constant dense<0xFF800000> : vector<1xf32>
    %481 = vector.multi_reduction <maximumf>, %480, %cst_117 [1] : vector<1x128xf32> to vector<1xf32>
    %482 = vector.shape_cast %481 : vector<1xf32> to vector<1x1xf32>
    %483 = vector.broadcast %482 : vector<1x1xf32> to vector<1x128xf32>
    %484 = arith.subf %480, %483 : vector<1x128xf32>
    %485 = math.exp %484 : vector<1x128xf32>
    %cst_118 = arith.constant dense<0.000000e+00> : vector<1xf32>
    %486 = vector.multi_reduction <add>, %485, %cst_118 [1] : vector<1x128xf32> to vector<1xf32>
    %487 = vector.shape_cast %486 : vector<1xf32> to vector<1x1xf32>
    %488 = vector.broadcast %487 : vector<1x1xf32> to vector<1x128xf32>
    %489 = arith.divf %485, %488 : vector<1x128xf32>
    %490 = vector.broadcast %438 : vector<1x1xf32> to vector<1x128xf32>
    %491 = arith.mulf %490, %489 : vector<1x128xf32>
    %cst_119 = arith.constant 1.000000e+00 : f32
    %492 = vector.broadcast %cst_119 : f32 to vector<1x1xf32>
    %493 = arith.subf %492, %438 : vector<1x1xf32>
    %494 = vector.broadcast %493 : vector<1x1xf32> to vector<1x128xf32>
    %495 = arith.mulf %494, %327 : vector<1x128xf32>
    %496 = arith.addf %491, %495 : vector<1x128xf32>
    %497 = vector.extract_strided_slice %457 {offsets = [0, 0], sizes = [1, 1], strides = [1, 1]} : vector<1x3xf32> to vector<1x1xf32>
    %c1_i32_120 = arith.constant 1 : i32
    %498 = tpu.dynamic_rotate %496 by %c1_i32_120 dim 1 : vector<1x128xf32>, i32 -> vector<1x128xf32>
    %499 = vector.broadcast %497 : vector<1x1xf32> to vector<1x128xf32>
    %500 = arith.mulf %499, %498 : vector<1x128xf32>
    %501 = vector.extract_strided_slice %457 {offsets = [0, 1], sizes = [1, 1], strides = [1, 1]} : vector<1x3xf32> to vector<1x1xf32>
    %502 = vector.broadcast %501 : vector<1x1xf32> to vector<1x128xf32>
    %503 = arith.mulf %502, %496 : vector<1x128xf32>
    %504 = arith.addf %500, %503 : vector<1x128xf32>
    %505 = vector.extract_strided_slice %457 {offsets = [0, 2], sizes = [1, 1], strides = [1, 1]} : vector<1x3xf32> to vector<1x1xf32>
    %c127_i32_121 = arith.constant 127 : i32
    %506 = tpu.dynamic_rotate %496 by %c127_i32_121 dim 1 : vector<1x128xf32>, i32 -> vector<1x128xf32>
    %507 = vector.broadcast %505 : vector<1x1xf32> to vector<1x128xf32>
    %508 = arith.mulf %507, %506 : vector<1x128xf32>
    %509 = arith.addf %504, %508 : vector<1x128xf32>
    %cst_122 = arith.constant 1.000000e-16 : f32
    %510 = vector.broadcast %cst_122 : f32 to vector<1x128xf32>
    %511 = arith.addf %509, %510 : vector<1x128xf32>
    %512 = vector.broadcast %442 : vector<1x1xf32> to vector<1x128xf32>
    %513 = math.powf %511, %512 : vector<1x128xf32>
    %cst_123 = arith.constant dense<0.000000e+00> : vector<1xf32>
    %514 = vector.multi_reduction <add>, %513, %cst_123 [1] : vector<1x128xf32> to vector<1xf32>
    %515 = vector.shape_cast %514 : vector<1xf32> to vector<1x1xf32>
    %516 = vector.broadcast %515 : vector<1x1xf32> to vector<1x128xf32>
    %517 = arith.divf %513, %516 : vector<1x128xf32>
    %518 = arith.select %19, %418, %413 : vector<1x128xi1>, vector<1x128xf32>
    %519 = vector.extract_strided_slice %518 {offsets = [0, 0], sizes = [1, 48], strides = [1, 1]} : vector<1x128xf32> to vector<1x48xf32>
    %cst_124 = arith.constant dense<0.000000e+00> : vector<48x128xf32>
    %520 = tpu.matmul %519, %517, %cst_124 {dimension_numbers = #tpu.dot_dimension_numbers<[0], [0], [1], [1], [0, 1, 1, 1], [], []>} : vector<1x48xf32>, vector<1x128xf32>, vector<48x128xf32> -> vector<48x128xf32>
    %521 = vector.extract_strided_slice %520 {offsets = [0, 0], sizes = [20, 128], strides = [1, 1]} : vector<48x128xf32> to vector<20x128xf32>
    %522 = vector.extract_strided_slice %520 {offsets = [24, 0], sizes = [20, 128], strides = [1, 1]} : vector<48x128xf32> to vector<20x128xf32>
    %cst_125 = arith.constant 1.000000e+00 : f32
    %523 = vector.broadcast %cst_125 : f32 to vector<20x128xf32>
    %524 = arith.subf %523, %521 : vector<20x128xf32>
    %525 = arith.mulf %336, %524 : vector<20x128xf32>
    %526 = arith.addf %525, %522 : vector<20x128xf32>
    %cst_126 = arith.constant dense<0.000000e+00> : vector<1x128xf32>
    %527 = tpu.matmul %434, %526, %cst_126 {dimension_numbers = #tpu.dot_dimension_numbers<[1], [0], [0], [1], [0, 0, 1, 1], [], []>} : vector<1x20xf32>, vector<20x128xf32>, vector<1x128xf32> -> vector<1x128xf32>
    %528 = arith.mulf %434, %434 : vector<1x20xf32>
    %cst_127 = arith.constant dense<0.000000e+00> : vector<1xf32>
    %529 = vector.multi_reduction <add>, %528, %cst_127 [1] : vector<1x20xf32> to vector<1xf32>
    %530 = vector.shape_cast %529 : vector<1xf32> to vector<1x1xf32>
    %531 = arith.mulf %526, %526 : vector<20x128xf32>
    %cst_128 = arith.constant dense<0.000000e+00> : vector<128xf32>
    %532 = vector.multi_reduction <add>, %531, %cst_128 [0] : vector<20x128xf32> to vector<128xf32>
    %533 = vector.shape_cast %532 : vector<128xf32> to vector<1x128xf32>
    %cst_129 = arith.constant 1.000000e-16 : f32
    %534 = vector.broadcast %cst_129 : f32 to vector<1x128xf32>
    %535 = arith.maximumf %533, %534 : vector<1x128xf32>
    %cst_130 = arith.constant 1.000000e-16 : f32
    %536 = vector.broadcast %cst_130 : f32 to vector<1x1xf32>
    %537 = arith.maximumf %530, %536 : vector<1x1xf32>
    %538 = vector.broadcast %537 : vector<1x1xf32> to vector<1x128xf32>
    %539 = arith.mulf %535, %538 : vector<1x128xf32>
    %540 = math.rsqrt %539 : vector<1x128xf32>
    %541 = arith.mulf %527, %540 : vector<1x128xf32>
    %542 = vector.broadcast %437 : vector<1x1xf32> to vector<1x128xf32>
    %543 = arith.mulf %542, %541 : vector<1x128xf32>
    %cst_131 = arith.constant dense<0xFF800000> : vector<1xf32>
    %544 = vector.multi_reduction <maximumf>, %543, %cst_131 [1] : vector<1x128xf32> to vector<1xf32>
    %545 = vector.shape_cast %544 : vector<1xf32> to vector<1x1xf32>
    %546 = vector.broadcast %545 : vector<1x1xf32> to vector<1x128xf32>
    %547 = arith.subf %543, %546 : vector<1x128xf32>
    %548 = math.exp %547 : vector<1x128xf32>
    %cst_132 = arith.constant dense<0.000000e+00> : vector<1xf32>
    %549 = vector.multi_reduction <add>, %548, %cst_132 [1] : vector<1x128xf32> to vector<1xf32>
    %550 = vector.shape_cast %549 : vector<1xf32> to vector<1x1xf32>
    %551 = vector.broadcast %550 : vector<1x1xf32> to vector<1x128xf32>
    %552 = arith.divf %548, %551 : vector<1x128xf32>
    %553 = vector.broadcast %439 : vector<1x1xf32> to vector<1x128xf32>
    %554 = arith.mulf %553, %552 : vector<1x128xf32>
    %cst_133 = arith.constant 1.000000e+00 : f32
    %555 = vector.broadcast %cst_133 : f32 to vector<1x1xf32>
    %556 = arith.subf %555, %439 : vector<1x1xf32>
    %557 = vector.broadcast %556 : vector<1x1xf32> to vector<1x128xf32>
    %558 = arith.mulf %557, %390 : vector<1x128xf32>
    %559 = arith.addf %554, %558 : vector<1x128xf32>
    %560 = vector.extract_strided_slice %463 {offsets = [0, 0], sizes = [1, 1], strides = [1, 1]} : vector<1x3xf32> to vector<1x1xf32>
    %c1_i32_134 = arith.constant 1 : i32
    %561 = tpu.dynamic_rotate %559 by %c1_i32_134 dim 1 : vector<1x128xf32>, i32 -> vector<1x128xf32>
    %562 = vector.broadcast %560 : vector<1x1xf32> to vector<1x128xf32>
    %563 = arith.mulf %562, %561 : vector<1x128xf32>
    %564 = vector.extract_strided_slice %463 {offsets = [0, 1], sizes = [1, 1], strides = [1, 1]} : vector<1x3xf32> to vector<1x1xf32>
    %565 = vector.broadcast %564 : vector<1x1xf32> to vector<1x128xf32>
    %566 = arith.mulf %565, %559 : vector<1x128xf32>
    %567 = arith.addf %563, %566 : vector<1x128xf32>
    %568 = vector.extract_strided_slice %463 {offsets = [0, 2], sizes = [1, 1], strides = [1, 1]} : vector<1x3xf32> to vector<1x1xf32>
    %c127_i32_135 = arith.constant 127 : i32
    %569 = tpu.dynamic_rotate %559 by %c127_i32_135 dim 1 : vector<1x128xf32>, i32 -> vector<1x128xf32>
    %570 = vector.broadcast %568 : vector<1x1xf32> to vector<1x128xf32>
    %571 = arith.mulf %570, %569 : vector<1x128xf32>
    %572 = arith.addf %567, %571 : vector<1x128xf32>
    %cst_136 = arith.constant 1.000000e-16 : f32
    %573 = vector.broadcast %cst_136 : f32 to vector<1x128xf32>
    %574 = arith.addf %572, %573 : vector<1x128xf32>
    %575 = vector.broadcast %445 : vector<1x1xf32> to vector<1x128xf32>
    %576 = math.powf %574, %575 : vector<1x128xf32>
    %cst_137 = arith.constant dense<0.000000e+00> : vector<1xf32>
    %577 = vector.multi_reduction <add>, %576, %cst_137 [1] : vector<1x128xf32> to vector<1xf32>
    %578 = vector.shape_cast %577 : vector<1xf32> to vector<1x1xf32>
    %579 = vector.broadcast %578 : vector<1x1xf32> to vector<1x128xf32>
    %580 = arith.divf %576, %579 : vector<1x128xf32>
    %cst_138 = arith.constant dense<0.000000e+00> : vector<1x20xf32>
    %581 = tpu.matmul %580, %526, %cst_138 {dimension_numbers = #tpu.dot_dimension_numbers<[1], [1], [0], [0], [0, 0, 1, 0], [], []>} : vector<1x128xf32>, vector<20x128xf32>, vector<1x20xf32> -> vector<1x20xf32>
    %582 = arith.index_cast %c2_i32 : i32 to index
    %c0_139 = arith.constant 0 : index
    %583 = vector.load %arg10[%582, %c0_139] : memref<8x128xf32, #tpu.memory_space<vmem>>, vector<1x128xf32>
    tpu.vector_store %arg10[%582, %c0_139], %517 {strides = array<i32>} : memref<8x128xf32, #tpu.memory_space<vmem>>, vector<1x128xf32>,
    %584 = arith.index_cast %c2_i32 : i32 to index
    %c0_140 = arith.constant 0 : index
    %585 = vector.load %arg11[%584, %c0_140] : memref<8x128xf32, #tpu.memory_space<vmem>>, vector<1x128xf32>
    tpu.vector_store %arg11[%584, %c0_140], %580 {strides = array<i32>} : memref<8x128xf32, #tpu.memory_space<vmem>>, vector<1x128xf32>,
    %586 = arith.index_cast %c2_i32 : i32 to index
    %c0_141 = arith.constant 0 : index
    %587 = vector.load %arg12[%586, %c0_141] : memref<8x20xf32, #tpu.memory_space<vmem>>, vector<1x20xf32>
    tpu.vector_store %arg12[%586, %c0_141], %435 {strides = array<i32>} : memref<8x20xf32, #tpu.memory_space<vmem>>, vector<1x20xf32>,
    %588 = arith.index_cast %c2_i32 : i32 to index
    %c0_142 = arith.constant 0 : index
    %589 = vector.load %arg13[%588, %c0_142] : memref<8x20xf32, #tpu.memory_space<vmem>>, vector<1x20xf32>
    tpu.vector_store %arg13[%588, %c0_142], %581 {strides = array<i32>} : memref<8x20xf32, #tpu.memory_space<vmem>>, vector<1x20xf32>,
    %c3_i32 = arith.constant 3 : i32
    %590 = arith.index_cast %c3_i32 : i32 to index
    %c0_143 = arith.constant 0 : index
    %591 = vector.load %arg14[%590, %c0_143] : memref<8x128xf32, #tpu.memory_space<vmem>>, vector<1x128xf32>
    %592 = arith.truncf %581 : vector<1x20xf32> to vector<1x20xbf16>
    %cst_144 = arith.constant dense<0.000000e+00> : vector<1x128xf32>
    %593 = tpu.matmul %592, %0, %cst_144 {dimension_numbers = #tpu.dot_dimension_numbers<[1], [0], [0], [1], [0, 0, 1, 1], [], []>} : vector<1x20xbf16>, vector<20x128xbf16>, vector<1x128xf32> -> vector<1x128xf32>
    %594 = arith.addf %591, %593 : vector<1x128xf32>
    %595 = arith.negf %594 : vector<1x128xf32>
    %596 = math.exp %595 : vector<1x128xf32>
    %cst_145 = arith.constant 1.000000e+00 : f32
    %597 = vector.broadcast %cst_145 : f32 to vector<1x128xf32>
    %598 = arith.addf %597, %596 : vector<1x128xf32>
    %599 = arith.divf %597, %598 : vector<1x128xf32>
    %600 = arith.truncf %599 : vector<1x128xf32> to vector<1x128xbf16>
    %cst_146 = arith.constant dense<0.000000e+00> : vector<1x128xf32>
    %601 = tpu.matmul %600, %1, %cst_146 {dimension_numbers = #tpu.dot_dimension_numbers<[1], [0], [0], [1], [0, 0, 1, 1], [], []>} : vector<1x128xbf16>, vector<128x128xbf16>, vector<1x128xf32> -> vector<1x128xf32>
    %602 = arith.addf %601, %2 : vector<1x128xf32>
    %603 = math.tanh %602 : vector<1x128xf32>
    %604 = arith.negf %602 : vector<1x128xf32>
    %605 = math.exp %604 : vector<1x128xf32>
    %cst_147 = arith.constant 1.000000e+00 : f32
    %606 = vector.broadcast %cst_147 : f32 to vector<1x128xf32>
    %607 = arith.addf %606, %605 : vector<1x128xf32>
    %608 = arith.divf %606, %607 : vector<1x128xf32>
    %cst_148 = arith.constant 0.000000e+00 : f32
    %609 = vector.broadcast %cst_148 : f32 to vector<1x128xf32>
    %610 = arith.maximumf %602, %609 : vector<1x128xf32>
    %611 = vector.broadcast %cst_148 : f32 to vector<1x128xf32>
    %612 = arith.subf %602, %611 : vector<1x128xf32>
    %613 = arith.cmpf one, %612, %612 : vector<1x128xf32>
    %614 = vector.broadcast %cst_148 : f32 to vector<1x128xf32>
    %615 = arith.addf %602, %614 : vector<1x128xf32>
    %616 = math.absf %612 : vector<1x128xf32>
    %cst_149 = arith.constant 0.000000e+00 : f32
    %617 = vector.broadcast %cst_149 : f32 to vector<1x128xf32>
    %618 = arith.subf %617, %616 : vector<1x128xf32>
    %619 = math.exp %618 : vector<1x128xf32>
    %620 = math.log1p %619 : vector<1x128xf32>
    %621 = arith.addf %610, %620 : vector<1x128xf32>
    %622 = arith.select %613, %615, %621 : vector<1x128xi1>, vector<1x128xf32>
    %623 = vector.extract_strided_slice %603 {offsets = [0, 48], sizes = [1, 20], strides = [1, 1]} : vector<1x128xf32> to vector<1x20xf32>
    %624 = vector.extract_strided_slice %603 {offsets = [0, 68], sizes = [1, 20], strides = [1, 1]} : vector<1x128xf32> to vector<1x20xf32>
    %625 = vector.extract_strided_slice %603 {offsets = [0, 24], sizes = [1, 20], strides = [1, 1]} : vector<1x128xf32> to vector<1x20xf32>
    %626 = vector.extract_strided_slice %622 {offsets = [0, 88], sizes = [1, 1], strides = [1, 1]} : vector<1x128xf32> to vector<1x1xf32>
    %627 = vector.extract_strided_slice %622 {offsets = [0, 89], sizes = [1, 1], strides = [1, 1]} : vector<1x128xf32> to vector<1x1xf32>
    %628 = vector.extract_strided_slice %608 {offsets = [0, 90], sizes = [1, 1], strides = [1, 1]} : vector<1x128xf32> to vector<1x1xf32>
    %629 = vector.extract_strided_slice %608 {offsets = [0, 91], sizes = [1, 1], strides = [1, 1]} : vector<1x128xf32> to vector<1x1xf32>
    %630 = vector.extract_strided_slice %622 {offsets = [0, 92], sizes = [1, 1], strides = [1, 1]} : vector<1x128xf32> to vector<1x1xf32>
    %cst_150 = arith.constant 1.000000e+00 : f32
    %631 = vector.broadcast %cst_150 : f32 to vector<1x1xf32>
    %632 = arith.addf %631, %630 : vector<1x1xf32>
    %633 = vector.extract_strided_slice %622 {offsets = [0, 93], sizes = [1, 1], strides = [1, 1]} : vector<1x128xf32> to vector<1x1xf32>
    %cst_151 = arith.constant 1.000000e+00 : f32
    %634 = vector.broadcast %cst_151 : f32 to vector<1x1xf32>
    %635 = arith.addf %634, %633 : vector<1x1xf32>
    %636 = vector.extract_strided_slice %602 {offsets = [0, 94], sizes = [1, 6], strides = [1, 1]} : vector<1x128xf32> to vector<1x6xf32>
    %cst_152 = arith.constant dense<0xFF800000> : vector<1xf32>
    %637 = vector.multi_reduction <maximumf>, %636, %cst_152 [1] : vector<1x6xf32> to vector<1xf32>
    %638 = vector.shape_cast %637 : vector<1xf32> to vector<1x1xf32>
    %639 = vector.broadcast %638 : vector<1x1xf32> to vector<1x6xf32>
    %640 = arith.subf %636, %639 : vector<1x6xf32>
    %641 = math.exp %640 : vector<1x6xf32>
    %642 = vector.extract_strided_slice %641 {offsets = [0, 0], sizes = [1, 3], strides = [1, 1]} : vector<1x6xf32> to vector<1x3xf32>
    %643 = vector.extract_strided_slice %641 {offsets = [0, 0], sizes = [1, 3], strides = [1, 1]} : vector<1x6xf32> to vector<1x3xf32>
    %cst_153 = arith.constant dense<0.000000e+00> : vector<1xf32>
    %644 = vector.multi_reduction <add>, %643, %cst_153 [1] : vector<1x3xf32> to vector<1xf32>
    %645 = vector.shape_cast %644 : vector<1xf32> to vector<1x1xf32>
    %646 = vector.broadcast %645 : vector<1x1xf32> to vector<1x3xf32>
    %647 = arith.divf %642, %646 : vector<1x3xf32>
    %648 = vector.extract_strided_slice %641 {offsets = [0, 3], sizes = [1, 3], strides = [1, 1]} : vector<1x6xf32> to vector<1x3xf32>
    %649 = vector.extract_strided_slice %641 {offsets = [0, 3], sizes = [1, 3], strides = [1, 1]} : vector<1x6xf32> to vector<1x3xf32>
    %cst_154 = arith.constant dense<0.000000e+00> : vector<1xf32>
    %650 = vector.multi_reduction <add>, %649, %cst_154 [1] : vector<1x3xf32> to vector<1xf32>
    %651 = vector.shape_cast %650 : vector<1xf32> to vector<1x1xf32>
    %652 = vector.broadcast %651 : vector<1x1xf32> to vector<1x3xf32>
    %653 = arith.divf %648, %652 : vector<1x3xf32>
    %cst_155 = arith.constant dense<0.000000e+00> : vector<1x128xf32>
    %654 = tpu.matmul %623, %526, %cst_155 {dimension_numbers = #tpu.dot_dimension_numbers<[1], [0], [0], [1], [0, 0, 1, 1], [], []>} : vector<1x20xf32>, vector<20x128xf32>, vector<1x128xf32> -> vector<1x128xf32>
    %655 = arith.mulf %623, %623 : vector<1x20xf32>
    %cst_156 = arith.constant dense<0.000000e+00> : vector<1xf32>
    %656 = vector.multi_reduction <add>, %655, %cst_156 [1] : vector<1x20xf32> to vector<1xf32>
    %657 = vector.shape_cast %656 : vector<1xf32> to vector<1x1xf32>
    %658 = arith.mulf %526, %526 : vector<20x128xf32>
    %cst_157 = arith.constant dense<0.000000e+00> : vector<128xf32>
    %659 = vector.multi_reduction <add>, %658, %cst_157 [0] : vector<20x128xf32> to vector<128xf32>
    %660 = vector.shape_cast %659 : vector<128xf32> to vector<1x128xf32>
    %cst_158 = arith.constant 1.000000e-16 : f32
    %661 = vector.broadcast %cst_158 : f32 to vector<1x128xf32>
    %662 = arith.maximumf %660, %661 : vector<1x128xf32>
    %cst_159 = arith.constant 1.000000e-16 : f32
    %663 = vector.broadcast %cst_159 : f32 to vector<1x1xf32>
    %664 = arith.maximumf %657, %663 : vector<1x1xf32>
    %665 = vector.broadcast %664 : vector<1x1xf32> to vector<1x128xf32>
    %666 = arith.mulf %662, %665 : vector<1x128xf32>
    %667 = math.rsqrt %666 : vector<1x128xf32>
    %668 = arith.mulf %654, %667 : vector<1x128xf32>
    %669 = vector.broadcast %626 : vector<1x1xf32> to vector<1x128xf32>
    %670 = arith.mulf %669, %668 : vector<1x128xf32>
    %cst_160 = arith.constant dense<0xFF800000> : vector<1xf32>
    %671 = vector.multi_reduction <maximumf>, %670, %cst_160 [1] : vector<1x128xf32> to vector<1xf32>
    %672 = vector.shape_cast %671 : vector<1xf32> to vector<1x1xf32>
    %673 = vector.broadcast %672 : vector<1x1xf32> to vector<1x128xf32>
    %674 = arith.subf %670, %673 : vector<1x128xf32>
    %675 = math.exp %674 : vector<1x128xf32>
    %cst_161 = arith.constant dense<0.000000e+00> : vector<1xf32>
    %676 = vector.multi_reduction <add>, %675, %cst_161 [1] : vector<1x128xf32> to vector<1xf32>
    %677 = vector.shape_cast %676 : vector<1xf32> to vector<1x1xf32>
    %678 = vector.broadcast %677 : vector<1x1xf32> to vector<1x128xf32>
    %679 = arith.divf %675, %678 : vector<1x128xf32>
    %680 = vector.broadcast %628 : vector<1x1xf32> to vector<1x128xf32>
    %681 = arith.mulf %680, %679 : vector<1x128xf32>
    %cst_162 = arith.constant 1.000000e+00 : f32
    %682 = vector.broadcast %cst_162 : f32 to vector<1x1xf32>
    %683 = arith.subf %682, %628 : vector<1x1xf32>
    %684 = vector.broadcast %683 : vector<1x1xf32> to vector<1x128xf32>
    %685 = arith.mulf %684, %517 : vector<1x128xf32>
    %686 = arith.addf %681, %685 : vector<1x128xf32>
    %687 = vector.extract_strided_slice %647 {offsets = [0, 0], sizes = [1, 1], strides = [1, 1]} : vector<1x3xf32> to vector<1x1xf32>
    %c1_i32_163 = arith.constant 1 : i32
    %688 = tpu.dynamic_rotate %686 by %c1_i32_163 dim 1 : vector<1x128xf32>, i32 -> vector<1x128xf32>
    %689 = vector.broadcast %687 : vector<1x1xf32> to vector<1x128xf32>
    %690 = arith.mulf %689, %688 : vector<1x128xf32>
    %691 = vector.extract_strided_slice %647 {offsets = [0, 1], sizes = [1, 1], strides = [1, 1]} : vector<1x3xf32> to vector<1x1xf32>
    %692 = vector.broadcast %691 : vector<1x1xf32> to vector<1x128xf32>
    %693 = arith.mulf %692, %686 : vector<1x128xf32>
    %694 = arith.addf %690, %693 : vector<1x128xf32>
    %695 = vector.extract_strided_slice %647 {offsets = [0, 2], sizes = [1, 1], strides = [1, 1]} : vector<1x3xf32> to vector<1x1xf32>
    %c127_i32_164 = arith.constant 127 : i32
    %696 = tpu.dynamic_rotate %686 by %c127_i32_164 dim 1 : vector<1x128xf32>, i32 -> vector<1x128xf32>
    %697 = vector.broadcast %695 : vector<1x1xf32> to vector<1x128xf32>
    %698 = arith.mulf %697, %696 : vector<1x128xf32>
    %699 = arith.addf %694, %698 : vector<1x128xf32>
    %cst_165 = arith.constant 1.000000e-16 : f32
    %700 = vector.broadcast %cst_165 : f32 to vector<1x128xf32>
    %701 = arith.addf %699, %700 : vector<1x128xf32>
    %702 = vector.broadcast %632 : vector<1x1xf32> to vector<1x128xf32>
    %703 = math.powf %701, %702 : vector<1x128xf32>
    %cst_166 = arith.constant dense<0.000000e+00> : vector<1xf32>
    %704 = vector.multi_reduction <add>, %703, %cst_166 [1] : vector<1x128xf32> to vector<1xf32>
    %705 = vector.shape_cast %704 : vector<1xf32> to vector<1x1xf32>
    %706 = vector.broadcast %705 : vector<1x1xf32> to vector<1x128xf32>
    %707 = arith.divf %703, %706 : vector<1x128xf32>
    %708 = arith.select %19, %608, %603 : vector<1x128xi1>, vector<1x128xf32>
    %709 = vector.extract_strided_slice %708 {offsets = [0, 0], sizes = [1, 48], strides = [1, 1]} : vector<1x128xf32> to vector<1x48xf32>
    %cst_167 = arith.constant dense<0.000000e+00> : vector<48x128xf32>
    %710 = tpu.matmul %709, %707, %cst_167 {dimension_numbers = #tpu.dot_dimension_numbers<[0], [0], [1], [1], [0, 1, 1, 1], [], []>} : vector<1x48xf32>, vector<1x128xf32>, vector<48x128xf32> -> vector<48x128xf32>
    %711 = vector.extract_strided_slice %710 {offsets = [0, 0], sizes = [20, 128], strides = [1, 1]} : vector<48x128xf32> to vector<20x128xf32>
    %712 = vector.extract_strided_slice %710 {offsets = [24, 0], sizes = [20, 128], strides = [1, 1]} : vector<48x128xf32> to vector<20x128xf32>
    %cst_168 = arith.constant 1.000000e+00 : f32
    %713 = vector.broadcast %cst_168 : f32 to vector<20x128xf32>
    %714 = arith.subf %713, %711 : vector<20x128xf32>
    %715 = arith.mulf %526, %714 : vector<20x128xf32>
    %716 = arith.addf %715, %712 : vector<20x128xf32>
    %cst_169 = arith.constant dense<0.000000e+00> : vector<1x128xf32>
    %717 = tpu.matmul %624, %716, %cst_169 {dimension_numbers = #tpu.dot_dimension_numbers<[1], [0], [0], [1], [0, 0, 1, 1], [], []>} : vector<1x20xf32>, vector<20x128xf32>, vector<1x128xf32> -> vector<1x128xf32>
    %718 = arith.mulf %624, %624 : vector<1x20xf32>
    %cst_170 = arith.constant dense<0.000000e+00> : vector<1xf32>
    %719 = vector.multi_reduction <add>, %718, %cst_170 [1] : vector<1x20xf32> to vector<1xf32>
    %720 = vector.shape_cast %719 : vector<1xf32> to vector<1x1xf32>
    %721 = arith.mulf %716, %716 : vector<20x128xf32>
    %cst_171 = arith.constant dense<0.000000e+00> : vector<128xf32>
    %722 = vector.multi_reduction <add>, %721, %cst_171 [0] : vector<20x128xf32> to vector<128xf32>
    %723 = vector.shape_cast %722 : vector<128xf32> to vector<1x128xf32>
    %cst_172 = arith.constant 1.000000e-16 : f32
    %724 = vector.broadcast %cst_172 : f32 to vector<1x128xf32>
    %725 = arith.maximumf %723, %724 : vector<1x128xf32>
    %cst_173 = arith.constant 1.000000e-16 : f32
    %726 = vector.broadcast %cst_173 : f32 to vector<1x1xf32>
    %727 = arith.maximumf %720, %726 : vector<1x1xf32>
    %728 = vector.broadcast %727 : vector<1x1xf32> to vector<1x128xf32>
    %729 = arith.mulf %725, %728 : vector<1x128xf32>
    %730 = math.rsqrt %729 : vector<1x128xf32>
    %731 = arith.mulf %717, %730 : vector<1x128xf32>
    %732 = vector.broadcast %627 : vector<1x1xf32> to vector<1x128xf32>
    %733 = arith.mulf %732, %731 : vector<1x128xf32>
    %cst_174 = arith.constant dense<0xFF800000> : vector<1xf32>
    %734 = vector.multi_reduction <maximumf>, %733, %cst_174 [1] : vector<1x128xf32> to vector<1xf32>
    %735 = vector.shape_cast %734 : vector<1xf32> to vector<1x1xf32>
    %736 = vector.broadcast %735 : vector<1x1xf32> to vector<1x128xf32>
    %737 = arith.subf %733, %736 : vector<1x128xf32>
    %738 = math.exp %737 : vector<1x128xf32>
    %cst_175 = arith.constant dense<0.000000e+00> : vector<1xf32>
    %739 = vector.multi_reduction <add>, %738, %cst_175 [1] : vector<1x128xf32> to vector<1xf32>
    %740 = vector.shape_cast %739 : vector<1xf32> to vector<1x1xf32>
    %741 = vector.broadcast %740 : vector<1x1xf32> to vector<1x128xf32>
    %742 = arith.divf %738, %741 : vector<1x128xf32>
    %743 = vector.broadcast %629 : vector<1x1xf32> to vector<1x128xf32>
    %744 = arith.mulf %743, %742 : vector<1x128xf32>
    %cst_176 = arith.constant 1.000000e+00 : f32
    %745 = vector.broadcast %cst_176 : f32 to vector<1x1xf32>
    %746 = arith.subf %745, %629 : vector<1x1xf32>
    %747 = vector.broadcast %746 : vector<1x1xf32> to vector<1x128xf32>
    %748 = arith.mulf %747, %580 : vector<1x128xf32>
    %749 = arith.addf %744, %748 : vector<1x128xf32>
    %750 = vector.extract_strided_slice %653 {offsets = [0, 0], sizes = [1, 1], strides = [1, 1]} : vector<1x3xf32> to vector<1x1xf32>
    %c1_i32_177 = arith.constant 1 : i32
    %751 = tpu.dynamic_rotate %749 by %c1_i32_177 dim 1 : vector<1x128xf32>, i32 -> vector<1x128xf32>
    %752 = vector.broadcast %750 : vector<1x1xf32> to vector<1x128xf32>
    %753 = arith.mulf %752, %751 : vector<1x128xf32>
    %754 = vector.extract_strided_slice %653 {offsets = [0, 1], sizes = [1, 1], strides = [1, 1]} : vector<1x3xf32> to vector<1x1xf32>
    %755 = vector.broadcast %754 : vector<1x1xf32> to vector<1x128xf32>
    %756 = arith.mulf %755, %749 : vector<1x128xf32>
    %757 = arith.addf %753, %756 : vector<1x128xf32>
    %758 = vector.extract_strided_slice %653 {offsets = [0, 2], sizes = [1, 1], strides = [1, 1]} : vector<1x3xf32> to vector<1x1xf32>
    %c127_i32_178 = arith.constant 127 : i32
    %759 = tpu.dynamic_rotate %749 by %c127_i32_178 dim 1 : vector<1x128xf32>, i32 -> vector<1x128xf32>
    %760 = vector.broadcast %758 : vector<1x1xf32> to vector<1x128xf32>
    %761 = arith.mulf %760, %759 : vector<1x128xf32>
    %762 = arith.addf %757, %761 : vector<1x128xf32>
    %cst_179 = arith.constant 1.000000e-16 : f32
    %763 = vector.broadcast %cst_179 : f32 to vector<1x128xf32>
    %764 = arith.addf %762, %763 : vector<1x128xf32>
    %765 = vector.broadcast %635 : vector<1x1xf32> to vector<1x128xf32>
    %766 = math.powf %764, %765 : vector<1x128xf32>
    %cst_180 = arith.constant dense<0.000000e+00> : vector<1xf32>
    %767 = vector.multi_reduction <add>, %766, %cst_180 [1] : vector<1x128xf32> to vector<1xf32>
    %768 = vector.shape_cast %767 : vector<1xf32> to vector<1x1xf32>
    %769 = vector.broadcast %768 : vector<1x1xf32> to vector<1x128xf32>
    %770 = arith.divf %766, %769 : vector<1x128xf32>
    %cst_181 = arith.constant dense<0.000000e+00> : vector<1x20xf32>
    %771 = tpu.matmul %770, %716, %cst_181 {dimension_numbers = #tpu.dot_dimension_numbers<[1], [1], [0], [0], [0, 0, 1, 0], [], []>} : vector<1x128xf32>, vector<20x128xf32>, vector<1x20xf32> -> vector<1x20xf32>
    %772 = arith.index_cast %c3_i32 : i32 to index
    %c0_182 = arith.constant 0 : index
    %773 = vector.load %arg10[%772, %c0_182] : memref<8x128xf32, #tpu.memory_space<vmem>>, vector<1x128xf32>
    tpu.vector_store %arg10[%772, %c0_182], %707 {strides = array<i32>} : memref<8x128xf32, #tpu.memory_space<vmem>>, vector<1x128xf32>,
    %774 = arith.index_cast %c3_i32 : i32 to index
    %c0_183 = arith.constant 0 : index
    %775 = vector.load %arg11[%774, %c0_183] : memref<8x128xf32, #tpu.memory_space<vmem>>, vector<1x128xf32>
    tpu.vector_store %arg11[%774, %c0_183], %770 {strides = array<i32>} : memref<8x128xf32, #tpu.memory_space<vmem>>, vector<1x128xf32>,
    %776 = arith.index_cast %c3_i32 : i32 to index
    %c0_184 = arith.constant 0 : index
    %777 = vector.load %arg12[%776, %c0_184] : memref<8x20xf32, #tpu.memory_space<vmem>>, vector<1x20xf32>
    tpu.vector_store %arg12[%776, %c0_184], %625 {strides = array<i32>} : memref<8x20xf32, #tpu.memory_space<vmem>>, vector<1x20xf32>,
    %778 = arith.index_cast %c3_i32 : i32 to index
    %c0_185 = arith.constant 0 : index
    %779 = vector.load %arg13[%778, %c0_185] : memref<8x20xf32, #tpu.memory_space<vmem>>, vector<1x20xf32>
    tpu.vector_store %arg13[%778, %c0_185], %771 {strides = array<i32>} : memref<8x20xf32, #tpu.memory_space<vmem>>, vector<1x20xf32>,
    %c4_i32 = arith.constant 4 : i32
    %780 = arith.index_cast %c4_i32 : i32 to index
    %c0_186 = arith.constant 0 : index
    %781 = vector.load %arg14[%780, %c0_186] : memref<8x128xf32, #tpu.memory_space<vmem>>, vector<1x128xf32>
    %782 = arith.truncf %771 : vector<1x20xf32> to vector<1x20xbf16>
    %cst_187 = arith.constant dense<0.000000e+00> : vector<1x128xf32>
    %783 = tpu.matmul %782, %0, %cst_187 {dimension_numbers = #tpu.dot_dimension_numbers<[1], [0], [0], [1], [0, 0, 1, 1], [], []>} : vector<1x20xbf16>, vector<20x128xbf16>, vector<1x128xf32> -> vector<1x128xf32>
    %784 = arith.addf %781, %783 : vector<1x128xf32>
    %785 = arith.negf %784 : vector<1x128xf32>
    %786 = math.exp %785 : vector<1x128xf32>
    %cst_188 = arith.constant 1.000000e+00 : f32
    %787 = vector.broadcast %cst_188 : f32 to vector<1x128xf32>
    %788 = arith.addf %787, %786 : vector<1x128xf32>
    %789 = arith.divf %787, %788 : vector<1x128xf32>
    %790 = arith.truncf %789 : vector<1x128xf32> to vector<1x128xbf16>
    %cst_189 = arith.constant dense<0.000000e+00> : vector<1x128xf32>
    %791 = tpu.matmul %790, %1, %cst_189 {dimension_numbers = #tpu.dot_dimension_numbers<[1], [0], [0], [1], [0, 0, 1, 1], [], []>} : vector<1x128xbf16>, vector<128x128xbf16>, vector<1x128xf32> -> vector<1x128xf32>
    %792 = arith.addf %791, %2 : vector<1x128xf32>
    %793 = math.tanh %792 : vector<1x128xf32>
    %794 = arith.negf %792 : vector<1x128xf32>
    %795 = math.exp %794 : vector<1x128xf32>
    %cst_190 = arith.constant 1.000000e+00 : f32
    %796 = vector.broadcast %cst_190 : f32 to vector<1x128xf32>
    %797 = arith.addf %796, %795 : vector<1x128xf32>
    %798 = arith.divf %796, %797 : vector<1x128xf32>
    %cst_191 = arith.constant 0.000000e+00 : f32
    %799 = vector.broadcast %cst_191 : f32 to vector<1x128xf32>
    %800 = arith.maximumf %792, %799 : vector<1x128xf32>
    %801 = vector.broadcast %cst_191 : f32 to vector<1x128xf32>
    %802 = arith.subf %792, %801 : vector<1x128xf32>
    %803 = arith.cmpf one, %802, %802 : vector<1x128xf32>
    %804 = vector.broadcast %cst_191 : f32 to vector<1x128xf32>
    %805 = arith.addf %792, %804 : vector<1x128xf32>
    %806 = math.absf %802 : vector<1x128xf32>
    %cst_192 = arith.constant 0.000000e+00 : f32
    %807 = vector.broadcast %cst_192 : f32 to vector<1x128xf32>
    %808 = arith.subf %807, %806 : vector<1x128xf32>
    %809 = math.exp %808 : vector<1x128xf32>
    %810 = math.log1p %809 : vector<1x128xf32>
    %811 = arith.addf %800, %810 : vector<1x128xf32>
    %812 = arith.select %803, %805, %811 : vector<1x128xi1>, vector<1x128xf32>
    %813 = vector.extract_strided_slice %793 {offsets = [0, 48], sizes = [1, 20], strides = [1, 1]} : vector<1x128xf32> to vector<1x20xf32>
    %814 = vector.extract_strided_slice %793 {offsets = [0, 68], sizes = [1, 20], strides = [1, 1]} : vector<1x128xf32> to vector<1x20xf32>
    %815 = vector.extract_strided_slice %793 {offsets = [0, 24], sizes = [1, 20], strides = [1, 1]} : vector<1x128xf32> to vector<1x20xf32>
    %816 = vector.extract_strided_slice %812 {offsets = [0, 88], sizes = [1, 1], strides = [1, 1]} : vector<1x128xf32> to vector<1x1xf32>
    %817 = vector.extract_strided_slice %812 {offsets = [0, 89], sizes = [1, 1], strides = [1, 1]} : vector<1x128xf32> to vector<1x1xf32>
    %818 = vector.extract_strided_slice %798 {offsets = [0, 90], sizes = [1, 1], strides = [1, 1]} : vector<1x128xf32> to vector<1x1xf32>
    %819 = vector.extract_strided_slice %798 {offsets = [0, 91], sizes = [1, 1], strides = [1, 1]} : vector<1x128xf32> to vector<1x1xf32>
    %820 = vector.extract_strided_slice %812 {offsets = [0, 92], sizes = [1, 1], strides = [1, 1]} : vector<1x128xf32> to vector<1x1xf32>
    %cst_193 = arith.constant 1.000000e+00 : f32
    %821 = vector.broadcast %cst_193 : f32 to vector<1x1xf32>
    %822 = arith.addf %821, %820 : vector<1x1xf32>
    %823 = vector.extract_strided_slice %812 {offsets = [0, 93], sizes = [1, 1], strides = [1, 1]} : vector<1x128xf32> to vector<1x1xf32>
    %cst_194 = arith.constant 1.000000e+00 : f32
    %824 = vector.broadcast %cst_194 : f32 to vector<1x1xf32>
    %825 = arith.addf %824, %823 : vector<1x1xf32>
    %826 = vector.extract_strided_slice %792 {offsets = [0, 94], sizes = [1, 6], strides = [1, 1]} : vector<1x128xf32> to vector<1x6xf32>
    %cst_195 = arith.constant dense<0xFF800000> : vector<1xf32>
    %827 = vector.multi_reduction <maximumf>, %826, %cst_195 [1] : vector<1x6xf32> to vector<1xf32>
    %828 = vector.shape_cast %827 : vector<1xf32> to vector<1x1xf32>
    %829 = vector.broadcast %828 : vector<1x1xf32> to vector<1x6xf32>
    %830 = arith.subf %826, %829 : vector<1x6xf32>
    %831 = math.exp %830 : vector<1x6xf32>
    %832 = vector.extract_strided_slice %831 {offsets = [0, 0], sizes = [1, 3], strides = [1, 1]} : vector<1x6xf32> to vector<1x3xf32>
    %833 = vector.extract_strided_slice %831 {offsets = [0, 0], sizes = [1, 3], strides = [1, 1]} : vector<1x6xf32> to vector<1x3xf32>
    %cst_196 = arith.constant dense<0.000000e+00> : vector<1xf32>
    %834 = vector.multi_reduction <add>, %833, %cst_196 [1] : vector<1x3xf32> to vector<1xf32>
    %835 = vector.shape_cast %834 : vector<1xf32> to vector<1x1xf32>
    %836 = vector.broadcast %835 : vector<1x1xf32> to vector<1x3xf32>
    %837 = arith.divf %832, %836 : vector<1x3xf32>
    %838 = vector.extract_strided_slice %831 {offsets = [0, 3], sizes = [1, 3], strides = [1, 1]} : vector<1x6xf32> to vector<1x3xf32>
    %839 = vector.extract_strided_slice %831 {offsets = [0, 3], sizes = [1, 3], strides = [1, 1]} : vector<1x6xf32> to vector<1x3xf32>
    %cst_197 = arith.constant dense<0.000000e+00> : vector<1xf32>
    %840 = vector.multi_reduction <add>, %839, %cst_197 [1] : vector<1x3xf32> to vector<1xf32>
    %841 = vector.shape_cast %840 : vector<1xf32> to vector<1x1xf32>
    %842 = vector.broadcast %841 : vector<1x1xf32> to vector<1x3xf32>
    %843 = arith.divf %838, %842 : vector<1x3xf32>
    %cst_198 = arith.constant dense<0.000000e+00> : vector<1x128xf32>
    %844 = tpu.matmul %813, %716, %cst_198 {dimension_numbers = #tpu.dot_dimension_numbers<[1], [0], [0], [1], [0, 0, 1, 1], [], []>} : vector<1x20xf32>, vector<20x128xf32>, vector<1x128xf32> -> vector<1x128xf32>
    %845 = arith.mulf %813, %813 : vector<1x20xf32>
    %cst_199 = arith.constant dense<0.000000e+00> : vector<1xf32>
    %846 = vector.multi_reduction <add>, %845, %cst_199 [1] : vector<1x20xf32> to vector<1xf32>
    %847 = vector.shape_cast %846 : vector<1xf32> to vector<1x1xf32>
    %848 = arith.mulf %716, %716 : vector<20x128xf32>
    %cst_200 = arith.constant dense<0.000000e+00> : vector<128xf32>
    %849 = vector.multi_reduction <add>, %848, %cst_200 [0] : vector<20x128xf32> to vector<128xf32>
    %850 = vector.shape_cast %849 : vector<128xf32> to vector<1x128xf32>
    %cst_201 = arith.constant 1.000000e-16 : f32
    %851 = vector.broadcast %cst_201 : f32 to vector<1x128xf32>
    %852 = arith.maximumf %850, %851 : vector<1x128xf32>
    %cst_202 = arith.constant 1.000000e-16 : f32
    %853 = vector.broadcast %cst_202 : f32 to vector<1x1xf32>
    %854 = arith.maximumf %847, %853 : vector<1x1xf32>
    %855 = vector.broadcast %854 : vector<1x1xf32> to vector<1x128xf32>
    %856 = arith.mulf %852, %855 : vector<1x128xf32>
    %857 = math.rsqrt %856 : vector<1x128xf32>
    %858 = arith.mulf %844, %857 : vector<1x128xf32>
    %859 = vector.broadcast %816 : vector<1x1xf32> to vector<1x128xf32>
    %860 = arith.mulf %859, %858 : vector<1x128xf32>
    %cst_203 = arith.constant dense<0xFF800000> : vector<1xf32>
    %861 = vector.multi_reduction <maximumf>, %860, %cst_203 [1] : vector<1x128xf32> to vector<1xf32>
    %862 = vector.shape_cast %861 : vector<1xf32> to vector<1x1xf32>
    %863 = vector.broadcast %862 : vector<1x1xf32> to vector<1x128xf32>
    %864 = arith.subf %860, %863 : vector<1x128xf32>
    %865 = math.exp %864 : vector<1x128xf32>
    %cst_204 = arith.constant dense<0.000000e+00> : vector<1xf32>
    %866 = vector.multi_reduction <add>, %865, %cst_204 [1] : vector<1x128xf32> to vector<1xf32>
    %867 = vector.shape_cast %866 : vector<1xf32> to vector<1x1xf32>
    %868 = vector.broadcast %867 : vector<1x1xf32> to vector<1x128xf32>
    %869 = arith.divf %865, %868 : vector<1x128xf32>
    %870 = vector.broadcast %818 : vector<1x1xf32> to vector<1x128xf32>
    %871 = arith.mulf %870, %869 : vector<1x128xf32>
    %cst_205 = arith.constant 1.000000e+00 : f32
    %872 = vector.broadcast %cst_205 : f32 to vector<1x1xf32>
    %873 = arith.subf %872, %818 : vector<1x1xf32>
    %874 = vector.broadcast %873 : vector<1x1xf32> to vector<1x128xf32>
    %875 = arith.mulf %874, %707 : vector<1x128xf32>
    %876 = arith.addf %871, %875 : vector<1x128xf32>
    %877 = vector.extract_strided_slice %837 {offsets = [0, 0], sizes = [1, 1], strides = [1, 1]} : vector<1x3xf32> to vector<1x1xf32>
    %c1_i32_206 = arith.constant 1 : i32
    %878 = tpu.dynamic_rotate %876 by %c1_i32_206 dim 1 : vector<1x128xf32>, i32 -> vector<1x128xf32>
    %879 = vector.broadcast %877 : vector<1x1xf32> to vector<1x128xf32>
    %880 = arith.mulf %879, %878 : vector<1x128xf32>
    %881 = vector.extract_strided_slice %837 {offsets = [0, 1], sizes = [1, 1], strides = [1, 1]} : vector<1x3xf32> to vector<1x1xf32>
    %882 = vector.broadcast %881 : vector<1x1xf32> to vector<1x128xf32>
    %883 = arith.mulf %882, %876 : vector<1x128xf32>
    %884 = arith.addf %880, %883 : vector<1x128xf32>
    %885 = vector.extract_strided_slice %837 {offsets = [0, 2], sizes = [1, 1], strides = [1, 1]} : vector<1x3xf32> to vector<1x1xf32>
    %c127_i32_207 = arith.constant 127 : i32
    %886 = tpu.dynamic_rotate %876 by %c127_i32_207 dim 1 : vector<1x128xf32>, i32 -> vector<1x128xf32>
    %887 = vector.broadcast %885 : vector<1x1xf32> to vector<1x128xf32>
    %888 = arith.mulf %887, %886 : vector<1x128xf32>
    %889 = arith.addf %884, %888 : vector<1x128xf32>
    %cst_208 = arith.constant 1.000000e-16 : f32
    %890 = vector.broadcast %cst_208 : f32 to vector<1x128xf32>
    %891 = arith.addf %889, %890 : vector<1x128xf32>
    %892 = vector.broadcast %822 : vector<1x1xf32> to vector<1x128xf32>
    %893 = math.powf %891, %892 : vector<1x128xf32>
    %cst_209 = arith.constant dense<0.000000e+00> : vector<1xf32>
    %894 = vector.multi_reduction <add>, %893, %cst_209 [1] : vector<1x128xf32> to vector<1xf32>
    %895 = vector.shape_cast %894 : vector<1xf32> to vector<1x1xf32>
    %896 = vector.broadcast %895 : vector<1x1xf32> to vector<1x128xf32>
    %897 = arith.divf %893, %896 : vector<1x128xf32>
    %898 = arith.select %19, %798, %793 : vector<1x128xi1>, vector<1x128xf32>
    %899 = vector.extract_strided_slice %898 {offsets = [0, 0], sizes = [1, 48], strides = [1, 1]} : vector<1x128xf32> to vector<1x48xf32>
    %cst_210 = arith.constant dense<0.000000e+00> : vector<48x128xf32>
    %900 = tpu.matmul %899, %897, %cst_210 {dimension_numbers = #tpu.dot_dimension_numbers<[0], [0], [1], [1], [0, 1, 1, 1], [], []>} : vector<1x48xf32>, vector<1x128xf32>, vector<48x128xf32> -> vector<48x128xf32>
    %901 = vector.extract_strided_slice %900 {offsets = [0, 0], sizes = [20, 128], strides = [1, 1]} : vector<48x128xf32> to vector<20x128xf32>
    %902 = vector.extract_strided_slice %900 {offsets = [24, 0], sizes = [20, 128], strides = [1, 1]} : vector<48x128xf32> to vector<20x128xf32>
    %cst_211 = arith.constant 1.000000e+00 : f32
    %903 = vector.broadcast %cst_211 : f32 to vector<20x128xf32>
    %904 = arith.subf %903, %901 : vector<20x128xf32>
    %905 = arith.mulf %716, %904 : vector<20x128xf32>
    %906 = arith.addf %905, %902 : vector<20x128xf32>
    %cst_212 = arith.constant dense<0.000000e+00> : vector<1x128xf32>
    %907 = tpu.matmul %814, %906, %cst_212 {dimension_numbers = #tpu.dot_dimension_numbers<[1], [0], [0], [1], [0, 0, 1, 1], [], []>} : vector<1x20xf32>, vector<20x128xf32>, vector<1x128xf32> -> vector<1x128xf32>
    %908 = arith.mulf %814, %814 : vector<1x20xf32>
    %cst_213 = arith.constant dense<0.000000e+00> : vector<1xf32>
    %909 = vector.multi_reduction <add>, %908, %cst_213 [1] : vector<1x20xf32> to vector<1xf32>
    %910 = vector.shape_cast %909 : vector<1xf32> to vector<1x1xf32>
    %911 = arith.mulf %906, %906 : vector<20x128xf32>
    %cst_214 = arith.constant dense<0.000000e+00> : vector<128xf32>
    %912 = vector.multi_reduction <add>, %911, %cst_214 [0] : vector<20x128xf32> to vector<128xf32>
    %913 = vector.shape_cast %912 : vector<128xf32> to vector<1x128xf32>
    %cst_215 = arith.constant 1.000000e-16 : f32
    %914 = vector.broadcast %cst_215 : f32 to vector<1x128xf32>
    %915 = arith.maximumf %913, %914 : vector<1x128xf32>
    %cst_216 = arith.constant 1.000000e-16 : f32
    %916 = vector.broadcast %cst_216 : f32 to vector<1x1xf32>
    %917 = arith.maximumf %910, %916 : vector<1x1xf32>
    %918 = vector.broadcast %917 : vector<1x1xf32> to vector<1x128xf32>
    %919 = arith.mulf %915, %918 : vector<1x128xf32>
    %920 = math.rsqrt %919 : vector<1x128xf32>
    %921 = arith.mulf %907, %920 : vector<1x128xf32>
    %922 = vector.broadcast %817 : vector<1x1xf32> to vector<1x128xf32>
    %923 = arith.mulf %922, %921 : vector<1x128xf32>
    %cst_217 = arith.constant dense<0xFF800000> : vector<1xf32>
    %924 = vector.multi_reduction <maximumf>, %923, %cst_217 [1] : vector<1x128xf32> to vector<1xf32>
    %925 = vector.shape_cast %924 : vector<1xf32> to vector<1x1xf32>
    %926 = vector.broadcast %925 : vector<1x1xf32> to vector<1x128xf32>
    %927 = arith.subf %923, %926 : vector<1x128xf32>
    %928 = math.exp %927 : vector<1x128xf32>
    %cst_218 = arith.constant dense<0.000000e+00> : vector<1xf32>
    %929 = vector.multi_reduction <add>, %928, %cst_218 [1] : vector<1x128xf32> to vector<1xf32>
    %930 = vector.shape_cast %929 : vector<1xf32> to vector<1x1xf32>
    %931 = vector.broadcast %930 : vector<1x1xf32> to vector<1x128xf32>
    %932 = arith.divf %928, %931 : vector<1x128xf32>
    %933 = vector.broadcast %819 : vector<1x1xf32> to vector<1x128xf32>
    %934 = arith.mulf %933, %932 : vector<1x128xf32>
    %cst_219 = arith.constant 1.000000e+00 : f32
    %935 = vector.broadcast %cst_219 : f32 to vector<1x1xf32>
    %936 = arith.subf %935, %819 : vector<1x1xf32>
    %937 = vector.broadcast %936 : vector<1x1xf32> to vector<1x128xf32>
    %938 = arith.mulf %937, %770 : vector<1x128xf32>
    %939 = arith.addf %934, %938 : vector<1x128xf32>
    %940 = vector.extract_strided_slice %843 {offsets = [0, 0], sizes = [1, 1], strides = [1, 1]} : vector<1x3xf32> to vector<1x1xf32>
    %c1_i32_220 = arith.constant 1 : i32
    %941 = tpu.dynamic_rotate %939 by %c1_i32_220 dim 1 : vector<1x128xf32>, i32 -> vector<1x128xf32>
    %942 = vector.broadcast %940 : vector<1x1xf32> to vector<1x128xf32>
    %943 = arith.mulf %942, %941 : vector<1x128xf32>
    %944 = vector.extract_strided_slice %843 {offsets = [0, 1], sizes = [1, 1], strides = [1, 1]} : vector<1x3xf32> to vector<1x1xf32>
    %945 = vector.broadcast %944 : vector<1x1xf32> to vector<1x128xf32>
    %946 = arith.mulf %945, %939 : vector<1x128xf32>
    %947 = arith.addf %943, %946 : vector<1x128xf32>
    %948 = vector.extract_strided_slice %843 {offsets = [0, 2], sizes = [1, 1], strides = [1, 1]} : vector<1x3xf32> to vector<1x1xf32>
    %c127_i32_221 = arith.constant 127 : i32
    %949 = tpu.dynamic_rotate %939 by %c127_i32_221 dim 1 : vector<1x128xf32>, i32 -> vector<1x128xf32>
    %950 = vector.broadcast %948 : vector<1x1xf32> to vector<1x128xf32>
    %951 = arith.mulf %950, %949 : vector<1x128xf32>
    %952 = arith.addf %947, %951 : vector<1x128xf32>
    %cst_222 = arith.constant 1.000000e-16 : f32
    %953 = vector.broadcast %cst_222 : f32 to vector<1x128xf32>
    %954 = arith.addf %952, %953 : vector<1x128xf32>
    %955 = vector.broadcast %825 : vector<1x1xf32> to vector<1x128xf32>
    %956 = math.powf %954, %955 : vector<1x128xf32>
    %cst_223 = arith.constant dense<0.000000e+00> : vector<1xf32>
    %957 = vector.multi_reduction <add>, %956, %cst_223 [1] : vector<1x128xf32> to vector<1xf32>
    %958 = vector.shape_cast %957 : vector<1xf32> to vector<1x1xf32>
    %959 = vector.broadcast %958 : vector<1x1xf32> to vector<1x128xf32>
    %960 = arith.divf %956, %959 : vector<1x128xf32>
    %cst_224 = arith.constant dense<0.000000e+00> : vector<1x20xf32>
    %961 = tpu.matmul %960, %906, %cst_224 {dimension_numbers = #tpu.dot_dimension_numbers<[1], [1], [0], [0], [0, 0, 1, 0], [], []>} : vector<1x128xf32>, vector<20x128xf32>, vector<1x20xf32> -> vector<1x20xf32>
    %962 = arith.index_cast %c4_i32 : i32 to index
    %c0_225 = arith.constant 0 : index
    %963 = vector.load %arg10[%962, %c0_225] : memref<8x128xf32, #tpu.memory_space<vmem>>, vector<1x128xf32>
    tpu.vector_store %arg10[%962, %c0_225], %897 {strides = array<i32>} : memref<8x128xf32, #tpu.memory_space<vmem>>, vector<1x128xf32>,
    %964 = arith.index_cast %c4_i32 : i32 to index
    %c0_226 = arith.constant 0 : index
    %965 = vector.load %arg11[%964, %c0_226] : memref<8x128xf32, #tpu.memory_space<vmem>>, vector<1x128xf32>
    tpu.vector_store %arg11[%964, %c0_226], %960 {strides = array<i32>} : memref<8x128xf32, #tpu.memory_space<vmem>>, vector<1x128xf32>,
    %966 = arith.index_cast %c4_i32 : i32 to index
    %c0_227 = arith.constant 0 : index
    %967 = vector.load %arg12[%966, %c0_227] : memref<8x20xf32, #tpu.memory_space<vmem>>, vector<1x20xf32>
    tpu.vector_store %arg12[%966, %c0_227], %815 {strides = array<i32>} : memref<8x20xf32, #tpu.memory_space<vmem>>, vector<1x20xf32>,
    %968 = arith.index_cast %c4_i32 : i32 to index
    %c0_228 = arith.constant 0 : index
    %969 = vector.load %arg13[%968, %c0_228] : memref<8x20xf32, #tpu.memory_space<vmem>>, vector<1x20xf32>
    tpu.vector_store %arg13[%968, %c0_228], %961 {strides = array<i32>} : memref<8x20xf32, #tpu.memory_space<vmem>>, vector<1x20xf32>,
    %c5_i32 = arith.constant 5 : i32
    %970 = arith.index_cast %c5_i32 : i32 to index
    %c0_229 = arith.constant 0 : index
    %971 = vector.load %arg14[%970, %c0_229] : memref<8x128xf32, #tpu.memory_space<vmem>>, vector<1x128xf32>
    %972 = arith.truncf %961 : vector<1x20xf32> to vector<1x20xbf16>
    %cst_230 = arith.constant dense<0.000000e+00> : vector<1x128xf32>
    %973 = tpu.matmul %972, %0, %cst_230 {dimension_numbers = #tpu.dot_dimension_numbers<[1], [0], [0], [1], [0, 0, 1, 1], [], []>} : vector<1x20xbf16>, vector<20x128xbf16>, vector<1x128xf32> -> vector<1x128xf32>
    %974 = arith.addf %971, %973 : vector<1x128xf32>
    %975 = arith.negf %974 : vector<1x128xf32>
    %976 = math.exp %975 : vector<1x128xf32>
    %cst_231 = arith.constant 1.000000e+00 : f32
    %977 = vector.broadcast %cst_231 : f32 to vector<1x128xf32>
    %978 = arith.addf %977, %976 : vector<1x128xf32>
    %979 = arith.divf %977, %978 : vector<1x128xf32>
    %980 = arith.truncf %979 : vector<1x128xf32> to vector<1x128xbf16>
    %cst_232 = arith.constant dense<0.000000e+00> : vector<1x128xf32>
    %981 = tpu.matmul %980, %1, %cst_232 {dimension_numbers = #tpu.dot_dimension_numbers<[1], [0], [0], [1], [0, 0, 1, 1], [], []>} : vector<1x128xbf16>, vector<128x128xbf16>, vector<1x128xf32> -> vector<1x128xf32>
    %982 = arith.addf %981, %2 : vector<1x128xf32>
    %983 = math.tanh %982 : vector<1x128xf32>
    %984 = arith.negf %982 : vector<1x128xf32>
    %985 = math.exp %984 : vector<1x128xf32>
    %cst_233 = arith.constant 1.000000e+00 : f32
    %986 = vector.broadcast %cst_233 : f32 to vector<1x128xf32>
    %987 = arith.addf %986, %985 : vector<1x128xf32>
    %988 = arith.divf %986, %987 : vector<1x128xf32>
    %cst_234 = arith.constant 0.000000e+00 : f32
    %989 = vector.broadcast %cst_234 : f32 to vector<1x128xf32>
    %990 = arith.maximumf %982, %989 : vector<1x128xf32>
    %991 = vector.broadcast %cst_234 : f32 to vector<1x128xf32>
    %992 = arith.subf %982, %991 : vector<1x128xf32>
    %993 = arith.cmpf one, %992, %992 : vector<1x128xf32>
    %994 = vector.broadcast %cst_234 : f32 to vector<1x128xf32>
    %995 = arith.addf %982, %994 : vector<1x128xf32>
    %996 = math.absf %992 : vector<1x128xf32>
    %cst_235 = arith.constant 0.000000e+00 : f32
    %997 = vector.broadcast %cst_235 : f32 to vector<1x128xf32>
    %998 = arith.subf %997, %996 : vector<1x128xf32>
    %999 = math.exp %998 : vector<1x128xf32>
    %1000 = math.log1p %999 : vector<1x128xf32>
    %1001 = arith.addf %990, %1000 : vector<1x128xf32>
    %1002 = arith.select %993, %995, %1001 : vector<1x128xi1>, vector<1x128xf32>
    %1003 = vector.extract_strided_slice %983 {offsets = [0, 48], sizes = [1, 20], strides = [1, 1]} : vector<1x128xf32> to vector<1x20xf32>
    %1004 = vector.extract_strided_slice %983 {offsets = [0, 68], sizes = [1, 20], strides = [1, 1]} : vector<1x128xf32> to vector<1x20xf32>
    %1005 = vector.extract_strided_slice %983 {offsets = [0, 24], sizes = [1, 20], strides = [1, 1]} : vector<1x128xf32> to vector<1x20xf32>
    %1006 = vector.extract_strided_slice %1002 {offsets = [0, 88], sizes = [1, 1], strides = [1, 1]} : vector<1x128xf32> to vector<1x1xf32>
    %1007 = vector.extract_strided_slice %1002 {offsets = [0, 89], sizes = [1, 1], strides = [1, 1]} : vector<1x128xf32> to vector<1x1xf32>
    %1008 = vector.extract_strided_slice %988 {offsets = [0, 90], sizes = [1, 1], strides = [1, 1]} : vector<1x128xf32> to vector<1x1xf32>
    %1009 = vector.extract_strided_slice %988 {offsets = [0, 91], sizes = [1, 1], strides = [1, 1]} : vector<1x128xf32> to vector<1x1xf32>
    %1010 = vector.extract_strided_slice %1002 {offsets = [0, 92], sizes = [1, 1], strides = [1, 1]} : vector<1x128xf32> to vector<1x1xf32>
    %cst_236 = arith.constant 1.000000e+00 : f32
    %1011 = vector.broadcast %cst_236 : f32 to vector<1x1xf32>
    %1012 = arith.addf %1011, %1010 : vector<1x1xf32>
    %1013 = vector.extract_strided_slice %1002 {offsets = [0, 93], sizes = [1, 1], strides = [1, 1]} : vector<1x128xf32> to vector<1x1xf32>
    %cst_237 = arith.constant 1.000000e+00 : f32
    %1014 = vector.broadcast %cst_237 : f32 to vector<1x1xf32>
    %1015 = arith.addf %1014, %1013 : vector<1x1xf32>
    %1016 = vector.extract_strided_slice %982 {offsets = [0, 94], sizes = [1, 6], strides = [1, 1]} : vector<1x128xf32> to vector<1x6xf32>
    %cst_238 = arith.constant dense<0xFF800000> : vector<1xf32>
    %1017 = vector.multi_reduction <maximumf>, %1016, %cst_238 [1] : vector<1x6xf32> to vector<1xf32>
    %1018 = vector.shape_cast %1017 : vector<1xf32> to vector<1x1xf32>
    %1019 = vector.broadcast %1018 : vector<1x1xf32> to vector<1x6xf32>
    %1020 = arith.subf %1016, %1019 : vector<1x6xf32>
    %1021 = math.exp %1020 : vector<1x6xf32>
    %1022 = vector.extract_strided_slice %1021 {offsets = [0, 0], sizes = [1, 3], strides = [1, 1]} : vector<1x6xf32> to vector<1x3xf32>
    %1023 = vector.extract_strided_slice %1021 {offsets = [0, 0], sizes = [1, 3], strides = [1, 1]} : vector<1x6xf32> to vector<1x3xf32>
    %cst_239 = arith.constant dense<0.000000e+00> : vector<1xf32>
    %1024 = vector.multi_reduction <add>, %1023, %cst_239 [1] : vector<1x3xf32> to vector<1xf32>
    %1025 = vector.shape_cast %1024 : vector<1xf32> to vector<1x1xf32>
    %1026 = vector.broadcast %1025 : vector<1x1xf32> to vector<1x3xf32>
    %1027 = arith.divf %1022, %1026 : vector<1x3xf32>
    %1028 = vector.extract_strided_slice %1021 {offsets = [0, 3], sizes = [1, 3], strides = [1, 1]} : vector<1x6xf32> to vector<1x3xf32>
    %1029 = vector.extract_strided_slice %1021 {offsets = [0, 3], sizes = [1, 3], strides = [1, 1]} : vector<1x6xf32> to vector<1x3xf32>
    %cst_240 = arith.constant dense<0.000000e+00> : vector<1xf32>
    %1030 = vector.multi_reduction <add>, %1029, %cst_240 [1] : vector<1x3xf32> to vector<1xf32>
    %1031 = vector.shape_cast %1030 : vector<1xf32> to vector<1x1xf32>
    %1032 = vector.broadcast %1031 : vector<1x1xf32> to vector<1x3xf32>
    %1033 = arith.divf %1028, %1032 : vector<1x3xf32>
    %cst_241 = arith.constant dense<0.000000e+00> : vector<1x128xf32>
    %1034 = tpu.matmul %1003, %906, %cst_241 {dimension_numbers = #tpu.dot_dimension_numbers<[1], [0], [0], [1], [0, 0, 1, 1], [], []>} : vector<1x20xf32>, vector<20x128xf32>, vector<1x128xf32> -> vector<1x128xf32>
    %1035 = arith.mulf %1003, %1003 : vector<1x20xf32>
    %cst_242 = arith.constant dense<0.000000e+00> : vector<1xf32>
    %1036 = vector.multi_reduction <add>, %1035, %cst_242 [1] : vector<1x20xf32> to vector<1xf32>
    %1037 = vector.shape_cast %1036 : vector<1xf32> to vector<1x1xf32>
    %1038 = arith.mulf %906, %906 : vector<20x128xf32>
    %cst_243 = arith.constant dense<0.000000e+00> : vector<128xf32>
    %1039 = vector.multi_reduction <add>, %1038, %cst_243 [0] : vector<20x128xf32> to vector<128xf32>
    %1040 = vector.shape_cast %1039 : vector<128xf32> to vector<1x128xf32>
    %cst_244 = arith.constant 1.000000e-16 : f32
    %1041 = vector.broadcast %cst_244 : f32 to vector<1x128xf32>
    %1042 = arith.maximumf %1040, %1041 : vector<1x128xf32>
    %cst_245 = arith.constant 1.000000e-16 : f32
    %1043 = vector.broadcast %cst_245 : f32 to vector<1x1xf32>
    %1044 = arith.maximumf %1037, %1043 : vector<1x1xf32>
    %1045 = vector.broadcast %1044 : vector<1x1xf32> to vector<1x128xf32>
    %1046 = arith.mulf %1042, %1045 : vector<1x128xf32>
    %1047 = math.rsqrt %1046 : vector<1x128xf32>
    %1048 = arith.mulf %1034, %1047 : vector<1x128xf32>
    %1049 = vector.broadcast %1006 : vector<1x1xf32> to vector<1x128xf32>
    %1050 = arith.mulf %1049, %1048 : vector<1x128xf32>
    %cst_246 = arith.constant dense<0xFF800000> : vector<1xf32>
    %1051 = vector.multi_reduction <maximumf>, %1050, %cst_246 [1] : vector<1x128xf32> to vector<1xf32>
    %1052 = vector.shape_cast %1051 : vector<1xf32> to vector<1x1xf32>
    %1053 = vector.broadcast %1052 : vector<1x1xf32> to vector<1x128xf32>
    %1054 = arith.subf %1050, %1053 : vector<1x128xf32>
    %1055 = math.exp %1054 : vector<1x128xf32>
    %cst_247 = arith.constant dense<0.000000e+00> : vector<1xf32>
    %1056 = vector.multi_reduction <add>, %1055, %cst_247 [1] : vector<1x128xf32> to vector<1xf32>
    %1057 = vector.shape_cast %1056 : vector<1xf32> to vector<1x1xf32>
    %1058 = vector.broadcast %1057 : vector<1x1xf32> to vector<1x128xf32>
    %1059 = arith.divf %1055, %1058 : vector<1x128xf32>
    %1060 = vector.broadcast %1008 : vector<1x1xf32> to vector<1x128xf32>
    %1061 = arith.mulf %1060, %1059 : vector<1x128xf32>
    %cst_248 = arith.constant 1.000000e+00 : f32
    %1062 = vector.broadcast %cst_248 : f32 to vector<1x1xf32>
    %1063 = arith.subf %1062, %1008 : vector<1x1xf32>
    %1064 = vector.broadcast %1063 : vector<1x1xf32> to vector<1x128xf32>
    %1065 = arith.mulf %1064, %897 : vector<1x128xf32>
    %1066 = arith.addf %1061, %1065 : vector<1x128xf32>
    %1067 = vector.extract_strided_slice %1027 {offsets = [0, 0], sizes = [1, 1], strides = [1, 1]} : vector<1x3xf32> to vector<1x1xf32>
    %c1_i32_249 = arith.constant 1 : i32
    %1068 = tpu.dynamic_rotate %1066 by %c1_i32_249 dim 1 : vector<1x128xf32>, i32 -> vector<1x128xf32>
    %1069 = vector.broadcast %1067 : vector<1x1xf32> to vector<1x128xf32>
    %1070 = arith.mulf %1069, %1068 : vector<1x128xf32>
    %1071 = vector.extract_strided_slice %1027 {offsets = [0, 1], sizes = [1, 1], strides = [1, 1]} : vector<1x3xf32> to vector<1x1xf32>
    %1072 = vector.broadcast %1071 : vector<1x1xf32> to vector<1x128xf32>
    %1073 = arith.mulf %1072, %1066 : vector<1x128xf32>
    %1074 = arith.addf %1070, %1073 : vector<1x128xf32>
    %1075 = vector.extract_strided_slice %1027 {offsets = [0, 2], sizes = [1, 1], strides = [1, 1]} : vector<1x3xf32> to vector<1x1xf32>
    %c127_i32_250 = arith.constant 127 : i32
    %1076 = tpu.dynamic_rotate %1066 by %c127_i32_250 dim 1 : vector<1x128xf32>, i32 -> vector<1x128xf32>
    %1077 = vector.broadcast %1075 : vector<1x1xf32> to vector<1x128xf32>
    %1078 = arith.mulf %1077, %1076 : vector<1x128xf32>
    %1079 = arith.addf %1074, %1078 : vector<1x128xf32>
    %cst_251 = arith.constant 1.000000e-16 : f32
    %1080 = vector.broadcast %cst_251 : f32 to vector<1x128xf32>
    %1081 = arith.addf %1079, %1080 : vector<1x128xf32>
    %1082 = vector.broadcast %1012 : vector<1x1xf32> to vector<1x128xf32>
    %1083 = math.powf %1081, %1082 : vector<1x128xf32>
    %cst_252 = arith.constant dense<0.000000e+00> : vector<1xf32>
    %1084 = vector.multi_reduction <add>, %1083, %cst_252 [1] : vector<1x128xf32> to vector<1xf32>
    %1085 = vector.shape_cast %1084 : vector<1xf32> to vector<1x1xf32>
    %1086 = vector.broadcast %1085 : vector<1x1xf32> to vector<1x128xf32>
    %1087 = arith.divf %1083, %1086 : vector<1x128xf32>
    %1088 = arith.select %19, %988, %983 : vector<1x128xi1>, vector<1x128xf32>
    %1089 = vector.extract_strided_slice %1088 {offsets = [0, 0], sizes = [1, 48], strides = [1, 1]} : vector<1x128xf32> to vector<1x48xf32>
    %cst_253 = arith.constant dense<0.000000e+00> : vector<48x128xf32>
    %1090 = tpu.matmul %1089, %1087, %cst_253 {dimension_numbers = #tpu.dot_dimension_numbers<[0], [0], [1], [1], [0, 1, 1, 1], [], []>} : vector<1x48xf32>, vector<1x128xf32>, vector<48x128xf32> -> vector<48x128xf32>
    %1091 = vector.extract_strided_slice %1090 {offsets = [0, 0], sizes = [20, 128], strides = [1, 1]} : vector<48x128xf32> to vector<20x128xf32>
    %1092 = vector.extract_strided_slice %1090 {offsets = [24, 0], sizes = [20, 128], strides = [1, 1]} : vector<48x128xf32> to vector<20x128xf32>
    %cst_254 = arith.constant 1.000000e+00 : f32
    %1093 = vector.broadcast %cst_254 : f32 to vector<20x128xf32>
    %1094 = arith.subf %1093, %1091 : vector<20x128xf32>
    %1095 = arith.mulf %906, %1094 : vector<20x128xf32>
    %1096 = arith.addf %1095, %1092 : vector<20x128xf32>
    %cst_255 = arith.constant dense<0.000000e+00> : vector<1x128xf32>
    %1097 = tpu.matmul %1004, %1096, %cst_255 {dimension_numbers = #tpu.dot_dimension_numbers<[1], [0], [0], [1], [0, 0, 1, 1], [], []>} : vector<1x20xf32>, vector<20x128xf32>, vector<1x128xf32> -> vector<1x128xf32>
    %1098 = arith.mulf %1004, %1004 : vector<1x20xf32>
    %cst_256 = arith.constant dense<0.000000e+00> : vector<1xf32>
    %1099 = vector.multi_reduction <add>, %1098, %cst_256 [1] : vector<1x20xf32> to vector<1xf32>
    %1100 = vector.shape_cast %1099 : vector<1xf32> to vector<1x1xf32>
    %1101 = arith.mulf %1096, %1096 : vector<20x128xf32>
    %cst_257 = arith.constant dense<0.000000e+00> : vector<128xf32>
    %1102 = vector.multi_reduction <add>, %1101, %cst_257 [0] : vector<20x128xf32> to vector<128xf32>
    %1103 = vector.shape_cast %1102 : vector<128xf32> to vector<1x128xf32>
    %cst_258 = arith.constant 1.000000e-16 : f32
    %1104 = vector.broadcast %cst_258 : f32 to vector<1x128xf32>
    %1105 = arith.maximumf %1103, %1104 : vector<1x128xf32>
    %cst_259 = arith.constant 1.000000e-16 : f32
    %1106 = vector.broadcast %cst_259 : f32 to vector<1x1xf32>
    %1107 = arith.maximumf %1100, %1106 : vector<1x1xf32>
    %1108 = vector.broadcast %1107 : vector<1x1xf32> to vector<1x128xf32>
    %1109 = arith.mulf %1105, %1108 : vector<1x128xf32>
    %1110 = math.rsqrt %1109 : vector<1x128xf32>
    %1111 = arith.mulf %1097, %1110 : vector<1x128xf32>
    %1112 = vector.broadcast %1007 : vector<1x1xf32> to vector<1x128xf32>
    %1113 = arith.mulf %1112, %1111 : vector<1x128xf32>
    %cst_260 = arith.constant dense<0xFF800000> : vector<1xf32>
    %1114 = vector.multi_reduction <maximumf>, %1113, %cst_260 [1] : vector<1x128xf32> to vector<1xf32>
    %1115 = vector.shape_cast %1114 : vector<1xf32> to vector<1x1xf32>
    %1116 = vector.broadcast %1115 : vector<1x1xf32> to vector<1x128xf32>
    %1117 = arith.subf %1113, %1116 : vector<1x128xf32>
    %1118 = math.exp %1117 : vector<1x128xf32>
    %cst_261 = arith.constant dense<0.000000e+00> : vector<1xf32>
    %1119 = vector.multi_reduction <add>, %1118, %cst_261 [1] : vector<1x128xf32> to vector<1xf32>
    %1120 = vector.shape_cast %1119 : vector<1xf32> to vector<1x1xf32>
    %1121 = vector.broadcast %1120 : vector<1x1xf32> to vector<1x128xf32>
    %1122 = arith.divf %1118, %1121 : vector<1x128xf32>
    %1123 = vector.broadcast %1009 : vector<1x1xf32> to vector<1x128xf32>
    %1124 = arith.mulf %1123, %1122 : vector<1x128xf32>
    %cst_262 = arith.constant 1.000000e+00 : f32
    %1125 = vector.broadcast %cst_262 : f32 to vector<1x1xf32>
    %1126 = arith.subf %1125, %1009 : vector<1x1xf32>
    %1127 = vector.broadcast %1126 : vector<1x1xf32> to vector<1x128xf32>
    %1128 = arith.mulf %1127, %960 : vector<1x128xf32>
    %1129 = arith.addf %1124, %1128 : vector<1x128xf32>
    %1130 = vector.extract_strided_slice %1033 {offsets = [0, 0], sizes = [1, 1], strides = [1, 1]} : vector<1x3xf32> to vector<1x1xf32>
    %c1_i32_263 = arith.constant 1 : i32
    %1131 = tpu.dynamic_rotate %1129 by %c1_i32_263 dim 1 : vector<1x128xf32>, i32 -> vector<1x128xf32>
    %1132 = vector.broadcast %1130 : vector<1x1xf32> to vector<1x128xf32>
    %1133 = arith.mulf %1132, %1131 : vector<1x128xf32>
    %1134 = vector.extract_strided_slice %1033 {offsets = [0, 1], sizes = [1, 1], strides = [1, 1]} : vector<1x3xf32> to vector<1x1xf32>
    %1135 = vector.broadcast %1134 : vector<1x1xf32> to vector<1x128xf32>
    %1136 = arith.mulf %1135, %1129 : vector<1x128xf32>
    %1137 = arith.addf %1133, %1136 : vector<1x128xf32>
    %1138 = vector.extract_strided_slice %1033 {offsets = [0, 2], sizes = [1, 1], strides = [1, 1]} : vector<1x3xf32> to vector<1x1xf32>
    %c127_i32_264 = arith.constant 127 : i32
    %1139 = tpu.dynamic_rotate %1129 by %c127_i32_264 dim 1 : vector<1x128xf32>, i32 -> vector<1x128xf32>
    %1140 = vector.broadcast %1138 : vector<1x1xf32> to vector<1x128xf32>
    %1141 = arith.mulf %1140, %1139 : vector<1x128xf32>
    %1142 = arith.addf %1137, %1141 : vector<1x128xf32>
    %cst_265 = arith.constant 1.000000e-16 : f32
    %1143 = vector.broadcast %cst_265 : f32 to vector<1x128xf32>
    %1144 = arith.addf %1142, %1143 : vector<1x128xf32>
    %1145 = vector.broadcast %1015 : vector<1x1xf32> to vector<1x128xf32>
    %1146 = math.powf %1144, %1145 : vector<1x128xf32>
    %cst_266 = arith.constant dense<0.000000e+00> : vector<1xf32>
    %1147 = vector.multi_reduction <add>, %1146, %cst_266 [1] : vector<1x128xf32> to vector<1xf32>
    %1148 = vector.shape_cast %1147 : vector<1xf32> to vector<1x1xf32>
    %1149 = vector.broadcast %1148 : vector<1x1xf32> to vector<1x128xf32>
    %1150 = arith.divf %1146, %1149 : vector<1x128xf32>
    %cst_267 = arith.constant dense<0.000000e+00> : vector<1x20xf32>
    %1151 = tpu.matmul %1150, %1096, %cst_267 {dimension_numbers = #tpu.dot_dimension_numbers<[1], [1], [0], [0], [0, 0, 1, 0], [], []>} : vector<1x128xf32>, vector<20x128xf32>, vector<1x20xf32> -> vector<1x20xf32>
    %1152 = arith.index_cast %c5_i32 : i32 to index
    %c0_268 = arith.constant 0 : index
    %1153 = vector.load %arg10[%1152, %c0_268] : memref<8x128xf32, #tpu.memory_space<vmem>>, vector<1x128xf32>
    tpu.vector_store %arg10[%1152, %c0_268], %1087 {strides = array<i32>} : memref<8x128xf32, #tpu.memory_space<vmem>>, vector<1x128xf32>,
    %1154 = arith.index_cast %c5_i32 : i32 to index
    %c0_269 = arith.constant 0 : index
    %1155 = vector.load %arg11[%1154, %c0_269] : memref<8x128xf32, #tpu.memory_space<vmem>>, vector<1x128xf32>
    tpu.vector_store %arg11[%1154, %c0_269], %1150 {strides = array<i32>} : memref<8x128xf32, #tpu.memory_space<vmem>>, vector<1x128xf32>,
    %1156 = arith.index_cast %c5_i32 : i32 to index
    %c0_270 = arith.constant 0 : index
    %1157 = vector.load %arg12[%1156, %c0_270] : memref<8x20xf32, #tpu.memory_space<vmem>>, vector<1x20xf32>
    tpu.vector_store %arg12[%1156, %c0_270], %1005 {strides = array<i32>} : memref<8x20xf32, #tpu.memory_space<vmem>>, vector<1x20xf32>,
    %1158 = arith.index_cast %c5_i32 : i32 to index
    %c0_271 = arith.constant 0 : index
    %1159 = vector.load %arg13[%1158, %c0_271] : memref<8x20xf32, #tpu.memory_space<vmem>>, vector<1x20xf32>
    tpu.vector_store %arg13[%1158, %c0_271], %1151 {strides = array<i32>} : memref<8x20xf32, #tpu.memory_space<vmem>>, vector<1x20xf32>,
    %c6_i32 = arith.constant 6 : i32
    %1160 = arith.index_cast %c6_i32 : i32 to index
    %c0_272 = arith.constant 0 : index
    %1161 = vector.load %arg14[%1160, %c0_272] : memref<8x128xf32, #tpu.memory_space<vmem>>, vector<1x128xf32>
    %1162 = arith.truncf %1151 : vector<1x20xf32> to vector<1x20xbf16>
    %cst_273 = arith.constant dense<0.000000e+00> : vector<1x128xf32>
    %1163 = tpu.matmul %1162, %0, %cst_273 {dimension_numbers = #tpu.dot_dimension_numbers<[1], [0], [0], [1], [0, 0, 1, 1], [], []>} : vector<1x20xbf16>, vector<20x128xbf16>, vector<1x128xf32> -> vector<1x128xf32>
    %1164 = arith.addf %1161, %1163 : vector<1x128xf32>
    %1165 = arith.negf %1164 : vector<1x128xf32>
    %1166 = math.exp %1165 : vector<1x128xf32>
    %cst_274 = arith.constant 1.000000e+00 : f32
    %1167 = vector.broadcast %cst_274 : f32 to vector<1x128xf32>
    %1168 = arith.addf %1167, %1166 : vector<1x128xf32>
    %1169 = arith.divf %1167, %1168 : vector<1x128xf32>
    %1170 = arith.truncf %1169 : vector<1x128xf32> to vector<1x128xbf16>
    %cst_275 = arith.constant dense<0.000000e+00> : vector<1x128xf32>
    %1171 = tpu.matmul %1170, %1, %cst_275 {dimension_numbers = #tpu.dot_dimension_numbers<[1], [0], [0], [1], [0, 0, 1, 1], [], []>} : vector<1x128xbf16>, vector<128x128xbf16>, vector<1x128xf32> -> vector<1x128xf32>
    %1172 = arith.addf %1171, %2 : vector<1x128xf32>
    %1173 = math.tanh %1172 : vector<1x128xf32>
    %1174 = arith.negf %1172 : vector<1x128xf32>
    %1175 = math.exp %1174 : vector<1x128xf32>
    %cst_276 = arith.constant 1.000000e+00 : f32
    %1176 = vector.broadcast %cst_276 : f32 to vector<1x128xf32>
    %1177 = arith.addf %1176, %1175 : vector<1x128xf32>
    %1178 = arith.divf %1176, %1177 : vector<1x128xf32>
    %cst_277 = arith.constant 0.000000e+00 : f32
    %1179 = vector.broadcast %cst_277 : f32 to vector<1x128xf32>
    %1180 = arith.maximumf %1172, %1179 : vector<1x128xf32>
    %1181 = vector.broadcast %cst_277 : f32 to vector<1x128xf32>
    %1182 = arith.subf %1172, %1181 : vector<1x128xf32>
    %1183 = arith.cmpf one, %1182, %1182 : vector<1x128xf32>
    %1184 = vector.broadcast %cst_277 : f32 to vector<1x128xf32>
    %1185 = arith.addf %1172, %1184 : vector<1x128xf32>
    %1186 = math.absf %1182 : vector<1x128xf32>
    %cst_278 = arith.constant 0.000000e+00 : f32
    %1187 = vector.broadcast %cst_278 : f32 to vector<1x128xf32>
    %1188 = arith.subf %1187, %1186 : vector<1x128xf32>
    %1189 = math.exp %1188 : vector<1x128xf32>
    %1190 = math.log1p %1189 : vector<1x128xf32>
    %1191 = arith.addf %1180, %1190 : vector<1x128xf32>
    %1192 = arith.select %1183, %1185, %1191 : vector<1x128xi1>, vector<1x128xf32>
    %1193 = vector.extract_strided_slice %1173 {offsets = [0, 48], sizes = [1, 20], strides = [1, 1]} : vector<1x128xf32> to vector<1x20xf32>
    %1194 = vector.extract_strided_slice %1173 {offsets = [0, 68], sizes = [1, 20], strides = [1, 1]} : vector<1x128xf32> to vector<1x20xf32>
    %1195 = vector.extract_strided_slice %1173 {offsets = [0, 24], sizes = [1, 20], strides = [1, 1]} : vector<1x128xf32> to vector<1x20xf32>
    %1196 = vector.extract_strided_slice %1192 {offsets = [0, 88], sizes = [1, 1], strides = [1, 1]} : vector<1x128xf32> to vector<1x1xf32>
    %1197 = vector.extract_strided_slice %1192 {offsets = [0, 89], sizes = [1, 1], strides = [1, 1]} : vector<1x128xf32> to vector<1x1xf32>
    %1198 = vector.extract_strided_slice %1178 {offsets = [0, 90], sizes = [1, 1], strides = [1, 1]} : vector<1x128xf32> to vector<1x1xf32>
    %1199 = vector.extract_strided_slice %1178 {offsets = [0, 91], sizes = [1, 1], strides = [1, 1]} : vector<1x128xf32> to vector<1x1xf32>
    %1200 = vector.extract_strided_slice %1192 {offsets = [0, 92], sizes = [1, 1], strides = [1, 1]} : vector<1x128xf32> to vector<1x1xf32>
    %cst_279 = arith.constant 1.000000e+00 : f32
    %1201 = vector.broadcast %cst_279 : f32 to vector<1x1xf32>
    %1202 = arith.addf %1201, %1200 : vector<1x1xf32>
    %1203 = vector.extract_strided_slice %1192 {offsets = [0, 93], sizes = [1, 1], strides = [1, 1]} : vector<1x128xf32> to vector<1x1xf32>
    %cst_280 = arith.constant 1.000000e+00 : f32
    %1204 = vector.broadcast %cst_280 : f32 to vector<1x1xf32>
    %1205 = arith.addf %1204, %1203 : vector<1x1xf32>
    %1206 = vector.extract_strided_slice %1172 {offsets = [0, 94], sizes = [1, 6], strides = [1, 1]} : vector<1x128xf32> to vector<1x6xf32>
    %cst_281 = arith.constant dense<0xFF800000> : vector<1xf32>
    %1207 = vector.multi_reduction <maximumf>, %1206, %cst_281 [1] : vector<1x6xf32> to vector<1xf32>
    %1208 = vector.shape_cast %1207 : vector<1xf32> to vector<1x1xf32>
    %1209 = vector.broadcast %1208 : vector<1x1xf32> to vector<1x6xf32>
    %1210 = arith.subf %1206, %1209 : vector<1x6xf32>
    %1211 = math.exp %1210 : vector<1x6xf32>
    %1212 = vector.extract_strided_slice %1211 {offsets = [0, 0], sizes = [1, 3], strides = [1, 1]} : vector<1x6xf32> to vector<1x3xf32>
    %1213 = vector.extract_strided_slice %1211 {offsets = [0, 0], sizes = [1, 3], strides = [1, 1]} : vector<1x6xf32> to vector<1x3xf32>
    %cst_282 = arith.constant dense<0.000000e+00> : vector<1xf32>
    %1214 = vector.multi_reduction <add>, %1213, %cst_282 [1] : vector<1x3xf32> to vector<1xf32>
    %1215 = vector.shape_cast %1214 : vector<1xf32> to vector<1x1xf32>
    %1216 = vector.broadcast %1215 : vector<1x1xf32> to vector<1x3xf32>
    %1217 = arith.divf %1212, %1216 : vector<1x3xf32>
    %1218 = vector.extract_strided_slice %1211 {offsets = [0, 3], sizes = [1, 3], strides = [1, 1]} : vector<1x6xf32> to vector<1x3xf32>
    %1219 = vector.extract_strided_slice %1211 {offsets = [0, 3], sizes = [1, 3], strides = [1, 1]} : vector<1x6xf32> to vector<1x3xf32>
    %cst_283 = arith.constant dense<0.000000e+00> : vector<1xf32>
    %1220 = vector.multi_reduction <add>, %1219, %cst_283 [1] : vector<1x3xf32> to vector<1xf32>
    %1221 = vector.shape_cast %1220 : vector<1xf32> to vector<1x1xf32>
    %1222 = vector.broadcast %1221 : vector<1x1xf32> to vector<1x3xf32>
    %1223 = arith.divf %1218, %1222 : vector<1x3xf32>
    %cst_284 = arith.constant dense<0.000000e+00> : vector<1x128xf32>
    %1224 = tpu.matmul %1193, %1096, %cst_284 {dimension_numbers = #tpu.dot_dimension_numbers<[1], [0], [0], [1], [0, 0, 1, 1], [], []>} : vector<1x20xf32>, vector<20x128xf32>, vector<1x128xf32> -> vector<1x128xf32>
    %1225 = arith.mulf %1193, %1193 : vector<1x20xf32>
    %cst_285 = arith.constant dense<0.000000e+00> : vector<1xf32>
    %1226 = vector.multi_reduction <add>, %1225, %cst_285 [1] : vector<1x20xf32> to vector<1xf32>
    %1227 = vector.shape_cast %1226 : vector<1xf32> to vector<1x1xf32>
    %1228 = arith.mulf %1096, %1096 : vector<20x128xf32>
    %cst_286 = arith.constant dense<0.000000e+00> : vector<128xf32>
    %1229 = vector.multi_reduction <add>, %1228, %cst_286 [0] : vector<20x128xf32> to vector<128xf32>
    %1230 = vector.shape_cast %1229 : vector<128xf32> to vector<1x128xf32>
    %cst_287 = arith.constant 1.000000e-16 : f32
    %1231 = vector.broadcast %cst_287 : f32 to vector<1x128xf32>
    %1232 = arith.maximumf %1230, %1231 : vector<1x128xf32>
    %cst_288 = arith.constant 1.000000e-16 : f32
    %1233 = vector.broadcast %cst_288 : f32 to vector<1x1xf32>
    %1234 = arith.maximumf %1227, %1233 : vector<1x1xf32>
    %1235 = vector.broadcast %1234 : vector<1x1xf32> to vector<1x128xf32>
    %1236 = arith.mulf %1232, %1235 : vector<1x128xf32>
    %1237 = math.rsqrt %1236 : vector<1x128xf32>
    %1238 = arith.mulf %1224, %1237 : vector<1x128xf32>
    %1239 = vector.broadcast %1196 : vector<1x1xf32> to vector<1x128xf32>
    %1240 = arith.mulf %1239, %1238 : vector<1x128xf32>
    %cst_289 = arith.constant dense<0xFF800000> : vector<1xf32>
    %1241 = vector.multi_reduction <maximumf>, %1240, %cst_289 [1] : vector<1x128xf32> to vector<1xf32>
    %1242 = vector.shape_cast %1241 : vector<1xf32> to vector<1x1xf32>
    %1243 = vector.broadcast %1242 : vector<1x1xf32> to vector<1x128xf32>
    %1244 = arith.subf %1240, %1243 : vector<1x128xf32>
    %1245 = math.exp %1244 : vector<1x128xf32>
    %cst_290 = arith.constant dense<0.000000e+00> : vector<1xf32>
    %1246 = vector.multi_reduction <add>, %1245, %cst_290 [1] : vector<1x128xf32> to vector<1xf32>
    %1247 = vector.shape_cast %1246 : vector<1xf32> to vector<1x1xf32>
    %1248 = vector.broadcast %1247 : vector<1x1xf32> to vector<1x128xf32>
    %1249 = arith.divf %1245, %1248 : vector<1x128xf32>
    %1250 = vector.broadcast %1198 : vector<1x1xf32> to vector<1x128xf32>
    %1251 = arith.mulf %1250, %1249 : vector<1x128xf32>
    %cst_291 = arith.constant 1.000000e+00 : f32
    %1252 = vector.broadcast %cst_291 : f32 to vector<1x1xf32>
    %1253 = arith.subf %1252, %1198 : vector<1x1xf32>
    %1254 = vector.broadcast %1253 : vector<1x1xf32> to vector<1x128xf32>
    %1255 = arith.mulf %1254, %1087 : vector<1x128xf32>
    %1256 = arith.addf %1251, %1255 : vector<1x128xf32>
    %1257 = vector.extract_strided_slice %1217 {offsets = [0, 0], sizes = [1, 1], strides = [1, 1]} : vector<1x3xf32> to vector<1x1xf32>
    %c1_i32_292 = arith.constant 1 : i32
    %1258 = tpu.dynamic_rotate %1256 by %c1_i32_292 dim 1 : vector<1x128xf32>, i32 -> vector<1x128xf32>
    %1259 = vector.broadcast %1257 : vector<1x1xf32> to vector<1x128xf32>
    %1260 = arith.mulf %1259, %1258 : vector<1x128xf32>
    %1261 = vector.extract_strided_slice %1217 {offsets = [0, 1], sizes = [1, 1], strides = [1, 1]} : vector<1x3xf32> to vector<1x1xf32>
    %1262 = vector.broadcast %1261 : vector<1x1xf32> to vector<1x128xf32>
    %1263 = arith.mulf %1262, %1256 : vector<1x128xf32>
    %1264 = arith.addf %1260, %1263 : vector<1x128xf32>
    %1265 = vector.extract_strided_slice %1217 {offsets = [0, 2], sizes = [1, 1], strides = [1, 1]} : vector<1x3xf32> to vector<1x1xf32>
    %c127_i32_293 = arith.constant 127 : i32
    %1266 = tpu.dynamic_rotate %1256 by %c127_i32_293 dim 1 : vector<1x128xf32>, i32 -> vector<1x128xf32>
    %1267 = vector.broadcast %1265 : vector<1x1xf32> to vector<1x128xf32>
    %1268 = arith.mulf %1267, %1266 : vector<1x128xf32>
    %1269 = arith.addf %1264, %1268 : vector<1x128xf32>
    %cst_294 = arith.constant 1.000000e-16 : f32
    %1270 = vector.broadcast %cst_294 : f32 to vector<1x128xf32>
    %1271 = arith.addf %1269, %1270 : vector<1x128xf32>
    %1272 = vector.broadcast %1202 : vector<1x1xf32> to vector<1x128xf32>
    %1273 = math.powf %1271, %1272 : vector<1x128xf32>
    %cst_295 = arith.constant dense<0.000000e+00> : vector<1xf32>
    %1274 = vector.multi_reduction <add>, %1273, %cst_295 [1] : vector<1x128xf32> to vector<1xf32>
    %1275 = vector.shape_cast %1274 : vector<1xf32> to vector<1x1xf32>
    %1276 = vector.broadcast %1275 : vector<1x1xf32> to vector<1x128xf32>
    %1277 = arith.divf %1273, %1276 : vector<1x128xf32>
    %1278 = arith.select %19, %1178, %1173 : vector<1x128xi1>, vector<1x128xf32>
    %1279 = vector.extract_strided_slice %1278 {offsets = [0, 0], sizes = [1, 48], strides = [1, 1]} : vector<1x128xf32> to vector<1x48xf32>
    %cst_296 = arith.constant dense<0.000000e+00> : vector<48x128xf32>
    %1280 = tpu.matmul %1279, %1277, %cst_296 {dimension_numbers = #tpu.dot_dimension_numbers<[0], [0], [1], [1], [0, 1, 1, 1], [], []>} : vector<1x48xf32>, vector<1x128xf32>, vector<48x128xf32> -> vector<48x128xf32>
    %1281 = vector.extract_strided_slice %1280 {offsets = [0, 0], sizes = [20, 128], strides = [1, 1]} : vector<48x128xf32> to vector<20x128xf32>
    %1282 = vector.extract_strided_slice %1280 {offsets = [24, 0], sizes = [20, 128], strides = [1, 1]} : vector<48x128xf32> to vector<20x128xf32>
    %cst_297 = arith.constant 1.000000e+00 : f32
    %1283 = vector.broadcast %cst_297 : f32 to vector<20x128xf32>
    %1284 = arith.subf %1283, %1281 : vector<20x128xf32>
    %1285 = arith.mulf %1096, %1284 : vector<20x128xf32>
    %1286 = arith.addf %1285, %1282 : vector<20x128xf32>
    %cst_298 = arith.constant dense<0.000000e+00> : vector<1x128xf32>
    %1287 = tpu.matmul %1194, %1286, %cst_298 {dimension_numbers = #tpu.dot_dimension_numbers<[1], [0], [0], [1], [0, 0, 1, 1], [], []>} : vector<1x20xf32>, vector<20x128xf32>, vector<1x128xf32> -> vector<1x128xf32>
    %1288 = arith.mulf %1194, %1194 : vector<1x20xf32>
    %cst_299 = arith.constant dense<0.000000e+00> : vector<1xf32>
    %1289 = vector.multi_reduction <add>, %1288, %cst_299 [1] : vector<1x20xf32> to vector<1xf32>
    %1290 = vector.shape_cast %1289 : vector<1xf32> to vector<1x1xf32>
    %1291 = arith.mulf %1286, %1286 : vector<20x128xf32>
    %cst_300 = arith.constant dense<0.000000e+00> : vector<128xf32>
    %1292 = vector.multi_reduction <add>, %1291, %cst_300 [0] : vector<20x128xf32> to vector<128xf32>
    %1293 = vector.shape_cast %1292 : vector<128xf32> to vector<1x128xf32>
    %cst_301 = arith.constant 1.000000e-16 : f32
    %1294 = vector.broadcast %cst_301 : f32 to vector<1x128xf32>
    %1295 = arith.maximumf %1293, %1294 : vector<1x128xf32>
    %cst_302 = arith.constant 1.000000e-16 : f32
    %1296 = vector.broadcast %cst_302 : f32 to vector<1x1xf32>
    %1297 = arith.maximumf %1290, %1296 : vector<1x1xf32>
    %1298 = vector.broadcast %1297 : vector<1x1xf32> to vector<1x128xf32>
    %1299 = arith.mulf %1295, %1298 : vector<1x128xf32>
    %1300 = math.rsqrt %1299 : vector<1x128xf32>
    %1301 = arith.mulf %1287, %1300 : vector<1x128xf32>
    %1302 = vector.broadcast %1197 : vector<1x1xf32> to vector<1x128xf32>
    %1303 = arith.mulf %1302, %1301 : vector<1x128xf32>
    %cst_303 = arith.constant dense<0xFF800000> : vector<1xf32>
    %1304 = vector.multi_reduction <maximumf>, %1303, %cst_303 [1] : vector<1x128xf32> to vector<1xf32>
    %1305 = vector.shape_cast %1304 : vector<1xf32> to vector<1x1xf32>
    %1306 = vector.broadcast %1305 : vector<1x1xf32> to vector<1x128xf32>
    %1307 = arith.subf %1303, %1306 : vector<1x128xf32>
    %1308 = math.exp %1307 : vector<1x128xf32>
    %cst_304 = arith.constant dense<0.000000e+00> : vector<1xf32>
    %1309 = vector.multi_reduction <add>, %1308, %cst_304 [1] : vector<1x128xf32> to vector<1xf32>
    %1310 = vector.shape_cast %1309 : vector<1xf32> to vector<1x1xf32>
    %1311 = vector.broadcast %1310 : vector<1x1xf32> to vector<1x128xf32>
    %1312 = arith.divf %1308, %1311 : vector<1x128xf32>
    %1313 = vector.broadcast %1199 : vector<1x1xf32> to vector<1x128xf32>
    %1314 = arith.mulf %1313, %1312 : vector<1x128xf32>
    %cst_305 = arith.constant 1.000000e+00 : f32
    %1315 = vector.broadcast %cst_305 : f32 to vector<1x1xf32>
    %1316 = arith.subf %1315, %1199 : vector<1x1xf32>
    %1317 = vector.broadcast %1316 : vector<1x1xf32> to vector<1x128xf32>
    %1318 = arith.mulf %1317, %1150 : vector<1x128xf32>
    %1319 = arith.addf %1314, %1318 : vector<1x128xf32>
    %1320 = vector.extract_strided_slice %1223 {offsets = [0, 0], sizes = [1, 1], strides = [1, 1]} : vector<1x3xf32> to vector<1x1xf32>
    %c1_i32_306 = arith.constant 1 : i32
    %1321 = tpu.dynamic_rotate %1319 by %c1_i32_306 dim 1 : vector<1x128xf32>, i32 -> vector<1x128xf32>
    %1322 = vector.broadcast %1320 : vector<1x1xf32> to vector<1x128xf32>
    %1323 = arith.mulf %1322, %1321 : vector<1x128xf32>
    %1324 = vector.extract_strided_slice %1223 {offsets = [0, 1], sizes = [1, 1], strides = [1, 1]} : vector<1x3xf32> to vector<1x1xf32>
    %1325 = vector.broadcast %1324 : vector<1x1xf32> to vector<1x128xf32>
    %1326 = arith.mulf %1325, %1319 : vector<1x128xf32>
    %1327 = arith.addf %1323, %1326 : vector<1x128xf32>
    %1328 = vector.extract_strided_slice %1223 {offsets = [0, 2], sizes = [1, 1], strides = [1, 1]} : vector<1x3xf32> to vector<1x1xf32>
    %c127_i32_307 = arith.constant 127 : i32
    %1329 = tpu.dynamic_rotate %1319 by %c127_i32_307 dim 1 : vector<1x128xf32>, i32 -> vector<1x128xf32>
    %1330 = vector.broadcast %1328 : vector<1x1xf32> to vector<1x128xf32>
    %1331 = arith.mulf %1330, %1329 : vector<1x128xf32>
    %1332 = arith.addf %1327, %1331 : vector<1x128xf32>
    %cst_308 = arith.constant 1.000000e-16 : f32
    %1333 = vector.broadcast %cst_308 : f32 to vector<1x128xf32>
    %1334 = arith.addf %1332, %1333 : vector<1x128xf32>
    %1335 = vector.broadcast %1205 : vector<1x1xf32> to vector<1x128xf32>
    %1336 = math.powf %1334, %1335 : vector<1x128xf32>
    %cst_309 = arith.constant dense<0.000000e+00> : vector<1xf32>
    %1337 = vector.multi_reduction <add>, %1336, %cst_309 [1] : vector<1x128xf32> to vector<1xf32>
    %1338 = vector.shape_cast %1337 : vector<1xf32> to vector<1x1xf32>
    %1339 = vector.broadcast %1338 : vector<1x1xf32> to vector<1x128xf32>
    %1340 = arith.divf %1336, %1339 : vector<1x128xf32>
    %cst_310 = arith.constant dense<0.000000e+00> : vector<1x20xf32>
    %1341 = tpu.matmul %1340, %1286, %cst_310 {dimension_numbers = #tpu.dot_dimension_numbers<[1], [1], [0], [0], [0, 0, 1, 0], [], []>} : vector<1x128xf32>, vector<20x128xf32>, vector<1x20xf32> -> vector<1x20xf32>
    %1342 = arith.index_cast %c6_i32 : i32 to index
    %c0_311 = arith.constant 0 : index
    %1343 = vector.load %arg10[%1342, %c0_311] : memref<8x128xf32, #tpu.memory_space<vmem>>, vector<1x128xf32>
    tpu.vector_store %arg10[%1342, %c0_311], %1277 {strides = array<i32>} : memref<8x128xf32, #tpu.memory_space<vmem>>, vector<1x128xf32>,
    %1344 = arith.index_cast %c6_i32 : i32 to index
    %c0_312 = arith.constant 0 : index
    %1345 = vector.load %arg11[%1344, %c0_312] : memref<8x128xf32, #tpu.memory_space<vmem>>, vector<1x128xf32>
    tpu.vector_store %arg11[%1344, %c0_312], %1340 {strides = array<i32>} : memref<8x128xf32, #tpu.memory_space<vmem>>, vector<1x128xf32>,
    %1346 = arith.index_cast %c6_i32 : i32 to index
    %c0_313 = arith.constant 0 : index
    %1347 = vector.load %arg12[%1346, %c0_313] : memref<8x20xf32, #tpu.memory_space<vmem>>, vector<1x20xf32>
    tpu.vector_store %arg12[%1346, %c0_313], %1195 {strides = array<i32>} : memref<8x20xf32, #tpu.memory_space<vmem>>, vector<1x20xf32>,
    %1348 = arith.index_cast %c6_i32 : i32 to index
    %c0_314 = arith.constant 0 : index
    %1349 = vector.load %arg13[%1348, %c0_314] : memref<8x20xf32, #tpu.memory_space<vmem>>, vector<1x20xf32>
    tpu.vector_store %arg13[%1348, %c0_314], %1341 {strides = array<i32>} : memref<8x20xf32, #tpu.memory_space<vmem>>, vector<1x20xf32>,
    %c7_i32 = arith.constant 7 : i32
    %1350 = arith.index_cast %c7_i32 : i32 to index
    %c0_315 = arith.constant 0 : index
    %1351 = vector.load %arg14[%1350, %c0_315] : memref<8x128xf32, #tpu.memory_space<vmem>>, vector<1x128xf32>
    %1352 = arith.truncf %1341 : vector<1x20xf32> to vector<1x20xbf16>
    %cst_316 = arith.constant dense<0.000000e+00> : vector<1x128xf32>
    %1353 = tpu.matmul %1352, %0, %cst_316 {dimension_numbers = #tpu.dot_dimension_numbers<[1], [0], [0], [1], [0, 0, 1, 1], [], []>} : vector<1x20xbf16>, vector<20x128xbf16>, vector<1x128xf32> -> vector<1x128xf32>
    %1354 = arith.addf %1351, %1353 : vector<1x128xf32>
    %1355 = arith.negf %1354 : vector<1x128xf32>
    %1356 = math.exp %1355 : vector<1x128xf32>
    %cst_317 = arith.constant 1.000000e+00 : f32
    %1357 = vector.broadcast %cst_317 : f32 to vector<1x128xf32>
    %1358 = arith.addf %1357, %1356 : vector<1x128xf32>
    %1359 = arith.divf %1357, %1358 : vector<1x128xf32>
    %1360 = arith.truncf %1359 : vector<1x128xf32> to vector<1x128xbf16>
    %cst_318 = arith.constant dense<0.000000e+00> : vector<1x128xf32>
    %1361 = tpu.matmul %1360, %1, %cst_318 {dimension_numbers = #tpu.dot_dimension_numbers<[1], [0], [0], [1], [0, 0, 1, 1], [], []>} : vector<1x128xbf16>, vector<128x128xbf16>, vector<1x128xf32> -> vector<1x128xf32>
    %1362 = arith.addf %1361, %2 : vector<1x128xf32>
    %1363 = math.tanh %1362 : vector<1x128xf32>
    %1364 = arith.negf %1362 : vector<1x128xf32>
    %1365 = math.exp %1364 : vector<1x128xf32>
    %cst_319 = arith.constant 1.000000e+00 : f32
    %1366 = vector.broadcast %cst_319 : f32 to vector<1x128xf32>
    %1367 = arith.addf %1366, %1365 : vector<1x128xf32>
    %1368 = arith.divf %1366, %1367 : vector<1x128xf32>
    %cst_320 = arith.constant 0.000000e+00 : f32
    %1369 = vector.broadcast %cst_320 : f32 to vector<1x128xf32>
    %1370 = arith.maximumf %1362, %1369 : vector<1x128xf32>
    %1371 = vector.broadcast %cst_320 : f32 to vector<1x128xf32>
    %1372 = arith.subf %1362, %1371 : vector<1x128xf32>
    %1373 = arith.cmpf one, %1372, %1372 : vector<1x128xf32>
    %1374 = vector.broadcast %cst_320 : f32 to vector<1x128xf32>
    %1375 = arith.addf %1362, %1374 : vector<1x128xf32>
    %1376 = math.absf %1372 : vector<1x128xf32>
    %cst_321 = arith.constant 0.000000e+00 : f32
    %1377 = vector.broadcast %cst_321 : f32 to vector<1x128xf32>
    %1378 = arith.subf %1377, %1376 : vector<1x128xf32>
    %1379 = math.exp %1378 : vector<1x128xf32>
    %1380 = math.log1p %1379 : vector<1x128xf32>
    %1381 = arith.addf %1370, %1380 : vector<1x128xf32>
    %1382 = arith.select %1373, %1375, %1381 : vector<1x128xi1>, vector<1x128xf32>
    %1383 = vector.extract_strided_slice %1363 {offsets = [0, 48], sizes = [1, 20], strides = [1, 1]} : vector<1x128xf32> to vector<1x20xf32>
    %1384 = vector.extract_strided_slice %1363 {offsets = [0, 68], sizes = [1, 20], strides = [1, 1]} : vector<1x128xf32> to vector<1x20xf32>
    %1385 = vector.extract_strided_slice %1363 {offsets = [0, 24], sizes = [1, 20], strides = [1, 1]} : vector<1x128xf32> to vector<1x20xf32>
    %1386 = vector.extract_strided_slice %1382 {offsets = [0, 88], sizes = [1, 1], strides = [1, 1]} : vector<1x128xf32> to vector<1x1xf32>
    %1387 = vector.extract_strided_slice %1382 {offsets = [0, 89], sizes = [1, 1], strides = [1, 1]} : vector<1x128xf32> to vector<1x1xf32>
    %1388 = vector.extract_strided_slice %1368 {offsets = [0, 90], sizes = [1, 1], strides = [1, 1]} : vector<1x128xf32> to vector<1x1xf32>
    %1389 = vector.extract_strided_slice %1368 {offsets = [0, 91], sizes = [1, 1], strides = [1, 1]} : vector<1x128xf32> to vector<1x1xf32>
    %1390 = vector.extract_strided_slice %1382 {offsets = [0, 92], sizes = [1, 1], strides = [1, 1]} : vector<1x128xf32> to vector<1x1xf32>
    %cst_322 = arith.constant 1.000000e+00 : f32
    %1391 = vector.broadcast %cst_322 : f32 to vector<1x1xf32>
    %1392 = arith.addf %1391, %1390 : vector<1x1xf32>
    %1393 = vector.extract_strided_slice %1382 {offsets = [0, 93], sizes = [1, 1], strides = [1, 1]} : vector<1x128xf32> to vector<1x1xf32>
    %cst_323 = arith.constant 1.000000e+00 : f32
    %1394 = vector.broadcast %cst_323 : f32 to vector<1x1xf32>
    %1395 = arith.addf %1394, %1393 : vector<1x1xf32>
    %1396 = vector.extract_strided_slice %1362 {offsets = [0, 94], sizes = [1, 6], strides = [1, 1]} : vector<1x128xf32> to vector<1x6xf32>
    %cst_324 = arith.constant dense<0xFF800000> : vector<1xf32>
    %1397 = vector.multi_reduction <maximumf>, %1396, %cst_324 [1] : vector<1x6xf32> to vector<1xf32>
    %1398 = vector.shape_cast %1397 : vector<1xf32> to vector<1x1xf32>
    %1399 = vector.broadcast %1398 : vector<1x1xf32> to vector<1x6xf32>
    %1400 = arith.subf %1396, %1399 : vector<1x6xf32>
    %1401 = math.exp %1400 : vector<1x6xf32>
    %1402 = vector.extract_strided_slice %1401 {offsets = [0, 0], sizes = [1, 3], strides = [1, 1]} : vector<1x6xf32> to vector<1x3xf32>
    %1403 = vector.extract_strided_slice %1401 {offsets = [0, 0], sizes = [1, 3], strides = [1, 1]} : vector<1x6xf32> to vector<1x3xf32>
    %cst_325 = arith.constant dense<0.000000e+00> : vector<1xf32>
    %1404 = vector.multi_reduction <add>, %1403, %cst_325 [1] : vector<1x3xf32> to vector<1xf32>
    %1405 = vector.shape_cast %1404 : vector<1xf32> to vector<1x1xf32>
    %1406 = vector.broadcast %1405 : vector<1x1xf32> to vector<1x3xf32>
    %1407 = arith.divf %1402, %1406 : vector<1x3xf32>
    %1408 = vector.extract_strided_slice %1401 {offsets = [0, 3], sizes = [1, 3], strides = [1, 1]} : vector<1x6xf32> to vector<1x3xf32>
    %1409 = vector.extract_strided_slice %1401 {offsets = [0, 3], sizes = [1, 3], strides = [1, 1]} : vector<1x6xf32> to vector<1x3xf32>
    %cst_326 = arith.constant dense<0.000000e+00> : vector<1xf32>
    %1410 = vector.multi_reduction <add>, %1409, %cst_326 [1] : vector<1x3xf32> to vector<1xf32>
    %1411 = vector.shape_cast %1410 : vector<1xf32> to vector<1x1xf32>
    %1412 = vector.broadcast %1411 : vector<1x1xf32> to vector<1x3xf32>
    %1413 = arith.divf %1408, %1412 : vector<1x3xf32>
    %cst_327 = arith.constant dense<0.000000e+00> : vector<1x128xf32>
    %1414 = tpu.matmul %1383, %1286, %cst_327 {dimension_numbers = #tpu.dot_dimension_numbers<[1], [0], [0], [1], [0, 0, 1, 1], [], []>} : vector<1x20xf32>, vector<20x128xf32>, vector<1x128xf32> -> vector<1x128xf32>
    %1415 = arith.mulf %1383, %1383 : vector<1x20xf32>
    %cst_328 = arith.constant dense<0.000000e+00> : vector<1xf32>
    %1416 = vector.multi_reduction <add>, %1415, %cst_328 [1] : vector<1x20xf32> to vector<1xf32>
    %1417 = vector.shape_cast %1416 : vector<1xf32> to vector<1x1xf32>
    %1418 = arith.mulf %1286, %1286 : vector<20x128xf32>
    %cst_329 = arith.constant dense<0.000000e+00> : vector<128xf32>
    %1419 = vector.multi_reduction <add>, %1418, %cst_329 [0] : vector<20x128xf32> to vector<128xf32>
    %1420 = vector.shape_cast %1419 : vector<128xf32> to vector<1x128xf32>
    %cst_330 = arith.constant 1.000000e-16 : f32
    %1421 = vector.broadcast %cst_330 : f32 to vector<1x128xf32>
    %1422 = arith.maximumf %1420, %1421 : vector<1x128xf32>
    %cst_331 = arith.constant 1.000000e-16 : f32
    %1423 = vector.broadcast %cst_331 : f32 to vector<1x1xf32>
    %1424 = arith.maximumf %1417, %1423 : vector<1x1xf32>
    %1425 = vector.broadcast %1424 : vector<1x1xf32> to vector<1x128xf32>
    %1426 = arith.mulf %1422, %1425 : vector<1x128xf32>
    %1427 = math.rsqrt %1426 : vector<1x128xf32>
    %1428 = arith.mulf %1414, %1427 : vector<1x128xf32>
    %1429 = vector.broadcast %1386 : vector<1x1xf32> to vector<1x128xf32>
    %1430 = arith.mulf %1429, %1428 : vector<1x128xf32>
    %cst_332 = arith.constant dense<0xFF800000> : vector<1xf32>
    %1431 = vector.multi_reduction <maximumf>, %1430, %cst_332 [1] : vector<1x128xf32> to vector<1xf32>
    %1432 = vector.shape_cast %1431 : vector<1xf32> to vector<1x1xf32>
    %1433 = vector.broadcast %1432 : vector<1x1xf32> to vector<1x128xf32>
    %1434 = arith.subf %1430, %1433 : vector<1x128xf32>
    %1435 = math.exp %1434 : vector<1x128xf32>
    %cst_333 = arith.constant dense<0.000000e+00> : vector<1xf32>
    %1436 = vector.multi_reduction <add>, %1435, %cst_333 [1] : vector<1x128xf32> to vector<1xf32>
    %1437 = vector.shape_cast %1436 : vector<1xf32> to vector<1x1xf32>
    %1438 = vector.broadcast %1437 : vector<1x1xf32> to vector<1x128xf32>
    %1439 = arith.divf %1435, %1438 : vector<1x128xf32>
    %1440 = vector.broadcast %1388 : vector<1x1xf32> to vector<1x128xf32>
    %1441 = arith.mulf %1440, %1439 : vector<1x128xf32>
    %cst_334 = arith.constant 1.000000e+00 : f32
    %1442 = vector.broadcast %cst_334 : f32 to vector<1x1xf32>
    %1443 = arith.subf %1442, %1388 : vector<1x1xf32>
    %1444 = vector.broadcast %1443 : vector<1x1xf32> to vector<1x128xf32>
    %1445 = arith.mulf %1444, %1277 : vector<1x128xf32>
    %1446 = arith.addf %1441, %1445 : vector<1x128xf32>
    %1447 = vector.extract_strided_slice %1407 {offsets = [0, 0], sizes = [1, 1], strides = [1, 1]} : vector<1x3xf32> to vector<1x1xf32>
    %c1_i32_335 = arith.constant 1 : i32
    %1448 = tpu.dynamic_rotate %1446 by %c1_i32_335 dim 1 : vector<1x128xf32>, i32 -> vector<1x128xf32>
    %1449 = vector.broadcast %1447 : vector<1x1xf32> to vector<1x128xf32>
    %1450 = arith.mulf %1449, %1448 : vector<1x128xf32>
    %1451 = vector.extract_strided_slice %1407 {offsets = [0, 1], sizes = [1, 1], strides = [1, 1]} : vector<1x3xf32> to vector<1x1xf32>
    %1452 = vector.broadcast %1451 : vector<1x1xf32> to vector<1x128xf32>
    %1453 = arith.mulf %1452, %1446 : vector<1x128xf32>
    %1454 = arith.addf %1450, %1453 : vector<1x128xf32>
    %1455 = vector.extract_strided_slice %1407 {offsets = [0, 2], sizes = [1, 1], strides = [1, 1]} : vector<1x3xf32> to vector<1x1xf32>
    %c127_i32_336 = arith.constant 127 : i32
    %1456 = tpu.dynamic_rotate %1446 by %c127_i32_336 dim 1 : vector<1x128xf32>, i32 -> vector<1x128xf32>
    %1457 = vector.broadcast %1455 : vector<1x1xf32> to vector<1x128xf32>
    %1458 = arith.mulf %1457, %1456 : vector<1x128xf32>
    %1459 = arith.addf %1454, %1458 : vector<1x128xf32>
    %cst_337 = arith.constant 1.000000e-16 : f32
    %1460 = vector.broadcast %cst_337 : f32 to vector<1x128xf32>
    %1461 = arith.addf %1459, %1460 : vector<1x128xf32>
    %1462 = vector.broadcast %1392 : vector<1x1xf32> to vector<1x128xf32>
    %1463 = math.powf %1461, %1462 : vector<1x128xf32>
    %cst_338 = arith.constant dense<0.000000e+00> : vector<1xf32>
    %1464 = vector.multi_reduction <add>, %1463, %cst_338 [1] : vector<1x128xf32> to vector<1xf32>
    %1465 = vector.shape_cast %1464 : vector<1xf32> to vector<1x1xf32>
    %1466 = vector.broadcast %1465 : vector<1x1xf32> to vector<1x128xf32>
    %1467 = arith.divf %1463, %1466 : vector<1x128xf32>
    %1468 = arith.select %19, %1368, %1363 : vector<1x128xi1>, vector<1x128xf32>
    %1469 = vector.extract_strided_slice %1468 {offsets = [0, 0], sizes = [1, 48], strides = [1, 1]} : vector<1x128xf32> to vector<1x48xf32>
    %cst_339 = arith.constant dense<0.000000e+00> : vector<48x128xf32>
    %1470 = tpu.matmul %1469, %1467, %cst_339 {dimension_numbers = #tpu.dot_dimension_numbers<[0], [0], [1], [1], [0, 1, 1, 1], [], []>} : vector<1x48xf32>, vector<1x128xf32>, vector<48x128xf32> -> vector<48x128xf32>
    %1471 = vector.extract_strided_slice %1470 {offsets = [0, 0], sizes = [20, 128], strides = [1, 1]} : vector<48x128xf32> to vector<20x128xf32>
    %1472 = vector.extract_strided_slice %1470 {offsets = [24, 0], sizes = [20, 128], strides = [1, 1]} : vector<48x128xf32> to vector<20x128xf32>
    %cst_340 = arith.constant 1.000000e+00 : f32
    %1473 = vector.broadcast %cst_340 : f32 to vector<20x128xf32>
    %1474 = arith.subf %1473, %1471 : vector<20x128xf32>
    %1475 = arith.mulf %1286, %1474 : vector<20x128xf32>
    %1476 = arith.addf %1475, %1472 : vector<20x128xf32>
    %cst_341 = arith.constant dense<0.000000e+00> : vector<1x128xf32>
    %1477 = tpu.matmul %1384, %1476, %cst_341 {dimension_numbers = #tpu.dot_dimension_numbers<[1], [0], [0], [1], [0, 0, 1, 1], [], []>} : vector<1x20xf32>, vector<20x128xf32>, vector<1x128xf32> -> vector<1x128xf32>
    %1478 = arith.mulf %1384, %1384 : vector<1x20xf32>
    %cst_342 = arith.constant dense<0.000000e+00> : vector<1xf32>
    %1479 = vector.multi_reduction <add>, %1478, %cst_342 [1] : vector<1x20xf32> to vector<1xf32>
    %1480 = vector.shape_cast %1479 : vector<1xf32> to vector<1x1xf32>
    %1481 = arith.mulf %1476, %1476 : vector<20x128xf32>
    %cst_343 = arith.constant dense<0.000000e+00> : vector<128xf32>
    %1482 = vector.multi_reduction <add>, %1481, %cst_343 [0] : vector<20x128xf32> to vector<128xf32>
    %1483 = vector.shape_cast %1482 : vector<128xf32> to vector<1x128xf32>
    %cst_344 = arith.constant 1.000000e-16 : f32
    %1484 = vector.broadcast %cst_344 : f32 to vector<1x128xf32>
    %1485 = arith.maximumf %1483, %1484 : vector<1x128xf32>
    %cst_345 = arith.constant 1.000000e-16 : f32
    %1486 = vector.broadcast %cst_345 : f32 to vector<1x1xf32>
    %1487 = arith.maximumf %1480, %1486 : vector<1x1xf32>
    %1488 = vector.broadcast %1487 : vector<1x1xf32> to vector<1x128xf32>
    %1489 = arith.mulf %1485, %1488 : vector<1x128xf32>
    %1490 = math.rsqrt %1489 : vector<1x128xf32>
    %1491 = arith.mulf %1477, %1490 : vector<1x128xf32>
    %1492 = vector.broadcast %1387 : vector<1x1xf32> to vector<1x128xf32>
    %1493 = arith.mulf %1492, %1491 : vector<1x128xf32>
    %cst_346 = arith.constant dense<0xFF800000> : vector<1xf32>
    %1494 = vector.multi_reduction <maximumf>, %1493, %cst_346 [1] : vector<1x128xf32> to vector<1xf32>
    %1495 = vector.shape_cast %1494 : vector<1xf32> to vector<1x1xf32>
    %1496 = vector.broadcast %1495 : vector<1x1xf32> to vector<1x128xf32>
    %1497 = arith.subf %1493, %1496 : vector<1x128xf32>
    %1498 = math.exp %1497 : vector<1x128xf32>
    %cst_347 = arith.constant dense<0.000000e+00> : vector<1xf32>
    %1499 = vector.multi_reduction <add>, %1498, %cst_347 [1] : vector<1x128xf32> to vector<1xf32>
    %1500 = vector.shape_cast %1499 : vector<1xf32> to vector<1x1xf32>
    %1501 = vector.broadcast %1500 : vector<1x1xf32> to vector<1x128xf32>
    %1502 = arith.divf %1498, %1501 : vector<1x128xf32>
    %1503 = vector.broadcast %1389 : vector<1x1xf32> to vector<1x128xf32>
    %1504 = arith.mulf %1503, %1502 : vector<1x128xf32>
    %cst_348 = arith.constant 1.000000e+00 : f32
    %1505 = vector.broadcast %cst_348 : f32 to vector<1x1xf32>
    %1506 = arith.subf %1505, %1389 : vector<1x1xf32>
    %1507 = vector.broadcast %1506 : vector<1x1xf32> to vector<1x128xf32>
    %1508 = arith.mulf %1507, %1340 : vector<1x128xf32>
    %1509 = arith.addf %1504, %1508 : vector<1x128xf32>
    %1510 = vector.extract_strided_slice %1413 {offsets = [0, 0], sizes = [1, 1], strides = [1, 1]} : vector<1x3xf32> to vector<1x1xf32>
    %c1_i32_349 = arith.constant 1 : i32
    %1511 = tpu.dynamic_rotate %1509 by %c1_i32_349 dim 1 : vector<1x128xf32>, i32 -> vector<1x128xf32>
    %1512 = vector.broadcast %1510 : vector<1x1xf32> to vector<1x128xf32>
    %1513 = arith.mulf %1512, %1511 : vector<1x128xf32>
    %1514 = vector.extract_strided_slice %1413 {offsets = [0, 1], sizes = [1, 1], strides = [1, 1]} : vector<1x3xf32> to vector<1x1xf32>
    %1515 = vector.broadcast %1514 : vector<1x1xf32> to vector<1x128xf32>
    %1516 = arith.mulf %1515, %1509 : vector<1x128xf32>
    %1517 = arith.addf %1513, %1516 : vector<1x128xf32>
    %1518 = vector.extract_strided_slice %1413 {offsets = [0, 2], sizes = [1, 1], strides = [1, 1]} : vector<1x3xf32> to vector<1x1xf32>
    %c127_i32_350 = arith.constant 127 : i32
    %1519 = tpu.dynamic_rotate %1509 by %c127_i32_350 dim 1 : vector<1x128xf32>, i32 -> vector<1x128xf32>
    %1520 = vector.broadcast %1518 : vector<1x1xf32> to vector<1x128xf32>
    %1521 = arith.mulf %1520, %1519 : vector<1x128xf32>
    %1522 = arith.addf %1517, %1521 : vector<1x128xf32>
    %cst_351 = arith.constant 1.000000e-16 : f32
    %1523 = vector.broadcast %cst_351 : f32 to vector<1x128xf32>
    %1524 = arith.addf %1522, %1523 : vector<1x128xf32>
    %1525 = vector.broadcast %1395 : vector<1x1xf32> to vector<1x128xf32>
    %1526 = math.powf %1524, %1525 : vector<1x128xf32>
    %cst_352 = arith.constant dense<0.000000e+00> : vector<1xf32>
    %1527 = vector.multi_reduction <add>, %1526, %cst_352 [1] : vector<1x128xf32> to vector<1xf32>
    %1528 = vector.shape_cast %1527 : vector<1xf32> to vector<1x1xf32>
    %1529 = vector.broadcast %1528 : vector<1x1xf32> to vector<1x128xf32>
    %1530 = arith.divf %1526, %1529 : vector<1x128xf32>
    %cst_353 = arith.constant dense<0.000000e+00> : vector<1x20xf32>
    %1531 = tpu.matmul %1530, %1476, %cst_353 {dimension_numbers = #tpu.dot_dimension_numbers<[1], [1], [0], [0], [0, 0, 1, 0], [], []>} : vector<1x128xf32>, vector<20x128xf32>, vector<1x20xf32> -> vector<1x20xf32>
    %1532 = arith.index_cast %c7_i32 : i32 to index
    %c0_354 = arith.constant 0 : index
    %1533 = vector.load %arg10[%1532, %c0_354] : memref<8x128xf32, #tpu.memory_space<vmem>>, vector<1x128xf32>
    tpu.vector_store %arg10[%1532, %c0_354], %1467 {strides = array<i32>} : memref<8x128xf32, #tpu.memory_space<vmem>>, vector<1x128xf32>,
    %1534 = arith.index_cast %c7_i32 : i32 to index
    %c0_355 = arith.constant 0 : index
    %1535 = vector.load %arg11[%1534, %c0_355] : memref<8x128xf32, #tpu.memory_space<vmem>>, vector<1x128xf32>
    tpu.vector_store %arg11[%1534, %c0_355], %1530 {strides = array<i32>} : memref<8x128xf32, #tpu.memory_space<vmem>>, vector<1x128xf32>,
    %1536 = arith.index_cast %c7_i32 : i32 to index
    %c0_356 = arith.constant 0 : index
    %1537 = vector.load %arg12[%1536, %c0_356] : memref<8x20xf32, #tpu.memory_space<vmem>>, vector<1x20xf32>
    tpu.vector_store %arg12[%1536, %c0_356], %1385 {strides = array<i32>} : memref<8x20xf32, #tpu.memory_space<vmem>>, vector<1x20xf32>,
    %1538 = arith.index_cast %c7_i32 : i32 to index
    %c0_357 = arith.constant 0 : index
    %1539 = vector.load %arg13[%1538, %c0_357] : memref<8x20xf32, #tpu.memory_space<vmem>>, vector<1x20xf32>
    tpu.vector_store %arg13[%1538, %c0_357], %1531 {strides = array<i32>} : memref<8x20xf32, #tpu.memory_space<vmem>>, vector<1x20xf32>,
    %c8_i32 = arith.constant 8 : i32
    %c0_358 = arith.constant 0 : index
    %c0_359 = arith.constant 0 : index
    %1540 = vector.load %arg13[%c0_358, %c0_359] : memref<8x20xf32, #tpu.memory_space<vmem>>, vector<8x20xf32>
    %c0_360 = arith.constant 0 : index
    %c0_361 = arith.constant 0 : index
    %1541 = vector.load %arg7[%c0_360, %c0_361] : memref<20x10xf32, #tpu.memory_space<vmem>>, vector<20x10xf32>
    %cst_362 = arith.constant dense<0.000000e+00> : vector<8x10xf32>
    %1542 = tpu.matmul %1540, %1541, %cst_362 {dimension_numbers = #tpu.dot_dimension_numbers<[1], [0], [0], [1], [0, 0, 1, 1], [], []>} : vector<8x20xf32>, vector<20x10xf32>, vector<8x10xf32> -> vector<8x10xf32>
    %c0_363 = arith.constant 0 : index
    %c0_364 = arith.constant 0 : index
    %1543 = vector.load %arg8[%c0_363, %c0_364] : memref<1x10xf32, #tpu.memory_space<vmem>>, vector<1x10xf32>
    %1544 = vector.broadcast %1543 : vector<1x10xf32> to vector<8x10xf32>
    %1545 = arith.addf %1542, %1544 : vector<8x10xf32>
    %cst_365 = arith.constant 0.000000e+00 : f32
    %cst_366 = arith.constant 1.000000e+00 : f32
    %1546 = vector.broadcast %cst_365 : f32 to vector<8x10xf32>
    %1547 = arith.maximumf %1546, %1545 : vector<8x10xf32>
    %1548 = vector.broadcast %cst_366 : f32 to vector<8x10xf32>
    %1549 = arith.minimumf %1548, %1547 : vector<8x10xf32>
    %c0_367 = arith.constant 0 : index
    %c0_368 = arith.constant 0 : index
    %1550 = vector.load %arg9[%c0_367, %c0_368] : memref<8x10xf32, #tpu.memory_space<vmem>>, vector<8x10xf32>
    tpu.vector_store %arg9[%c0_367, %c0_368], %1549 {strides = array<i32>} : memref<8x10xf32, #tpu.memory_space<vmem>>, vector<8x10xf32>,
    return
  }
  func.func @transform_0(%arg0: i32) -> (i32, i32) {
    %c0_i32 = arith.constant 0 : i32
    %c0_i32_0 = arith.constant 0 : i32
    %c0_i32_1 = arith.constant 0 : i32
    return %c0_i32, %c0_i32_0 : i32, i32
  }
  func.func @transform_1(%arg0: i32) -> (i32, i32) {
    %c0_i32 = arith.constant 0 : i32
    %c0_i32_0 = arith.constant 0 : i32
    %c0_i32_1 = arith.constant 0 : i32
    return %c0_i32, %c0_i32_0 : i32, i32
  }
  func.func @transform_2(%arg0: i32) -> (i32, i32) {
    %c0_i32 = arith.constant 0 : i32
    %c0_i32_0 = arith.constant 0 : i32
    %c0_i32_1 = arith.constant 0 : i32
    return %c0_i32, %c0_i32_0 : i32, i32
  }
  func.func @transform_3(%arg0: i32) -> (i32, i32) {
    %c0_i32 = arith.constant 0 : i32
    %c0_i32_0 = arith.constant 0 : i32
    %c0_i32_1 = arith.constant 0 : i32
    return %c0_i32, %c0_i32_0 : i32, i32
  }
  func.func @transform_4(%arg0: i32) -> (i32, i32) {
    %c0_i32 = arith.constant 0 : i32
    %c0_i32_0 = arith.constant 0 : i32
    %c0_i32_1 = arith.constant 0 : i32
    return %c0_i32, %c0_i32_0 : i32, i32
  }
  func.func @transform_5(%arg0: i32) -> (i32, i32) {
    %c0_i32 = arith.constant 0 : i32
    %c0_i32_0 = arith.constant 0 : i32
    %c0_i32_1 = arith.constant 0 : i32
    return %c0_i32, %c0_i32_0 : i32, i32
  }
  func.func @transform_6(%arg0: i32) -> (i32, i32) {
    %c0_i32 = arith.constant 0 : i32
    %c0_i32_0 = arith.constant 0 : i32
    %c0_i32_1 = arith.constant 0 : i32
    return %c0_i32, %c0_i32_0 : i32, i32
  }
  func.func @transform_7(%arg0: i32) -> (i32, i32) {
    %c0_i32 = arith.constant 0 : i32
    %c0_i32_0 = arith.constant 0 : i32
    %c0_i32_1 = arith.constant 0 : i32
    return %c0_i32, %c0_i32_0 : i32, i32
  }
  func.func @transform_8(%arg0: i32) -> (i32, i32) {
    %c0_i32 = arith.constant 0 : i32
    %c0_i32_0 = arith.constant 0 : i32
    %c0_i32_1 = arith.constant 0 : i32
    return %c0_i32, %c0_i32_0 : i32, i32
  }
  func.func @transform_9(%arg0: i32) -> (i32, i32) {
    %c0_i32 = arith.constant 0 : i32
    %c0_i32_0 = arith.constant 0 : i32
    %c0_i32_1 = arith.constant 0 : i32
    return %c0_i32, %c0_i32_0 : i32, i32
  }
  func.func @transform_10(%arg0: i32) -> (i32, i32) {
    %c0_i32 = arith.constant 0 : i32
    %c0_i32_0 = arith.constant 0 : i32
    %c0_i32_1 = arith.constant 0 : i32
    return %c0_i32, %c0_i32_0 : i32, i32
  }
  func.func @transform_11(%arg0: i32) -> (i32, i32) {
    %c0_i32 = arith.constant 0 : i32
    %c0_i32_0 = arith.constant 0 : i32
    %c0_i32_1 = arith.constant 0 : i32
    return %c0_i32, %c0_i32_0 : i32, i32
  }
  func.func @transform_12(%arg0: i32) -> (i32, i32) {
    %c0_i32 = arith.constant 0 : i32
    %c0_i32_0 = arith.constant 0 : i32
    %c0_i32_1 = arith.constant 0 : i32
    return %c0_i32, %c0_i32_0 : i32, i32
  }
}

</mosaic_0001>

<llo_original>
// kernel: ntm_forward.1
$region0: #{ntm_forward.1}
  #allocation0 [shape = 'u32[]', space=smem, size = 0x4, offset = 0x4, fixed_abs, tag = 'smem constant byte address 0x4 - core index']
  #allocation1 [shape = 'u32[144,128]{1,0:T(1,128)}', space=vmem, size = 0x12000, scoped, tag = 'internal scratch']
  #allocation2 [shape = 'f32[8,128]{1,0:T(8,128)}', space=vmem, size = 0x1000, scoped, tag = 'scratch operand']
  %s0 = inlined_call_operand.vmem [shape: f32[8,10], index: 0, kind: input, shape index: {}]
  %s1 = inlined_call_operand.vmem [shape: f32[10,128], index: 1, kind: input, shape index: {}]
  %s2 = inlined_call_operand.vmem [shape: bf16[20,128], index: 2, kind: input, shape index: {}]
  %s3 = inlined_call_operand.vmem [shape: f32[1,128], index: 3, kind: input, shape index: {}]
  %s4 = inlined_call_operand.hbm [shape: bf16[128,128], index: 4, kind: input, shape index: {}]
  %s5 = inlined_call_operand.vmem [shape: f32[1,128], index: 5, kind: input, shape index: {}]
  %s6 = inlined_call_operand.vmem [shape: f32[20,10], index: 6, kind: input, shape index: {}]
  %s7 = inlined_call_operand.vmem [shape: f32[1,10], index: 7, kind: input, shape index: {}]
  %s8 = inlined_call_operand.hbm [shape: f32[8,10], index: 8, kind: output, shape index: {0}]
  %s9 = inlined_call_operand.hbm [shape: f32[8,128], index: 9, kind: output, shape index: {1}]
  %s10 = inlined_call_operand.hbm [shape: f32[8,128], index: 10, kind: output, shape index: {2}]
  %s11 = inlined_call_operand.hbm [shape: f32[8,20], index: 11, kind: output, shape index: {3}]
  %s12 = inlined_call_operand.hbm [shape: f32[8,20], index: 12, kind: output, shape index: {4}]
  %13 = xla_tuple %s8, %s9, %s10, %s11, %s12
  %s14 = sld [smem:[#allocation0]]
  $region78: #{ntm_forward.1} parent=0
    _
  %s16 = ssub.s32 1, %s14
  %s17 = scalar_select 0, %s16, %s14
  $region1: #{ntm_forward.1} parent=0
    #allocation3 [shape = 'u8[32768]{0}', space=vmem, size = 0x8000, scoped, tag = 'input window, operand 4, single buffered']
    #allocation4 [shape = 's32[1]{0}', space=sflag, size = 0x4, scoped, tag = 'scoped memory for ntm_forward.1']
    #allocation5 [shape = 's32[1]{0}', space=sflag, size = 0x4, scoped, tag = 'scoped memory for ntm_forward.1']
    #allocation6 [shape = 'u8[4096]{0}', space=vmem, size = 0x1000, scoped, tag = 'output window, operand 0, single buffered']
    #allocation7 [shape = 'u8[4096]{0}', space=vmem, size = 0x1000, scoped, tag = 'output window, operand 1, single buffered']
    #allocation8 [shape = 's32[1]{0}', space=sflag, size = 0x4, scoped, tag = 'scoped memory for ntm_forward.1']
    #allocation9 [shape = 'u8[4096]{0}', space=vmem, size = 0x1000, scoped, tag = 'output window, operand 2, single buffered']
    #allocation10 [shape = 'u8[4096]{0}', space=vmem, size = 0x1000, scoped, tag = 'output window, operand 3, single buffered']
    #allocation11 [shape = 's32[1]{0}', space=sflag, size = 0x4, scoped, tag = 'scoped memory for ntm_forward.1']
    #allocation12 [shape = 'u8[4096]{0}', space=vmem, size = 0x1000, scoped, tag = 'output window, operand 4, single buffered']
    %18 = vsyncpa [#allocation4], 0
    %19 = vsyncpa [#allocation5], 0
    %20 = vsyncpa [#allocation8], 0
    %21 = vsyncpa [#allocation11], 0
    // Predicated region
    $region2: #{ntm_forward.1} parent=1 // pred_check
      _
    $region3: #{ntm_forward.1} parent=1 // pred_check_branch
      %23 = sbr.rel (0) target = $region5
    $region4: #{ntm_forward.1} parent=1 // pred_region
      _
    $region5: #{ntm_forward.1} parent=1 // pred_fallthru
      _
    // Predicated region
    $region6: #{ntm_forward.1} parent=1 // pred_check
      _
    $region7: #{ntm_forward.1} parent=1 // pred_check_branch
      %25 = sbr.rel (0) target = $region9
    $region8: #{ntm_forward.1} parent=1 // pred_region
      _
    $region9: #{ntm_forward.1} parent=1 // pred_fallthru
      _
    // Predicated region
    $region10: #{ntm_forward.1} parent=1 // pred_check
      _
    $region11: #{ntm_forward.1} parent=1 // pred_check_branch
      %27 = sbr.rel (0) target = $region13
    $region12: #{ntm_forward.1} parent=1 // pred_region
      _
    $region13: #{ntm_forward.1} parent=1 // pred_fallthru
      _
    // Predicated region
    $region14: #{ntm_forward.1} parent=1 // pred_check
      _
    $region15: #{ntm_forward.1} parent=1 // pred_check_branch
      %29 = sbr.rel (0) target = $region17
    $region16: #{ntm_forward.1} parent=1 // pred_region
      _
    $region17: #{ntm_forward.1} parent=1 // pred_fallthru
      _
    // Predicated region
    $region18: #{ntm_forward.1} parent=1 // pred_check
      _
    $region19: #{ntm_forward.1} parent=1 // pred_check_branch
      %31 = sbr.rel (0) target = $region21
    $region20: #{ntm_forward.1} parent=1 // pred_region
      %s33 = ssub.s32 1024, 1024
      %34 = vsyncadd [#allocation4], %s33
      %s35 = sshll.u32 [#allocation3], 4
      %s36 = int_to_ptr.vmem [resolvable:$true] %s35
      %41 = dma.hbm_to_vmem [thread:$0]  %s4, 1024, %s36, [#allocation4], 64, 64, 4
    $region21: #{ntm_forward.1} parent=1 // pred_fallthru
      _
    // Predicated region
    $region22: #{ntm_forward.1} parent=1 // pred_check
      _
    $region23: #{ntm_forward.1} parent=1 // pred_check_branch
      %43 = sbr.rel (0) target = $region25
    $region24: #{ntm_forward.1} parent=1 // pred_region
      _
    $region25: #{ntm_forward.1} parent=1 // pred_fallthru
      _
    // Predicated region
    $region26: #{ntm_forward.1} parent=1 // pred_check
      _
    $region27: #{ntm_forward.1} parent=1 // pred_check_branch
      %45 = sbr.rel (0) target = $region29
    $region28: #{ntm_forward.1} parent=1 // pred_region
      _
    $region29: #{ntm_forward.1} parent=1 // pred_fallthru
      _
    // Predicated region
    $region30: #{ntm_forward.1} parent=1 // pred_check
      _
    $region31: #{ntm_forward.1} parent=1 // pred_check_branch
      %47 = sbr.rel (0) target = $region33
    $region32: #{ntm_forward.1} parent=1 // pred_region
      _
    $region33: #{ntm_forward.1} parent=1 // pred_fallthru
      _
    // Predicated region
    $region34: #{ntm_forward.1} parent=1 // pred_check
      _
    $region35: #{ntm_forward.1} parent=1 // pred_check_branch
      %49 = sbr.rel (0) target = $region37
    $region36: #{ntm_forward.1} parent=1 // pred_region
      %50 = dma.done [#allocation4], 1024
    $region37: #{ntm_forward.1} parent=1 // pred_fallthru
      _
    %v52 = vld [vmem:[%s2] sm:$0xf]
    %v53 = vld [vmem:[%s2 + $0x4] sm:$0xf]
    %v54 = vld [vmem:[%s2 + $0x8] sm:$0x3]
    %v55 = vld [vmem:[#allocation3] sm:$0xf]
    %v56 = vld [vmem:[#allocation3 + $0x4] sm:$0xf]
    %v57 = vld [vmem:[#allocation3 + $0x8] sm:$0xf]
    %v58 = vld [vmem:[#allocation3 + $0xc] sm:$0xf]
    %v59 = vld [vmem:[#allocation3 + $0x10] sm:$0xf]
    %v60 = vld [vmem:[#allocation3 + $0x14] sm:$0xf]
    %v61 = vld [vmem:[#allocation3 + $0x18] sm:$0xf]
    %v62 = vld [vmem:[#allocation3 + $0x1c] sm:$0xf]
    %v63 = vld [vmem:[#allocation3 + $0x20] sm:$0xf]
    %v64 = vld [vmem:[#allocation3 + $0x24] sm:$0xf]
    %v65 = vld [vmem:[#allocation3 + $0x28] sm:$0xf]
    %v66 = vld [vmem:[#allocation3 + $0x2c] sm:$0xf]
    %v67 = vld [vmem:[#allocation3 + $0x30] sm:$0xf]
    %v68 = vld [vmem:[#allocation3 + $0x34] sm:$0xf]
    %v69 = vld [vmem:[#allocation3 + $0x38] sm:$0xf]
    %v70 = vld [vmem:[#allocation3 + $0x3c] sm:$0xf]
    %v71 = vld [vmem:[%s5] sm:$0x1]
    %v72 = vld [vmem:[%s0] sm:$0xff]
    %v73 = vld [vmem:[%s1] sm:$0xff]
    %v74 = vld [vmem:[%s1 + $0x8] sm:$0x3]
    %v75 = vld [vmem:[%s3] sm:$0x1]
    %v77 = vlaneseq
    %v78 = vshrl.u32 %v77, 7
    %v79 = vsub.s32 0, %v78
    %v80 = vrot.slane %v75, %v79
    %vm82 = vcmask 80896
    %v84 = vsel %vm82, %v72, 0
    %vm86 = vcmask 1041408
    %v88 = vsel %vm86, %v74, 0
    %90 = vmatprep.subr.mxu0 0.0
    %91 = vmatpush1.msra.mxu0 %v73
    %92 = vmatprep.subr.mxu0 0.0
    %93 = vmatpush1.msra.mxu0 %v88
    %94 = vmatprep.subr.mxu0 0.0
    %95 = vmatpush1.msra.mxu0 0.0
    %96 = vmatprep.subr.mxu0 0.0
    %97 = vmatpush1.msra.mxu0 0.0
    %98 = vmatprep.subr.mxu0 0.0
    %99 = vmatpush1.msra.mxu0 0.0
    %100 = vmatprep.subr.mxu0 0.0
    %101 = vmatpush1.msra.mxu0 0.0
    %102 = vmatprep.subr.mxu0 0.0
    %103 = vmatpush1.msra.mxu0 0.0
    %104 = vmatprep.subr.mxu0 0.0
    %105 = vmatpush1.msra.mxu0 0.0
    %106 = vmatprep.subr.mxu0 0.0
    %107 = vmatpush1.msra.mxu0 0.0
    %108 = vmatprep.subr.mxu0 0.0
    %109 = vmatpush1.msra.mxu0 0.0
    %110 = vmatprep.subr.mxu0 0.0
    %111 = vmatpush1.msra.mxu0 0.0
    %112 = vmatprep.subr.mxu0 0.0
    %113 = vmatpush1.msra.mxu0 0.0
    %114 = vmatprep.subr.mxu0 0.0
    %115 = vmatpush1.msra.mxu0 0.0
    %116 = vmatprep.subr.mxu0 0.0
    %117 = vmatpush1.msra.mxu0 0.0
    %118 = vmatprep.subr.mxu0 0.0
    %119 = vmatpush1.msra.mxu0 0.0
    %120 = vmatprep.subr.mxu0 0.0
    %121 = vmatpush1.msra.mxu0 0.0
    %122 = vmatprep.subr.mxu0 0.0
    %123 = vmatpush1.msra.mxu0 0.0
    %124 = vmatprep.subr.mxu0 0.0
    %125 = vmatpush1.msra.mxu0 0.0
    %126 = vmatprep.subr.mxu0 0.0
    %127 = vmatpush1.msra.mxu0 0.0
    %128 = vmatprep.subr.mxu0 0.0
    %129 = vmatpush1.msra.mxu0 0.0
    %130 = vmatprep.subr.mxu0 0.0
    %131 = vmatpush1.msra.mxu0 0.0
    %132 = vmatprep.subr.mxu0 0.0
    %133 = vmatpush1.msra.mxu0 0.0
    %134 = vmatprep.subr.mxu0 0.0
    %135 = vmatpush1.msra.mxu0 0.0
    %136 = vmatprep.subr.mxu0 0.0
    %137 = vmatpush1.msra.mxu0 0.0
    %138 = vmatprep.subr.mxu0 0.0
    %139 = vmatpush1.msra.mxu0 0.0
    %140 = vmatprep.subr.mxu0 0.0
    %141 = vmatpush1.msra.mxu0 0.0
    %142 = vmatprep.subr.mxu0 0.0
    %143 = vmatpush1.msra.mxu0 0.0
    %144 = vmatprep.subr.mxu0 0.0
    %145 = vmatpush1.msra.mxu0 0.0
    %146 = vmatprep.subr.mxu0 0.0
    %147 = vmatpush1.msra.mxu0 0.0
    %148 = vmatprep.subr.mxu0 0.0
    %149 = vmatpush1.msra.mxu0 0.0
    %150 = vmatprep.subr.mxu0 0.0
    %151 = vmatpush1.msra.mxu0 0.0
    %152 = vmatprep.subr.mxu0 0.0
    %153 = vmatpush1.msra.mxu0 0.0
    %154 = vmatprep.mubr.f32.mxu0 0.0
    %155 = vmatmul.mubr.f32.gmra.mrb[0].mxu0 %v84
    %v156 = vpop.f32.mrb[0].mxu0
    %v157 = vadd.f32 %v80, %v156
    %v158 = vpop.f32.mrb[0].mxu0
    %159 = vdwg.mxu0
    %160 = vst [vmem:[#allocation2] sm:$0xff] %v157
    %v161 = vlaneseq
    %v162 = vand.u32 %v161, 127
    %vm163 = vcmp.eq.s32.totalorder %v162, 64
    %v164 = vsel %vm163, 1, 0
    %v165 = vcvt.s32.f32 %v164
    %vm166 = vcmp.lt.s32.totalorder %v162, 24
    %v167 = vld [vmem:[#allocation2] sm:$0x1]
    %v168 = vpack.c.bf16 1e-06, 1e-06
    %v172 = vunpack.c.l.b16 %v52
    %v173 = vunpack.c.l.b16 %v53
    %v174 = vunpack.c.l.b16 %v54
    %v175 = vpack.c.b16 %v173, %v172
    %v176 = vpack.c.b16 %v174, %v174
    %vm178 = vcmask 162816
    %v180 = vsel %vm178, %v168, 0
    %v183 = vsel %vm86, %v176, 0
    %185 = vmatprep.subr.bf16.mxu0 0
    %186 = vmatpush1.bf16.msra.mxu0 %v175
    %187 = vmatprep.subr.bf16.mxu0 0
    %188 = vmatpush1.bf16.msra.mxu0 %v183
    %189 = vmatprep.subr.bf16.mxu0 0
    %190 = vmatpush1.bf16.msra.mxu0 0
    %191 = vmatprep.subr.bf16.mxu0 0
    %192 = vmatpush1.bf16.msra.mxu0 0
    %193 = vmatprep.subr.bf16.mxu0 0
    %194 = vmatpush1.bf16.msra.mxu0 0
    %195 = vmatprep.subr.bf16.mxu0 0
    %196 = vmatpush1.bf16.msra.mxu0 0
    %197 = vmatprep.subr.bf16.mxu0 0
    %198 = vmatpush1.bf16.msra.mxu0 0
    %199 = vmatprep.subr.bf16.mxu0 0
    %200 = vmatpush1.bf16.msra.mxu0 0
    %201 = vmatprep.subr.bf16.mxu0 0
    %202 = vmatpush1.bf16.msra.mxu0 0
    %203 = vmatprep.subr.bf16.mxu0 0
    %204 = vmatpush1.bf16.msra.mxu0 0
    %205 = vmatprep.subr.bf16.mxu0 0
    %206 = vmatpush1.bf16.msra.mxu0 0
    %207 = vmatprep.subr.bf16.mxu0 0
    %208 = vmatpush1.bf16.msra.mxu0 0
    %209 = vmatprep.subr.bf16.mxu0 0
    %210 = vmatpush1.bf16.msra.mxu0 0
    %211 = vmatprep.subr.bf16.mxu0 0
    %212 = vmatpush1.bf16.msra.mxu0 0
    %213 = vmatprep.subr.bf16.mxu0 0
    %214 = vmatpush1.bf16.msra.mxu0 0
    %215 = vmatprep.subr.bf16.mxu0 0
    %216 = vmatpush1.bf16.msra.mxu0 0
    %217 = vmatprep.mubr.bf16.mxu0 0
    %218 = vmatmul.mubr.bf16.gmra.mrb[0].mxu0 %v180
    %v219 = vpop.f32.mrb[0].mxu0
    %v220 = vadd.f32 0.0, %v219
    %v221 = vpop.f32.mrb[0].mxu0
    %v222 = vpop.f32.mrb[0].mxu0
    %v223 = vpop.f32.mrb[0].mxu0
    %224 = vdwg.mxu0
    %v225 = vadd.f32 %v167, %v220
    %v226 = vxor.u32 %v225, 2147483648
    %v227 = vmul.f32 %v226, 1.442695
    %v228 = vpow.pop %v227
    %v229 = vadd.f32 %v228, 1.0
    %v230 = vrcp.pop %v229
    %v231 = vmul.f32 1.0, %v230
    %v232 = vpack.c.bf16 %v231, %v231
    %v249 = vunpack.c.l.b16 %v55
    %v250 = vunpack.c.l.b16 %v56
    %v251 = vunpack.c.l.b16 %v57
    %v252 = vunpack.c.l.b16 %v58
    %v253 = vunpack.c.l.b16 %v59
    %v254 = vunpack.c.l.b16 %v60
    %v255 = vunpack.c.l.b16 %v61
    %v256 = vunpack.c.l.b16 %v62
    %v257 = vunpack.c.l.b16 %v63
    %v258 = vunpack.c.l.b16 %v64
    %v259 = vunpack.c.l.b16 %v65
    %v260 = vunpack.c.l.b16 %v66
    %v261 = vunpack.c.l.b16 %v67
    %v262 = vunpack.c.l.b16 %v68
    %v263 = vunpack.c.l.b16 %v69
    %v264 = vunpack.c.l.b16 %v70
    %v265 = vpack.c.b16 %v250, %v249
    %v266 = vpack.c.b16 %v252, %v251
    %v267 = vpack.c.b16 %v254, %v253
    %v268 = vpack.c.b16 %v256, %v255
    %v269 = vpack.c.b16 %v258, %v257
    %v270 = vpack.c.b16 %v260, %v259
    %v271 = vpack.c.b16 %v262, %v261
    %v272 = vpack.c.b16 %v264, %v263
    %281 = vmatprep.subr.bf16.mxu0 0
    %282 = vmatpush1.bf16.msra.mxu0 %v265
    %283 = vmatprep.subr.bf16.mxu0 0
    %284 = vmatpush1.bf16.msra.mxu0 %v266
    %285 = vmatprep.subr.bf16.mxu0 0
    %286 = vmatpush1.bf16.msra.mxu0 %v267
    %287 = vmatprep.subr.bf16.mxu0 0
    %288 = vmatpush1.bf16.msra.mxu0 %v268
    %289 = vmatprep.subr.bf16.mxu0 0
    %290 = vmatpush1.bf16.msra.mxu0 %v269
    %291 = vmatprep.subr.bf16.mxu0 0
    %292 = vmatpush1.bf16.msra.mxu0 %v270
    %293 = vmatprep.subr.bf16.mxu0 0
    %294 = vmatpush1.bf16.msra.mxu0 %v271
    %295 = vmatprep.subr.bf16.mxu0 0
    %296 = vmatpush1.bf16.msra.mxu0 %v272
    %297 = vmatprep.subr.bf16.mxu0 0
    %298 = vmatpush1.bf16.msra.mxu0 0
    %299 = vmatprep.subr.bf16.mxu0 0
    %300 = vmatpush1.bf16.msra.mxu0 0
    %301 = vmatprep.subr.bf16.mxu0 0
    %302 = vmatpush1.bf16.msra.mxu0 0
    %303 = vmatprep.subr.bf16.mxu0 0
    %304 = vmatpush1.bf16.msra.mxu0 0
    %305 = vmatprep.subr.bf16.mxu0 0
    %306 = vmatpush1.bf16.msra.mxu0 0
    %307 = vmatprep.subr.bf16.mxu0 0
    %308 = vmatpush1.bf16.msra.mxu0 0
    %309 = vmatprep.subr.bf16.mxu0 0
    %310 = vmatpush1.bf16.msra.mxu0 0
    %311 = vmatprep.subr.bf16.mxu0 0
    %312 = vmatpush1.bf16.msra.mxu0 0
    %313 = vmatprep.mubr.bf16.mxu0 0
    %314 = vmatmul.mubr.bf16.gmra.mrb[0].mxu0 %v232
    %v315 = vpop.f32.mrb[0].mxu0
    %v316 = vadd.f32 %v71, %v315
    %v317 = vpop.f32.mrb[0].mxu0
    %v318 = vpop.f32.mrb[0].mxu0
    %v319 = vpop.f32.mrb[0].mxu0
    %320 = vdwg.mxu0
    %v321 = vtanh.pop %v316
    %v322 = vxor.u32 %v316, 2147483648
    %v323 = vmul.f32 %v322, 1.442695
    %v324 = vpow.pop %v323
    %v325 = vadd.f32 %v324, 1.0
    %v326 = vrcp.pop %v325
    %v327 = vmul.f32 1.0, %v326
    %v328 = vmax.f32 %v316, 0.0
    %vm329 = vcmp.ne.f32.partialorder %v316, %v316
    %v330 = vadd.f32 %v316, 0.0
    %v331 = vand.u32 2147483647, %v316
    %v332 = vsub.f32 0.0, %v331
    %v333 = vmul.f32 %v332, 1.442695
    %v334 = vpow.pop %v333
    %v335 = vadd.f32 %v334, 1.0
    %v336 = vlog2.pop %v335
    %v337 = vmul.f32 %v336, 0.6931472
    %v338 = vmul.f32 -0.5, %v334
    %v339 = vadd.f32 %v338, 1.0
    %v340 = vmul.f32 %v339, %v334
    %v341 = vand.u32 2147483647, %v334
    %vm342 = vcmp.lt.f32.partialorder %v341, 0.0004427343
    %v343 = vsel %vm342, %v340, %v337
    %v344 = vadd.f32 %v328, %v343
    %v345 = vsel %vm329, %v330, %v344
    %v346 = vadd.f32 %v345, 1.0
    %vm347 = vcmask 811760
    %v348 = vsel %vm347, %v316, -inf
    %349 = vmax.xlane.f32.xlu0 %v348
    %v350 = vpop.xlane.xlu0 %349
    %v351 = vsub.f32 %v316, %v350
    %v352 = vmul.f32 %v351, 1.442695
    %v353 = vpow.pop %v352
    %355 = vrot.lane.b32.xlu0 %v353, 34
    %v356 = vpop.permute.xlu0 %355
    %vm358 = vcmask 16384
    %v359 = vsel %vm358, %v356, 0.0
    %360 = vadd.xlane.f32.xlu0 %v359
    %v361 = vpop.xlane.xlu0 %360
    %v362 = vrcp.pop %v361
    %v363 = vmul.f32 %v353, %v362
    %364 = vrot.lane.b32.xlu0 %v353, 31
    %v365 = vpop.permute.xlu0 %364
    %v367 = vsel %vm358, %v365, 0.0
    %368 = vadd.xlane.f32.xlu0 %v367
    %v369 = vpop.xlane.xlu0 %368
    %v370 = vrcp.pop %v369
    %v371 = vmul.f32 %v353, %v370
    %373 = vrot.lane.b32.xlu0 %v321, 80
    %v374 = vpop.permute.xlu0 %373
    %v375 = vsel %vm178, %v374, 0
    %vm377 = vcmask 1043456
    %v379 = vsel %vm377, 1e-06, 0
    %381 = vmatprep.subr.mxu0 0.0
    %382 = vmatpush1.msra.mxu0 1e-06
    %383 = vmatprep.subr.mxu0 0.0
    %384 = vmatpush1.msra.mxu0 1e-06
    %385 = vmatprep.subr.mxu0 0.0
    %386 = vmatpush1.msra.mxu0 %v379
    %387 = vmatprep.subr.mxu0 0.0
    %388 = vmatpush1.msra.mxu0 0.0
    %389 = vmatprep.subr.mxu0 0.0
    %390 = vmatpush1.msra.mxu0 0.0
    %391 = vmatprep.subr.mxu0 0.0
    %392 = vmatpush1.msra.mxu0 0.0
    %393 = vmatprep.subr.mxu0 0.0
    %394 = vmatpush1.msra.mxu0 0.0
    %395 = vmatprep.subr.mxu0 0.0
    %396 = vmatpush1.msra.mxu0 0.0
    %397 = vmatprep.subr.mxu0 0.0
    %398 = vmatpush1.msra.mxu0 0.0
    %399 = vmatprep.subr.mxu0 0.0
    %400 = vmatpush1.msra.mxu0 0.0
    %401 = vmatprep.subr.mxu0 0.0
    %402 = vmatpush1.msra.mxu0 0.0
    %403 = vmatprep.subr.mxu0 0.0
    %404 = vmatpush1.msra.mxu0 0.0
    %405 = vmatprep.subr.mxu0 0.0
    %406 = vmatpush1.msra.mxu0 0.0
    %407 = vmatprep.subr.mxu0 0.0
    %408 = vmatpush1.msra.mxu0 0.0
    %409 = vmatprep.subr.mxu0 0.0
    %410 = vmatpush1.msra.mxu0 0.0
    %411 = vmatprep.subr.mxu0 0.0
    %412 = vmatpush1.msra.mxu0 0.0
    %413 = vmatprep.subr.mxu0 0.0
    %414 = vmatpush1.msra.mxu0 0.0
    %415 = vmatprep.subr.mxu0 0.0
    %416 = vmatpush1.msra.mxu0 0.0
    %417 = vmatprep.subr.mxu0 0.0
    %418 = vmatpush1.msra.mxu0 0.0
    %419 = vmatprep.subr.mxu0 0.0
    %420 = vmatpush1.msra.mxu0 0.0
    %421 = vmatprep.subr.mxu0 0.0
    %422 = vmatpush1.msra.mxu0 0.0
    %423 = vmatprep.subr.mxu0 0.0
    %424 = vmatpush1.msra.mxu0 0.0
    %425 = vmatprep.subr.mxu0 0.0
    %426 = vmatpush1.msra.mxu0 0.0
    %427 = vmatprep.subr.mxu0 0.0
    %428 = vmatpush1.msra.mxu0 0.0
    %429 = vmatprep.subr.mxu0 0.0
    %430 = vmatpush1.msra.mxu0 0.0
    %431 = vmatprep.subr.mxu0 0.0
    %432 = vmatpush1.msra.mxu0 0.0
    %433 = vmatprep.subr.mxu0 0.0
    %434 = vmatpush1.msra.mxu0 0.0
    %435 = vmatprep.subr.mxu0 0.0
    %436 = vmatpush1.msra.mxu0 0.0
    %437 = vmatprep.subr.mxu0 0.0
    %438 = vmatpush1.msra.mxu0 0.0
    %439 = vmatprep.subr.mxu0 0.0
    %440 = vmatpush1.msra.mxu0 0.0
    %441 = vmatprep.subr.mxu0 0.0
    %442 = vmatpush1.msra.mxu0 0.0
    %443 = vmatprep.subr.mxu0 0.0
    %444 = vmatpush1.msra.mxu0 0.0
    %445 = vmatprep.mubr.f32.mxu0 0.0
    %446 = vmatmul.mubr.f32.gmra.mrb[0].mxu0 %v375
    %v447 = vpop.f32.mrb[0].mxu0
    %v448 = vadd.f32 0.0, %v447
    %v449 = vpop.f32.mrb[0].mxu0
    %450 = vdwg.mxu0
    %v451 = vmul.f32 %v321, %v321
    %453 = vrot.lane.b32.xlu0 %v451, 80
    %v454 = vpop.permute.xlu0 %453
    %vm456 = vcmask 155648
    %v457 = vsel %vm456, %v454, 0.0
    %458 = vadd.xlane.f32.xlu0 %v457
    %v459 = vpop.xlane.xlu0 %458
    %v460 = vsel %vm377, 1e-12, 0.0
    %v461 = vadd.f32 %v460, 2e-12
    %v462 = vrot.slane %v461, 4
    %v463 = vadd.f32 %v461, %v462
    %v464 = vrot.slane %v463, 2
    %v465 = vadd.f32 %v463, %v464
    %v466 = vrot.slane %v465, 1
    %v467 = vadd.f32 %v465, %v466
    %v468 = vmax.f32 %v467, 1e-16
    %v469 = vmax.f32 %v459, 1e-16
    %v470 = vmul.f32 %v468, %v469
    %v471 = vrsqrt.pop %v470
    %v472 = vmul.f32 %v448, %v471
    %474 = vset.pattern.permute.xlu0 88
    %475 = vperm.xlu0 %474, %v345
    %v476 = vpop.permute.xlu0 %475
    %v478 = vmul.f32 %v476, %v472
    %vm479 = vcmask 1040384
    %v480 = vsel %vm479, %v478, -inf
    %481 = vmax.xlane.f32.xlu0 %v480
    %v482 = vpop.xlane.xlu0 %481
    %v483 = vsub.f32 %v478, %v482
    %v484 = vmul.f32 %v483, 1.442695
    %v485 = vpow.pop %v484
    %v486 = vsel %vm479, %v485, 0.0
    %487 = vadd.xlane.f32.xlu0 %v486
    %v488 = vpop.xlane.xlu0 %487
    %v489 = vrcp.pop %v488
    %v490 = vmul.f32 %v485, %v489
    %492 = vset.pattern.permute.xlu0 90
    %493 = vperm.xlu0 %492, %v327
    %v494 = vpop.permute.xlu0 %493
    %v496 = vmul.f32 %v494, %v490
    %v497 = vsub.f32 1.0, %v327
    %499 = vset.pattern.permute.xlu0 90
    %500 = vperm.xlu0 %499, %v497
    %v501 = vpop.permute.xlu0 %500
    %v503 = vmul.f32 %v501, %v165
    %v504 = vadd.f32 %v496, %v503
    %505 = vrot.lane.b32.xlu0 %v504, 1
    %v506 = vpop.permute.xlu0 %505
    %508 = vset.pattern.permute.xlu0 94
    %509 = vperm.xlu0 %508, %v363
    %v510 = vpop.permute.xlu0 %509
    %v512 = vmul.f32 %v510, %v506
    %513 = vset.pattern.permute.xlu0 95
    %514 = vperm.xlu0 %513, %v363
    %v515 = vpop.permute.xlu0 %514
    %v517 = vmul.f32 %v515, %v504
    %v518 = vadd.f32 %v512, %v517
    %519 = vrot.lane.b32.xlu0 %v504, 127
    %v520 = vpop.permute.xlu0 %519
    %521 = vset.pattern.permute.xlu0 96
    %522 = vperm.xlu0 %521, %v363
    %v523 = vpop.permute.xlu0 %522
    %v525 = vmul.f32 %v523, %v520
    %v526 = vadd.f32 %v518, %v525
    %v527 = vadd.f32 %v526, 1e-16
    %529 = vset.pattern.permute.xlu0 92
    %530 = vperm.xlu0 %529, %v346
    %v531 = vpop.permute.xlu0 %530
    %v533 = vpow.f32 %v527, %v531
    %v534 = vsel %vm479, %v533, 0.0
    %535 = vadd.xlane.f32.xlu0 %v534
    %v536 = vpop.xlane.xlu0 %535
    %v537 = vrcp.pop %v536
    %v538 = vmul.f32 %v533, %v537
    %v539 = vsel %vm166, %v327, %v321
    %540 = vxpose.xlu0.b32.start [1/16] %v539, 128
    %541 = vxpose.xlu0.b32.cont [2/16] 0.0, 128
    %542 = vxpose.xlu0.b32.cont [3/16] 0.0, 128
    %543 = vxpose.xlu0.b32.cont [4/16] 0.0, 128
    %544 = vxpose.xlu0.b32.cont [5/16] 0.0, 128
    %545 = vxpose.xlu0.b32.cont [6/16] 0.0, 128
    %546 = vxpose.xlu0.b32.cont [7/16] 0.0, 128
    %547 = vxpose.xlu0.b32.cont [8/16] 0.0, 128
    %548 = vxpose.xlu0.b32.cont [9/16] 0.0, 128
    %549 = vxpose.xlu0.b32.cont [10/16] 0.0, 128
    %550 = vxpose.xlu0.b32.cont [11/16] 0.0, 128
    %551 = vxpose.xlu0.b32.cont [12/16] 0.0, 128
    %552 = vxpose.xlu0.b32.cont [13/16] 0.0, 128
    %553 = vxpose.xlu0.b32.cont [14/16] 0.0, 128
    %554 = vxpose.xlu0.b32.cont [15/16] 0.0, 128
    %555 = vxpose.xlu0.b32.end [16/16] 0.0, 128
    %v556 = vpop.trf.xlu0
    %v557 = vpop.trf.xlu0
    %v558 = vpop.trf.xlu0
    %v559 = vpop.trf.xlu0
    %v560 = vpop.trf.xlu0
    %v561 = vpop.trf.xlu0
    %v562 = vpop.trf.xlu0
    %v563 = vpop.trf.xlu0
    %v564 = vpop.trf.xlu0
    %v565 = vpop.trf.xlu0
    %v566 = vpop.trf.xlu0
    %v567 = vpop.trf.xlu0
    %v568 = vpop.trf.xlu0
    %v569 = vpop.trf.xlu0
    %v570 = vpop.trf.xlu0
    %v571 = vpop.trf.xlu0
    %vm572 = vcmask 7168
    %v574 = vsel %vm572, %v556, 0
    %v577 = vsel %vm572, %v557, 0
    %v580 = vsel %vm572, %v558, 0
    %v583 = vsel %vm572, %v559, 0
    %v586 = vsel %vm572, %v560, 0
    %v589 = vsel %vm572, %v561, 0
    %v592 = vsel %vm479, %v538, 0
    %594 = vmatprep.subr.mxu0 0.0
    %595 = vmatpush1.msra.mxu0 %v592
    %596 = vmatprep.subr.mxu0 0.0
    %597 = vmatpush1.msra.mxu0 0.0
    %598 = vmatprep.subr.mxu0 0.0
    %599 = vmatpush1.msra.mxu0 0.0
    %600 = vmatprep.subr.mxu0 0.0
    %601 = vmatpush1.msra.mxu0 0.0
    %602 = vmatprep.subr.mxu0 0.0
    %603 = vmatpush1.msra.mxu0 0.0
    %604 = vmatprep.subr.mxu0 0.0
    %605 = vmatpush1.msra.mxu0 0.0
    %606 = vmatprep.subr.mxu0 0.0
    %607 = vmatpush1.msra.mxu0 0.0
    %608 = vmatprep.subr.mxu0 0.0
    %609 = vmatpush1.msra.mxu0 0.0
    %610 = vmatprep.subr.mxu0 0.0
    %611 = vmatpush1.msra.mxu0 0.0
    %612 = vmatprep.subr.mxu0 0.0
    %613 = vmatpush1.msra.mxu0 0.0
    %614 = vmatprep.subr.mxu0 0.0
    %615 = vmatpush1.msra.mxu0 0.0
    %616 = vmatprep.subr.mxu0 0.0
    %617 = vmatpush1.msra.mxu0 0.0
    %618 = vmatprep.subr.mxu0 0.0
    %619 = vmatpush1.msra.mxu0 0.0
    %620 = vmatprep.subr.mxu0 0.0
    %621 = vmatpush1.msra.mxu0 0.0
    %622 = vmatprep.subr.mxu0 0.0
    %623 = vmatpush1.msra.mxu0 0.0
    %624 = vmatprep.subr.mxu0 0.0
    %625 = vmatpush1.msra.mxu0 0.0
    %626 = vmatprep.subr.mxu0 0.0
    %627 = vmatpush1.msra.mxu0 0.0
    %628 = vmatprep.subr.mxu0 0.0
    %629 = vmatpush1.msra.mxu0 0.0
    %630 = vmatprep.subr.mxu0 0.0
    %631 = vmatpush1.msra.mxu0 0.0
    %632 = vmatprep.subr.mxu0 0.0
    %633 = vmatpush1.msra.mxu0 0.0
    %634 = vmatprep.subr.mxu0 0.0
    %635 = vmatpush1.msra.mxu0 0.0
    %636 = vmatprep.subr.mxu0 0.0
    %637 = vmatpush1.msra.mxu0 0.0
    %638 = vmatprep.subr.mxu0 0.0
    %639 = vmatpush1.msra.mxu0 0.0
    %640 = vmatprep.subr.mxu0 0.0
    %641 = vmatpush1.msra.mxu0 0.0
    %642 = vmatprep.subr.mxu0 0.0
    %643 = vmatpush1.msra.mxu0 0.0
    %644 = vmatprep.subr.mxu0 0.0
    %645 = vmatpush1.msra.mxu0 0.0
    %646 = vmatprep.subr.mxu0 0.0
    %647 = vmatpush1.msra.mxu0 0.0
    %648 = vmatprep.subr.mxu0 0.0
    %649 = vmatpush1.msra.mxu0 0.0
    %650 = vmatprep.subr.mxu0 0.0
    %651 = vmatpush1.msra.mxu0 0.0
    %652 = vmatprep.subr.mxu0 0.0
    %653 = vmatpush1.msra.mxu0 0.0
    %654 = vmatprep.subr.mxu0 0.0
    %655 = vmatpush1.msra.mxu0 0.0
    %656 = vmatprep.subr.mxu0 0.0
    %657 = vmatpush1.msra.mxu0 0.0
    %658 = vmatprep.mubr.f32.mxu0 0.0
    %659 = vmatmul.mubr.f32.gmra.mrb[0].mxu0 %v574
    %v660 = vpop.f32.mrb[0].mxu0
    %v661 = vadd.f32 0.0, %v660
    %v662 = vpop.f32.mrb[0].mxu0
    %663 = vmatprep.mubr.f32.mxu0 0.0
    %664 = vmatmul.mubr.f32.gmra.mrb[0].mxu0 %v577
    %v665 = vpop.f32.mrb[0].mxu0
    %v666 = vadd.f32 0.0, %v665
    %v667 = vpop.f32.mrb[0].mxu0
    %668 = vmatprep.mubr.f32.mxu0 0.0
    %669 = vmatmul.mubr.f32.gmra.mrb[0].mxu0 %v580
    %v670 = vpop.f32.mrb[0].mxu0
    %v671 = vadd.f32 0.0, %v670
    %v672 = vpop.f32.mrb[0].mxu0
    %673 = vmatprep.mubr.f32.mxu0 0.0
    %674 = vmatmul.mubr.f32.gmra.mrb[0].mxu0 %v583
    %v675 = vpop.f32.mrb[0].mxu0
    %v676 = vadd.f32 0.0, %v675
    %v677 = vpop.f32.mrb[0].mxu0
    %678 = vmatprep.mubr.f32.mxu0 0.0
    %679 = vmatmul.mubr.f32.gmra.mrb[0].mxu0 %v586
    %v680 = vpop.f32.mrb[0].mxu0
    %v681 = vadd.f32 0.0, %v680
    %v682 = vpop.f32.mrb[0].mxu0
    %683 = vmatprep.mubr.f32.mxu0 0.0
    %684 = vmatmul.mubr.f32.gmra.mrb[0].mxu0 %v589
    %v685 = vpop.f32.mrb[0].mxu0
    %v686 = vadd.f32 0.0, %v685
    %v687 = vpop.f32.mrb[0].mxu0
    %688 = vdwg.mxu0
    %v689 = vsub.f32 1.0, %v661
    %v690 = vsub.f32 1.0, %v666
    %v691 = vsub.f32 1.0, %v671
    %v692 = vmul.f32 %v689, 1e-06
    %v693 = vmul.f32 %v690, 1e-06
    %v694 = vmul.f32 %v691, 1e-06
    %v695 = vadd.f32 %v692, %v676
    %v696 = vadd.f32 %v693, %v681
    %v697 = vadd.f32 %v694, %v686
    %698 = vrot.lane.b32.xlu0 %v321, 60
    %v699 = vpop.permute.xlu0 %698
    %v700 = vsel %vm178, %v699, 0
    %v703 = vsel %vm377, %v697, 0
    %705 = vmatprep.subr.mxu0 0.0
    %706 = vmatpush1.msra.mxu0 %v695
    %707 = vmatprep.subr.mxu0 0.0
    %708 = vmatpush1.msra.mxu0 %v696
    %709 = vmatprep.subr.mxu0 0.0
    %710 = vmatpush1.msra.mxu0 %v703
    %711 = vmatprep.subr.mxu0 0.0
    %712 = vmatpush1.msra.mxu0 0.0
    %713 = vmatprep.subr.mxu0 0.0
    %714 = vmatpush1.msra.mxu0 0.0
    %715 = vmatprep.subr.mxu0 0.0
    %716 = vmatpush1.msra.mxu0 0.0
    %717 = vmatprep.subr.mxu0 0.0
    %718 = vmatpush1.msra.mxu0 0.0
    %719 = vmatprep.subr.mxu0 0.0
    %720 = vmatpush1.msra.mxu0 0.0
    %721 = vmatprep.subr.mxu0 0.0
    %722 = vmatpush1.msra.mxu0 0.0
    %723 = vmatprep.subr.mxu0 0.0
    %724 = vmatpush1.msra.mxu0 0.0
    %725 = vmatprep.subr.mxu0 0.0
    %726 = vmatpush1.msra.mxu0 0.0
    %727 = vmatprep.subr.mxu0 0.0
    %728 = vmatpush1.msra.mxu0 0.0
    %729 = vmatprep.subr.mxu0 0.0
    %730 = vmatpush1.msra.mxu0 0.0
    %731 = vmatprep.subr.mxu0 0.0
    %732 = vmatpush1.msra.mxu0 0.0
    %733 = vmatprep.subr.mxu0 0.0
    %734 = vmatpush1.msra.mxu0 0.0
    %735 = vmatprep.subr.mxu0 0.0
    %736 = vmatpush1.msra.mxu0 0.0
    %737 = vmatprep.subr.mxu0 0.0
    %738 = vmatpush1.msra.mxu0 0.0
    %739 = vmatprep.subr.mxu0 0.0
    %740 = vmatpush1.msra.mxu0 0.0
    %741 = vmatprep.subr.mxu0 0.0
    %742 = vmatpush1.msra.mxu0 0.0
    %743 = vmatprep.subr.mxu0 0.0
    %744 = vmatpush1.msra.mxu0 0.0
    %745 = vmatprep.subr.mxu0 0.0
    %746 = vmatpush1.msra.mxu0 0.0
    %747 = vmatprep.subr.mxu0 0.0
    %748 = vmatpush1.msra.mxu0 0.0
    %749 = vmatprep.subr.mxu0 0.0
    %750 = vmatpush1.msra.mxu0 0.0
    %751 = vmatprep.subr.mxu0 0.0
    %752 = vmatpush1.msra.mxu0 0.0
    %753 = vmatprep.subr.mxu0 0.0
    %754 = vmatpush1.msra.mxu0 0.0
    %755 = vmatprep.subr.mxu0 0.0
    %756 = vmatpush1.msra.mxu0 0.0
    %757 = vmatprep.subr.mxu0 0.0
    %758 = vmatpush1.msra.mxu0 0.0
    %759 = vmatprep.subr.mxu0 0.0
    %760 = vmatpush1.msra.mxu0 0.0
    %761 = vmatprep.subr.mxu0 0.0
    %762 = vmatpush1.msra.mxu0 0.0
    %763 = vmatprep.subr.mxu0 0.0
    %764 = vmatpush1.msra.mxu0 0.0
    %765 = vmatprep.subr.mxu0 0.0
    %766 = vmatpush1.msra.mxu0 0.0
    %767 = vmatprep.subr.mxu0 0.0
    %768 = vmatpush1.msra.mxu0 0.0
    %769 = vmatprep.mubr.f32.mxu0 0.0
    %770 = vmatmul.mubr.f32.gmra.mrb[0].mxu0 %v700
    %v771 = vpop.f32.mrb[0].mxu0
    %v772 = vadd.f32 0.0, %v771
    %v773 = vpop.f32.mrb[0].mxu0
    %774 = vdwg.mxu0
    %775 = vrot.lane.b32.xlu0 %v451, 60
    %v776 = vpop.permute.xlu0 %775
    %v778 = vsel %vm456, %v776, 0.0
    %779 = vadd.xlane.f32.xlu0 %v778
    %v780 = vpop.xlane.xlu0 %779
    %v781 = vmul.f32 %v695, %v695
    %v782 = vmul.f32 %v696, %v696
    %v783 = vmul.f32 %v697, %v697
    %v784 = vadd.f32 %v781, %v782
    %v785 = vsel %vm377, %v783, 0.0
    %v786 = vadd.f32 %v784, %v785
    %v787 = vrot.slane %v786, 4
    %v788 = vadd.f32 %v786, %v787
    %v789 = vrot.slane %v788, 2
    %v790 = vadd.f32 %v788, %v789
    %v791 = vrot.slane %v790, 1
    %v792 = vadd.f32 %v790, %v791
    %v793 = vmax.f32 %v792, 1e-16
    %v794 = vmax.f32 %v780, 1e-16
    %v795 = vmul.f32 %v793, %v794
    %v796 = vrsqrt.pop %v795
    %v797 = vmul.f32 %v772, %v796
    %798 = vset.pattern.permute.xlu0 89
    %799 = vperm.xlu0 %798, %v345
    %v800 = vpop.permute.xlu0 %799
    %v802 = vmul.f32 %v800, %v797
    %v803 = vsel %vm479, %v802, -inf
    %804 = vmax.xlane.f32.xlu0 %v803
    %v805 = vpop.xlane.xlu0 %804
    %v806 = vsub.f32 %v802, %v805
    %v807 = vmul.f32 %v806, 1.442695
    %v808 = vpow.pop %v807
    %v809 = vsel %vm479, %v808, 0.0
    %810 = vadd.xlane.f32.xlu0 %v809
    %v811 = vpop.xlane.xlu0 %810
    %v812 = vrcp.pop %v811
    %v813 = vmul.f32 %v808, %v812
    %814 = vset.pattern.permute.xlu0 91
    %815 = vperm.xlu0 %814, %v327
    %v816 = vpop.permute.xlu0 %815
    %v818 = vmul.f32 %v816, %v813
    %819 = vset.pattern.permute.xlu0 91
    %820 = vperm.xlu0 %819, %v497
    %v821 = vpop.permute.xlu0 %820
    %v823 = vmul.f32 %v821, %v165
    %v824 = vadd.f32 %v818, %v823
    %825 = vrot.lane.b32.xlu0 %v824, 1
    %v826 = vpop.permute.xlu0 %825
    %828 = vset.pattern.permute.xlu0 97
    %829 = vperm.xlu0 %828, %v371
    %v830 = vpop.permute.xlu0 %829
    %v832 = vmul.f32 %v830, %v826
    %833 = vset.pattern.permute.xlu0 98
    %834 = vperm.xlu0 %833, %v371
    %v835 = vpop.permute.xlu0 %834
    %v837 = vmul.f32 %v835, %v824
    %v838 = vadd.f32 %v832, %v837
    %839 = vrot.lane.b32.xlu0 %v824, 127
    %v840 = vpop.permute.xlu0 %839
    %841 = vset.pattern.permute.xlu0 99
    %842 = vperm.xlu0 %841, %v371
    %v843 = vpop.permute.xlu0 %842
    %v845 = vmul.f32 %v843, %v840
    %v846 = vadd.f32 %v838, %v845
    %v847 = vadd.f32 %v846, 1e-16
    %848 = vset.pattern.permute.xlu0 93
    %849 = vperm.xlu0 %848, %v346
    %v850 = vpop.permute.xlu0 %849
    %v852 = vpow.f32 %v847, %v850
    %v853 = vsel %vm479, %v852, 0.0
    %854 = vadd.xlane.f32.xlu0 %v853
    %v855 = vpop.xlane.xlu0 %854
    %v856 = vrcp.pop %v855
    %v857 = vmul.f32 %v852, %v856
    %858 = vmatprep.subr.mxu0 0.0
    %859 = vmatpush1.xpose.msra.mxu0 %v695
    %860 = vmatprep.subr.mxu0 0.0
    %861 = vmatpush1.xpose.msra.mxu0 %v696
    %862 = vmatprep.subr.mxu0 0.0
    %863 = vmatpush1.xpose.msra.mxu0 %v697
    %864 = vmatprep.subr.mxu0 0.0
    %865 = vmatpush1.xpose.msra.mxu0 0.0
    %866 = vmatprep.subr.mxu0 0.0
    %867 = vmatpush1.xpose.msra.mxu0 0.0
    %868 = vmatprep.subr.mxu0 0.0
    %869 = vmatpush1.xpose.msra.mxu0 0.0
    %870 = vmatprep.subr.mxu0 0.0
    %871 = vmatpush1.xpose.msra.mxu0 0.0
    %872 = vmatprep.subr.mxu0 0.0
    %873 = vmatpush1.xpose.msra.mxu0 0.0
    %874 = vmatprep.subr.mxu0 0.0
    %875 = vmatpush1.xpose.msra.mxu0 0.0
    %876 = vmatprep.subr.mxu0 0.0
    %877 = vmatpush1.xpose.msra.mxu0 0.0
    %878 = vmatprep.subr.mxu0 0.0
    %879 = vmatpush1.xpose.msra.mxu0 0.0
    %880 = vmatprep.subr.mxu0 0.0
    %881 = vmatpush1.xpose.msra.mxu0 0.0
    %882 = vmatprep.subr.mxu0 0.0
    %883 = vmatpush1.xpose.msra.mxu0 0.0
    %884 = vmatprep.subr.mxu0 0.0
    %885 = vmatpush1.xpose.msra.mxu0 0.0
    %886 = vmatprep.subr.mxu0 0.0
    %887 = vmatpush1.xpose.msra.mxu0 0.0
    %888 = vmatprep.subr.mxu0 0.0
    %889 = vmatpush1.xpose.msra.mxu0 0.0
    %890 = vmatprep.subr.mxu0 0.0
    %891 = vmatpush1.xpose.msra.mxu0 0.0
    %892 = vmatprep.subr.mxu0 0.0
    %893 = vmatpush1.xpose.msra.mxu0 0.0
    %894 = vmatprep.subr.mxu0 0.0
    %895 = vmatpush1.xpose.msra.mxu0 0.0
    %896 = vmatprep.subr.mxu0 0.0
    %897 = vmatpush1.xpose.msra.mxu0 0.0
    %898 = vmatprep.subr.mxu0 0.0
    %899 = vmatpush1.xpose.msra.mxu0 0.0
    %900 = vmatprep.subr.mxu0 0.0
    %901 = vmatpush1.xpose.msra.mxu0 0.0
    %902 = vmatprep.subr.mxu0 0.0
    %903 = vmatpush1.xpose.msra.mxu0 0.0
    %904 = vmatprep.subr.mxu0 0.0
    %905 = vmatpush1.xpose.msra.mxu0 0.0
    %906 = vmatprep.subr.mxu0 0.0
    %907 = vmatpush1.xpose.msra.mxu0 0.0
    %908 = vmatprep.subr.mxu0 0.0
    %909 = vmatpush1.xpose.msra.mxu0 0.0
    %910 = vmatprep.subr.mxu0 0.0
    %911 = vmatpush1.xpose.msra.mxu0 0.0
    %912 = vmatprep.subr.mxu0 0.0
    %913 = vmatpush1.xpose.msra.mxu0 0.0
    %914 = vmatprep.subr.mxu0 0.0
    %915 = vmatpush1.xpose.msra.mxu0 0.0
    %916 = vmatprep.subr.mxu0 0.0
    %917 = vmatpush1.xpose.msra.mxu0 0.0
    %918 = vmatprep.subr.mxu0 0.0
    %919 = vmatpush1.xpose.msra.mxu0 0.0
    %920 = vmatprep.subr.mxu0 0.0
    %921 = vmatpush1.xpose.msra.mxu0 0.0
    %922 = vmatprep.mubr.f32.mxu0 0.0
    %923 = vmatmul.mubr.f32.gmra.mrb[0].mxu0 %v857
    %v924 = vpop.f32.mrb[0].mxu0
    %v925 = vadd.f32 0.0, %v924
    %v926 = vpop.f32.mrb[0].mxu0
    %927 = vdwg.mxu0
    %928 = vst [vmem:[#allocation7] sm:$0x1] %v538
    %929 = vst [vmem:[#allocation9] sm:$0x1] %v857
    %930 = vrot.lane.b32.xlu0 %v321, 104
    %v931 = vpop.permute.xlu0 %930
    %933 = vst.msk [vmem:[#allocation10] sm:$0x1] %vm456, %v931
    %934 = vst.msk [vmem:[#allocation12] sm:$0x1] %vm456, %v925
    %v935 = vld [vmem:[#allocation2 + $0x1] sm:$0x1]
    %v936 = vpack.c.bf16 %v925, %v925
    %v938 = vsel %vm178, %v936, 0
    %940 = vmatprep.subr.bf16.mxu0 0
    %941 = vmatpush1.bf16.msra.mxu0 %v175
    %942 = vmatprep.subr.bf16.mxu0 0
    %943 = vmatpush1.bf16.msra.mxu0 %v183
    %944 = vmatprep.subr.bf16.mxu0 0
    %945 = vmatpush1.bf16.msra.mxu0 0
    %946 = vmatprep.subr.bf16.mxu0 0
    %947 = vmatpush1.bf16.msra.mxu0 0
    %948 = vmatprep.subr.bf16.mxu0 0
    %949 = vmatpush1.bf16.msra.mxu0 0
    %950 = vmatprep.subr.bf16.mxu0 0
    %951 = vmatpush1.bf16.msra.mxu0 0
    %952 = vmatprep.subr.bf16.mxu0 0
    %953 = vmatpush1.bf16.msra.mxu0 0
    %954 = vmatprep.subr.bf16.mxu0 0
    %955 = vmatpush1.bf16.msra.mxu0 0
    %956 = vmatprep.subr.bf16.mxu0 0
    %957 = vmatpush1.bf16.msra.mxu0 0
    %958 = vmatprep.subr.bf16.mxu0 0
    %959 = vmatpush1.bf16.msra.mxu0 0
    %960 = vmatprep.subr.bf16.mxu0 0
    %961 = vmatpush1.bf16.msra.mxu0 0
    %962 = vmatprep.subr.bf16.mxu0 0
    %963 = vmatpush1.bf16.msra.mxu0 0
    %964 = vmatprep.subr.bf16.mxu0 0
    %965 = vmatpush1.bf16.msra.mxu0 0
    %966 = vmatprep.subr.bf16.mxu0 0
    %967 = vmatpush1.bf16.msra.mxu0 0
    %968 = vmatprep.subr.bf16.mxu0 0
    %969 = vmatpush1.bf16.msra.mxu0 0
    %970 = vmatprep.subr.bf16.mxu0 0
    %971 = vmatpush1.bf16.msra.mxu0 0
    %972 = vmatprep.mubr.bf16.mxu0 0
    %973 = vmatmul.mubr.bf16.gmra.mrb[0].mxu0 %v938
    %v974 = vpop.f32.mrb[0].mxu0
    %v975 = vadd.f32 0.0, %v974
    %v976 = vpop.f32.mrb[0].mxu0
    %v977 = vpop.f32.mrb[0].mxu0
    %v978 = vpop.f32.mrb[0].mxu0
    %979 = vdwg.mxu0
    %v980 = vadd.f32 %v935, %v975
    %v981 = vxor.u32 %v980, 2147483648
    %v982 = vmul.f32 %v981, 1.442695
    %v983 = vpow.pop %v982
    %v984 = vadd.f32 %v983, 1.0
    %v985 = vrcp.pop %v984
    %v986 = vmul.f32 1.0, %v985
    %v987 = vpack.c.bf16 %v986, %v986
    %988 = vmatprep.subr.bf16.mxu0 0
    %989 = vmatpush1.bf16.msra.mxu0 %v265
    %990 = vmatprep.subr.bf16.mxu0 0
    %991 = vmatpush1.bf16.msra.mxu0 %v266
    %992 = vmatprep.subr.bf16.mxu0 0
    %993 = vmatpush1.bf16.msra.mxu0 %v267
    %994 = vmatprep.subr.bf16.mxu0 0
    %995 = vmatpush1.bf16.msra.mxu0 %v268
    %996 = vmatprep.subr.bf16.mxu0 0
    %997 = vmatpush1.bf16.msra.mxu0 %v269
    %998 = vmatprep.subr.bf16.mxu0 0
    %999 = vmatpush1.bf16.msra.mxu0 %v270
    %1000 = vmatprep.subr.bf16.mxu0 0
    %1001 = vmatpush1.bf16.msra.mxu0 %v271
    %1002 = vmatprep.subr.bf16.mxu0 0
    %1003 = vmatpush1.bf16.msra.mxu0 %v272
    %1004 = vmatprep.subr.bf16.mxu0 0
    %1005 = vmatpush1.bf16.msra.mxu0 0
    %1006 = vmatprep.subr.bf16.mxu0 0
    %1007 = vmatpush1.bf16.msra.mxu0 0
    %1008 = vmatprep.subr.bf16.mxu0 0
    %1009 = vmatpush1.bf16.msra.mxu0 0
    %1010 = vmatprep.subr.bf16.mxu0 0
    %1011 = vmatpush1.bf16.msra.mxu0 0
    %1012 = vmatprep.subr.bf16.mxu0 0
    %1013 = vmatpush1.bf16.msra.mxu0 0
    %1014 = vmatprep.subr.bf16.mxu0 0
    %1015 = vmatpush1.bf16.msra.mxu0 0
    %1016 = vmatprep.subr.bf16.mxu0 0
    %1017 = vmatpush1.bf16.msra.mxu0 0
    %1018 = vmatprep.subr.bf16.mxu0 0
    %1019 = vmatpush1.bf16.msra.mxu0 0
    %1020 = vmatprep.mubr.bf16.mxu0 0
    %1021 = vmatmul.mubr.bf16.gmra.mrb[0].mxu0 %v987
    %v1022 = vpop.f32.mrb[0].mxu0
    %v1023 = vadd.f32 %v71, %v1022
    %v1024 = vpop.f32.mrb[0].mxu0
    %v1025 = vpop.f32.mrb[0].mxu0
    %v1026 = vpop.f32.mrb[0].mxu0
    %1027 = vdwg.mxu0
    %v1028 = vtanh.pop %v1023
    %v1029 = vxor.u32 %v1023, 2147483648
    %v1030 = vmul.f32 %v1029, 1.442695
    %v1031 = vpow.pop %v1030
    %v1032 = vadd.f32 %v1031, 1.0
    %v1033 = vrcp.pop %v1032
    %v1034 = vmul.f32 1.0, %v1033
    %v1035 = vmax.f32 %v1023, 0.0
    %vm1036 = vcmp.ne.f32.partialorder %v1023, %v1023
    %v1037 = vadd.f32 %v1023, 0.0
    %v1038 = vand.u32 2147483647, %v1023
    %v1039 = vsub.f32 0.0, %v1038
    %v1040 = vmul.f32 %v1039, 1.442695
    %v1041 = vpow.pop %v1040
    %v1042 = vadd.f32 %v1041, 1.0
    %v1043 = vlog2.pop %v1042
    %v1044 = vmul.f32 %v1043, 0.6931472
    %v1045 = vmul.f32 -0.5, %v1041
    %v1046 = vadd.f32 %v1045, 1.0
    %v1047 = vmul.f32 %v1046, %v1041
    %v1048 = vand.u32 2147483647, %v1041
    %vm1049 = vcmp.lt.f32.partialorder %v1048, 0.0004427343
    %v1050 = vsel %vm1049, %v1047, %v1044
    %v1051 = vadd.f32 %v1035, %v1050
    %v1052 = vsel %vm1036, %v1037, %v1051
    %v1053 = vadd.f32 %v1052, 1.0
    %v1054 = vsel %vm347, %v1023, -inf
    %1055 = vmax.xlane.f32.xlu0 %v1054
    %v1056 = vpop.xlane.xlu0 %1055
    %v1057 = vsub.f32 %v1023, %v1056
    %v1058 = vmul.f32 %v1057, 1.442695
    %v1059 = vpow.pop %v1058
    %1061 = vrot.lane.b32.xlu0 %v1059, 34
    %v1062 = vpop.permute.xlu0 %1061
    %v1064 = vsel %vm358, %v1062, 0.0
    %1065 = vadd.xlane.f32.xlu0 %v1064
    %v1066 = vpop.xlane.xlu0 %1065
    %v1067 = vrcp.pop %v1066
    %v1068 = vmul.f32 %v1059, %v1067
    %1069 = vrot.lane.b32.xlu0 %v1059, 31
    %v1070 = vpop.permute.xlu0 %1069
    %v1072 = vsel %vm358, %v1070, 0.0
    %1073 = vadd.xlane.f32.xlu0 %v1072
    %v1074 = vpop.xlane.xlu0 %1073
    %v1075 = vrcp.pop %v1074
    %v1076 = vmul.f32 %v1059, %v1075
    %1078 = vrot.lane.b32.xlu0 %v1028, 80
    %v1079 = vpop.permute.xlu0 %1078
    %v1080 = vsel %vm178, %v1079, 0
    %1082 = vmatprep.subr.mxu0 0.0
    %1083 = vmatpush1.msra.mxu0 %v695
    %1084 = vmatprep.subr.mxu0 0.0
    %1085 = vmatpush1.msra.mxu0 %v696
    %1086 = vmatprep.subr.mxu0 0.0
    %1087 = vmatpush1.msra.mxu0 %v703
    %1088 = vmatprep.subr.mxu0 0.0
    %1089 = vmatpush1.msra.mxu0 0.0
    %1090 = vmatprep.subr.mxu0 0.0
    %1091 = vmatpush1.msra.mxu0 0.0
    %1092 = vmatprep.subr.mxu0 0.0
    %1093 = vmatpush1.msra.mxu0 0.0
    %1094 = vmatprep.subr.mxu0 0.0
    %1095 = vmatpush1.msra.mxu0 0.0
    %1096 = vmatprep.subr.mxu0 0.0
    %1097 = vmatpush1.msra.mxu0 0.0
    %1098 = vmatprep.subr.mxu0 0.0
    %1099 = vmatpush1.msra.mxu0 0.0
    %1100 = vmatprep.subr.mxu0 0.0
    %1101 = vmatpush1.msra.mxu0 0.0
    %1102 = vmatprep.subr.mxu0 0.0
    %1103 = vmatpush1.msra.mxu0 0.0
    %1104 = vmatprep.subr.mxu0 0.0
    %1105 = vmatpush1.msra.mxu0 0.0
    %1106 = vmatprep.subr.mxu0 0.0
    %1107 = vmatpush1.msra.mxu0 0.0
    %1108 = vmatprep.subr.mxu0 0.0
    %1109 = vmatpush1.msra.mxu0 0.0
    %1110 = vmatprep.subr.mxu0 0.0
    %1111 = vmatpush1.msra.mxu0 0.0
    %1112 = vmatprep.subr.mxu0 0.0
    %1113 = vmatpush1.msra.mxu0 0.0
    %1114 = vmatprep.subr.mxu0 0.0
    %1115 = vmatpush1.msra.mxu0 0.0
    %1116 = vmatprep.subr.mxu0 0.0
    %1117 = vmatpush1.msra.mxu0 0.0
    %1118 = vmatprep.subr.mxu0 0.0
    %1119 = vmatpush1.msra.mxu0 0.0
    %1120 = vmatprep.subr.mxu0 0.0
    %1121 = vmatpush1.msra.mxu0 0.0
    %1122 = vmatprep.subr.mxu0 0.0
    %1123 = vmatpush1.msra.mxu0 0.0
    %1124 = vmatprep.subr.mxu0 0.0
    %1125 = vmatpush1.msra.mxu0 0.0
    %1126 = vmatprep.subr.mxu0 0.0
    %1127 = vmatpush1.msra.mxu0 0.0
    %1128 = vmatprep.subr.mxu0 0.0
    %1129 = vmatpush1.msra.mxu0 0.0
    %1130 = vmatprep.subr.mxu0 0.0
    %1131 = vmatpush1.msra.mxu0 0.0
    %1132 = vmatprep.subr.mxu0 0.0
    %1133 = vmatpush1.msra.mxu0 0.0
    %1134 = vmatprep.subr.mxu0 0.0
    %1135 = vmatpush1.msra.mxu0 0.0
    %1136 = vmatprep.subr.mxu0 0.0
    %1137 = vmatpush1.msra.mxu0 0.0
    %1138 = vmatprep.subr.mxu0 0.0
    %1139 = vmatpush1.msra.mxu0 0.0
    %1140 = vmatprep.subr.mxu0 0.0
    %1141 = vmatpush1.msra.mxu0 0.0
    %1142 = vmatprep.subr.mxu0 0.0
    %1143 = vmatpush1.msra.mxu0 0.0
    %1144 = vmatprep.subr.mxu0 0.0
    %1145 = vmatpush1.msra.mxu0 0.0
    %1146 = vmatprep.mubr.f32.mxu0 0.0
    %1147 = vmatmul.mubr.f32.gmra.mrb[0].mxu0 %v1080
    %v1148 = vpop.f32.mrb[0].mxu0
    %v1149 = vadd.f32 0.0, %v1148
    %v1150 = vpop.f32.mrb[0].mxu0
    %1151 = vdwg.mxu0
    %v1152 = vmul.f32 %v1028, %v1028
    %1154 = vrot.lane.b32.xlu0 %v1152, 80
    %v1155 = vpop.permute.xlu0 %1154
    %v1157 = vsel %vm456, %v1155, 0.0
    %1158 = vadd.xlane.f32.xlu0 %v1157
    %v1159 = vpop.xlane.xlu0 %1158
    %v1160 = vmax.f32 %v1159, 1e-16
    %v1161 = vmul.f32 %v793, %v1160
    %v1162 = vrsqrt.pop %v1161
    %v1163 = vmul.f32 %v1149, %v1162
    %1165 = vset.pattern.permute.xlu0 88
    %1166 = vperm.xlu0 %1165, %v1052
    %v1167 = vpop.permute.xlu0 %1166
    %v1169 = vmul.f32 %v1167, %v1163
    %v1170 = vsel %vm479, %v1169, -inf
    %1171 = vmax.xlane.f32.xlu0 %v1170
    %v1172 = vpop.xlane.xlu0 %1171
    %v1173 = vsub.f32 %v1169, %v1172
    %v1174 = vmul.f32 %v1173, 1.442695
    %v1175 = vpow.pop %v1174
    %v1176 = vsel %vm479, %v1175, 0.0
    %1177 = vadd.xlane.f32.xlu0 %v1176
    %v1178 = vpop.xlane.xlu0 %1177
    %v1179 = vrcp.pop %v1178
    %v1180 = vmul.f32 %v1175, %v1179
    %1182 = vset.pattern.permute.xlu0 90
    %1183 = vperm.xlu0 %1182, %v1034
    %v1184 = vpop.permute.xlu0 %1183
    %v1186 = vmul.f32 %v1184, %v1180
    %v1187 = vsub.f32 1.0, %v1034
    %1189 = vset.pattern.permute.xlu0 90
    %1190 = vperm.xlu0 %1189, %v1187
    %v1191 = vpop.permute.xlu0 %1190
    %v1193 = vmul.f32 %v1191, %v538
    %v1194 = vadd.f32 %v1186, %v1193
    %1195 = vrot.lane.b32.xlu0 %v1194, 1
    %v1196 = vpop.permute.xlu0 %1195
    %1198 = vset.pattern.permute.xlu0 94
    %1199 = vperm.xlu0 %1198, %v1068
    %v1200 = vpop.permute.xlu0 %1199
    %v1202 = vmul.f32 %v1200, %v1196
    %1203 = vset.pattern.permute.xlu0 95
    %1204 = vperm.xlu0 %1203, %v1068
    %v1205 = vpop.permute.xlu0 %1204
    %v1207 = vmul.f32 %v1205, %v1194
    %v1208 = vadd.f32 %v1202, %v1207
    %1209 = vrot.lane.b32.xlu0 %v1194, 127
    %v1210 = vpop.permute.xlu0 %1209
    %1211 = vset.pattern.permute.xlu0 96
    %1212 = vperm.xlu0 %1211, %v1068
    %v1213 = vpop.permute.xlu0 %1212
    %v1215 = vmul.f32 %v1213, %v1210
    %v1216 = vadd.f32 %v1208, %v1215
    %v1217 = vadd.f32 %v1216, 1e-16
    %1219 = vset.pattern.permute.xlu0 92
    %1220 = vperm.xlu0 %1219, %v1053
    %v1221 = vpop.permute.xlu0 %1220
    %v1223 = vpow.f32 %v1217, %v1221
    %v1224 = vsel %vm479, %v1223, 0.0
    %1225 = vadd.xlane.f32.xlu0 %v1224
    %v1226 = vpop.xlane.xlu0 %1225
    %v1227 = vrcp.pop %v1226
    %v1228 = vmul.f32 %v1223, %v1227
    %v1229 = vsel %vm166, %v1034, %v1028
    %1230 = vxpose.xlu0.b32.start [1/16] %v1229, 128
    %1231 = vxpose.xlu0.b32.cont [2/16] 0.0, 128
    %1232 = vxpose.xlu0.b32.cont [3/16] 0.0, 128
    %1233 = vxpose.xlu0.b32.cont [4/16] 0.0, 128
    %1234 = vxpose.xlu0.b32.cont [5/16] 0.0, 128
    %1235 = vxpose.xlu0.b32.cont [6/16] 0.0, 128
    %1236 = vxpose.xlu0.b32.cont [7/16] 0.0, 128
    %1237 = vxpose.xlu0.b32.cont [8/16] 0.0, 128
    %1238 = vxpose.xlu0.b32.cont [9/16] 0.0, 128
    %1239 = vxpose.xlu0.b32.cont [10/16] 0.0, 128
    %1240 = vxpose.xlu0.b32.cont [11/16] 0.0, 128
    %1241 = vxpose.xlu0.b32.cont [12/16] 0.0, 128
    %1242 = vxpose.xlu0.b32.cont [13/16] 0.0, 128
    %1243 = vxpose.xlu0.b32.cont [14/16] 0.0, 128
    %1244 = vxpose.xlu0.b32.cont [15/16] 0.0, 128
    %1245 = vxpose.xlu0.b32.end [16/16] 0.0, 128
    %v1246 = vpop.trf.xlu0
    %v1247 = vpop.trf.xlu0
    %v1248 = vpop.trf.xlu0
    %v1249 = vpop.trf.xlu0
    %v1250 = vpop.trf.xlu0
    %v1251 = vpop.trf.xlu0
    %v1252 = vpop.trf.xlu0
    %v1253 = vpop.trf.xlu0
    %v1254 = vpop.trf.xlu0
    %v1255 = vpop.trf.xlu0
    %v1256 = vpop.trf.xlu0
    %v1257 = vpop.trf.xlu0
    %v1258 = vpop.trf.xlu0
    %v1259 = vpop.trf.xlu0
    %v1260 = vpop.trf.xlu0
    %v1261 = vpop.trf.xlu0
    %v1263 = vsel %vm572, %v1246, 0
    %v1266 = vsel %vm572, %v1247, 0
    %v1269 = vsel %vm572, %v1248, 0
    %v1272 = vsel %vm572, %v1249, 0
    %v1275 = vsel %vm572, %v1250, 0
    %v1278 = vsel %vm572, %v1251, 0
    %v1281 = vsel %vm479, %v1228, 0
    %1283 = vmatprep.subr.mxu0 0.0
    %1284 = vmatpush1.msra.mxu0 %v1281
    %1285 = vmatprep.subr.mxu0 0.0
    %1286 = vmatpush1.msra.mxu0 0.0
    %1287 = vmatprep.subr.mxu0 0.0
    %1288 = vmatpush1.msra.mxu0 0.0
    %1289 = vmatprep.subr.mxu0 0.0
    %1290 = vmatpush1.msra.mxu0 0.0
    %1291 = vmatprep.subr.mxu0 0.0
    %1292 = vmatpush1.msra.mxu0 0.0
    %1293 = vmatprep.subr.mxu0 0.0
    %1294 = vmatpush1.msra.mxu0 0.0
    %1295 = vmatprep.subr.mxu0 0.0
    %1296 = vmatpush1.msra.mxu0 0.0
    %1297 = vmatprep.subr.mxu0 0.0
    %1298 = vmatpush1.msra.mxu0 0.0
    %1299 = vmatprep.subr.mxu0 0.0
    %1300 = vmatpush1.msra.mxu0 0.0
    %1301 = vmatprep.subr.mxu0 0.0
    %1302 = vmatpush1.msra.mxu0 0.0
    %1303 = vmatprep.subr.mxu0 0.0
    %1304 = vmatpush1.msra.mxu0 0.0
    %1305 = vmatprep.subr.mxu0 0.0
    %1306 = vmatpush1.msra.mxu0 0.0
    %1307 = vmatprep.subr.mxu0 0.0
    %1308 = vmatpush1.msra.mxu0 0.0
    %1309 = vmatprep.subr.mxu0 0.0
    %1310 = vmatpush1.msra.mxu0 0.0
    %1311 = vmatprep.subr.mxu0 0.0
    %1312 = vmatpush1.msra.mxu0 0.0
    %1313 = vmatprep.subr.mxu0 0.0
    %1314 = vmatpush1.msra.mxu0 0.0
    %1315 = vmatprep.subr.mxu0 0.0
    %1316 = vmatpush1.msra.mxu0 0.0
    %1317 = vmatprep.subr.mxu0 0.0
    %1318 = vmatpush1.msra.mxu0 0.0
    %1319 = vmatprep.subr.mxu0 0.0
    %1320 = vmatpush1.msra.mxu0 0.0
    %1321 = vmatprep.subr.mxu0 0.0
    %1322 = vmatpush1.msra.mxu0 0.0
    %1323 = vmatprep.subr.mxu0 0.0
    %1324 = vmatpush1.msra.mxu0 0.0
    %1325 = vmatprep.subr.mxu0 0.0
    %1326 = vmatpush1.msra.mxu0 0.0
    %1327 = vmatprep.subr.mxu0 0.0
    %1328 = vmatpush1.msra.mxu0 0.0
    %1329 = vmatprep.subr.mxu0 0.0
    %1330 = vmatpush1.msra.mxu0 0.0
    %1331 = vmatprep.subr.mxu0 0.0
    %1332 = vmatpush1.msra.mxu0 0.0
    %1333 = vmatprep.subr.mxu0 0.0
    %1334 = vmatpush1.msra.mxu0 0.0
    %1335 = vmatprep.subr.mxu0 0.0
    %1336 = vmatpush1.msra.mxu0 0.0
    %1337 = vmatprep.subr.mxu0 0.0
    %1338 = vmatpush1.msra.mxu0 0.0
    %1339 = vmatprep.subr.mxu0 0.0
    %1340 = vmatpush1.msra.mxu0 0.0
    %1341 = vmatprep.subr.mxu0 0.0
    %1342 = vmatpush1.msra.mxu0 0.0
    %1343 = vmatprep.subr.mxu0 0.0
    %1344 = vmatpush1.msra.mxu0 0.0
    %1345 = vmatprep.subr.mxu0 0.0
    %1346 = vmatpush1.msra.mxu0 0.0
    %1347 = vmatprep.mubr.f32.mxu0 0.0
    %1348 = vmatmul.mubr.f32.gmra.mrb[0].mxu0 %v1263
    %v1349 = vpop.f32.mrb[0].mxu0
    %v1350 = vadd.f32 0.0, %v1349
    %v1351 = vpop.f32.mrb[0].mxu0
    %1352 = vmatprep.mubr.f32.mxu0 0.0
    %1353 = vmatmul.mubr.f32.gmra.mrb[0].mxu0 %v1266
    %v1354 = vpop.f32.mrb[0].mxu0
    %v1355 = vadd.f32 0.0, %v1354
    %v1356 = vpop.f32.mrb[0].mxu0
    %1357 = vmatprep.mubr.f32.mxu0 0.0
    %1358 = vmatmul.mubr.f32.gmra.mrb[0].mxu0 %v1269
    %v1359 = vpop.f32.mrb[0].mxu0
    %v1360 = vadd.f32 0.0, %v1359
    %v1361 = vpop.f32.mrb[0].mxu0
    %1362 = vmatprep.mubr.f32.mxu0 0.0
    %1363 = vmatmul.mubr.f32.gmra.mrb[0].mxu0 %v1272
    %v1364 = vpop.f32.mrb[0].mxu0
    %v1365 = vadd.f32 0.0, %v1364
    %v1366 = vpop.f32.mrb[0].mxu0
    %1367 = vmatprep.mubr.f32.mxu0 0.0
    %1368 = vmatmul.mubr.f32.gmra.mrb[0].mxu0 %v1275
    %v1369 = vpop.f32.mrb[0].mxu0
    %v1370 = vadd.f32 0.0, %v1369
    %v1371 = vpop.f32.mrb[0].mxu0
    %1372 = vmatprep.mubr.f32.mxu0 0.0
    %1373 = vmatmul.mubr.f32.gmra.mrb[0].mxu0 %v1278
    %v1374 = vpop.f32.mrb[0].mxu0
    %v1375 = vadd.f32 0.0, %v1374
    %v1376 = vpop.f32.mrb[0].mxu0
    %1377 = vdwg.mxu0
    %v1378 = vsub.f32 1.0, %v1350
    %v1379 = vsub.f32 1.0, %v1355
    %v1380 = vsub.f32 1.0, %v1360
    %v1381 = vmul.f32 %v695, %v1378
    %v1382 = vmul.f32 %v696, %v1379
    %v1383 = vmul.f32 %v697, %v1380
    %v1384 = vadd.f32 %v1381, %v1365
    %v1385 = vadd.f32 %v1382, %v1370
    %v1386 = vadd.f32 %v1383, %v1375
    %1387 = vrot.lane.b32.xlu0 %v1028, 60
    %v1388 = vpop.permute.xlu0 %1387
    %v1389 = vsel %vm178, %v1388, 0
    %v1392 = vsel %vm377, %v1386, 0
    %1394 = vmatprep.subr.mxu0 0.0
    %1395 = vmatpush1.msra.mxu0 %v1384
    %1396 = vmatprep.subr.mxu0 0.0
    %1397 = vmatpush1.msra.mxu0 %v1385
    %1398 = vmatprep.subr.mxu0 0.0
    %1399 = vmatpush1.msra.mxu0 %v1392
    %1400 = vmatprep.subr.mxu0 0.0
    %1401 = vmatpush1.msra.mxu0 0.0
    %1402 = vmatprep.subr.mxu0 0.0
    %1403 = vmatpush1.msra.mxu0 0.0
    %1404 = vmatprep.subr.mxu0 0.0
    %1405 = vmatpush1.msra.mxu0 0.0
    %1406 = vmatprep.subr.mxu0 0.0
    %1407 = vmatpush1.msra.mxu0 0.0
    %1408 = vmatprep.subr.mxu0 0.0
    %1409 = vmatpush1.msra.mxu0 0.0
    %1410 = vmatprep.subr.mxu0 0.0
    %1411 = vmatpush1.msra.mxu0 0.0
    %1412 = vmatprep.subr.mxu0 0.0
    %1413 = vmatpush1.msra.mxu0 0.0
    %1414 = vmatprep.subr.mxu0 0.0
    %1415 = vmatpush1.msra.mxu0 0.0
    %1416 = vmatprep.subr.mxu0 0.0
    %1417 = vmatpush1.msra.mxu0 0.0
    %1418 = vmatprep.subr.mxu0 0.0
    %1419 = vmatpush1.msra.mxu0 0.0
    %1420 = vmatprep.subr.mxu0 0.0
    %1421 = vmatpush1.msra.mxu0 0.0
    %1422 = vmatprep.subr.mxu0 0.0
    %1423 = vmatpush1.msra.mxu0 0.0
    %1424 = vmatprep.subr.mxu0 0.0
    %1425 = vmatpush1.msra.mxu0 0.0
    %1426 = vmatprep.subr.mxu0 0.0
    %1427 = vmatpush1.msra.mxu0 0.0
    %1428 = vmatprep.subr.mxu0 0.0
    %1429 = vmatpush1.msra.mxu0 0.0
    %1430 = vmatprep.subr.mxu0 0.0
    %1431 = vmatpush1.msra.mxu0 0.0
    %1432 = vmatprep.subr.mxu0 0.0
    %1433 = vmatpush1.msra.mxu0 0.0
    %1434 = vmatprep.subr.mxu0 0.0
    %1435 = vmatpush1.msra.mxu0 0.0
    %1436 = vmatprep.subr.mxu0 0.0
    %1437 = vmatpush1.msra.mxu0 0.0
    %1438 = vmatprep.subr.mxu0 0.0
    %1439 = vmatpush1.msra.mxu0 0.0
    %1440 = vmatprep.subr.mxu0 0.0
    %1441 = vmatpush1.msra.mxu0 0.0
    %1442 = vmatprep.subr.mxu0 0.0
    %1443 = vmatpush1.msra.mxu0 0.0
    %1444 = vmatprep.subr.mxu0 0.0
    %1445 = vmatpush1.msra.mxu0 0.0
    %1446 = vmatprep.subr.mxu0 0.0
    %1447 = vmatpush1.msra.mxu0 0.0
    %1448 = vmatprep.subr.mxu0 0.0
    %1449 = vmatpush1.msra.mxu0 0.0
    %1450 = vmatprep.subr.mxu0 0.0
    %1451 = vmatpush1.msra.mxu0 0.0
    %1452 = vmatprep.subr.mxu0 0.0
    %1453 = vmatpush1.msra.mxu0 0.0
    %1454 = vmatprep.subr.mxu0 0.0
    %1455 = vmatpush1.msra.mxu0 0.0
    %1456 = vmatprep.subr.mxu0 0.0
    %1457 = vmatpush1.msra.mxu0 0.0
    %1458 = vmatprep.mubr.f32.mxu0 0.0
    %1459 = vmatmul.mubr.f32.gmra.mrb[0].mxu0 %v1389
    %v1460 = vpop.f32.mrb[0].mxu0
    %v1461 = vadd.f32 0.0, %v1460
    %v1462 = vpop.f32.mrb[0].mxu0
    %1463 = vdwg.mxu0
    %1464 = vrot.lane.b32.xlu0 %v1152, 60
    %v1465 = vpop.permute.xlu0 %1464
    %v1467 = vsel %vm456, %v1465, 0.0
    %1468 = vadd.xlane.f32.xlu0 %v1467
    %v1469 = vpop.xlane.xlu0 %1468
    %v1470 = vmul.f32 %v1384, %v1384
    %v1471 = vmul.f32 %v1385, %v1385
    %v1472 = vmul.f32 %v1386, %v1386
    %v1473 = vadd.f32 %v1470, %v1471
    %v1474 = vsel %vm377, %v1472, 0.0
    %v1475 = vadd.f32 %v1473, %v1474
    %v1476 = vrot.slane %v1475, 4
    %v1477 = vadd.f32 %v1475, %v1476
    %v1478 = vrot.slane %v1477, 2
    %v1479 = vadd.f32 %v1477, %v1478
    %v1480 = vrot.slane %v1479, 1
    %v1481 = vadd.f32 %v1479, %v1480
    %v1482 = vmax.f32 %v1481, 1e-16
    %v1483 = vmax.f32 %v1469, 1e-16
    %v1484 = vmul.f32 %v1482, %v1483
    %v1485 = vrsqrt.pop %v1484
    %v1486 = vmul.f32 %v1461, %v1485
    %1487 = vset.pattern.permute.xlu0 89
    %1488 = vperm.xlu0 %1487, %v1052
    %v1489 = vpop.permute.xlu0 %1488
    %v1491 = vmul.f32 %v1489, %v1486
    %v1492 = vsel %vm479, %v1491, -inf
    %1493 = vmax.xlane.f32.xlu0 %v1492
    %v1494 = vpop.xlane.xlu0 %1493
    %v1495 = vsub.f32 %v1491, %v1494
    %v1496 = vmul.f32 %v1495, 1.442695
    %v1497 = vpow.pop %v1496
    %v1498 = vsel %vm479, %v1497, 0.0
    %1499 = vadd.xlane.f32.xlu0 %v1498
    %v1500 = vpop.xlane.xlu0 %1499
    %v1501 = vrcp.pop %v1500
    %v1502 = vmul.f32 %v1497, %v1501
    %1503 = vset.pattern.permute.xlu0 91
    %1504 = vperm.xlu0 %1503, %v1034
    %v1505 = vpop.permute.xlu0 %1504
    %v1507 = vmul.f32 %v1505, %v1502
    %1508 = vset.pattern.permute.xlu0 91
    %1509 = vperm.xlu0 %1508, %v1187
    %v1510 = vpop.permute.xlu0 %1509
    %v1512 = vmul.f32 %v1510, %v857
    %v1513 = vadd.f32 %v1507, %v1512
    %1514 = vrot.lane.b32.xlu0 %v1513, 1
    %v1515 = vpop.permute.xlu0 %1514
    %1517 = vset.pattern.permute.xlu0 97
    %1518 = vperm.xlu0 %1517, %v1076
    %v1519 = vpop.permute.xlu0 %1518
    %v1521 = vmul.f32 %v1519, %v1515
    %1522 = vset.pattern.permute.xlu0 98
    %1523 = vperm.xlu0 %1522, %v1076
    %v1524 = vpop.permute.xlu0 %1523
    %v1526 = vmul.f32 %v1524, %v1513
    %v1527 = vadd.f32 %v1521, %v1526
    %1528 = vrot.lane.b32.xlu0 %v1513, 127
    %v1529 = vpop.permute.xlu0 %1528
    %1530 = vset.pattern.permute.xlu0 99
    %1531 = vperm.xlu0 %1530, %v1076
    %v1532 = vpop.permute.xlu0 %1531
    %v1534 = vmul.f32 %v1532, %v1529
    %v1535 = vadd.f32 %v1527, %v1534
    %v1536 = vadd.f32 %v1535, 1e-16
    %1537 = vset.pattern.permute.xlu0 93
    %1538 = vperm.xlu0 %1537, %v1053
    %v1539 = vpop.permute.xlu0 %1538
    %v1541 = vpow.f32 %v1536, %v1539
    %v1542 = vsel %vm479, %v1541, 0.0
    %1543 = vadd.xlane.f32.xlu0 %v1542
    %v1544 = vpop.xlane.xlu0 %1543
    %v1545 = vrcp.pop %v1544
    %v1546 = vmul.f32 %v1541, %v1545
    %1547 = vmatprep.subr.mxu0 0.0
    %1548 = vmatpush1.xpose.msra.mxu0 %v1384
    %1549 = vmatprep.subr.mxu0 0.0
    %1550 = vmatpush1.xpose.msra.mxu0 %v1385
    %1551 = vmatprep.subr.mxu0 0.0
    %1552 = vmatpush1.xpose.msra.mxu0 %v1386
    %1553 = vmatprep.subr.mxu0 0.0
    %1554 = vmatpush1.xpose.msra.mxu0 0.0
    %1555 = vmatprep.subr.mxu0 0.0
    %1556 = vmatpush1.xpose.msra.mxu0 0.0
    %1557 = vmatprep.subr.mxu0 0.0
    %1558 = vmatpush1.xpose.msra.mxu0 0.0
    %1559 = vmatprep.subr.mxu0 0.0
    %1560 = vmatpush1.xpose.msra.mxu0 0.0
    %1561 = vmatprep.subr.mxu0 0.0
    %1562 = vmatpush1.xpose.msra.mxu0 0.0
    %1563 = vmatprep.subr.mxu0 0.0
    %1564 = vmatpush1.xpose.msra.mxu0 0.0
    %1565 = vmatprep.subr.mxu0 0.0
    %1566 = vmatpush1.xpose.msra.mxu0 0.0
    %1567 = vmatprep.subr.mxu0 0.0
    %1568 = vmatpush1.xpose.msra.mxu0 0.0
    %1569 = vmatprep.subr.mxu0 0.0
    %1570 = vmatpush1.xpose.msra.mxu0 0.0
    %1571 = vmatprep.subr.mxu0 0.0
    %1572 = vmatpush1.xpose.msra.mxu0 0.0
    %1573 = vmatprep.subr.mxu0 0.0
    %1574 = vmatpush1.xpose.msra.mxu0 0.0
    %1575 = vmatprep.subr.mxu0 0.0
    %1576 = vmatpush1.xpose.msra.mxu0 0.0
    %1577 = vmatprep.subr.mxu0 0.0
    %1578 = vmatpush1.xpose.msra.mxu0 0.0
    %1579 = vmatprep.subr.mxu0 0.0
    %1580 = vmatpush1.xpose.msra.mxu0 0.0
    %1581 = vmatprep.subr.mxu0 0.0
    %1582 = vmatpush1.xpose.msra.mxu0 0.0
    %1583 = vmatprep.subr.mxu0 0.0
    %1584 = vmatpush1.xpose.msra.mxu0 0.0
    %1585 = vmatprep.subr.mxu0 0.0
    %1586 = vmatpush1.xpose.msra.mxu0 0.0
    %1587 = vmatprep.subr.mxu0 0.0
    %1588 = vmatpush1.xpose.msra.mxu0 0.0
    %1589 = vmatprep.subr.mxu0 0.0
    %1590 = vmatpush1.xpose.msra.mxu0 0.0
    %1591 = vmatprep.subr.mxu0 0.0
    %1592 = vmatpush1.xpose.msra.mxu0 0.0
    %1593 = vmatprep.subr.mxu0 0.0
    %1594 = vmatpush1.xpose.msra.mxu0 0.0
    %1595 = vmatprep.subr.mxu0 0.0
    %1596 = vmatpush1.xpose.msra.mxu0 0.0
    %1597 = vmatprep.subr.mxu0 0.0
    %1598 = vmatpush1.xpose.msra.mxu0 0.0
    %1599 = vmatprep.subr.mxu0 0.0
    %1600 = vmatpush1.xpose.msra.mxu0 0.0
    %1601 = vmatprep.subr.mxu0 0.0
    %1602 = vmatpush1.xpose.msra.mxu0 0.0
    %1603 = vmatprep.subr.mxu0 0.0
    %1604 = vmatpush1.xpose.msra.mxu0 0.0
    %1605 = vmatprep.subr.mxu0 0.0
    %1606 = vmatpush1.xpose.msra.mxu0 0.0
    %1607 = vmatprep.subr.mxu0 0.0
    %1608 = vmatpush1.xpose.msra.mxu0 0.0
    %1609 = vmatprep.subr.mxu0 0.0
    %1610 = vmatpush1.xpose.msra.mxu0 0.0
    %1611 = vmatprep.mubr.f32.mxu0 0.0
    %1612 = vmatmul.mubr.f32.gmra.mrb[0].mxu0 %v1546
    %v1613 = vpop.f32.mrb[0].mxu0
    %v1614 = vadd.f32 0.0, %v1613
    %v1615 = vpop.f32.mrb[0].mxu0
    %1616 = vdwg.mxu0
    %1617 = vst [vmem:[#allocation7 + $0x1] sm:$0x1] %v1228
    %1618 = vst [vmem:[#allocation9 + $0x1] sm:$0x1] %v1546
    %1619 = vrot.lane.b32.xlu0 %v1028, 104
    %v1620 = vpop.permute.xlu0 %1619
    %1622 = vst.msk [vmem:[#allocation10 + $0x1] sm:$0x1] %vm456, %v1620
    %1623 = vst.msk [vmem:[#allocation12 + $0x1] sm:$0x1] %vm456, %v1614
    %v1624 = vld [vmem:[#allocation2 + $0x2] sm:$0x1]
    %v1625 = vpack.c.bf16 %v1614, %v1614
    %v1627 = vsel %vm178, %v1625, 0
    %1629 = vmatprep.subr.bf16.mxu0 0
    %1630 = vmatpush1.bf16.msra.mxu0 %v175
    %1631 = vmatprep.subr.bf16.mxu0 0
    %1632 = vmatpush1.bf16.msra.mxu0 %v183
    %1633 = vmatprep.subr.bf16.mxu0 0
    %1634 = vmatpush1.bf16.msra.mxu0 0
    %1635 = vmatprep.subr.bf16.mxu0 0
    %1636 = vmatpush1.bf16.msra.mxu0 0
    %1637 = vmatprep.subr.bf16.mxu0 0
    %1638 = vmatpush1.bf16.msra.mxu0 0
    %1639 = vmatprep.subr.bf16.mxu0 0
    %1640 = vmatpush1.bf16.msra.mxu0 0
    %1641 = vmatprep.subr.bf16.mxu0 0
    %1642 = vmatpush1.bf16.msra.mxu0 0
    %1643 = vmatprep.subr.bf16.mxu0 0
    %1644 = vmatpush1.bf16.msra.mxu0 0
    %1645 = vmatprep.subr.bf16.mxu0 0
    %1646 = vmatpush1.bf16.msra.mxu0 0
    %1647 = vmatprep.subr.bf16.mxu0 0
    %1648 = vmatpush1.bf16.msra.mxu0 0
    %1649 = vmatprep.subr.bf16.mxu0 0
    %1650 = vmatpush1.bf16.msra.mxu0 0
    %1651 = vmatprep.subr.bf16.mxu0 0
    %1652 = vmatpush1.bf16.msra.mxu0 0
    %1653 = vmatprep.subr.bf16.mxu0 0
    %1654 = vmatpush1.bf16.msra.mxu0 0
    %1655 = vmatprep.subr.bf16.mxu0 0
    %1656 = vmatpush1.bf16.msra.mxu0 0
    %1657 = vmatprep.subr.bf16.mxu0 0
    %1658 = vmatpush1.bf16.msra.mxu0 0
    %1659 = vmatprep.subr.bf16.mxu0 0
    %1660 = vmatpush1.bf16.msra.mxu0 0
    %1661 = vmatprep.mubr.bf16.mxu0 0
    %1662 = vmatmul.mubr.bf16.gmra.mrb[0].mxu0 %v1627
    %v1663 = vpop.f32.mrb[0].mxu0
    %v1664 = vadd.f32 0.0, %v1663
    %v1665 = vpop.f32.mrb[0].mxu0
    %v1666 = vpop.f32.mrb[0].mxu0
    %v1667 = vpop.f32.mrb[0].mxu0
    %1668 = vdwg.mxu0
    %v1669 = vadd.f32 %v1624, %v1664
    %v1670 = vxor.u32 %v1669, 2147483648
    %v1671 = vmul.f32 %v1670, 1.442695
    %v1672 = vpow.pop %v1671
    %v1673 = vadd.f32 %v1672, 1.0
    %v1674 = vrcp.pop %v1673
    %v1675 = vmul.f32 1.0, %v1674
    %v1676 = vpack.c.bf16 %v1675, %v1675
    %1677 = vmatprep.subr.bf16.mxu0 0
    %1678 = vmatpush1.bf16.msra.mxu0 %v265
    %1679 = vmatprep.subr.bf16.mxu0 0
    %1680 = vmatpush1.bf16.msra.mxu0 %v266
    %1681 = vmatprep.subr.bf16.mxu0 0
    %1682 = vmatpush1.bf16.msra.mxu0 %v267
    %1683 = vmatprep.subr.bf16.mxu0 0
    %1684 = vmatpush1.bf16.msra.mxu0 %v268
    %1685 = vmatprep.subr.bf16.mxu0 0
    %1686 = vmatpush1.bf16.msra.mxu0 %v269
    %1687 = vmatprep.subr.bf16.mxu0 0
    %1688 = vmatpush1.bf16.msra.mxu0 %v270
    %1689 = vmatprep.subr.bf16.mxu0 0
    %1690 = vmatpush1.bf16.msra.mxu0 %v271
    %1691 = vmatprep.subr.bf16.mxu0 0
    %1692 = vmatpush1.bf16.msra.mxu0 %v272
    %1693 = vmatprep.subr.bf16.mxu0 0
    %1694 = vmatpush1.bf16.msra.mxu0 0
    %1695 = vmatprep.subr.bf16.mxu0 0
    %1696 = vmatpush1.bf16.msra.mxu0 0
    %1697 = vmatprep.subr.bf16.mxu0 0
    %1698 = vmatpush1.bf16.msra.mxu0 0
    %1699 = vmatprep.subr.bf16.mxu0 0
    %1700 = vmatpush1.bf16.msra.mxu0 0
    %1701 = vmatprep.subr.bf16.mxu0 0
    %1702 = vmatpush1.bf16.msra.mxu0 0
    %1703 = vmatprep.subr.bf16.mxu0 0
    %1704 = vmatpush1.bf16.msra.mxu0 0
    %1705 = vmatprep.subr.bf16.mxu0 0
    %1706 = vmatpush1.bf16.msra.mxu0 0
    %1707 = vmatprep.subr.bf16.mxu0 0
    %1708 = vmatpush1.bf16.msra.mxu0 0
    %1709 = vmatprep.mubr.bf16.mxu0 0
    %1710 = vmatmul.mubr.bf16.gmra.mrb[0].mxu0 %v1676
    %v1711 = vpop.f32.mrb[0].mxu0
    %v1712 = vadd.f32 %v71, %v1711
    %v1713 = vpop.f32.mrb[0].mxu0
    %v1714 = vpop.f32.mrb[0].mxu0
    %v1715 = vpop.f32.mrb[0].mxu0
    %1716 = vdwg.mxu0
    %v1717 = vtanh.pop %v1712
    %v1718 = vxor.u32 %v1712, 2147483648
    %v1719 = vmul.f32 %v1718, 1.442695
    %v1720 = vpow.pop %v1719
    %v1721 = vadd.f32 %v1720, 1.0
    %v1722 = vrcp.pop %v1721
    %v1723 = vmul.f32 1.0, %v1722
    %v1724 = vmax.f32 %v1712, 0.0
    %vm1725 = vcmp.ne.f32.partialorder %v1712, %v1712
    %v1726 = vadd.f32 %v1712, 0.0
    %v1727 = vand.u32 2147483647, %v1712
    %v1728 = vsub.f32 0.0, %v1727
    %v1729 = vmul.f32 %v1728, 1.442695
    %v1730 = vpow.pop %v1729
    %v1731 = vadd.f32 %v1730, 1.0
    %v1732 = vlog2.pop %v1731
    %v1733 = vmul.f32 %v1732, 0.6931472
    %v1734 = vmul.f32 -0.5, %v1730
    %v1735 = vadd.f32 %v1734, 1.0
    %v1736 = vmul.f32 %v1735, %v1730
    %v1737 = vand.u32 2147483647, %v1730
    %vm1738 = vcmp.lt.f32.partialorder %v1737, 0.0004427343
    %v1739 = vsel %vm1738, %v1736, %v1733
    %v1740 = vadd.f32 %v1724, %v1739
    %v1741 = vsel %vm1725, %v1726, %v1740
    %v1742 = vadd.f32 %v1741, 1.0
    %v1743 = vsel %vm347, %v1712, -inf
    %1744 = vmax.xlane.f32.xlu0 %v1743
    %v1745 = vpop.xlane.xlu0 %1744
    %v1746 = vsub.f32 %v1712, %v1745
    %v1747 = vmul.f32 %v1746, 1.442695
    %v1748 = vpow.pop %v1747
    %1750 = vrot.lane.b32.xlu0 %v1748, 34
    %v1751 = vpop.permute.xlu0 %1750
    %v1753 = vsel %vm358, %v1751, 0.0
    %1754 = vadd.xlane.f32.xlu0 %v1753
    %v1755 = vpop.xlane.xlu0 %1754
    %v1756 = vrcp.pop %v1755
    %v1757 = vmul.f32 %v1748, %v1756
    %1758 = vrot.lane.b32.xlu0 %v1748, 31
    %v1759 = vpop.permute.xlu0 %1758
    %v1761 = vsel %vm358, %v1759, 0.0
    %1762 = vadd.xlane.f32.xlu0 %v1761
    %v1763 = vpop.xlane.xlu0 %1762
    %v1764 = vrcp.pop %v1763
    %v1765 = vmul.f32 %v1748, %v1764
    %1767 = vrot.lane.b32.xlu0 %v1717, 80
    %v1768 = vpop.permute.xlu0 %1767
    %v1769 = vsel %vm178, %v1768, 0
    %1771 = vmatprep.subr.mxu0 0.0
    %1772 = vmatpush1.msra.mxu0 %v1384
    %1773 = vmatprep.subr.mxu0 0.0
    %1774 = vmatpush1.msra.mxu0 %v1385
    %1775 = vmatprep.subr.mxu0 0.0
    %1776 = vmatpush1.msra.mxu0 %v1392
    %1777 = vmatprep.subr.mxu0 0.0
    %1778 = vmatpush1.msra.mxu0 0.0
    %1779 = vmatprep.subr.mxu0 0.0
    %1780 = vmatpush1.msra.mxu0 0.0
    %1781 = vmatprep.subr.mxu0 0.0
    %1782 = vmatpush1.msra.mxu0 0.0
    %1783 = vmatprep.subr.mxu0 0.0
    %1784 = vmatpush1.msra.mxu0 0.0
    %1785 = vmatprep.subr.mxu0 0.0
    %1786 = vmatpush1.msra.mxu0 0.0
    %1787 = vmatprep.subr.mxu0 0.0
    %1788 = vmatpush1.msra.mxu0 0.0
    %1789 = vmatprep.subr.mxu0 0.0
    %1790 = vmatpush1.msra.mxu0 0.0
    %1791 = vmatprep.subr.mxu0 0.0
    %1792 = vmatpush1.msra.mxu0 0.0
    %1793 = vmatprep.subr.mxu0 0.0
    %1794 = vmatpush1.msra.mxu0 0.0
    %1795 = vmatprep.subr.mxu0 0.0
    %1796 = vmatpush1.msra.mxu0 0.0
    %1797 = vmatprep.subr.mxu0 0.0
    %1798 = vmatpush1.msra.mxu0 0.0
    %1799 = vmatprep.subr.mxu0 0.0
    %1800 = vmatpush1.msra.mxu0 0.0
    %1801 = vmatprep.subr.mxu0 0.0
    %1802 = vmatpush1.msra.mxu0 0.0
    %1803 = vmatprep.subr.mxu0 0.0
    %1804 = vmatpush1.msra.mxu0 0.0
    %1805 = vmatprep.subr.mxu0 0.0
    %1806 = vmatpush1.msra.mxu0 0.0
    %1807 = vmatprep.subr.mxu0 0.0
    %1808 = vmatpush1.msra.mxu0 0.0
    %1809 = vmatprep.subr.mxu0 0.0
    %1810 = vmatpush1.msra.mxu0 0.0
    %1811 = vmatprep.subr.mxu0 0.0
    %1812 = vmatpush1.msra.mxu0 0.0
    %1813 = vmatprep.subr.mxu0 0.0
    %1814 = vmatpush1.msra.mxu0 0.0
    %1815 = vmatprep.subr.mxu0 0.0
    %1816 = vmatpush1.msra.mxu0 0.0
    %1817 = vmatprep.subr.mxu0 0.0
    %1818 = vmatpush1.msra.mxu0 0.0
    %1819 = vmatprep.subr.mxu0 0.0
    %1820 = vmatpush1.msra.mxu0 0.0
    %1821 = vmatprep.subr.mxu0 0.0
    %1822 = vmatpush1.msra.mxu0 0.0
    %1823 = vmatprep.subr.mxu0 0.0
    %1824 = vmatpush1.msra.mxu0 0.0
    %1825 = vmatprep.subr.mxu0 0.0
    %1826 = vmatpush1.msra.mxu0 0.0
    %1827 = vmatprep.subr.mxu0 0.0
    %1828 = vmatpush1.msra.mxu0 0.0
    %1829 = vmatprep.subr.mxu0 0.0
    %1830 = vmatpush1.msra.mxu0 0.0
    %1831 = vmatprep.subr.mxu0 0.0
    %1832 = vmatpush1.msra.mxu0 0.0
    %1833 = vmatprep.subr.mxu0 0.0
    %1834 = vmatpush1.msra.mxu0 0.0
    %1835 = vmatprep.mubr.f32.mxu0 0.0
    %1836 = vmatmul.mubr.f32.gmra.mrb[0].mxu0 %v1769
    %v1837 = vpop.f32.mrb[0].mxu0
    %v1838 = vadd.f32 0.0, %v1837
    %v1839 = vpop.f32.mrb[0].mxu0
    %1840 = vdwg.mxu0
    %v1841 = vmul.f32 %v1717, %v1717
    %1843 = vrot.lane.b32.xlu0 %v1841, 80
    %v1844 = vpop.permute.xlu0 %1843
    %v1846 = vsel %vm456, %v1844, 0.0
    %1847 = vadd.xlane.f32.xlu0 %v1846
    %v1848 = vpop.xlane.xlu0 %1847
    %v1849 = vmax.f32 %v1848, 1e-16
    %v1850 = vmul.f32 %v1482, %v1849
    %v1851 = vrsqrt.pop %v1850
    %v1852 = vmul.f32 %v1838, %v1851
    %1854 = vset.pattern.permute.xlu0 88
    %1855 = vperm.xlu0 %1854, %v1741
    %v1856 = vpop.permute.xlu0 %1855
    %v1858 = vmul.f32 %v1856, %v1852
    %v1859 = vsel %vm479, %v1858, -inf
    %1860 = vmax.xlane.f32.xlu0 %v1859
    %v1861 = vpop.xlane.xlu0 %1860
    %v1862 = vsub.f32 %v1858, %v1861
    %v1863 = vmul.f32 %v1862, 1.442695
    %v1864 = vpow.pop %v1863
    %v1865 = vsel %vm479, %v1864, 0.0
    %1866 = vadd.xlane.f32.xlu0 %v1865
    %v1867 = vpop.xlane.xlu0 %1866
    %v1868 = vrcp.pop %v1867
    %v1869 = vmul.f32 %v1864, %v1868
    %1871 = vset.pattern.permute.xlu0 90
    %1872 = vperm.xlu0 %1871, %v1723
    %v1873 = vpop.permute.xlu0 %1872
    %v1875 = vmul.f32 %v1873, %v1869
    %v1876 = vsub.f32 1.0, %v1723
    %1878 = vset.pattern.permute.xlu0 90
    %1879 = vperm.xlu0 %1878, %v1876
    %v1880 = vpop.permute.xlu0 %1879
    %v1882 = vmul.f32 %v1880, %v1228
    %v1883 = vadd.f32 %v1875, %v1882
    %1884 = vrot.lane.b32.xlu0 %v1883, 1
    %v1885 = vpop.permute.xlu0 %1884
    %1887 = vset.pattern.permute.xlu0 94
    %1888 = vperm.xlu0 %1887, %v1757
    %v1889 = vpop.permute.xlu0 %1888
    %v1891 = vmul.f32 %v1889, %v1885
    %1892 = vset.pattern.permute.xlu0 95
    %1893 = vperm.xlu0 %1892, %v1757
    %v1894 = vpop.permute.xlu0 %1893
    %v1896 = vmul.f32 %v1894, %v1883
    %v1897 = vadd.f32 %v1891, %v1896
    %1898 = vrot.lane.b32.xlu0 %v1883, 127
    %v1899 = vpop.permute.xlu0 %1898
    %1900 = vset.pattern.permute.xlu0 96
    %1901 = vperm.xlu0 %1900, %v1757
    %v1902 = vpop.permute.xlu0 %1901
    %v1904 = vmul.f32 %v1902, %v1899
    %v1905 = vadd.f32 %v1897, %v1904
    %v1906 = vadd.f32 %v1905, 1e-16
    %1908 = vset.pattern.permute.xlu0 92
    %1909 = vperm.xlu0 %1908, %v1742
    %v1910 = vpop.permute.xlu0 %1909
    %v1912 = vpow.f32 %v1906, %v1910
    %v1913 = vsel %vm479, %v1912, 0.0
    %1914 = vadd.xlane.f32.xlu0 %v1913
    %v1915 = vpop.xlane.xlu0 %1914
    %v1916 = vrcp.pop %v1915
    %v1917 = vmul.f32 %v1912, %v1916
    %v1918 = vsel %vm166, %v1723, %v1717
    %1919 = vxpose.xlu0.b32.start [1/16] %v1918, 128
    %1920 = vxpose.xlu0.b32.cont [2/16] 0.0, 128
    %1921 = vxpose.xlu0.b32.cont [3/16] 0.0, 128
    %1922 = vxpose.xlu0.b32.cont [4/16] 0.0, 128
    %1923 = vxpose.xlu0.b32.cont [5/16] 0.0, 128
    %1924 = vxpose.xlu0.b32.cont [6/16] 0.0, 128
    %1925 = vxpose.xlu0.b32.cont [7/16] 0.0, 128
    %1926 = vxpose.xlu0.b32.cont [8/16] 0.0, 128
    %1927 = vxpose.xlu0.b32.cont [9/16] 0.0, 128
    %1928 = vxpose.xlu0.b32.cont [10/16] 0.0, 128
    %1929 = vxpose.xlu0.b32.cont [11/16] 0.0, 128
    %1930 = vxpose.xlu0.b32.cont [12/16] 0.0, 128
    %1931 = vxpose.xlu0.b32.cont [13/16] 0.0, 128
    %1932 = vxpose.xlu0.b32.cont [14/16] 0.0, 128
    %1933 = vxpose.xlu0.b32.cont [15/16] 0.0, 128
    %1934 = vxpose.xlu0.b32.end [16/16] 0.0, 128
    %v1935 = vpop.trf.xlu0
    %v1936 = vpop.trf.xlu0
    %v1937 = vpop.trf.xlu0
    %v1938 = vpop.trf.xlu0
    %v1939 = vpop.trf.xlu0
    %v1940 = vpop.trf.xlu0
    %v1941 = vpop.trf.xlu0
    %v1942 = vpop.trf.xlu0
    %v1943 = vpop.trf.xlu0
    %v1944 = vpop.trf.xlu0
    %v1945 = vpop.trf.xlu0
    %v1946 = vpop.trf.xlu0
    %v1947 = vpop.trf.xlu0
    %v1948 = vpop.trf.xlu0
    %v1949 = vpop.trf.xlu0
    %v1950 = vpop.trf.xlu0
    %v1952 = vsel %vm572, %v1935, 0
    %v1955 = vsel %vm572, %v1936, 0
    %v1958 = vsel %vm572, %v1937, 0
    %v1961 = vsel %vm572, %v1938, 0
    %v1964 = vsel %vm572, %v1939, 0
    %v1967 = vsel %vm572, %v1940, 0
    %v1970 = vsel %vm479, %v1917, 0
    %1972 = vmatprep.subr.mxu0 0.0
    %1973 = vmatpush1.msra.mxu0 %v1970
    %1974 = vmatprep.subr.mxu0 0.0
    %1975 = vmatpush1.msra.mxu0 0.0
    %1976 = vmatprep.subr.mxu0 0.0
    %1977 = vmatpush1.msra.mxu0 0.0
    %1978 = vmatprep.subr.mxu0 0.0
    %1979 = vmatpush1.msra.mxu0 0.0
    %1980 = vmatprep.subr.mxu0 0.0
    %1981 = vmatpush1.msra.mxu0 0.0
    %1982 = vmatprep.subr.mxu0 0.0
    %1983 = vmatpush1.msra.mxu0 0.0
    %1984 = vmatprep.subr.mxu0 0.0
    %1985 = vmatpush1.msra.mxu0 0.0
    %1986 = vmatprep.subr.mxu0 0.0
    %1987 = vmatpush1.msra.mxu0 0.0
    %1988 = vmatprep.subr.mxu0 0.0
    %1989 = vmatpush1.msra.mxu0 0.0
    %1990 = vmatprep.subr.mxu0 0.0
    %1991 = vmatpush1.msra.mxu0 0.0
    %1992 = vmatprep.subr.mxu0 0.0
    %1993 = vmatpush1.msra.mxu0 0.0
    %1994 = vmatprep.subr.mxu0 0.0
    %1995 = vmatpush1.msra.mxu0 0.0
    %1996 = vmatprep.subr.mxu0 0.0
    %1997 = vmatpush1.msra.mxu0 0.0
    %1998 = vmatprep.subr.mxu0 0.0
    %1999 = vmatpush1.msra.mxu0 0.0
    %2000 = vmatprep.subr.mxu0 0.0
    %2001 = vmatpush1.msra.mxu0 0.0
    %2002 = vmatprep.subr.mxu0 0.0
    %2003 = vmatpush1.msra.mxu0 0.0
    %2004 = vmatprep.subr.mxu0 0.0
    %2005 = vmatpush1.msra.mxu0 0.0
    %2006 = vmatprep.subr.mxu0 0.0
    %2007 = vmatpush1.msra.mxu0 0.0
    %2008 = vmatprep.subr.mxu0 0.0
    %2009 = vmatpush1.msra.mxu0 0.0
    %2010 = vmatprep.subr.mxu0 0.0
    %2011 = vmatpush1.msra.mxu0 0.0
    %2012 = vmatprep.subr.mxu0 0.0
    %2013 = vmatpush1.msra.mxu0 0.0
    %2014 = vmatprep.subr.mxu0 0.0
    %2015 = vmatpush1.msra.mxu0 0.0
    %2016 = vmatprep.subr.mxu0 0.0
    %2017 = vmatpush1.msra.mxu0 0.0
    %2018 = vmatprep.subr.mxu0 0.0
    %2019 = vmatpush1.msra.mxu0 0.0
    %2020 = vmatprep.subr.mxu0 0.0
    %2021 = vmatpush1.msra.mxu0 0.0
    %2022 = vmatprep.subr.mxu0 0.0
    %2023 = vmatpush1.msra.mxu0 0.0
    %2024 = vmatprep.subr.mxu0 0.0
    %2025 = vmatpush1.msra.mxu0 0.0
    %2026 = vmatprep.subr.mxu0 0.0
    %2027 = vmatpush1.msra.mxu0 0.0
    %2028 = vmatprep.subr.mxu0 0.0
    %2029 = vmatpush1.msra.mxu0 0.0
    %2030 = vmatprep.subr.mxu0 0.0
    %2031 = vmatpush1.msra.mxu0 0.0
    %2032 = vmatprep.subr.mxu0 0.0
    %2033 = vmatpush1.msra.mxu0 0.0
    %2034 = vmatprep.subr.mxu0 0.0
    %2035 = vmatpush1.msra.mxu0 0.0
    %2036 = vmatprep.mubr.f32.mxu0 0.0
    %2037 = vmatmul.mubr.f32.gmra.mrb[0].mxu0 %v1952
    %v2038 = vpop.f32.mrb[0].mxu0
    %v2039 = vadd.f32 0.0, %v2038
    %v2040 = vpop.f32.mrb[0].mxu0
    %2041 = vmatprep.mubr.f32.mxu0 0.0
    %2042 = vmatmul.mubr.f32.gmra.mrb[0].mxu0 %v1955
    %v2043 = vpop.f32.mrb[0].mxu0
    %v2044 = vadd.f32 0.0, %v2043
    %v2045 = vpop.f32.mrb[0].mxu0
    %2046 = vmatprep.mubr.f32.mxu0 0.0
    %2047 = vmatmul.mubr.f32.gmra.mrb[0].mxu0 %v1958
    %v2048 = vpop.f32.mrb[0].mxu0
    %v2049 = vadd.f32 0.0, %v2048
    %v2050 = vpop.f32.mrb[0].mxu0
    %2051 = vmatprep.mubr.f32.mxu0 0.0
    %2052 = vmatmul.mubr.f32.gmra.mrb[0].mxu0 %v1961
    %v2053 = vpop.f32.mrb[0].mxu0
    %v2054 = vadd.f32 0.0, %v2053
    %v2055 = vpop.f32.mrb[0].mxu0
    %2056 = vmatprep.mubr.f32.mxu0 0.0
    %2057 = vmatmul.mubr.f32.gmra.mrb[0].mxu0 %v1964
    %v2058 = vpop.f32.mrb[0].mxu0
    %v2059 = vadd.f32 0.0, %v2058
    %v2060 = vpop.f32.mrb[0].mxu0
    %2061 = vmatprep.mubr.f32.mxu0 0.0
    %2062 = vmatmul.mubr.f32.gmra.mrb[0].mxu0 %v1967
    %v2063 = vpop.f32.mrb[0].mxu0
    %v2064 = vadd.f32 0.0, %v2063
    %v2065 = vpop.f32.mrb[0].mxu0
    %2066 = vdwg.mxu0
    %v2067 = vsub.f32 1.0, %v2039
    %v2068 = vsub.f32 1.0, %v2044
    %v2069 = vsub.f32 1.0, %v2049
    %v2070 = vmul.f32 %v1384, %v2067
    %v2071 = vmul.f32 %v1385, %v2068
    %v2072 = vmul.f32 %v1386, %v2069
    %v2073 = vadd.f32 %v2070, %v2054
    %v2074 = vadd.f32 %v2071, %v2059
    %v2075 = vadd.f32 %v2072, %v2064
    %2076 = vrot.lane.b32.xlu0 %v1717, 60
    %v2077 = vpop.permute.xlu0 %2076
    %v2078 = vsel %vm178, %v2077, 0
    %v2081 = vsel %vm377, %v2075, 0
    %2083 = vmatprep.subr.mxu0 0.0
    %2084 = vmatpush1.msra.mxu0 %v2073
    %2085 = vmatprep.subr.mxu0 0.0
    %2086 = vmatpush1.msra.mxu0 %v2074
    %2087 = vmatprep.subr.mxu0 0.0
    %2088 = vmatpush1.msra.mxu0 %v2081
    %2089 = vmatprep.subr.mxu0 0.0
    %2090 = vmatpush1.msra.mxu0 0.0
    %2091 = vmatprep.subr.mxu0 0.0
    %2092 = vmatpush1.msra.mxu0 0.0
    %2093 = vmatprep.subr.mxu0 0.0
    %2094 = vmatpush1.msra.mxu0 0.0
    %2095 = vmatprep.subr.mxu0 0.0
    %2096 = vmatpush1.msra.mxu0 0.0
    %2097 = vmatprep.subr.mxu0 0.0
    %2098 = vmatpush1.msra.mxu0 0.0
    %2099 = vmatprep.subr.mxu0 0.0
    %2100 = vmatpush1.msra.mxu0 0.0
    %2101 = vmatprep.subr.mxu0 0.0
    %2102 = vmatpush1.msra.mxu0 0.0
    %2103 = vmatprep.subr.mxu0 0.0
    %2104 = vmatpush1.msra.mxu0 0.0
    %2105 = vmatprep.subr.mxu0 0.0
    %2106 = vmatpush1.msra.mxu0 0.0
    %2107 = vmatprep.subr.mxu0 0.0
    %2108 = vmatpush1.msra.mxu0 0.0
    %2109 = vmatprep.subr.mxu0 0.0
    %2110 = vmatpush1.msra.mxu0 0.0
    %2111 = vmatprep.subr.mxu0 0.0
    %2112 = vmatpush1.msra.mxu0 0.0
    %2113 = vmatprep.subr.mxu0 0.0
    %2114 = vmatpush1.msra.mxu0 0.0
    %2115 = vmatprep.subr.mxu0 0.0
    %2116 = vmatpush1.msra.mxu0 0.0
    %2117 = vmatprep.subr.mxu0 0.0
    %2118 = vmatpush1.msra.mxu0 0.0
    %2119 = vmatprep.subr.mxu0 0.0
    %2120 = vmatpush1.msra.mxu0 0.0
    %2121 = vmatprep.subr.mxu0 0.0
    %2122 = vmatpush1.msra.mxu0 0.0
    %2123 = vmatprep.subr.mxu0 0.0
    %2124 = vmatpush1.msra.mxu0 0.0
    %2125 = vmatprep.subr.mxu0 0.0
    %2126 = vmatpush1.msra.mxu0 0.0
    %2127 = vmatprep.subr.mxu0 0.0
    %2128 = vmatpush1.msra.mxu0 0.0
    %2129 = vmatprep.subr.mxu0 0.0
    %2130 = vmatpush1.msra.mxu0 0.0
    %2131 = vmatprep.subr.mxu0 0.0
    %2132 = vmatpush1.msra.mxu0 0.0
    %2133 = vmatprep.subr.mxu0 0.0
    %2134 = vmatpush1.msra.mxu0 0.0
    %2135 = vmatprep.subr.mxu0 0.0
    %2136 = vmatpush1.msra.mxu0 0.0
    %2137 = vmatprep.subr.mxu0 0.0
    %2138 = vmatpush1.msra.mxu0 0.0
    %2139 = vmatprep.subr.mxu0 0.0
    %2140 = vmatpush1.msra.mxu0 0.0
    %2141 = vmatprep.subr.mxu0 0.0
    %2142 = vmatpush1.msra.mxu0 0.0
    %2143 = vmatprep.subr.mxu0 0.0
    %2144 = vmatpush1.msra.mxu0 0.0
    %2145 = vmatprep.subr.mxu0 0.0
    %2146 = vmatpush1.msra.mxu0 0.0
    %2147 = vmatprep.mubr.f32.mxu0 0.0
    %2148 = vmatmul.mubr.f32.gmra.mrb[0].mxu0 %v2078
    %v2149 = vpop.f32.mrb[0].mxu0
    %v2150 = vadd.f32 0.0, %v2149
    %v2151 = vpop.f32.mrb[0].mxu0
    %2152 = vdwg.mxu0
    %2153 = vrot.lane.b32.xlu0 %v1841, 60
    %v2154 = vpop.permute.xlu0 %2153
    %v2156 = vsel %vm456, %v2154, 0.0
    %2157 = vadd.xlane.f32.xlu0 %v2156
    %v2158 = vpop.xlane.xlu0 %2157
    %v2159 = vmul.f32 %v2073, %v2073
    %v2160 = vmul.f32 %v2074, %v2074
    %v2161 = vmul.f32 %v2075, %v2075
    %v2162 = vadd.f32 %v2159, %v2160
    %v2163 = vsel %vm377, %v2161, 0.0
    %v2164 = vadd.f32 %v2162, %v2163
    %v2165 = vrot.slane %v2164, 4
    %v2166 = vadd.f32 %v2164, %v2165
    %v2167 = vrot.slane %v2166, 2
    %v2168 = vadd.f32 %v2166, %v2167
    %v2169 = vrot.slane %v2168, 1
    %v2170 = vadd.f32 %v2168, %v2169
    %v2171 = vmax.f32 %v2170, 1e-16
    %v2172 = vmax.f32 %v2158, 1e-16
    %v2173 = vmul.f32 %v2171, %v2172
    %v2174 = vrsqrt.pop %v2173
    %v2175 = vmul.f32 %v2150, %v2174
    %2176 = vset.pattern.permute.xlu0 89
    %2177 = vperm.xlu0 %2176, %v1741
    %v2178 = vpop.permute.xlu0 %2177
    %v2180 = vmul.f32 %v2178, %v2175
    %v2181 = vsel %vm479, %v2180, -inf
    %2182 = vmax.xlane.f32.xlu0 %v2181
    %v2183 = vpop.xlane.xlu0 %2182
    %v2184 = vsub.f32 %v2180, %v2183
    %v2185 = vmul.f32 %v2184, 1.442695
    %v2186 = vpow.pop %v2185
    %v2187 = vsel %vm479, %v2186, 0.0
    %2188 = vadd.xlane.f32.xlu0 %v2187
    %v2189 = vpop.xlane.xlu0 %2188
    %v2190 = vrcp.pop %v2189
    %v2191 = vmul.f32 %v2186, %v2190
    %2192 = vset.pattern.permute.xlu0 91
    %2193 = vperm.xlu0 %2192, %v1723
    %v2194 = vpop.permute.xlu0 %2193
    %v2196 = vmul.f32 %v2194, %v2191
    %2197 = vset.pattern.permute.xlu0 91
    %2198 = vperm.xlu0 %2197, %v1876
    %v2199 = vpop.permute.xlu0 %2198
    %v2201 = vmul.f32 %v2199, %v1546
    %v2202 = vadd.f32 %v2196, %v2201
    %2203 = vrot.lane.b32.xlu0 %v2202, 1
    %v2204 = vpop.permute.xlu0 %2203
    %2206 = vset.pattern.permute.xlu0 97
    %2207 = vperm.xlu0 %2206, %v1765
    %v2208 = vpop.permute.xlu0 %2207
    %v2210 = vmul.f32 %v2208, %v2204
    %2211 = vset.pattern.permute.xlu0 98
    %2212 = vperm.xlu0 %2211, %v1765
    %v2213 = vpop.permute.xlu0 %2212
    %v2215 = vmul.f32 %v2213, %v2202
    %v2216 = vadd.f32 %v2210, %v2215
    %2217 = vrot.lane.b32.xlu0 %v2202, 127
    %v2218 = vpop.permute.xlu0 %2217
    %2219 = vset.pattern.permute.xlu0 99
    %2220 = vperm.xlu0 %2219, %v1765
    %v2221 = vpop.permute.xlu0 %2220
    %v2223 = vmul.f32 %v2221, %v2218
    %v2224 = vadd.f32 %v2216, %v2223
    %v2225 = vadd.f32 %v2224, 1e-16
    %2226 = vset.pattern.permute.xlu0 93
    %2227 = vperm.xlu0 %2226, %v1742
    %v2228 = vpop.permute.xlu0 %2227
    %v2230 = vpow.f32 %v2225, %v2228
    %v2231 = vsel %vm479, %v2230, 0.0
    %2232 = vadd.xlane.f32.xlu0 %v2231
    %v2233 = vpop.xlane.xlu0 %2232
    %v2234 = vrcp.pop %v2233
    %v2235 = vmul.f32 %v2230, %v2234
    %2236 = vmatprep.subr.mxu0 0.0
    %2237 = vmatpush1.xpose.msra.mxu0 %v2073
    %2238 = vmatprep.subr.mxu0 0.0
    %2239 = vmatpush1.xpose.msra.mxu0 %v2074
    %2240 = vmatprep.subr.mxu0 0.0
    %2241 = vmatpush1.xpose.msra.mxu0 %v2075
    %2242 = vmatprep.subr.mxu0 0.0
    %2243 = vmatpush1.xpose.msra.mxu0 0.0
    %2244 = vmatprep.subr.mxu0 0.0
    %2245 = vmatpush1.xpose.msra.mxu0 0.0
    %2246 = vmatprep.subr.mxu0 0.0
    %2247 = vmatpush1.xpose.msra.mxu0 0.0
    %2248 = vmatprep.subr.mxu0 0.0
    %2249 = vmatpush1.xpose.msra.mxu0 0.0
    %2250 = vmatprep.subr.mxu0 0.0
    %2251 = vmatpush1.xpose.msra.mxu0 0.0
    %2252 = vmatprep.subr.mxu0 0.0
    %2253 = vmatpush1.xpose.msra.mxu0 0.0
    %2254 = vmatprep.subr.mxu0 0.0
    %2255 = vmatpush1.xpose.msra.mxu0 0.0
    %2256 = vmatprep.subr.mxu0 0.0
    %2257 = vmatpush1.xpose.msra.mxu0 0.0
    %2258 = vmatprep.subr.mxu0 0.0
    %2259 = vmatpush1.xpose.msra.mxu0 0.0
    %2260 = vmatprep.subr.mxu0 0.0
    %2261 = vmatpush1.xpose.msra.mxu0 0.0
    %2262 = vmatprep.subr.mxu0 0.0
    %2263 = vmatpush1.xpose.msra.mxu0 0.0
    %2264 = vmatprep.subr.mxu0 0.0
    %2265 = vmatpush1.xpose.msra.mxu0 0.0
    %2266 = vmatprep.subr.mxu0 0.0
    %2267 = vmatpush1.xpose.msra.mxu0 0.0
    %2268 = vmatprep.subr.mxu0 0.0
    %2269 = vmatpush1.xpose.msra.mxu0 0.0
    %2270 = vmatprep.subr.mxu0 0.0
    %2271 = vmatpush1.xpose.msra.mxu0 0.0
    %2272 = vmatprep.subr.mxu0 0.0
    %2273 = vmatpush1.xpose.msra.mxu0 0.0
    %2274 = vmatprep.subr.mxu0 0.0
    %2275 = vmatpush1.xpose.msra.mxu0 0.0
    %2276 = vmatprep.subr.mxu0 0.0
    %2277 = vmatpush1.xpose.msra.mxu0 0.0
    %2278 = vmatprep.subr.mxu0 0.0
    %2279 = vmatpush1.xpose.msra.mxu0 0.0
    %2280 = vmatprep.subr.mxu0 0.0
    %2281 = vmatpush1.xpose.msra.mxu0 0.0
    %2282 = vmatprep.subr.mxu0 0.0
    %2283 = vmatpush1.xpose.msra.mxu0 0.0
    %2284 = vmatprep.subr.mxu0 0.0
    %2285 = vmatpush1.xpose.msra.mxu0 0.0
    %2286 = vmatprep.subr.mxu0 0.0
    %2287 = vmatpush1.xpose.msra.mxu0 0.0
    %2288 = vmatprep.subr.mxu0 0.0
    %2289 = vmatpush1.xpose.msra.mxu0 0.0
    %2290 = vmatprep.subr.mxu0 0.0
    %2291 = vmatpush1.xpose.msra.mxu0 0.0
    %2292 = vmatprep.subr.mxu0 0.0
    %2293 = vmatpush1.xpose.msra.mxu0 0.0
    %2294 = vmatprep.subr.mxu0 0.0
    %2295 = vmatpush1.xpose.msra.mxu0 0.0
    %2296 = vmatprep.subr.mxu0 0.0
    %2297 = vmatpush1.xpose.msra.mxu0 0.0
    %2298 = vmatprep.subr.mxu0 0.0
    %2299 = vmatpush1.xpose.msra.mxu0 0.0
    %2300 = vmatprep.mubr.f32.mxu0 0.0
    %2301 = vmatmul.mubr.f32.gmra.mrb[0].mxu0 %v2235
    %v2302 = vpop.f32.mrb[0].mxu0
    %v2303 = vadd.f32 0.0, %v2302
    %v2304 = vpop.f32.mrb[0].mxu0
    %2305 = vdwg.mxu0
    %2306 = vst [vmem:[#allocation7 + $0x2] sm:$0x1] %v1917
    %2307 = vst [vmem:[#allocation9 + $0x2] sm:$0x1] %v2235
    %2308 = vrot.lane.b32.xlu0 %v1717, 104
    %v2309 = vpop.permute.xlu0 %2308
    %2311 = vst.msk [vmem:[#allocation10 + $0x2] sm:$0x1] %vm456, %v2309
    %2312 = vst.msk [vmem:[#allocation12 + $0x2] sm:$0x1] %vm456, %v2303
    %v2313 = vld [vmem:[#allocation2 + $0x3] sm:$0x1]
    %v2314 = vpack.c.bf16 %v2303, %v2303
    %v2316 = vsel %vm178, %v2314, 0
    %2318 = vmatprep.subr.bf16.mxu0 0
    %2319 = vmatpush1.bf16.msra.mxu0 %v175
    %2320 = vmatprep.subr.bf16.mxu0 0
    %2321 = vmatpush1.bf16.msra.mxu0 %v183
    %2322 = vmatprep.subr.bf16.mxu0 0
    %2323 = vmatpush1.bf16.msra.mxu0 0
    %2324 = vmatprep.subr.bf16.mxu0 0
    %2325 = vmatpush1.bf16.msra.mxu0 0
    %2326 = vmatprep.subr.bf16.mxu0 0
    %2327 = vmatpush1.bf16.msra.mxu0 0
    %2328 = vmatprep.subr.bf16.mxu0 0
    %2329 = vmatpush1.bf16.msra.mxu0 0
    %2330 = vmatprep.subr.bf16.mxu0 0
    %2331 = vmatpush1.bf16.msra.mxu0 0
    %2332 = vmatprep.subr.bf16.mxu0 0
    %2333 = vmatpush1.bf16.msra.mxu0 0
    %2334 = vmatprep.subr.bf16.mxu0 0
    %2335 = vmatpush1.bf16.msra.mxu0 0
    %2336 = vmatprep.subr.bf16.mxu0 0
    %2337 = vmatpush1.bf16.msra.mxu0 0
    %2338 = vmatprep.subr.bf16.mxu0 0
    %2339 = vmatpush1.bf16.msra.mxu0 0
    %2340 = vmatprep.subr.bf16.mxu0 0
    %2341 = vmatpush1.bf16.msra.mxu0 0
    %2342 = vmatprep.subr.bf16.mxu0 0
    %2343 = vmatpush1.bf16.msra.mxu0 0
    %2344 = vmatprep.subr.bf16.mxu0 0
    %2345 = vmatpush1.bf16.msra.mxu0 0
    %2346 = vmatprep.subr.bf16.mxu0 0
    %2347 = vmatpush1.bf16.msra.mxu0 0
    %2348 = vmatprep.subr.bf16.mxu0 0
    %2349 = vmatpush1.bf16.msra.mxu0 0
    %2350 = vmatprep.mubr.bf16.mxu0 0
    %2351 = vmatmul.mubr.bf16.gmra.mrb[0].mxu0 %v2316
    %v2352 = vpop.f32.mrb[0].mxu0
    %v2353 = vadd.f32 0.0, %v2352
    %v2354 = vpop.f32.mrb[0].mxu0
    %v2355 = vpop.f32.mrb[0].mxu0
    %v2356 = vpop.f32.mrb[0].mxu0
    %2357 = vdwg.mxu0
    %v2358 = vadd.f32 %v2313, %v2353
    %v2359 = vxor.u32 %v2358, 2147483648
    %v2360 = vmul.f32 %v2359, 1.442695
    %v2361 = vpow.pop %v2360
    %v2362 = vadd.f32 %v2361, 1.0
    %v2363 = vrcp.pop %v2362
    %v2364 = vmul.f32 1.0, %v2363
    %v2365 = vpack.c.bf16 %v2364, %v2364
    %2366 = vmatprep.subr.bf16.mxu0 0
    %2367 = vmatpush1.bf16.msra.mxu0 %v265
    %2368 = vmatprep.subr.bf16.mxu0 0
    %2369 = vmatpush1.bf16.msra.mxu0 %v266
    %2370 = vmatprep.subr.bf16.mxu0 0
    %2371 = vmatpush1.bf16.msra.mxu0 %v267
    %2372 = vmatprep.subr.bf16.mxu0 0
    %2373 = vmatpush1.bf16.msra.mxu0 %v268
    %2374 = vmatprep.subr.bf16.mxu0 0
    %2375 = vmatpush1.bf16.msra.mxu0 %v269
    %2376 = vmatprep.subr.bf16.mxu0 0
    %2377 = vmatpush1.bf16.msra.mxu0 %v270
    %2378 = vmatprep.subr.bf16.mxu0 0
    %2379 = vmatpush1.bf16.msra.mxu0 %v271
    %2380 = vmatprep.subr.bf16.mxu0 0
    %2381 = vmatpush1.bf16.msra.mxu0 %v272
    %2382 = vmatprep.subr.bf16.mxu0 0
    %2383 = vmatpush1.bf16.msra.mxu0 0
    %2384 = vmatprep.subr.bf16.mxu0 0
    %2385 = vmatpush1.bf16.msra.mxu0 0
    %2386 = vmatprep.subr.bf16.mxu0 0
    %2387 = vmatpush1.bf16.msra.mxu0 0
    %2388 = vmatprep.subr.bf16.mxu0 0
    %2389 = vmatpush1.bf16.msra.mxu0 0
    %2390 = vmatprep.subr.bf16.mxu0 0
    %2391 = vmatpush1.bf16.msra.mxu0 0
    %2392 = vmatprep.subr.bf16.mxu0 0
    %2393 = vmatpush1.bf16.msra.mxu0 0
    %2394 = vmatprep.subr.bf16.mxu0 0
    %2395 = vmatpush1.bf16.msra.mxu0 0
    %2396 = vmatprep.subr.bf16.mxu0 0
    %2397 = vmatpush1.bf16.msra.mxu0 0
    %2398 = vmatprep.mubr.bf16.mxu0 0
    %2399 = vmatmul.mubr.bf16.gmra.mrb[0].mxu0 %v2365
    %v2400 = vpop.f32.mrb[0].mxu0
    %v2401 = vadd.f32 %v71, %v2400
    %v2402 = vpop.f32.mrb[0].mxu0
    %v2403 = vpop.f32.mrb[0].mxu0
    %v2404 = vpop.f32.mrb[0].mxu0
    %2405 = vdwg.mxu0
    %v2406 = vtanh.pop %v2401
    %v2407 = vxor.u32 %v2401, 2147483648
    %v2408 = vmul.f32 %v2407, 1.442695
    %v2409 = vpow.pop %v2408
    %v2410 = vadd.f32 %v2409, 1.0
    %v2411 = vrcp.pop %v2410
    %v2412 = vmul.f32 1.0, %v2411
    %v2413 = vmax.f32 %v2401, 0.0
    %vm2414 = vcmp.ne.f32.partialorder %v2401, %v2401
    %v2415 = vadd.f32 %v2401, 0.0
    %v2416 = vand.u32 2147483647, %v2401
    %v2417 = vsub.f32 0.0, %v2416
    %v2418 = vmul.f32 %v2417, 1.442695
    %v2419 = vpow.pop %v2418
    %v2420 = vadd.f32 %v2419, 1.0
    %v2421 = vlog2.pop %v2420
    %v2422 = vmul.f32 %v2421, 0.6931472
    %v2423 = vmul.f32 -0.5, %v2419
    %v2424 = vadd.f32 %v2423, 1.0
    %v2425 = vmul.f32 %v2424, %v2419
    %v2426 = vand.u32 2147483647, %v2419
    %vm2427 = vcmp.lt.f32.partialorder %v2426, 0.0004427343
    %v2428 = vsel %vm2427, %v2425, %v2422
    %v2429 = vadd.f32 %v2413, %v2428
    %v2430 = vsel %vm2414, %v2415, %v2429
    %v2431 = vadd.f32 %v2430, 1.0
    %v2432 = vsel %vm347, %v2401, -inf
    %2433 = vmax.xlane.f32.xlu0 %v2432
    %v2434 = vpop.xlane.xlu0 %2433
    %v2435 = vsub.f32 %v2401, %v2434
    %v2436 = vmul.f32 %v2435, 1.442695
    %v2437 = vpow.pop %v2436
    %2439 = vrot.lane.b32.xlu0 %v2437, 34
    %v2440 = vpop.permute.xlu0 %2439
    %v2442 = vsel %vm358, %v2440, 0.0
    %2443 = vadd.xlane.f32.xlu0 %v2442
    %v2444 = vpop.xlane.xlu0 %2443
    %v2445 = vrcp.pop %v2444
    %v2446 = vmul.f32 %v2437, %v2445
    %2447 = vrot.lane.b32.xlu0 %v2437, 31
    %v2448 = vpop.permute.xlu0 %2447
    %v2450 = vsel %vm358, %v2448, 0.0
    %2451 = vadd.xlane.f32.xlu0 %v2450
    %v2452 = vpop.xlane.xlu0 %2451
    %v2453 = vrcp.pop %v2452
    %v2454 = vmul.f32 %v2437, %v2453
    %2456 = vrot.lane.b32.xlu0 %v2406, 80
    %v2457 = vpop.permute.xlu0 %2456
    %v2458 = vsel %vm178, %v2457, 0
    %2460 = vmatprep.subr.mxu0 0.0
    %2461 = vmatpush1.msra.mxu0 %v2073
    %2462 = vmatprep.subr.mxu0 0.0
    %2463 = vmatpush1.msra.mxu0 %v2074
    %2464 = vmatprep.subr.mxu0 0.0
    %2465 = vmatpush1.msra.mxu0 %v2081
    %2466 = vmatprep.subr.mxu0 0.0
    %2467 = vmatpush1.msra.mxu0 0.0
    %2468 = vmatprep.subr.mxu0 0.0
    %2469 = vmatpush1.msra.mxu0 0.0
    %2470 = vmatprep.subr.mxu0 0.0
    %2471 = vmatpush1.msra.mxu0 0.0
    %2472 = vmatprep.subr.mxu0 0.0
    %2473 = vmatpush1.msra.mxu0 0.0
    %2474 = vmatprep.subr.mxu0 0.0
    %2475 = vmatpush1.msra.mxu0 0.0
    %2476 = vmatprep.subr.mxu0 0.0
    %2477 = vmatpush1.msra.mxu0 0.0
    %2478 = vmatprep.subr.mxu0 0.0
    %2479 = vmatpush1.msra.mxu0 0.0
    %2480 = vmatprep.subr.mxu0 0.0
    %2481 = vmatpush1.msra.mxu0 0.0
    %2482 = vmatprep.subr.mxu0 0.0
    %2483 = vmatpush1.msra.mxu0 0.0
    %2484 = vmatprep.subr.mxu0 0.0
    %2485 = vmatpush1.msra.mxu0 0.0
    %2486 = vmatprep.subr.mxu0 0.0
    %2487 = vmatpush1.msra.mxu0 0.0
    %2488 = vmatprep.subr.mxu0 0.0
    %2489 = vmatpush1.msra.mxu0 0.0
    %2490 = vmatprep.subr.mxu0 0.0
    %2491 = vmatpush1.msra.mxu0 0.0
    %2492 = vmatprep.subr.mxu0 0.0
    %2493 = vmatpush1.msra.mxu0 0.0
    %2494 = vmatprep.subr.mxu0 0.0
    %2495 = vmatpush1.msra.mxu0 0.0
    %2496 = vmatprep.subr.mxu0 0.0
    %2497 = vmatpush1.msra.mxu0 0.0
    %2498 = vmatprep.subr.mxu0 0.0
    %2499 = vmatpush1.msra.mxu0 0.0
    %2500 = vmatprep.subr.mxu0 0.0
    %2501 = vmatpush1.msra.mxu0 0.0
    %2502 = vmatprep.subr.mxu0 0.0
    %2503 = vmatpush1.msra.mxu0 0.0
    %2504 = vmatprep.subr.mxu0 0.0
    %2505 = vmatpush1.msra.mxu0 0.0
    %2506 = vmatprep.subr.mxu0 0.0
    %2507 = vmatpush1.msra.mxu0 0.0
    %2508 = vmatprep.subr.mxu0 0.0
    %2509 = vmatpush1.msra.mxu0 0.0
    %2510 = vmatprep.subr.mxu0 0.0
    %2511 = vmatpush1.msra.mxu0 0.0
    %2512 = vmatprep.subr.mxu0 0.0
    %2513 = vmatpush1.msra.mxu0 0.0
    %2514 = vmatprep.subr.mxu0 0.0
    %2515 = vmatpush1.msra.mxu0 0.0
    %2516 = vmatprep.subr.mxu0 0.0
    %2517 = vmatpush1.msra.mxu0 0.0
    %2518 = vmatprep.subr.mxu0 0.0
    %2519 = vmatpush1.msra.mxu0 0.0
    %2520 = vmatprep.subr.mxu0 0.0
    %2521 = vmatpush1.msra.mxu0 0.0
    %2522 = vmatprep.subr.mxu0 0.0
    %2523 = vmatpush1.msra.mxu0 0.0
    %2524 = vmatprep.mubr.f32.mxu0 0.0
    %2525 = vmatmul.mubr.f32.gmra.mrb[0].mxu0 %v2458
    %v2526 = vpop.f32.mrb[0].mxu0
    %v2527 = vadd.f32 0.0, %v2526
    %v2528 = vpop.f32.mrb[0].mxu0
    %2529 = vdwg.mxu0
    %v2530 = vmul.f32 %v2406, %v2406
    %2532 = vrot.lane.b32.xlu0 %v2530, 80
    %v2533 = vpop.permute.xlu0 %2532
    %v2535 = vsel %vm456, %v2533, 0.0
    %2536 = vadd.xlane.f32.xlu0 %v2535
    %v2537 = vpop.xlane.xlu0 %2536
    %v2538 = vmax.f32 %v2537, 1e-16
    %v2539 = vmul.f32 %v2171, %v2538
    %v2540 = vrsqrt.pop %v2539
    %v2541 = vmul.f32 %v2527, %v2540
    %2543 = vset.pattern.permute.xlu0 88
    %2544 = vperm.xlu0 %2543, %v2430
    %v2545 = vpop.permute.xlu0 %2544
    %v2547 = vmul.f32 %v2545, %v2541
    %v2548 = vsel %vm479, %v2547, -inf
    %2549 = vmax.xlane.f32.xlu0 %v2548
    %v2550 = vpop.xlane.xlu0 %2549
    %v2551 = vsub.f32 %v2547, %v2550
    %v2552 = vmul.f32 %v2551, 1.442695
    %v2553 = vpow.pop %v2552
    %v2554 = vsel %vm479, %v2553, 0.0
    %2555 = vadd.xlane.f32.xlu0 %v2554
    %v2556 = vpop.xlane.xlu0 %2555
    %v2557 = vrcp.pop %v2556
    %v2558 = vmul.f32 %v2553, %v2557
    %2560 = vset.pattern.permute.xlu0 90
    %2561 = vperm.xlu0 %2560, %v2412
    %v2562 = vpop.permute.xlu0 %2561
    %v2564 = vmul.f32 %v2562, %v2558
    %v2565 = vsub.f32 1.0, %v2412
    %2567 = vset.pattern.permute.xlu0 90
    %2568 = vperm.xlu0 %2567, %v2565
    %v2569 = vpop.permute.xlu0 %2568
    %v2571 = vmul.f32 %v2569, %v1917
    %v2572 = vadd.f32 %v2564, %v2571
    %2573 = vrot.lane.b32.xlu0 %v2572, 1
    %v2574 = vpop.permute.xlu0 %2573
    %2576 = vset.pattern.permute.xlu0 94
    %2577 = vperm.xlu0 %2576, %v2446
    %v2578 = vpop.permute.xlu0 %2577
    %v2580 = vmul.f32 %v2578, %v2574
    %2581 = vset.pattern.permute.xlu0 95
    %2582 = vperm.xlu0 %2581, %v2446
    %v2583 = vpop.permute.xlu0 %2582
    %v2585 = vmul.f32 %v2583, %v2572
    %v2586 = vadd.f32 %v2580, %v2585
    %2587 = vrot.lane.b32.xlu0 %v2572, 127
    %v2588 = vpop.permute.xlu0 %2587
    %2589 = vset.pattern.permute.xlu0 96
    %2590 = vperm.xlu0 %2589, %v2446
    %v2591 = vpop.permute.xlu0 %2590
    %v2593 = vmul.f32 %v2591, %v2588
    %v2594 = vadd.f32 %v2586, %v2593
    %v2595 = vadd.f32 %v2594, 1e-16
    %2597 = vset.pattern.permute.xlu0 92
    %2598 = vperm.xlu0 %2597, %v2431
    %v2599 = vpop.permute.xlu0 %2598
    %v2601 = vpow.f32 %v2595, %v2599
    %v2602 = vsel %vm479, %v2601, 0.0
    %2603 = vadd.xlane.f32.xlu0 %v2602
    %v2604 = vpop.xlane.xlu0 %2603
    %v2605 = vrcp.pop %v2604
    %v2606 = vmul.f32 %v2601, %v2605
    %v2607 = vsel %vm166, %v2412, %v2406
    %2608 = vxpose.xlu0.b32.start [1/16] %v2607, 128
    %2609 = vxpose.xlu0.b32.cont [2/16] 0.0, 128
    %2610 = vxpose.xlu0.b32.cont [3/16] 0.0, 128
    %2611 = vxpose.xlu0.b32.cont [4/16] 0.0, 128
    %2612 = vxpose.xlu0.b32.cont [5/16] 0.0, 128
    %2613 = vxpose.xlu0.b32.cont [6/16] 0.0, 128
    %2614 = vxpose.xlu0.b32.cont [7/16] 0.0, 128
    %2615 = vxpose.xlu0.b32.cont [8/16] 0.0, 128
    %2616 = vxpose.xlu0.b32.cont [9/16] 0.0, 128
    %2617 = vxpose.xlu0.b32.cont [10/16] 0.0, 128
    %2618 = vxpose.xlu0.b32.cont [11/16] 0.0, 128
    %2619 = vxpose.xlu0.b32.cont [12/16] 0.0, 128
    %2620 = vxpose.xlu0.b32.cont [13/16] 0.0, 128
    %2621 = vxpose.xlu0.b32.cont [14/16] 0.0, 128
    %2622 = vxpose.xlu0.b32.cont [15/16] 0.0, 128
    %2623 = vxpose.xlu0.b32.end [16/16] 0.0, 128
    %v2624 = vpop.trf.xlu0
    %v2625 = vpop.trf.xlu0
    %v2626 = vpop.trf.xlu0
    %v2627 = vpop.trf.xlu0
    %v2628 = vpop.trf.xlu0
    %v2629 = vpop.trf.xlu0
    %v2630 = vpop.trf.xlu0
    %v2631 = vpop.trf.xlu0
    %v2632 = vpop.trf.xlu0
    %v2633 = vpop.trf.xlu0
    %v2634 = vpop.trf.xlu0
    %v2635 = vpop.trf.xlu0
    %v2636 = vpop.trf.xlu0
    %v2637 = vpop.trf.xlu0
    %v2638 = vpop.trf.xlu0
    %v2639 = vpop.trf.xlu0
    %v2641 = vsel %vm572, %v2624, 0
    %v2644 = vsel %vm572, %v2625, 0
    %v2647 = vsel %vm572, %v2626, 0
    %v2650 = vsel %vm572, %v2627, 0
    %v2653 = vsel %vm572, %v2628, 0
    %v2656 = vsel %vm572, %v2629, 0
    %v2659 = vsel %vm479, %v2606, 0
    %2661 = vmatprep.subr.mxu0 0.0
    %2662 = vmatpush1.msra.mxu0 %v2659
    %2663 = vmatprep.subr.mxu0 0.0
    %2664 = vmatpush1.msra.mxu0 0.0
    %2665 = vmatprep.subr.mxu0 0.0
    %2666 = vmatpush1.msra.mxu0 0.0
    %2667 = vmatprep.subr.mxu0 0.0
    %2668 = vmatpush1.msra.mxu0 0.0
    %2669 = vmatprep.subr.mxu0 0.0
    %2670 = vmatpush1.msra.mxu0 0.0
    %2671 = vmatprep.subr.mxu0 0.0
    %2672 = vmatpush1.msra.mxu0 0.0
    %2673 = vmatprep.subr.mxu0 0.0
    %2674 = vmatpush1.msra.mxu0 0.0
    %2675 = vmatprep.subr.mxu0 0.0
    %2676 = vmatpush1.msra.mxu0 0.0
    %2677 = vmatprep.subr.mxu0 0.0
    %2678 = vmatpush1.msra.mxu0 0.0
    %2679 = vmatprep.subr.mxu0 0.0
    %2680 = vmatpush1.msra.mxu0 0.0
    %2681 = vmatprep.subr.mxu0 0.0
    %2682 = vmatpush1.msra.mxu0 0.0
    %2683 = vmatprep.subr.mxu0 0.0
    %2684 = vmatpush1.msra.mxu0 0.0
    %2685 = vmatprep.subr.mxu0 0.0
    %2686 = vmatpush1.msra.mxu0 0.0
    %2687 = vmatprep.subr.mxu0 0.0
    %2688 = vmatpush1.msra.mxu0 0.0
    %2689 = vmatprep.subr.mxu0 0.0
    %2690 = vmatpush1.msra.mxu0 0.0
    %2691 = vmatprep.subr.mxu0 0.0
    %2692 = vmatpush1.msra.mxu0 0.0
    %2693 = vmatprep.subr.mxu0 0.0
    %2694 = vmatpush1.msra.mxu0 0.0
    %2695 = vmatprep.subr.mxu0 0.0
    %2696 = vmatpush1.msra.mxu0 0.0
    %2697 = vmatprep.subr.mxu0 0.0
    %2698 = vmatpush1.msra.mxu0 0.0
    %2699 = vmatprep.subr.mxu0 0.0
    %2700 = vmatpush1.msra.mxu0 0.0
    %2701 = vmatprep.subr.mxu0 0.0
    %2702 = vmatpush1.msra.mxu0 0.0
    %2703 = vmatprep.subr.mxu0 0.0
    %2704 = vmatpush1.msra.mxu0 0.0
    %2705 = vmatprep.subr.mxu0 0.0
    %2706 = vmatpush1.msra.mxu0 0.0
    %2707 = vmatprep.subr.mxu0 0.0
    %2708 = vmatpush1.msra.mxu0 0.0
    %2709 = vmatprep.subr.mxu0 0.0
    %2710 = vmatpush1.msra.mxu0 0.0
    %2711 = vmatprep.subr.mxu0 0.0
    %2712 = vmatpush1.msra.mxu0 0.0
    %2713 = vmatprep.subr.mxu0 0.0
    %2714 = vmatpush1.msra.mxu0 0.0
    %2715 = vmatprep.subr.mxu0 0.0
    %2716 = vmatpush1.msra.mxu0 0.0
    %2717 = vmatprep.subr.mxu0 0.0
    %2718 = vmatpush1.msra.mxu0 0.0
    %2719 = vmatprep.subr.mxu0 0.0
    %2720 = vmatpush1.msra.mxu0 0.0
    %2721 = vmatprep.subr.mxu0 0.0
    %2722 = vmatpush1.msra.mxu0 0.0
    %2723 = vmatprep.subr.mxu0 0.0
    %2724 = vmatpush1.msra.mxu0 0.0
    %2725 = vmatprep.mubr.f32.mxu0 0.0
    %2726 = vmatmul.mubr.f32.gmra.mrb[0].mxu0 %v2641
    %v2727 = vpop.f32.mrb[0].mxu0
    %v2728 = vadd.f32 0.0, %v2727
    %v2729 = vpop.f32.mrb[0].mxu0
    %2730 = vmatprep.mubr.f32.mxu0 0.0
    %2731 = vmatmul.mubr.f32.gmra.mrb[0].mxu0 %v2644
    %v2732 = vpop.f32.mrb[0].mxu0
    %v2733 = vadd.f32 0.0, %v2732
    %v2734 = vpop.f32.mrb[0].mxu0
    %2735 = vmatprep.mubr.f32.mxu0 0.0
    %2736 = vmatmul.mubr.f32.gmra.mrb[0].mxu0 %v2647
    %v2737 = vpop.f32.mrb[0].mxu0
    %v2738 = vadd.f32 0.0, %v2737
    %v2739 = vpop.f32.mrb[0].mxu0
    %2740 = vmatprep.mubr.f32.mxu0 0.0
    %2741 = vmatmul.mubr.f32.gmra.mrb[0].mxu0 %v2650
    %v2742 = vpop.f32.mrb[0].mxu0
    %v2743 = vadd.f32 0.0, %v2742
    %v2744 = vpop.f32.mrb[0].mxu0
    %2745 = vmatprep.mubr.f32.mxu0 0.0
    %2746 = vmatmul.mubr.f32.gmra.mrb[0].mxu0 %v2653
    %v2747 = vpop.f32.mrb[0].mxu0
    %v2748 = vadd.f32 0.0, %v2747
    %v2749 = vpop.f32.mrb[0].mxu0
    %2750 = vmatprep.mubr.f32.mxu0 0.0
    %2751 = vmatmul.mubr.f32.gmra.mrb[0].mxu0 %v2656
    %v2752 = vpop.f32.mrb[0].mxu0
    %v2753 = vadd.f32 0.0, %v2752
    %v2754 = vpop.f32.mrb[0].mxu0
    %2755 = vdwg.mxu0
    %v2756 = vsub.f32 1.0, %v2728
    %v2757 = vsub.f32 1.0, %v2733
    %v2758 = vsub.f32 1.0, %v2738
    %v2759 = vmul.f32 %v2073, %v2756
    %v2760 = vmul.f32 %v2074, %v2757
    %v2761 = vmul.f32 %v2075, %v2758
    %v2762 = vadd.f32 %v2759, %v2743
    %v2763 = vadd.f32 %v2760, %v2748
    %v2764 = vadd.f32 %v2761, %v2753
    %2765 = vrot.lane.b32.xlu0 %v2406, 60
    %v2766 = vpop.permute.xlu0 %2765
    %v2767 = vsel %vm178, %v2766, 0
    %v2770 = vsel %vm377, %v2764, 0
    %2772 = vmatprep.subr.mxu0 0.0
    %2773 = vmatpush1.msra.mxu0 %v2762
    %2774 = vmatprep.subr.mxu0 0.0
    %2775 = vmatpush1.msra.mxu0 %v2763
    %2776 = vmatprep.subr.mxu0 0.0
    %2777 = vmatpush1.msra.mxu0 %v2770
    %2778 = vmatprep.subr.mxu0 0.0
    %2779 = vmatpush1.msra.mxu0 0.0
    %2780 = vmatprep.subr.mxu0 0.0
    %2781 = vmatpush1.msra.mxu0 0.0
    %2782 = vmatprep.subr.mxu0 0.0
    %2783 = vmatpush1.msra.mxu0 0.0
    %2784 = vmatprep.subr.mxu0 0.0
    %2785 = vmatpush1.msra.mxu0 0.0
    %2786 = vmatprep.subr.mxu0 0.0
    %2787 = vmatpush1.msra.mxu0 0.0
    %2788 = vmatprep.subr.mxu0 0.0
    %2789 = vmatpush1.msra.mxu0 0.0
    %2790 = vmatprep.subr.mxu0 0.0
    %2791 = vmatpush1.msra.mxu0 0.0
    %2792 = vmatprep.subr.mxu0 0.0
    %2793 = vmatpush1.msra.mxu0 0.0
    %2794 = vmatprep.subr.mxu0 0.0
    %2795 = vmatpush1.msra.mxu0 0.0
    %2796 = vmatprep.subr.mxu0 0.0
    %2797 = vmatpush1.msra.mxu0 0.0
    %2798 = vmatprep.subr.mxu0 0.0
    %2799 = vmatpush1.msra.mxu0 0.0
    %2800 = vmatprep.subr.mxu0 0.0
    %2801 = vmatpush1.msra.mxu0 0.0
    %2802 = vmatprep.subr.mxu0 0.0
    %2803 = vmatpush1.msra.mxu0 0.0
    %2804 = vmatprep.subr.mxu0 0.0
    %2805 = vmatpush1.msra.mxu0 0.0
    %2806 = vmatprep.subr.mxu0 0.0
    %2807 = vmatpush1.msra.mxu0 0.0
    %2808 = vmatprep.subr.mxu0 0.0
    %2809 = vmatpush1.msra.mxu0 0.0
    %2810 = vmatprep.subr.mxu0 0.0
    %2811 = vmatpush1.msra.mxu0 0.0
    %2812 = vmatprep.subr.mxu0 0.0
    %2813 = vmatpush1.msra.mxu0 0.0
    %2814 = vmatprep.subr.mxu0 0.0
    %2815 = vmatpush1.msra.mxu0 0.0
    %2816 = vmatprep.subr.mxu0 0.0
    %2817 = vmatpush1.msra.mxu0 0.0
    %2818 = vmatprep.subr.mxu0 0.0
    %2819 = vmatpush1.msra.mxu0 0.0
    %2820 = vmatprep.subr.mxu0 0.0
    %2821 = vmatpush1.msra.mxu0 0.0
    %2822 = vmatprep.subr.mxu0 0.0
    %2823 = vmatpush1.msra.mxu0 0.0
    %2824 = vmatprep.subr.mxu0 0.0
    %2825 = vmatpush1.msra.mxu0 0.0
    %2826 = vmatprep.subr.mxu0 0.0
    %2827 = vmatpush1.msra.mxu0 0.0
    %2828 = vmatprep.subr.mxu0 0.0
    %2829 = vmatpush1.msra.mxu0 0.0
    %2830 = vmatprep.subr.mxu0 0.0
    %2831 = vmatpush1.msra.mxu0 0.0
    %2832 = vmatprep.subr.mxu0 0.0
    %2833 = vmatpush1.msra.mxu0 0.0
    %2834 = vmatprep.subr.mxu0 0.0
    %2835 = vmatpush1.msra.mxu0 0.0
    %2836 = vmatprep.mubr.f32.mxu0 0.0
    %2837 = vmatmul.mubr.f32.gmra.mrb[0].mxu0 %v2767
    %v2838 = vpop.f32.mrb[0].mxu0
    %v2839 = vadd.f32 0.0, %v2838
    %v2840 = vpop.f32.mrb[0].mxu0
    %2841 = vdwg.mxu0
    %2842 = vrot.lane.b32.xlu0 %v2530, 60
    %v2843 = vpop.permute.xlu0 %2842
    %v2845 = vsel %vm456, %v2843, 0.0
    %2846 = vadd.xlane.f32.xlu0 %v2845
    %v2847 = vpop.xlane.xlu0 %2846
    %v2848 = vmul.f32 %v2762, %v2762
    %v2849 = vmul.f32 %v2763, %v2763
    %v2850 = vmul.f32 %v2764, %v2764
    %v2851 = vadd.f32 %v2848, %v2849
    %v2852 = vsel %vm377, %v2850, 0.0
    %v2853 = vadd.f32 %v2851, %v2852
    %v2854 = vrot.slane %v2853, 4
    %v2855 = vadd.f32 %v2853, %v2854
    %v2856 = vrot.slane %v2855, 2
    %v2857 = vadd.f32 %v2855, %v2856
    %v2858 = vrot.slane %v2857, 1
    %v2859 = vadd.f32 %v2857, %v2858
    %v2860 = vmax.f32 %v2859, 1e-16
    %v2861 = vmax.f32 %v2847, 1e-16
    %v2862 = vmul.f32 %v2860, %v2861
    %v2863 = vrsqrt.pop %v2862
    %v2864 = vmul.f32 %v2839, %v2863
    %2865 = vset.pattern.permute.xlu0 89
    %2866 = vperm.xlu0 %2865, %v2430
    %v2867 = vpop.permute.xlu0 %2866
    %v2869 = vmul.f32 %v2867, %v2864
    %v2870 = vsel %vm479, %v2869, -inf
    %2871 = vmax.xlane.f32.xlu0 %v2870
    %v2872 = vpop.xlane.xlu0 %2871
    %v2873 = vsub.f32 %v2869, %v2872
    %v2874 = vmul.f32 %v2873, 1.442695
    %v2875 = vpow.pop %v2874
    %v2876 = vsel %vm479, %v2875, 0.0
    %2877 = vadd.xlane.f32.xlu0 %v2876
    %v2878 = vpop.xlane.xlu0 %2877
    %v2879 = vrcp.pop %v2878
    %v2880 = vmul.f32 %v2875, %v2879
    %2881 = vset.pattern.permute.xlu0 91
    %2882 = vperm.xlu0 %2881, %v2412
    %v2883 = vpop.permute.xlu0 %2882
    %v2885 = vmul.f32 %v2883, %v2880
    %2886 = vset.pattern.permute.xlu0 91
    %2887 = vperm.xlu0 %2886, %v2565
    %v2888 = vpop.permute.xlu0 %2887
    %v2890 = vmul.f32 %v2888, %v2235
    %v2891 = vadd.f32 %v2885, %v2890
    %2892 = vrot.lane.b32.xlu0 %v2891, 1
    %v2893 = vpop.permute.xlu0 %2892
    %2895 = vset.pattern.permute.xlu0 97
    %2896 = vperm.xlu0 %2895, %v2454
    %v2897 = vpop.permute.xlu0 %2896
    %v2899 = vmul.f32 %v2897, %v2893
    %2900 = vset.pattern.permute.xlu0 98
    %2901 = vperm.xlu0 %2900, %v2454
    %v2902 = vpop.permute.xlu0 %2901
    %v2904 = vmul.f32 %v2902, %v2891
    %v2905 = vadd.f32 %v2899, %v2904
    %2906 = vrot.lane.b32.xlu0 %v2891, 127
    %v2907 = vpop.permute.xlu0 %2906
    %2908 = vset.pattern.permute.xlu0 99
    %2909 = vperm.xlu0 %2908, %v2454
    %v2910 = vpop.permute.xlu0 %2909
    %v2912 = vmul.f32 %v2910, %v2907
    %v2913 = vadd.f32 %v2905, %v2912
    %v2914 = vadd.f32 %v2913, 1e-16
    %2915 = vset.pattern.permute.xlu0 93
    %2916 = vperm.xlu0 %2915, %v2431
    %v2917 = vpop.permute.xlu0 %2916
    %v2919 = vpow.f32 %v2914, %v2917
    %v2920 = vsel %vm479, %v2919, 0.0
    %2921 = vadd.xlane.f32.xlu0 %v2920
    %v2922 = vpop.xlane.xlu0 %2921
    %v2923 = vrcp.pop %v2922
    %v2924 = vmul.f32 %v2919, %v2923
    %2925 = vmatprep.subr.mxu0 0.0
    %2926 = vmatpush1.xpose.msra.mxu0 %v2762
    %2927 = vmatprep.subr.mxu0 0.0
    %2928 = vmatpush1.xpose.msra.mxu0 %v2763
    %2929 = vmatprep.subr.mxu0 0.0
    %2930 = vmatpush1.xpose.msra.mxu0 %v2764
    %2931 = vmatprep.subr.mxu0 0.0
    %2932 = vmatpush1.xpose.msra.mxu0 0.0
    %2933 = vmatprep.subr.mxu0 0.0
    %2934 = vmatpush1.xpose.msra.mxu0 0.0
    %2935 = vmatprep.subr.mxu0 0.0
    %2936 = vmatpush1.xpose.msra.mxu0 0.0
    %2937 = vmatprep.subr.mxu0 0.0
    %2938 = vmatpush1.xpose.msra.mxu0 0.0
    %2939 = vmatprep.subr.mxu0 0.0
    %2940 = vmatpush1.xpose.msra.mxu0 0.0
    %2941 = vmatprep.subr.mxu0 0.0
    %2942 = vmatpush1.xpose.msra.mxu0 0.0
    %2943 = vmatprep.subr.mxu0 0.0
    %2944 = vmatpush1.xpose.msra.mxu0 0.0
    %2945 = vmatprep.subr.mxu0 0.0
    %2946 = vmatpush1.xpose.msra.mxu0 0.0
    %2947 = vmatprep.subr.mxu0 0.0
    %2948 = vmatpush1.xpose.msra.mxu0 0.0
    %2949 = vmatprep.subr.mxu0 0.0
    %2950 = vmatpush1.xpose.msra.mxu0 0.0
    %2951 = vmatprep.subr.mxu0 0.0
    %2952 = vmatpush1.xpose.msra.mxu0 0.0
    %2953 = vmatprep.subr.mxu0 0.0
    %2954 = vmatpush1.xpose.msra.mxu0 0.0
    %2955 = vmatprep.subr.mxu0 0.0
    %2956 = vmatpush1.xpose.msra.mxu0 0.0
    %2957 = vmatprep.subr.mxu0 0.0
    %2958 = vmatpush1.xpose.msra.mxu0 0.0
    %2959 = vmatprep.subr.mxu0 0.0
    %2960 = vmatpush1.xpose.msra.mxu0 0.0
    %2961 = vmatprep.subr.mxu0 0.0
    %2962 = vmatpush1.xpose.msra.mxu0 0.0
    %2963 = vmatprep.subr.mxu0 0.0
    %2964 = vmatpush1.xpose.msra.mxu0 0.0
    %2965 = vmatprep.subr.mxu0 0.0
    %2966 = vmatpush1.xpose.msra.mxu0 0.0
    %2967 = vmatprep.subr.mxu0 0.0
    %2968 = vmatpush1.xpose.msra.mxu0 0.0
    %2969 = vmatprep.subr.mxu0 0.0
    %2970 = vmatpush1.xpose.msra.mxu0 0.0
    %2971 = vmatprep.subr.mxu0 0.0
    %2972 = vmatpush1.xpose.msra.mxu0 0.0
    %2973 = vmatprep.subr.mxu0 0.0
    %2974 = vmatpush1.xpose.msra.mxu0 0.0
    %2975 = vmatprep.subr.mxu0 0.0
    %2976 = vmatpush1.xpose.msra.mxu0 0.0
    %2977 = vmatprep.subr.mxu0 0.0
    %2978 = vmatpush1.xpose.msra.mxu0 0.0
    %2979 = vmatprep.subr.mxu0 0.0
    %2980 = vmatpush1.xpose.msra.mxu0 0.0
    %2981 = vmatprep.subr.mxu0 0.0
    %2982 = vmatpush1.xpose.msra.mxu0 0.0
    %2983 = vmatprep.subr.mxu0 0.0
    %2984 = vmatpush1.xpose.msra.mxu0 0.0
    %2985 = vmatprep.subr.mxu0 0.0
    %2986 = vmatpush1.xpose.msra.mxu0 0.0
    %2987 = vmatprep.subr.mxu0 0.0
    %2988 = vmatpush1.xpose.msra.mxu0 0.0
    %2989 = vmatprep.mubr.f32.mxu0 0.0
    %2990 = vmatmul.mubr.f32.gmra.mrb[0].mxu0 %v2924
    %v2991 = vpop.f32.mrb[0].mxu0
    %v2992 = vadd.f32 0.0, %v2991
    %v2993 = vpop.f32.mrb[0].mxu0
    %2994 = vdwg.mxu0
    %2995 = vst [vmem:[#allocation7 + $0x3] sm:$0x1] %v2606
    %2996 = vst [vmem:[#allocation9 + $0x3] sm:$0x1] %v2924
    %2997 = vrot.lane.b32.xlu0 %v2406, 104
    %v2998 = vpop.permute.xlu0 %2997
    %3000 = vst.msk [vmem:[#allocation10 + $0x3] sm:$0x1] %vm456, %v2998
    %3001 = vst.msk [vmem:[#allocation12 + $0x3] sm:$0x1] %vm456, %v2992
    %v3002 = vld [vmem:[#allocation2 + $0x4] sm:$0x1]
    %v3003 = vpack.c.bf16 %v2992, %v2992
    %v3005 = vsel %vm178, %v3003, 0
    %3007 = vmatprep.subr.bf16.mxu0 0
    %3008 = vmatpush1.bf16.msra.mxu0 %v175
    %3009 = vmatprep.subr.bf16.mxu0 0
    %3010 = vmatpush1.bf16.msra.mxu0 %v183
    %3011 = vmatprep.subr.bf16.mxu0 0
    %3012 = vmatpush1.bf16.msra.mxu0 0
    %3013 = vmatprep.subr.bf16.mxu0 0
    %3014 = vmatpush1.bf16.msra.mxu0 0
    %3015 = vmatprep.subr.bf16.mxu0 0
    %3016 = vmatpush1.bf16.msra.mxu0 0
    %3017 = vmatprep.subr.bf16.mxu0 0
    %3018 = vmatpush1.bf16.msra.mxu0 0
    %3019 = vmatprep.subr.bf16.mxu0 0
    %3020 = vmatpush1.bf16.msra.mxu0 0
    %3021 = vmatprep.subr.bf16.mxu0 0
    %3022 = vmatpush1.bf16.msra.mxu0 0
    %3023 = vmatprep.subr.bf16.mxu0 0
    %3024 = vmatpush1.bf16.msra.mxu0 0
    %3025 = vmatprep.subr.bf16.mxu0 0
    %3026 = vmatpush1.bf16.msra.mxu0 0
    %3027 = vmatprep.subr.bf16.mxu0 0
    %3028 = vmatpush1.bf16.msra.mxu0 0
    %3029 = vmatprep.subr.bf16.mxu0 0
    %3030 = vmatpush1.bf16.msra.mxu0 0
    %3031 = vmatprep.subr.bf16.mxu0 0
    %3032 = vmatpush1.bf16.msra.mxu0 0
    %3033 = vmatprep.subr.bf16.mxu0 0
    %3034 = vmatpush1.bf16.msra.mxu0 0
    %3035 = vmatprep.subr.bf16.mxu0 0
    %3036 = vmatpush1.bf16.msra.mxu0 0
    %3037 = vmatprep.subr.bf16.mxu0 0
    %3038 = vmatpush1.bf16.msra.mxu0 0
    %3039 = vmatprep.mubr.bf16.mxu0 0
    %3040 = vmatmul.mubr.bf16.gmra.mrb[0].mxu0 %v3005
    %v3041 = vpop.f32.mrb[0].mxu0
    %v3042 = vadd.f32 0.0, %v3041
    %v3043 = vpop.f32.mrb[0].mxu0
    %v3044 = vpop.f32.mrb[0].mxu0
    %v3045 = vpop.f32.mrb[0].mxu0
    %3046 = vdwg.mxu0
    %v3047 = vadd.f32 %v3002, %v3042
    %v3048 = vxor.u32 %v3047, 2147483648
    %v3049 = vmul.f32 %v3048, 1.442695
    %v3050 = vpow.pop %v3049
    %v3051 = vadd.f32 %v3050, 1.0
    %v3052 = vrcp.pop %v3051
    %v3053 = vmul.f32 1.0, %v3052
    %v3054 = vpack.c.bf16 %v3053, %v3053
    %3055 = vmatprep.subr.bf16.mxu0 0
    %3056 = vmatpush1.bf16.msra.mxu0 %v265
    %3057 = vmatprep.subr.bf16.mxu0 0
    %3058 = vmatpush1.bf16.msra.mxu0 %v266
    %3059 = vmatprep.subr.bf16.mxu0 0
    %3060 = vmatpush1.bf16.msra.mxu0 %v267
    %3061 = vmatprep.subr.bf16.mxu0 0
    %3062 = vmatpush1.bf16.msra.mxu0 %v268
    %3063 = vmatprep.subr.bf16.mxu0 0
    %3064 = vmatpush1.bf16.msra.mxu0 %v269
    %3065 = vmatprep.subr.bf16.mxu0 0
    %3066 = vmatpush1.bf16.msra.mxu0 %v270
    %3067 = vmatprep.subr.bf16.mxu0 0
    %3068 = vmatpush1.bf16.msra.mxu0 %v271
    %3069 = vmatprep.subr.bf16.mxu0 0
    %3070 = vmatpush1.bf16.msra.mxu0 %v272
    %3071 = vmatprep.subr.bf16.mxu0 0
    %3072 = vmatpush1.bf16.msra.mxu0 0
    %3073 = vmatprep.subr.bf16.mxu0 0
    %3074 = vmatpush1.bf16.msra.mxu0 0
    %3075 = vmatprep.subr.bf16.mxu0 0
    %3076 = vmatpush1.bf16.msra.mxu0 0
    %3077 = vmatprep.subr.bf16.mxu0 0
    %3078 = vmatpush1.bf16.msra.mxu0 0
    %3079 = vmatprep.subr.bf16.mxu0 0
    %3080 = vmatpush1.bf16.msra.mxu0 0
    %3081 = vmatprep.subr.bf16.mxu0 0
    %3082 = vmatpush1.bf16.msra.mxu0 0
    %3083 = vmatprep.subr.bf16.mxu0 0
    %3084 = vmatpush1.bf16.msra.mxu0 0
    %3085 = vmatprep.subr.bf16.mxu0 0
    %3086 = vmatpush1.bf16.msra.mxu0 0
    %3087 = vmatprep.mubr.bf16.mxu0 0
    %3088 = vmatmul.mubr.bf16.gmra.mrb[0].mxu0 %v3054
    %v3089 = vpop.f32.mrb[0].mxu0
    %v3090 = vadd.f32 %v71, %v3089
    %v3091 = vpop.f32.mrb[0].mxu0
    %v3092 = vpop.f32.mrb[0].mxu0
    %v3093 = vpop.f32.mrb[0].mxu0
    %3094 = vdwg.mxu0
    %v3095 = vtanh.pop %v3090
    %v3096 = vxor.u32 %v3090, 2147483648
    %v3097 = vmul.f32 %v3096, 1.442695
    %v3098 = vpow.pop %v3097
    %v3099 = vadd.f32 %v3098, 1.0
    %v3100 = vrcp.pop %v3099
    %v3101 = vmul.f32 1.0, %v3100
    %v3102 = vmax.f32 %v3090, 0.0
    %vm3103 = vcmp.ne.f32.partialorder %v3090, %v3090
    %v3104 = vadd.f32 %v3090, 0.0
    %v3105 = vand.u32 2147483647, %v3090
    %v3106 = vsub.f32 0.0, %v3105
    %v3107 = vmul.f32 %v3106, 1.442695
    %v3108 = vpow.pop %v3107
    %v3109 = vadd.f32 %v3108, 1.0
    %v3110 = vlog2.pop %v3109
    %v3111 = vmul.f32 %v3110, 0.6931472
    %v3112 = vmul.f32 -0.5, %v3108
    %v3113 = vadd.f32 %v3112, 1.0
    %v3114 = vmul.f32 %v3113, %v3108
    %v3115 = vand.u32 2147483647, %v3108
    %vm3116 = vcmp.lt.f32.partialorder %v3115, 0.0004427343
    %v3117 = vsel %vm3116, %v3114, %v3111
    %v3118 = vadd.f32 %v3102, %v3117
    %v3119 = vsel %vm3103, %v3104, %v3118
    %v3120 = vadd.f32 %v3119, 1.0
    %v3121 = vsel %vm347, %v3090, -inf
    %3122 = vmax.xlane.f32.xlu0 %v3121
    %v3123 = vpop.xlane.xlu0 %3122
    %v3124 = vsub.f32 %v3090, %v3123
    %v3125 = vmul.f32 %v3124, 1.442695
    %v3126 = vpow.pop %v3125
    %3128 = vrot.lane.b32.xlu0 %v3126, 34
    %v3129 = vpop.permute.xlu0 %3128
    %v3131 = vsel %vm358, %v3129, 0.0
    %3132 = vadd.xlane.f32.xlu0 %v3131
    %v3133 = vpop.xlane.xlu0 %3132
    %v3134 = vrcp.pop %v3133
    %v3135 = vmul.f32 %v3126, %v3134
    %3136 = vrot.lane.b32.xlu0 %v3126, 31
    %v3137 = vpop.permute.xlu0 %3136
    %v3139 = vsel %vm358, %v3137, 0.0
    %3140 = vadd.xlane.f32.xlu0 %v3139
    %v3141 = vpop.xlane.xlu0 %3140
    %v3142 = vrcp.pop %v3141
    %v3143 = vmul.f32 %v3126, %v3142
    %3145 = vrot.lane.b32.xlu0 %v3095, 80
    %v3146 = vpop.permute.xlu0 %3145
    %v3147 = vsel %vm178, %v3146, 0
    %3149 = vmatprep.subr.mxu0 0.0
    %3150 = vmatpush1.msra.mxu0 %v2762
    %3151 = vmatprep.subr.mxu0 0.0
    %3152 = vmatpush1.msra.mxu0 %v2763
    %3153 = vmatprep.subr.mxu0 0.0
    %3154 = vmatpush1.msra.mxu0 %v2770
    %3155 = vmatprep.subr.mxu0 0.0
    %3156 = vmatpush1.msra.mxu0 0.0
    %3157 = vmatprep.subr.mxu0 0.0
    %3158 = vmatpush1.msra.mxu0 0.0
    %3159 = vmatprep.subr.mxu0 0.0
    %3160 = vmatpush1.msra.mxu0 0.0
    %3161 = vmatprep.subr.mxu0 0.0
    %3162 = vmatpush1.msra.mxu0 0.0
    %3163 = vmatprep.subr.mxu0 0.0
    %3164 = vmatpush1.msra.mxu0 0.0
    %3165 = vmatprep.subr.mxu0 0.0
    %3166 = vmatpush1.msra.mxu0 0.0
    %3167 = vmatprep.subr.mxu0 0.0
    %3168 = vmatpush1.msra.mxu0 0.0
    %3169 = vmatprep.subr.mxu0 0.0
    %3170 = vmatpush1.msra.mxu0 0.0
    %3171 = vmatprep.subr.mxu0 0.0
    %3172 = vmatpush1.msra.mxu0 0.0
    %3173 = vmatprep.subr.mxu0 0.0
    %3174 = vmatpush1.msra.mxu0 0.0
    %3175 = vmatprep.subr.mxu0 0.0
    %3176 = vmatpush1.msra.mxu0 0.0
    %3177 = vmatprep.subr.mxu0 0.0
    %3178 = vmatpush1.msra.mxu0 0.0
    %3179 = vmatprep.subr.mxu0 0.0
    %3180 = vmatpush1.msra.mxu0 0.0
    %3181 = vmatprep.subr.mxu0 0.0
    %3182 = vmatpush1.msra.mxu0 0.0
    %3183 = vmatprep.subr.mxu0 0.0
    %3184 = vmatpush1.msra.mxu0 0.0
    %3185 = vmatprep.subr.mxu0 0.0
    %3186 = vmatpush1.msra.mxu0 0.0
    %3187 = vmatprep.subr.mxu0 0.0
    %3188 = vmatpush1.msra.mxu0 0.0
    %3189 = vmatprep.subr.mxu0 0.0
    %3190 = vmatpush1.msra.mxu0 0.0
    %3191 = vmatprep.subr.mxu0 0.0
    %3192 = vmatpush1.msra.mxu0 0.0
    %3193 = vmatprep.subr.mxu0 0.0
    %3194 = vmatpush1.msra.mxu0 0.0
    %3195 = vmatprep.subr.mxu0 0.0
    %3196 = vmatpush1.msra.mxu0 0.0
    %3197 = vmatprep.subr.mxu0 0.0
    %3198 = vmatpush1.msra.mxu0 0.0
    %3199 = vmatprep.subr.mxu0 0.0
    %3200 = vmatpush1.msra.mxu0 0.0
    %3201 = vmatprep.subr.mxu0 0.0
    %3202 = vmatpush1.msra.mxu0 0.0
    %3203 = vmatprep.subr.mxu0 0.0
    %3204 = vmatpush1.msra.mxu0 0.0
    %3205 = vmatprep.subr.mxu0 0.0
    %3206 = vmatpush1.msra.mxu0 0.0
    %3207 = vmatprep.subr.mxu0 0.0
    %3208 = vmatpush1.msra.mxu0 0.0
    %3209 = vmatprep.subr.mxu0 0.0
    %3210 = vmatpush1.msra.mxu0 0.0
    %3211 = vmatprep.subr.mxu0 0.0
    %3212 = vmatpush1.msra.mxu0 0.0
    %3213 = vmatprep.mubr.f32.mxu0 0.0
    %3214 = vmatmul.mubr.f32.gmra.mrb[0].mxu0 %v3147
    %v3215 = vpop.f32.mrb[0].mxu0
    %v3216 = vadd.f32 0.0, %v3215
    %v3217 = vpop.f32.mrb[0].mxu0
    %3218 = vdwg.mxu0
    %v3219 = vmul.f32 %v3095, %v3095
    %3221 = vrot.lane.b32.xlu0 %v3219, 80
    %v3222 = vpop.permute.xlu0 %3221
    %v3224 = vsel %vm456, %v3222, 0.0
    %3225 = vadd.xlane.f32.xlu0 %v3224
    %v3226 = vpop.xlane.xlu0 %3225
    %v3227 = vmax.f32 %v3226, 1e-16
    %v3228 = vmul.f32 %v2860, %v3227
    %v3229 = vrsqrt.pop %v3228
    %v3230 = vmul.f32 %v3216, %v3229
    %3232 = vset.pattern.permute.xlu0 88
    %3233 = vperm.xlu0 %3232, %v3119
    %v3234 = vpop.permute.xlu0 %3233
    %v3236 = vmul.f32 %v3234, %v3230
    %v3237 = vsel %vm479, %v3236, -inf
    %3238 = vmax.xlane.f32.xlu0 %v3237
    %v3239 = vpop.xlane.xlu0 %3238
    %v3240 = vsub.f32 %v3236, %v3239
    %v3241 = vmul.f32 %v3240, 1.442695
    %v3242 = vpow.pop %v3241
    %v3243 = vsel %vm479, %v3242, 0.0
    %3244 = vadd.xlane.f32.xlu0 %v3243
    %v3245 = vpop.xlane.xlu0 %3244
    %v3246 = vrcp.pop %v3245
    %v3247 = vmul.f32 %v3242, %v3246
    %3249 = vset.pattern.permute.xlu0 90
    %3250 = vperm.xlu0 %3249, %v3101
    %v3251 = vpop.permute.xlu0 %3250
    %v3253 = vmul.f32 %v3251, %v3247
    %v3254 = vsub.f32 1.0, %v3101
    %3256 = vset.pattern.permute.xlu0 90
    %3257 = vperm.xlu0 %3256, %v3254
    %v3258 = vpop.permute.xlu0 %3257
    %v3260 = vmul.f32 %v3258, %v2606
    %v3261 = vadd.f32 %v3253, %v3260
    %3262 = vrot.lane.b32.xlu0 %v3261, 1
    %v3263 = vpop.permute.xlu0 %3262
    %3265 = vset.pattern.permute.xlu0 94
    %3266 = vperm.xlu0 %3265, %v3135
    %v3267 = vpop.permute.xlu0 %3266
    %v3269 = vmul.f32 %v3267, %v3263
    %3270 = vset.pattern.permute.xlu0 95
    %3271 = vperm.xlu0 %3270, %v3135
    %v3272 = vpop.permute.xlu0 %3271
    %v3274 = vmul.f32 %v3272, %v3261
    %v3275 = vadd.f32 %v3269, %v3274
    %3276 = vrot.lane.b32.xlu0 %v3261, 127
    %v3277 = vpop.permute.xlu0 %3276
    %3278 = vset.pattern.permute.xlu0 96
    %3279 = vperm.xlu0 %3278, %v3135
    %v3280 = vpop.permute.xlu0 %3279
    %v3282 = vmul.f32 %v3280, %v3277
    %v3283 = vadd.f32 %v3275, %v3282
    %v3284 = vadd.f32 %v3283, 1e-16
    %3286 = vset.pattern.permute.xlu0 92
    %3287 = vperm.xlu0 %3286, %v3120
    %v3288 = vpop.permute.xlu0 %3287
    %v3290 = vpow.f32 %v3284, %v3288
    %v3291 = vsel %vm479, %v3290, 0.0
    %3292 = vadd.xlane.f32.xlu0 %v3291
    %v3293 = vpop.xlane.xlu0 %3292
    %v3294 = vrcp.pop %v3293
    %v3295 = vmul.f32 %v3290, %v3294
    %v3296 = vsel %vm166, %v3101, %v3095
    %3297 = vxpose.xlu0.b32.start [1/16] %v3296, 128
    %3298 = vxpose.xlu0.b32.cont [2/16] 0.0, 128
    %3299 = vxpose.xlu0.b32.cont [3/16] 0.0, 128
    %3300 = vxpose.xlu0.b32.cont [4/16] 0.0, 128
    %3301 = vxpose.xlu0.b32.cont [5/16] 0.0, 128
    %3302 = vxpose.xlu0.b32.cont [6/16] 0.0, 128
    %3303 = vxpose.xlu0.b32.cont [7/16] 0.0, 128
    %3304 = vxpose.xlu0.b32.cont [8/16] 0.0, 128
    %3305 = vxpose.xlu0.b32.cont [9/16] 0.0, 128
    %3306 = vxpose.xlu0.b32.cont [10/16] 0.0, 128
    %3307 = vxpose.xlu0.b32.cont [11/16] 0.0, 128
    %3308 = vxpose.xlu0.b32.cont [12/16] 0.0, 128
    %3309 = vxpose.xlu0.b32.cont [13/16] 0.0, 128
    %3310 = vxpose.xlu0.b32.cont [14/16] 0.0, 128
    %3311 = vxpose.xlu0.b32.cont [15/16] 0.0, 128
    %3312 = vxpose.xlu0.b32.end [16/16] 0.0, 128
    %v3313 = vpop.trf.xlu0
    %v3314 = vpop.trf.xlu0
    %v3315 = vpop.trf.xlu0
    %v3316 = vpop.trf.xlu0
    %v3317 = vpop.trf.xlu0
    %v3318 = vpop.trf.xlu0
    %v3319 = vpop.trf.xlu0
    %v3320 = vpop.trf.xlu0
    %v3321 = vpop.trf.xlu0
    %v3322 = vpop.trf.xlu0
    %v3323 = vpop.trf.xlu0
    %v3324 = vpop.trf.xlu0
    %v3325 = vpop.trf.xlu0
    %v3326 = vpop.trf.xlu0
    %v3327 = vpop.trf.xlu0
    %v3328 = vpop.trf.xlu0
    %v3330 = vsel %vm572, %v3313, 0
    %v3333 = vsel %vm572, %v3314, 0
    %v3336 = vsel %vm572, %v3315, 0
    %v3339 = vsel %vm572, %v3316, 0
    %v3342 = vsel %vm572, %v3317, 0
    %v3345 = vsel %vm572, %v3318, 0
    %v3348 = vsel %vm479, %v3295, 0
    %3350 = vmatprep.subr.mxu0 0.0
    %3351 = vmatpush1.msra.mxu0 %v3348
    %3352 = vmatprep.subr.mxu0 0.0
    %3353 = vmatpush1.msra.mxu0 0.0
    %3354 = vmatprep.subr.mxu0 0.0
    %3355 = vmatpush1.msra.mxu0 0.0
    %3356 = vmatprep.subr.mxu0 0.0
    %3357 = vmatpush1.msra.mxu0 0.0
    %3358 = vmatprep.subr.mxu0 0.0
    %3359 = vmatpush1.msra.mxu0 0.0
    %3360 = vmatprep.subr.mxu0 0.0
    %3361 = vmatpush1.msra.mxu0 0.0
    %3362 = vmatprep.subr.mxu0 0.0
    %3363 = vmatpush1.msra.mxu0 0.0
    %3364 = vmatprep.subr.mxu0 0.0
    %3365 = vmatpush1.msra.mxu0 0.0
    %3366 = vmatprep.subr.mxu0 0.0
    %3367 = vmatpush1.msra.mxu0 0.0
    %3368 = vmatprep.subr.mxu0 0.0
    %3369 = vmatpush1.msra.mxu0 0.0
    %3370 = vmatprep.subr.mxu0 0.0
    %3371 = vmatpush1.msra.mxu0 0.0
    %3372 = vmatprep.subr.mxu0 0.0
    %3373 = vmatpush1.msra.mxu0 0.0
    %3374 = vmatprep.subr.mxu0 0.0
    %3375 = vmatpush1.msra.mxu0 0.0
    %3376 = vmatprep.subr.mxu0 0.0
    %3377 = vmatpush1.msra.mxu0 0.0
    %3378 = vmatprep.subr.mxu0 0.0
    %3379 = vmatpush1.msra.mxu0 0.0
    %3380 = vmatprep.subr.mxu0 0.0
    %3381 = vmatpush1.msra.mxu0 0.0
    %3382 = vmatprep.subr.mxu0 0.0
    %3383 = vmatpush1.msra.mxu0 0.0
    %3384 = vmatprep.subr.mxu0 0.0
    %3385 = vmatpush1.msra.mxu0 0.0
    %3386 = vmatprep.subr.mxu0 0.0
    %3387 = vmatpush1.msra.mxu0 0.0
    %3388 = vmatprep.subr.mxu0 0.0
    %3389 = vmatpush1.msra.mxu0 0.0
    %3390 = vmatprep.subr.mxu0 0.0
    %3391 = vmatpush1.msra.mxu0 0.0
    %3392 = vmatprep.subr.mxu0 0.0
    %3393 = vmatpush1.msra.mxu0 0.0
    %3394 = vmatprep.subr.mxu0 0.0
    %3395 = vmatpush1.msra.mxu0 0.0
    %3396 = vmatprep.subr.mxu0 0.0
    %3397 = vmatpush1.msra.mxu0 0.0
    %3398 = vmatprep.subr.mxu0 0.0
    %3399 = vmatpush1.msra.mxu0 0.0
    %3400 = vmatprep.subr.mxu0 0.0
    %3401 = vmatpush1.msra.mxu0 0.0
    %3402 = vmatprep.subr.mxu0 0.0
    %3403 = vmatpush1.msra.mxu0 0.0
    %3404 = vmatprep.subr.mxu0 0.0
    %3405 = vmatpush1.msra.mxu0 0.0
    %3406 = vmatprep.subr.mxu0 0.0
    %3407 = vmatpush1.msra.mxu0 0.0
    %3408 = vmatprep.subr.mxu0 0.0
    %3409 = vmatpush1.msra.mxu0 0.0
    %3410 = vmatprep.subr.mxu0 0.0
    %3411 = vmatpush1.msra.mxu0 0.0
    %3412 = vmatprep.subr.mxu0 0.0
    %3413 = vmatpush1.msra.mxu0 0.0
    %3414 = vmatprep.mubr.f32.mxu0 0.0
    %3415 = vmatmul.mubr.f32.gmra.mrb[0].mxu0 %v3330
    %v3416 = vpop.f32.mrb[0].mxu0
    %v3417 = vadd.f32 0.0, %v3416
    %v3418 = vpop.f32.mrb[0].mxu0
    %3419 = vmatprep.mubr.f32.mxu0 0.0
    %3420 = vmatmul.mubr.f32.gmra.mrb[0].mxu0 %v3333
    %v3421 = vpop.f32.mrb[0].mxu0
    %v3422 = vadd.f32 0.0, %v3421
    %v3423 = vpop.f32.mrb[0].mxu0
    %3424 = vmatprep.mubr.f32.mxu0 0.0
    %3425 = vmatmul.mubr.f32.gmra.mrb[0].mxu0 %v3336
    %v3426 = vpop.f32.mrb[0].mxu0
    %v3427 = vadd.f32 0.0, %v3426
    %v3428 = vpop.f32.mrb[0].mxu0
    %3429 = vmatprep.mubr.f32.mxu0 0.0
    %3430 = vmatmul.mubr.f32.gmra.mrb[0].mxu0 %v3339
    %v3431 = vpop.f32.mrb[0].mxu0
    %v3432 = vadd.f32 0.0, %v3431
    %v3433 = vpop.f32.mrb[0].mxu0
    %3434 = vmatprep.mubr.f32.mxu0 0.0
    %3435 = vmatmul.mubr.f32.gmra.mrb[0].mxu0 %v3342
    %v3436 = vpop.f32.mrb[0].mxu0
    %v3437 = vadd.f32 0.0, %v3436
    %v3438 = vpop.f32.mrb[0].mxu0
    %3439 = vmatprep.mubr.f32.mxu0 0.0
    %3440 = vmatmul.mubr.f32.gmra.mrb[0].mxu0 %v3345
    %v3441 = vpop.f32.mrb[0].mxu0
    %v3442 = vadd.f32 0.0, %v3441
    %v3443 = vpop.f32.mrb[0].mxu0
    %3444 = vdwg.mxu0
    %v3445 = vsub.f32 1.0, %v3417
    %v3446 = vsub.f32 1.0, %v3422
    %v3447 = vsub.f32 1.0, %v3427
    %v3448 = vmul.f32 %v2762, %v3445
    %v3449 = vmul.f32 %v2763, %v3446
    %v3450 = vmul.f32 %v2764, %v3447
    %v3451 = vadd.f32 %v3448, %v3432
    %v3452 = vadd.f32 %v3449, %v3437
    %v3453 = vadd.f32 %v3450, %v3442
    %3454 = vrot.lane.b32.xlu0 %v3095, 60
    %v3455 = vpop.permute.xlu0 %3454
    %v3456 = vsel %vm178, %v3455, 0
    %v3459 = vsel %vm377, %v3453, 0
    %3461 = vmatprep.subr.mxu0 0.0
    %3462 = vmatpush1.msra.mxu0 %v3451
    %3463 = vmatprep.subr.mxu0 0.0
    %3464 = vmatpush1.msra.mxu0 %v3452
    %3465 = vmatprep.subr.mxu0 0.0
    %3466 = vmatpush1.msra.mxu0 %v3459
    %3467 = vmatprep.subr.mxu0 0.0
    %3468 = vmatpush1.msra.mxu0 0.0
    %3469 = vmatprep.subr.mxu0 0.0
    %3470 = vmatpush1.msra.mxu0 0.0
    %3471 = vmatprep.subr.mxu0 0.0
    %3472 = vmatpush1.msra.mxu0 0.0
    %3473 = vmatprep.subr.mxu0 0.0
    %3474 = vmatpush1.msra.mxu0 0.0
    %3475 = vmatprep.subr.mxu0 0.0
    %3476 = vmatpush1.msra.mxu0 0.0
    %3477 = vmatprep.subr.mxu0 0.0
    %3478 = vmatpush1.msra.mxu0 0.0
    %3479 = vmatprep.subr.mxu0 0.0
    %3480 = vmatpush1.msra.mxu0 0.0
    %3481 = vmatprep.subr.mxu0 0.0
    %3482 = vmatpush1.msra.mxu0 0.0
    %3483 = vmatprep.subr.mxu0 0.0
    %3484 = vmatpush1.msra.mxu0 0.0
    %3485 = vmatprep.subr.mxu0 0.0
    %3486 = vmatpush1.msra.mxu0 0.0
    %3487 = vmatprep.subr.mxu0 0.0
    %3488 = vmatpush1.msra.mxu0 0.0
    %3489 = vmatprep.subr.mxu0 0.0
    %3490 = vmatpush1.msra.mxu0 0.0
    %3491 = vmatprep.subr.mxu0 0.0
    %3492 = vmatpush1.msra.mxu0 0.0
    %3493 = vmatprep.subr.mxu0 0.0
    %3494 = vmatpush1.msra.mxu0 0.0
    %3495 = vmatprep.subr.mxu0 0.0
    %3496 = vmatpush1.msra.mxu0 0.0
    %3497 = vmatprep.subr.mxu0 0.0
    %3498 = vmatpush1.msra.mxu0 0.0
    %3499 = vmatprep.subr.mxu0 0.0
    %3500 = vmatpush1.msra.mxu0 0.0
    %3501 = vmatprep.subr.mxu0 0.0
    %3502 = vmatpush1.msra.mxu0 0.0
    %3503 = vmatprep.subr.mxu0 0.0
    %3504 = vmatpush1.msra.mxu0 0.0
    %3505 = vmatprep.subr.mxu0 0.0
    %3506 = vmatpush1.msra.mxu0 0.0
    %3507 = vmatprep.subr.mxu0 0.0
    %3508 = vmatpush1.msra.mxu0 0.0
    %3509 = vmatprep.subr.mxu0 0.0
    %3510 = vmatpush1.msra.mxu0 0.0
    %3511 = vmatprep.subr.mxu0 0.0
    %3512 = vmatpush1.msra.mxu0 0.0
    %3513 = vmatprep.subr.mxu0 0.0
    %3514 = vmatpush1.msra.mxu0 0.0
    %3515 = vmatprep.subr.mxu0 0.0
    %3516 = vmatpush1.msra.mxu0 0.0
    %3517 = vmatprep.subr.mxu0 0.0
    %3518 = vmatpush1.msra.mxu0 0.0
    %3519 = vmatprep.subr.mxu0 0.0
    %3520 = vmatpush1.msra.mxu0 0.0
    %3521 = vmatprep.subr.mxu0 0.0
    %3522 = vmatpush1.msra.mxu0 0.0
    %3523 = vmatprep.subr.mxu0 0.0
    %3524 = vmatpush1.msra.mxu0 0.0
    %3525 = vmatprep.mubr.f32.mxu0 0.0
    %3526 = vmatmul.mubr.f32.gmra.mrb[0].mxu0 %v3456
    %v3527 = vpop.f32.mrb[0].mxu0
    %v3528 = vadd.f32 0.0, %v3527
    %v3529 = vpop.f32.mrb[0].mxu0
    %3530 = vdwg.mxu0
    %3531 = vrot.lane.b32.xlu0 %v3219, 60
    %v3532 = vpop.permute.xlu0 %3531
    %v3534 = vsel %vm456, %v3532, 0.0
    %3535 = vadd.xlane.f32.xlu0 %v3534
    %v3536 = vpop.xlane.xlu0 %3535
    %v3537 = vmul.f32 %v3451, %v3451
    %v3538 = vmul.f32 %v3452, %v3452
    %v3539 = vmul.f32 %v3453, %v3453
    %v3540 = vadd.f32 %v3537, %v3538
    %v3541 = vsel %vm377, %v3539, 0.0
    %v3542 = vadd.f32 %v3540, %v3541
    %v3543 = vrot.slane %v3542, 4
    %v3544 = vadd.f32 %v3542, %v3543
    %v3545 = vrot.slane %v3544, 2
    %v3546 = vadd.f32 %v3544, %v3545
    %v3547 = vrot.slane %v3546, 1
    %v3548 = vadd.f32 %v3546, %v3547
    %v3549 = vmax.f32 %v3548, 1e-16
    %v3550 = vmax.f32 %v3536, 1e-16
    %v3551 = vmul.f32 %v3549, %v3550
    %v3552 = vrsqrt.pop %v3551
    %v3553 = vmul.f32 %v3528, %v3552
    %3554 = vset.pattern.permute.xlu0 89
    %3555 = vperm.xlu0 %3554, %v3119
    %v3556 = vpop.permute.xlu0 %3555
    %v3558 = vmul.f32 %v3556, %v3553
    %v3559 = vsel %vm479, %v3558, -inf
    %3560 = vmax.xlane.f32.xlu0 %v3559
    %v3561 = vpop.xlane.xlu0 %3560
    %v3562 = vsub.f32 %v3558, %v3561
    %v3563 = vmul.f32 %v3562, 1.442695
    %v3564 = vpow.pop %v3563
    %v3565 = vsel %vm479, %v3564, 0.0
    %3566 = vadd.xlane.f32.xlu0 %v3565
    %v3567 = vpop.xlane.xlu0 %3566
    %v3568 = vrcp.pop %v3567
    %v3569 = vmul.f32 %v3564, %v3568
    %3570 = vset.pattern.permute.xlu0 91
    %3571 = vperm.xlu0 %3570, %v3101
    %v3572 = vpop.permute.xlu0 %3571
    %v3574 = vmul.f32 %v3572, %v3569
    %3575 = vset.pattern.permute.xlu0 91
    %3576 = vperm.xlu0 %3575, %v3254
    %v3577 = vpop.permute.xlu0 %3576
    %v3579 = vmul.f32 %v3577, %v2924
    %v3580 = vadd.f32 %v3574, %v3579
    %3581 = vrot.lane.b32.xlu0 %v3580, 1
    %v3582 = vpop.permute.xlu0 %3581
    %3584 = vset.pattern.permute.xlu0 97
    %3585 = vperm.xlu0 %3584, %v3143
    %v3586 = vpop.permute.xlu0 %3585
    %v3588 = vmul.f32 %v3586, %v3582
    %3589 = vset.pattern.permute.xlu0 98
    %3590 = vperm.xlu0 %3589, %v3143
    %v3591 = vpop.permute.xlu0 %3590
    %v3593 = vmul.f32 %v3591, %v3580
    %v3594 = vadd.f32 %v3588, %v3593
    %3595 = vrot.lane.b32.xlu0 %v3580, 127
    %v3596 = vpop.permute.xlu0 %3595
    %3597 = vset.pattern.permute.xlu0 99
    %3598 = vperm.xlu0 %3597, %v3143
    %v3599 = vpop.permute.xlu0 %3598
    %v3601 = vmul.f32 %v3599, %v3596
    %v3602 = vadd.f32 %v3594, %v3601
    %v3603 = vadd.f32 %v3602, 1e-16
    %3604 = vset.pattern.permute.xlu0 93
    %3605 = vperm.xlu0 %3604, %v3120
    %v3606 = vpop.permute.xlu0 %3605
    %v3608 = vpow.f32 %v3603, %v3606
    %v3609 = vsel %vm479, %v3608, 0.0
    %3610 = vadd.xlane.f32.xlu0 %v3609
    %v3611 = vpop.xlane.xlu0 %3610
    %v3612 = vrcp.pop %v3611
    %v3613 = vmul.f32 %v3608, %v3612
    %3614 = vmatprep.subr.mxu0 0.0
    %3615 = vmatpush1.xpose.msra.mxu0 %v3451
    %3616 = vmatprep.subr.mxu0 0.0
    %3617 = vmatpush1.xpose.msra.mxu0 %v3452
    %3618 = vmatprep.subr.mxu0 0.0
    %3619 = vmatpush1.xpose.msra.mxu0 %v3453
    %3620 = vmatprep.subr.mxu0 0.0
    %3621 = vmatpush1.xpose.msra.mxu0 0.0
    %3622 = vmatprep.subr.mxu0 0.0
    %3623 = vmatpush1.xpose.msra.mxu0 0.0
    %3624 = vmatprep.subr.mxu0 0.0
    %3625 = vmatpush1.xpose.msra.mxu0 0.0
    %3626 = vmatprep.subr.mxu0 0.0
    %3627 = vmatpush1.xpose.msra.mxu0 0.0
    %3628 = vmatprep.subr.mxu0 0.0
    %3629 = vmatpush1.xpose.msra.mxu0 0.0
    %3630 = vmatprep.subr.mxu0 0.0
    %3631 = vmatpush1.xpose.msra.mxu0 0.0
    %3632 = vmatprep.subr.mxu0 0.0
    %3633 = vmatpush1.xpose.msra.mxu0 0.0
    %3634 = vmatprep.subr.mxu0 0.0
    %3635 = vmatpush1.xpose.msra.mxu0 0.0
    %3636 = vmatprep.subr.mxu0 0.0
    %3637 = vmatpush1.xpose.msra.mxu0 0.0
    %3638 = vmatprep.subr.mxu0 0.0
    %3639 = vmatpush1.xpose.msra.mxu0 0.0
    %3640 = vmatprep.subr.mxu0 0.0
    %3641 = vmatpush1.xpose.msra.mxu0 0.0
    %3642 = vmatprep.subr.mxu0 0.0
    %3643 = vmatpush1.xpose.msra.mxu0 0.0
    %3644 = vmatprep.subr.mxu0 0.0
    %3645 = vmatpush1.xpose.msra.mxu0 0.0
    %3646 = vmatprep.subr.mxu0 0.0
    %3647 = vmatpush1.xpose.msra.mxu0 0.0
    %3648 = vmatprep.subr.mxu0 0.0
    %3649 = vmatpush1.xpose.msra.mxu0 0.0
    %3650 = vmatprep.subr.mxu0 0.0
    %3651 = vmatpush1.xpose.msra.mxu0 0.0
    %3652 = vmatprep.subr.mxu0 0.0
    %3653 = vmatpush1.xpose.msra.mxu0 0.0
    %3654 = vmatprep.subr.mxu0 0.0
    %3655 = vmatpush1.xpose.msra.mxu0 0.0
    %3656 = vmatprep.subr.mxu0 0.0
    %3657 = vmatpush1.xpose.msra.mxu0 0.0
    %3658 = vmatprep.subr.mxu0 0.0
    %3659 = vmatpush1.xpose.msra.mxu0 0.0
    %3660 = vmatprep.subr.mxu0 0.0
    %3661 = vmatpush1.xpose.msra.mxu0 0.0
    %3662 = vmatprep.subr.mxu0 0.0
    %3663 = vmatpush1.xpose.msra.mxu0 0.0
    %3664 = vmatprep.subr.mxu0 0.0
    %3665 = vmatpush1.xpose.msra.mxu0 0.0
    %3666 = vmatprep.subr.mxu0 0.0
    %3667 = vmatpush1.xpose.msra.mxu0 0.0
    %3668 = vmatprep.subr.mxu0 0.0
    %3669 = vmatpush1.xpose.msra.mxu0 0.0
    %3670 = vmatprep.subr.mxu0 0.0
    %3671 = vmatpush1.xpose.msra.mxu0 0.0
    %3672 = vmatprep.subr.mxu0 0.0
    %3673 = vmatpush1.xpose.msra.mxu0 0.0
    %3674 = vmatprep.subr.mxu0 0.0
    %3675 = vmatpush1.xpose.msra.mxu0 0.0
    %3676 = vmatprep.subr.mxu0 0.0
    %3677 = vmatpush1.xpose.msra.mxu0 0.0
    %3678 = vmatprep.mubr.f32.mxu0 0.0
    %3679 = vmatmul.mubr.f32.gmra.mrb[0].mxu0 %v3613
    %v3680 = vpop.f32.mrb[0].mxu0
    %v3681 = vadd.f32 0.0, %v3680
    %v3682 = vpop.f32.mrb[0].mxu0
    %3683 = vdwg.mxu0
    %3684 = vst [vmem:[#allocation7 + $0x4] sm:$0x1] %v3295
    %3685 = vst [vmem:[#allocation9 + $0x4] sm:$0x1] %v3613
    %3686 = vrot.lane.b32.xlu0 %v3095, 104
    %v3687 = vpop.permute.xlu0 %3686
    %3689 = vst.msk [vmem:[#allocation10 + $0x4] sm:$0x1] %vm456, %v3687
    %3690 = vst.msk [vmem:[#allocation12 + $0x4] sm:$0x1] %vm456, %v3681
    %v3691 = vld [vmem:[#allocation2 + $0x5] sm:$0x1]
    %v3692 = vpack.c.bf16 %v3681, %v3681
    %v3694 = vsel %vm178, %v3692, 0
    %3696 = vmatprep.subr.bf16.mxu0 0
    %3697 = vmatpush1.bf16.msra.mxu0 %v175
    %3698 = vmatprep.subr.bf16.mxu0 0
    %3699 = vmatpush1.bf16.msra.mxu0 %v183
    %3700 = vmatprep.subr.bf16.mxu0 0
    %3701 = vmatpush1.bf16.msra.mxu0 0
    %3702 = vmatprep.subr.bf16.mxu0 0
    %3703 = vmatpush1.bf16.msra.mxu0 0
    %3704 = vmatprep.subr.bf16.mxu0 0
    %3705 = vmatpush1.bf16.msra.mxu0 0
    %3706 = vmatprep.subr.bf16.mxu0 0
    %3707 = vmatpush1.bf16.msra.mxu0 0
    %3708 = vmatprep.subr.bf16.mxu0 0
    %3709 = vmatpush1.bf16.msra.mxu0 0
    %3710 = vmatprep.subr.bf16.mxu0 0
    %3711 = vmatpush1.bf16.msra.mxu0 0
    %3712 = vmatprep.subr.bf16.mxu0 0
    %3713 = vmatpush1.bf16.msra.mxu0 0
    %3714 = vmatprep.subr.bf16.mxu0 0
    %3715 = vmatpush1.bf16.msra.mxu0 0
    %3716 = vmatprep.subr.bf16.mxu0 0
    %3717 = vmatpush1.bf16.msra.mxu0 0
    %3718 = vmatprep.subr.bf16.mxu0 0
    %3719 = vmatpush1.bf16.msra.mxu0 0
    %3720 = vmatprep.subr.bf16.mxu0 0
    %3721 = vmatpush1.bf16.msra.mxu0 0
    %3722 = vmatprep.subr.bf16.mxu0 0
    %3723 = vmatpush1.bf16.msra.mxu0 0
    %3724 = vmatprep.subr.bf16.mxu0 0
    %3725 = vmatpush1.bf16.msra.mxu0 0
    %3726 = vmatprep.subr.bf16.mxu0 0
    %3727 = vmatpush1.bf16.msra.mxu0 0
    %3728 = vmatprep.mubr.bf16.mxu0 0
    %3729 = vmatmul.mubr.bf16.gmra.mrb[0].mxu0 %v3694
    %v3730 = vpop.f32.mrb[0].mxu0
    %v3731 = vadd.f32 0.0, %v3730
    %v3732 = vpop.f32.mrb[0].mxu0
    %v3733 = vpop.f32.mrb[0].mxu0
    %v3734 = vpop.f32.mrb[0].mxu0
    %3735 = vdwg.mxu0
    %v3736 = vadd.f32 %v3691, %v3731
    %v3737 = vxor.u32 %v3736, 2147483648
    %v3738 = vmul.f32 %v3737, 1.442695
    %v3739 = vpow.pop %v3738
    %v3740 = vadd.f32 %v3739, 1.0
    %v3741 = vrcp.pop %v3740
    %v3742 = vmul.f32 1.0, %v3741
    %v3743 = vpack.c.bf16 %v3742, %v3742
    %3744 = vmatprep.subr.bf16.mxu0 0
    %3745 = vmatpush1.bf16.msra.mxu0 %v265
    %3746 = vmatprep.subr.bf16.mxu0 0
    %3747 = vmatpush1.bf16.msra.mxu0 %v266
    %3748 = vmatprep.subr.bf16.mxu0 0
    %3749 = vmatpush1.bf16.msra.mxu0 %v267
    %3750 = vmatprep.subr.bf16.mxu0 0
    %3751 = vmatpush1.bf16.msra.mxu0 %v268
    %3752 = vmatprep.subr.bf16.mxu0 0
    %3753 = vmatpush1.bf16.msra.mxu0 %v269
    %3754 = vmatprep.subr.bf16.mxu0 0
    %3755 = vmatpush1.bf16.msra.mxu0 %v270
    %3756 = vmatprep.subr.bf16.mxu0 0
    %3757 = vmatpush1.bf16.msra.mxu0 %v271
    %3758 = vmatprep.subr.bf16.mxu0 0
    %3759 = vmatpush1.bf16.msra.mxu0 %v272
    %3760 = vmatprep.subr.bf16.mxu0 0
    %3761 = vmatpush1.bf16.msra.mxu0 0
    %3762 = vmatprep.subr.bf16.mxu0 0
    %3763 = vmatpush1.bf16.msra.mxu0 0
    %3764 = vmatprep.subr.bf16.mxu0 0
    %3765 = vmatpush1.bf16.msra.mxu0 0
    %3766 = vmatprep.subr.bf16.mxu0 0
    %3767 = vmatpush1.bf16.msra.mxu0 0
    %3768 = vmatprep.subr.bf16.mxu0 0
    %3769 = vmatpush1.bf16.msra.mxu0 0
    %3770 = vmatprep.subr.bf16.mxu0 0
    %3771 = vmatpush1.bf16.msra.mxu0 0
    %3772 = vmatprep.subr.bf16.mxu0 0
    %3773 = vmatpush1.bf16.msra.mxu0 0
    %3774 = vmatprep.subr.bf16.mxu0 0
    %3775 = vmatpush1.bf16.msra.mxu0 0
    %3776 = vmatprep.mubr.bf16.mxu0 0
    %3777 = vmatmul.mubr.bf16.gmra.mrb[0].mxu0 %v3743
    %v3778 = vpop.f32.mrb[0].mxu0
    %v3779 = vadd.f32 %v71, %v3778
    %v3780 = vpop.f32.mrb[0].mxu0
    %v3781 = vpop.f32.mrb[0].mxu0
    %v3782 = vpop.f32.mrb[0].mxu0
    %3783 = vdwg.mxu0
    %v3784 = vtanh.pop %v3779
    %v3785 = vxor.u32 %v3779, 2147483648
    %v3786 = vmul.f32 %v3785, 1.442695
    %v3787 = vpow.pop %v3786
    %v3788 = vadd.f32 %v3787, 1.0
    %v3789 = vrcp.pop %v3788
    %v3790 = vmul.f32 1.0, %v3789
    %v3791 = vmax.f32 %v3779, 0.0
    %vm3792 = vcmp.ne.f32.partialorder %v3779, %v3779
    %v3793 = vadd.f32 %v3779, 0.0
    %v3794 = vand.u32 2147483647, %v3779
    %v3795 = vsub.f32 0.0, %v3794
    %v3796 = vmul.f32 %v3795, 1.442695
    %v3797 = vpow.pop %v3796
    %v3798 = vadd.f32 %v3797, 1.0
    %v3799 = vlog2.pop %v3798
    %v3800 = vmul.f32 %v3799, 0.6931472
    %v3801 = vmul.f32 -0.5, %v3797
    %v3802 = vadd.f32 %v3801, 1.0
    %v3803 = vmul.f32 %v3802, %v3797
    %v3804 = vand.u32 2147483647, %v3797
    %vm3805 = vcmp.lt.f32.partialorder %v3804, 0.0004427343
    %v3806 = vsel %vm3805, %v3803, %v3800
    %v3807 = vadd.f32 %v3791, %v3806
    %v3808 = vsel %vm3792, %v3793, %v3807
    %v3809 = vadd.f32 %v3808, 1.0
    %v3810 = vsel %vm347, %v3779, -inf
    %3811 = vmax.xlane.f32.xlu0 %v3810
    %v3812 = vpop.xlane.xlu0 %3811
    %v3813 = vsub.f32 %v3779, %v3812
    %v3814 = vmul.f32 %v3813, 1.442695
    %v3815 = vpow.pop %v3814
    %3817 = vrot.lane.b32.xlu0 %v3815, 34
    %v3818 = vpop.permute.xlu0 %3817
    %v3820 = vsel %vm358, %v3818, 0.0
    %3821 = vadd.xlane.f32.xlu0 %v3820
    %v3822 = vpop.xlane.xlu0 %3821
    %v3823 = vrcp.pop %v3822
    %v3824 = vmul.f32 %v3815, %v3823
    %3825 = vrot.lane.b32.xlu0 %v3815, 31
    %v3826 = vpop.permute.xlu0 %3825
    %v3828 = vsel %vm358, %v3826, 0.0
    %3829 = vadd.xlane.f32.xlu0 %v3828
    %v3830 = vpop.xlane.xlu0 %3829
    %v3831 = vrcp.pop %v3830
    %v3832 = vmul.f32 %v3815, %v3831
    %3834 = vrot.lane.b32.xlu0 %v3784, 80
    %v3835 = vpop.permute.xlu0 %3834
    %v3836 = vsel %vm178, %v3835, 0
    %3838 = vmatprep.subr.mxu0 0.0
    %3839 = vmatpush1.msra.mxu0 %v3451
    %3840 = vmatprep.subr.mxu0 0.0
    %3841 = vmatpush1.msra.mxu0 %v3452
    %3842 = vmatprep.subr.mxu0 0.0
    %3843 = vmatpush1.msra.mxu0 %v3459
    %3844 = vmatprep.subr.mxu0 0.0
    %3845 = vmatpush1.msra.mxu0 0.0
    %3846 = vmatprep.subr.mxu0 0.0
    %3847 = vmatpush1.msra.mxu0 0.0
    %3848 = vmatprep.subr.mxu0 0.0
    %3849 = vmatpush1.msra.mxu0 0.0
    %3850 = vmatprep.subr.mxu0 0.0
    %3851 = vmatpush1.msra.mxu0 0.0
    %3852 = vmatprep.subr.mxu0 0.0
    %3853 = vmatpush1.msra.mxu0 0.0
    %3854 = vmatprep.subr.mxu0 0.0
    %3855 = vmatpush1.msra.mxu0 0.0
    %3856 = vmatprep.subr.mxu0 0.0
    %3857 = vmatpush1.msra.mxu0 0.0
    %3858 = vmatprep.subr.mxu0 0.0
    %3859 = vmatpush1.msra.mxu0 0.0
    %3860 = vmatprep.subr.mxu0 0.0
    %3861 = vmatpush1.msra.mxu0 0.0
    %3862 = vmatprep.subr.mxu0 0.0
    %3863 = vmatpush1.msra.mxu0 0.0
    %3864 = vmatprep.subr.mxu0 0.0
    %3865 = vmatpush1.msra.mxu0 0.0
    %3866 = vmatprep.subr.mxu0 0.0
    %3867 = vmatpush1.msra.mxu0 0.0
    %3868 = vmatprep.subr.mxu0 0.0
    %3869 = vmatpush1.msra.mxu0 0.0
    %3870 = vmatprep.subr.mxu0 0.0
    %3871 = vmatpush1.msra.mxu0 0.0
    %3872 = vmatprep.subr.mxu0 0.0
    %3873 = vmatpush1.msra.mxu0 0.0
    %3874 = vmatprep.subr.mxu0 0.0
    %3875 = vmatpush1.msra.mxu0 0.0
    %3876 = vmatprep.subr.mxu0 0.0
    %3877 = vmatpush1.msra.mxu0 0.0
    %3878 = vmatprep.subr.mxu0 0.0
    %3879 = vmatpush1.msra.mxu0 0.0
    %3880 = vmatprep.subr.mxu0 0.0
    %3881 = vmatpush1.msra.mxu0 0.0
    %3882 = vmatprep.subr.mxu0 0.0
    %3883 = vmatpush1.msra.mxu0 0.0
    %3884 = vmatprep.subr.mxu0 0.0
    %3885 = vmatpush1.msra.mxu0 0.0
    %3886 = vmatprep.subr.mxu0 0.0
    %3887 = vmatpush1.msra.mxu0 0.0
    %3888 = vmatprep.subr.mxu0 0.0
    %3889 = vmatpush1.msra.mxu0 0.0
    %3890 = vmatprep.subr.mxu0 0.0
    %3891 = vmatpush1.msra.mxu0 0.0
    %3892 = vmatprep.subr.mxu0 0.0
    %3893 = vmatpush1.msra.mxu0 0.0
    %3894 = vmatprep.subr.mxu0 0.0
    %3895 = vmatpush1.msra.mxu0 0.0
    %3896 = vmatprep.subr.mxu0 0.0
    %3897 = vmatpush1.msra.mxu0 0.0
    %3898 = vmatprep.subr.mxu0 0.0
    %3899 = vmatpush1.msra.mxu0 0.0
    %3900 = vmatprep.subr.mxu0 0.0
    %3901 = vmatpush1.msra.mxu0 0.0
    %3902 = vmatprep.mubr.f32.mxu0 0.0
    %3903 = vmatmul.mubr.f32.gmra.mrb[0].mxu0 %v3836
    %v3904 = vpop.f32.mrb[0].mxu0
    %v3905 = vadd.f32 0.0, %v3904
    %v3906 = vpop.f32.mrb[0].mxu0
    %3907 = vdwg.mxu0
    %v3908 = vmul.f32 %v3784, %v3784
    %3910 = vrot.lane.b32.xlu0 %v3908, 80
    %v3911 = vpop.permute.xlu0 %3910
    %v3913 = vsel %vm456, %v3911, 0.0
    %3914 = vadd.xlane.f32.xlu0 %v3913
    %v3915 = vpop.xlane.xlu0 %3914
    %v3916 = vmax.f32 %v3915, 1e-16
    %v3917 = vmul.f32 %v3549, %v3916
    %v3918 = vrsqrt.pop %v3917
    %v3919 = vmul.f32 %v3905, %v3918
    %3921 = vset.pattern.permute.xlu0 88
    %3922 = vperm.xlu0 %3921, %v3808
    %v3923 = vpop.permute.xlu0 %3922
    %v3925 = vmul.f32 %v3923, %v3919
    %v3926 = vsel %vm479, %v3925, -inf
    %3927 = vmax.xlane.f32.xlu0 %v3926
    %v3928 = vpop.xlane.xlu0 %3927
    %v3929 = vsub.f32 %v3925, %v3928
    %v3930 = vmul.f32 %v3929, 1.442695
    %v3931 = vpow.pop %v3930
    %v3932 = vsel %vm479, %v3931, 0.0
    %3933 = vadd.xlane.f32.xlu0 %v3932
    %v3934 = vpop.xlane.xlu0 %3933
    %v3935 = vrcp.pop %v3934
    %v3936 = vmul.f32 %v3931, %v3935
    %3938 = vset.pattern.permute.xlu0 90
    %3939 = vperm.xlu0 %3938, %v3790
    %v3940 = vpop.permute.xlu0 %3939
    %v3942 = vmul.f32 %v3940, %v3936
    %v3943 = vsub.f32 1.0, %v3790
    %3945 = vset.pattern.permute.xlu0 90
    %3946 = vperm.xlu0 %3945, %v3943
    %v3947 = vpop.permute.xlu0 %3946
    %v3949 = vmul.f32 %v3947, %v3295
    %v3950 = vadd.f32 %v3942, %v3949
    %3951 = vrot.lane.b32.xlu0 %v3950, 1
    %v3952 = vpop.permute.xlu0 %3951
    %3954 = vset.pattern.permute.xlu0 94
    %3955 = vperm.xlu0 %3954, %v3824
    %v3956 = vpop.permute.xlu0 %3955
    %v3958 = vmul.f32 %v3956, %v3952
    %3959 = vset.pattern.permute.xlu0 95
    %3960 = vperm.xlu0 %3959, %v3824
    %v3961 = vpop.permute.xlu0 %3960
    %v3963 = vmul.f32 %v3961, %v3950
    %v3964 = vadd.f32 %v3958, %v3963
    %3965 = vrot.lane.b32.xlu0 %v3950, 127
    %v3966 = vpop.permute.xlu0 %3965
    %3967 = vset.pattern.permute.xlu0 96
    %3968 = vperm.xlu0 %3967, %v3824
    %v3969 = vpop.permute.xlu0 %3968
    %v3971 = vmul.f32 %v3969, %v3966
    %v3972 = vadd.f32 %v3964, %v3971
    %v3973 = vadd.f32 %v3972, 1e-16
    %3975 = vset.pattern.permute.xlu0 92
    %3976 = vperm.xlu0 %3975, %v3809
    %v3977 = vpop.permute.xlu0 %3976
    %v3979 = vpow.f32 %v3973, %v3977
    %v3980 = vsel %vm479, %v3979, 0.0
    %3981 = vadd.xlane.f32.xlu0 %v3980
    %v3982 = vpop.xlane.xlu0 %3981
    %v3983 = vrcp.pop %v3982
    %v3984 = vmul.f32 %v3979, %v3983
    %v3985 = vsel %vm166, %v3790, %v3784
    %3986 = vxpose.xlu0.b32.start [1/16] %v3985, 128
    %3987 = vxpose.xlu0.b32.cont [2/16] 0.0, 128
    %3988 = vxpose.xlu0.b32.cont [3/16] 0.0, 128
    %3989 = vxpose.xlu0.b32.cont [4/16] 0.0, 128
    %3990 = vxpose.xlu0.b32.cont [5/16] 0.0, 128
    %3991 = vxpose.xlu0.b32.cont [6/16] 0.0, 128
    %3992 = vxpose.xlu0.b32.cont [7/16] 0.0, 128
    %3993 = vxpose.xlu0.b32.cont [8/16] 0.0, 128
    %3994 = vxpose.xlu0.b32.cont [9/16] 0.0, 128
    %3995 = vxpose.xlu0.b32.cont [10/16] 0.0, 128
    %3996 = vxpose.xlu0.b32.cont [11/16] 0.0, 128
    %3997 = vxpose.xlu0.b32.cont [12/16] 0.0, 128
    %3998 = vxpose.xlu0.b32.cont [13/16] 0.0, 128
    %3999 = vxpose.xlu0.b32.cont [14/16] 0.0, 128
    %4000 = vxpose.xlu0.b32.cont [15/16] 0.0, 128
    %4001 = vxpose.xlu0.b32.end [16/16] 0.0, 128
    %v4002 = vpop.trf.xlu0
    %v4003 = vpop.trf.xlu0
    %v4004 = vpop.trf.xlu0
    %v4005 = vpop.trf.xlu0
    %v4006 = vpop.trf.xlu0
    %v4007 = vpop.trf.xlu0
    %v4008 = vpop.trf.xlu0
    %v4009 = vpop.trf.xlu0
    %v4010 = vpop.trf.xlu0
    %v4011 = vpop.trf.xlu0
    %v4012 = vpop.trf.xlu0
    %v4013 = vpop.trf.xlu0
    %v4014 = vpop.trf.xlu0
    %v4015 = vpop.trf.xlu0
    %v4016 = vpop.trf.xlu0
    %v4017 = vpop.trf.xlu0
    %v4019 = vsel %vm572, %v4002, 0
    %v4022 = vsel %vm572, %v4003, 0
    %v4025 = vsel %vm572, %v4004, 0
    %v4028 = vsel %vm572, %v4005, 0
    %v4031 = vsel %vm572, %v4006, 0
    %v4034 = vsel %vm572, %v4007, 0
    %v4037 = vsel %vm479, %v3984, 0
    %4039 = vmatprep.subr.mxu0 0.0
    %4040 = vmatpush1.msra.mxu0 %v4037
    %4041 = vmatprep.subr.mxu0 0.0
    %4042 = vmatpush1.msra.mxu0 0.0
    %4043 = vmatprep.subr.mxu0 0.0
    %4044 = vmatpush1.msra.mxu0 0.0
    %4045 = vmatprep.subr.mxu0 0.0
    %4046 = vmatpush1.msra.mxu0 0.0
    %4047 = vmatprep.subr.mxu0 0.0
    %4048 = vmatpush1.msra.mxu0 0.0
    %4049 = vmatprep.subr.mxu0 0.0
    %4050 = vmatpush1.msra.mxu0 0.0
    %4051 = vmatprep.subr.mxu0 0.0
    %4052 = vmatpush1.msra.mxu0 0.0
    %4053 = vmatprep.subr.mxu0 0.0
    %4054 = vmatpush1.msra.mxu0 0.0
    %4055 = vmatprep.subr.mxu0 0.0
    %4056 = vmatpush1.msra.mxu0 0.0
    %4057 = vmatprep.subr.mxu0 0.0
    %4058 = vmatpush1.msra.mxu0 0.0
    %4059 = vmatprep.subr.mxu0 0.0
    %4060 = vmatpush1.msra.mxu0 0.0
    %4061 = vmatprep.subr.mxu0 0.0
    %4062 = vmatpush1.msra.mxu0 0.0
    %4063 = vmatprep.subr.mxu0 0.0
    %4064 = vmatpush1.msra.mxu0 0.0
    %4065 = vmatprep.subr.mxu0 0.0
    %4066 = vmatpush1.msra.mxu0 0.0
    %4067 = vmatprep.subr.mxu0 0.0
    %4068 = vmatpush1.msra.mxu0 0.0
    %4069 = vmatprep.subr.mxu0 0.0
    %4070 = vmatpush1.msra.mxu0 0.0
    %4071 = vmatprep.subr.mxu0 0.0
    %4072 = vmatpush1.msra.mxu0 0.0
    %4073 = vmatprep.subr.mxu0 0.0
    %4074 = vmatpush1.msra.mxu0 0.0
    %4075 = vmatprep.subr.mxu0 0.0
    %4076 = vmatpush1.msra.mxu0 0.0
    %4077 = vmatprep.subr.mxu0 0.0
    %4078 = vmatpush1.msra.mxu0 0.0
    %4079 = vmatprep.subr.mxu0 0.0
    %4080 = vmatpush1.msra.mxu0 0.0
    %4081 = vmatprep.subr.mxu0 0.0
    %4082 = vmatpush1.msra.mxu0 0.0
    %4083 = vmatprep.subr.mxu0 0.0
    %4084 = vmatpush1.msra.mxu0 0.0
    %4085 = vmatprep.subr.mxu0 0.0
    %4086 = vmatpush1.msra.mxu0 0.0
    %4087 = vmatprep.subr.mxu0 0.0
    %4088 = vmatpush1.msra.mxu0 0.0
    %4089 = vmatprep.subr.mxu0 0.0
    %4090 = vmatpush1.msra.mxu0 0.0
    %4091 = vmatprep.subr.mxu0 0.0
    %4092 = vmatpush1.msra.mxu0 0.0
    %4093 = vmatprep.subr.mxu0 0.0
    %4094 = vmatpush1.msra.mxu0 0.0
    %4095 = vmatprep.subr.mxu0 0.0
    %4096 = vmatpush1.msra.mxu0 0.0
    %4097 = vmatprep.subr.mxu0 0.0
    %4098 = vmatpush1.msra.mxu0 0.0
    %4099 = vmatprep.subr.mxu0 0.0
    %4100 = vmatpush1.msra.mxu0 0.0
    %4101 = vmatprep.subr.mxu0 0.0
    %4102 = vmatpush1.msra.mxu0 0.0
    %4103 = vmatprep.mubr.f32.mxu0 0.0
    %4104 = vmatmul.mubr.f32.gmra.mrb[0].mxu0 %v4019
    %v4105 = vpop.f32.mrb[0].mxu0
    %v4106 = vadd.f32 0.0, %v4105
    %v4107 = vpop.f32.mrb[0].mxu0
    %4108 = vmatprep.mubr.f32.mxu0 0.0
    %4109 = vmatmul.mubr.f32.gmra.mrb[0].mxu0 %v4022
    %v4110 = vpop.f32.mrb[0].mxu0
    %v4111 = vadd.f32 0.0, %v4110
    %v4112 = vpop.f32.mrb[0].mxu0
    %4113 = vmatprep.mubr.f32.mxu0 0.0
    %4114 = vmatmul.mubr.f32.gmra.mrb[0].mxu0 %v4025
    %v4115 = vpop.f32.mrb[0].mxu0
    %v4116 = vadd.f32 0.0, %v4115
    %v4117 = vpop.f32.mrb[0].mxu0
    %4118 = vmatprep.mubr.f32.mxu0 0.0
    %4119 = vmatmul.mubr.f32.gmra.mrb[0].mxu0 %v4028
    %v4120 = vpop.f32.mrb[0].mxu0
    %v4121 = vadd.f32 0.0, %v4120
    %v4122 = vpop.f32.mrb[0].mxu0
    %4123 = vmatprep.mubr.f32.mxu0 0.0
    %4124 = vmatmul.mubr.f32.gmra.mrb[0].mxu0 %v4031
    %v4125 = vpop.f32.mrb[0].mxu0
    %v4126 = vadd.f32 0.0, %v4125
    %v4127 = vpop.f32.mrb[0].mxu0
    %4128 = vmatprep.mubr.f32.mxu0 0.0
    %4129 = vmatmul.mubr.f32.gmra.mrb[0].mxu0 %v4034
    %v4130 = vpop.f32.mrb[0].mxu0
    %v4131 = vadd.f32 0.0, %v4130
    %v4132 = vpop.f32.mrb[0].mxu0
    %4133 = vdwg.mxu0
    %v4134 = vsub.f32 1.0, %v4106
    %v4135 = vsub.f32 1.0, %v4111
    %v4136 = vsub.f32 1.0, %v4116
    %v4137 = vmul.f32 %v3451, %v4134
    %v4138 = vmul.f32 %v3452, %v4135
    %v4139 = vmul.f32 %v3453, %v4136
    %v4140 = vadd.f32 %v4137, %v4121
    %v4141 = vadd.f32 %v4138, %v4126
    %v4142 = vadd.f32 %v4139, %v4131
    %4143 = vrot.lane.b32.xlu0 %v3784, 60
    %v4144 = vpop.permute.xlu0 %4143
    %v4145 = vsel %vm178, %v4144, 0
    %v4148 = vsel %vm377, %v4142, 0
    %4150 = vmatprep.subr.mxu0 0.0
    %4151 = vmatpush1.msra.mxu0 %v4140
    %4152 = vmatprep.subr.mxu0 0.0
    %4153 = vmatpush1.msra.mxu0 %v4141
    %4154 = vmatprep.subr.mxu0 0.0
    %4155 = vmatpush1.msra.mxu0 %v4148
    %4156 = vmatprep.subr.mxu0 0.0
    %4157 = vmatpush1.msra.mxu0 0.0
    %4158 = vmatprep.subr.mxu0 0.0
    %4159 = vmatpush1.msra.mxu0 0.0
    %4160 = vmatprep.subr.mxu0 0.0
    %4161 = vmatpush1.msra.mxu0 0.0
    %4162 = vmatprep.subr.mxu0 0.0
    %4163 = vmatpush1.msra.mxu0 0.0
    %4164 = vmatprep.subr.mxu0 0.0
    %4165 = vmatpush1.msra.mxu0 0.0
    %4166 = vmatprep.subr.mxu0 0.0
    %4167 = vmatpush1.msra.mxu0 0.0
    %4168 = vmatprep.subr.mxu0 0.0
    %4169 = vmatpush1.msra.mxu0 0.0
    %4170 = vmatprep.subr.mxu0 0.0
    %4171 = vmatpush1.msra.mxu0 0.0
    %4172 = vmatprep.subr.mxu0 0.0
    %4173 = vmatpush1.msra.mxu0 0.0
    %4174 = vmatprep.subr.mxu0 0.0
    %4175 = vmatpush1.msra.mxu0 0.0
    %4176 = vmatprep.subr.mxu0 0.0
    %4177 = vmatpush1.msra.mxu0 0.0
    %4178 = vmatprep.subr.mxu0 0.0
    %4179 = vmatpush1.msra.mxu0 0.0
    %4180 = vmatprep.subr.mxu0 0.0
    %4181 = vmatpush1.msra.mxu0 0.0
    %4182 = vmatprep.subr.mxu0 0.0
    %4183 = vmatpush1.msra.mxu0 0.0
    %4184 = vmatprep.subr.mxu0 0.0
    %4185 = vmatpush1.msra.mxu0 0.0
    %4186 = vmatprep.subr.mxu0 0.0
    %4187 = vmatpush1.msra.mxu0 0.0
    %4188 = vmatprep.subr.mxu0 0.0
    %4189 = vmatpush1.msra.mxu0 0.0
    %4190 = vmatprep.subr.mxu0 0.0
    %4191 = vmatpush1.msra.mxu0 0.0
    %4192 = vmatprep.subr.mxu0 0.0
    %4193 = vmatpush1.msra.mxu0 0.0
    %4194 = vmatprep.subr.mxu0 0.0
    %4195 = vmatpush1.msra.mxu0 0.0
    %4196 = vmatprep.subr.mxu0 0.0
    %4197 = vmatpush1.msra.mxu0 0.0
    %4198 = vmatprep.subr.mxu0 0.0
    %4199 = vmatpush1.msra.mxu0 0.0
    %4200 = vmatprep.subr.mxu0 0.0
    %4201 = vmatpush1.msra.mxu0 0.0
    %4202 = vmatprep.subr.mxu0 0.0
    %4203 = vmatpush1.msra.mxu0 0.0
    %4204 = vmatprep.subr.mxu0 0.0
    %4205 = vmatpush1.msra.mxu0 0.0
    %4206 = vmatprep.subr.mxu0 0.0
    %4207 = vmatpush1.msra.mxu0 0.0
    %4208 = vmatprep.subr.mxu0 0.0
    %4209 = vmatpush1.msra.mxu0 0.0
    %4210 = vmatprep.subr.mxu0 0.0
    %4211 = vmatpush1.msra.mxu0 0.0
    %4212 = vmatprep.subr.mxu0 0.0
    %4213 = vmatpush1.msra.mxu0 0.0
    %4214 = vmatprep.mubr.f32.mxu0 0.0
    %4215 = vmatmul.mubr.f32.gmra.mrb[0].mxu0 %v4145
    %v4216 = vpop.f32.mrb[0].mxu0
    %v4217 = vadd.f32 0.0, %v4216
    %v4218 = vpop.f32.mrb[0].mxu0
    %4219 = vdwg.mxu0
    %4220 = vrot.lane.b32.xlu0 %v3908, 60
    %v4221 = vpop.permute.xlu0 %4220
    %v4223 = vsel %vm456, %v4221, 0.0
    %4224 = vadd.xlane.f32.xlu0 %v4223
    %v4225 = vpop.xlane.xlu0 %4224
    %v4226 = vmul.f32 %v4140, %v4140
    %v4227 = vmul.f32 %v4141, %v4141
    %v4228 = vmul.f32 %v4142, %v4142
    %v4229 = vadd.f32 %v4226, %v4227
    %v4230 = vsel %vm377, %v4228, 0.0
    %v4231 = vadd.f32 %v4229, %v4230
    %v4232 = vrot.slane %v4231, 4
    %v4233 = vadd.f32 %v4231, %v4232
    %v4234 = vrot.slane %v4233, 2
    %v4235 = vadd.f32 %v4233, %v4234
    %v4236 = vrot.slane %v4235, 1
    %v4237 = vadd.f32 %v4235, %v4236
    %v4238 = vmax.f32 %v4237, 1e-16
    %v4239 = vmax.f32 %v4225, 1e-16
    %v4240 = vmul.f32 %v4238, %v4239
    %v4241 = vrsqrt.pop %v4240
    %v4242 = vmul.f32 %v4217, %v4241
    %4243 = vset.pattern.permute.xlu0 89
    %4244 = vperm.xlu0 %4243, %v3808
    %v4245 = vpop.permute.xlu0 %4244
    %v4247 = vmul.f32 %v4245, %v4242
    %v4248 = vsel %vm479, %v4247, -inf
    %4249 = vmax.xlane.f32.xlu0 %v4248
    %v4250 = vpop.xlane.xlu0 %4249
    %v4251 = vsub.f32 %v4247, %v4250
    %v4252 = vmul.f32 %v4251, 1.442695
    %v4253 = vpow.pop %v4252
    %v4254 = vsel %vm479, %v4253, 0.0
    %4255 = vadd.xlane.f32.xlu0 %v4254
    %v4256 = vpop.xlane.xlu0 %4255
    %v4257 = vrcp.pop %v4256
    %v4258 = vmul.f32 %v4253, %v4257
    %4259 = vset.pattern.permute.xlu0 91
    %4260 = vperm.xlu0 %4259, %v3790
    %v4261 = vpop.permute.xlu0 %4260
    %v4263 = vmul.f32 %v4261, %v4258
    %4264 = vset.pattern.permute.xlu0 91
    %4265 = vperm.xlu0 %4264, %v3943
    %v4266 = vpop.permute.xlu0 %4265
    %v4268 = vmul.f32 %v4266, %v3613
    %v4269 = vadd.f32 %v4263, %v4268
    %4270 = vrot.lane.b32.xlu0 %v4269, 1
    %v4271 = vpop.permute.xlu0 %4270
    %4273 = vset.pattern.permute.xlu0 97
    %4274 = vperm.xlu0 %4273, %v3832
    %v4275 = vpop.permute.xlu0 %4274
    %v4277 = vmul.f32 %v4275, %v4271
    %4278 = vset.pattern.permute.xlu0 98
    %4279 = vperm.xlu0 %4278, %v3832
    %v4280 = vpop.permute.xlu0 %4279
    %v4282 = vmul.f32 %v4280, %v4269
    %v4283 = vadd.f32 %v4277, %v4282
    %4284 = vrot.lane.b32.xlu0 %v4269, 127
    %v4285 = vpop.permute.xlu0 %4284
    %4286 = vset.pattern.permute.xlu0 99
    %4287 = vperm.xlu0 %4286, %v3832
    %v4288 = vpop.permute.xlu0 %4287
    %v4290 = vmul.f32 %v4288, %v4285
    %v4291 = vadd.f32 %v4283, %v4290
    %v4292 = vadd.f32 %v4291, 1e-16
    %4293 = vset.pattern.permute.xlu0 93
    %4294 = vperm.xlu0 %4293, %v3809
    %v4295 = vpop.permute.xlu0 %4294
    %v4297 = vpow.f32 %v4292, %v4295
    %v4298 = vsel %vm479, %v4297, 0.0
    %4299 = vadd.xlane.f32.xlu0 %v4298
    %v4300 = vpop.xlane.xlu0 %4299
    %v4301 = vrcp.pop %v4300
    %v4302 = vmul.f32 %v4297, %v4301
    %4303 = vmatprep.subr.mxu0 0.0
    %4304 = vmatpush1.xpose.msra.mxu0 %v4140
    %4305 = vmatprep.subr.mxu0 0.0
    %4306 = vmatpush1.xpose.msra.mxu0 %v4141
    %4307 = vmatprep.subr.mxu0 0.0
    %4308 = vmatpush1.xpose.msra.mxu0 %v4142
    %4309 = vmatprep.subr.mxu0 0.0
    %4310 = vmatpush1.xpose.msra.mxu0 0.0
    %4311 = vmatprep.subr.mxu0 0.0
    %4312 = vmatpush1.xpose.msra.mxu0 0.0
    %4313 = vmatprep.subr.mxu0 0.0
    %4314 = vmatpush1.xpose.msra.mxu0 0.0
    %4315 = vmatprep.subr.mxu0 0.0
    %4316 = vmatpush1.xpose.msra.mxu0 0.0
    %4317 = vmatprep.subr.mxu0 0.0
    %4318 = vmatpush1.xpose.msra.mxu0 0.0
    %4319 = vmatprep.subr.mxu0 0.0
    %4320 = vmatpush1.xpose.msra.mxu0 0.0
    %4321 = vmatprep.subr.mxu0 0.0
    %4322 = vmatpush1.xpose.msra.mxu0 0.0
    %4323 = vmatprep.subr.mxu0 0.0
    %4324 = vmatpush1.xpose.msra.mxu0 0.0
    %4325 = vmatprep.subr.mxu0 0.0
    %4326 = vmatpush1.xpose.msra.mxu0 0.0
    %4327 = vmatprep.subr.mxu0 0.0
    %4328 = vmatpush1.xpose.msra.mxu0 0.0
    %4329 = vmatprep.subr.mxu0 0.0
    %4330 = vmatpush1.xpose.msra.mxu0 0.0
    %4331 = vmatprep.subr.mxu0 0.0
    %4332 = vmatpush1.xpose.msra.mxu0 0.0
    %4333 = vmatprep.subr.mxu0 0.0
    %4334 = vmatpush1.xpose.msra.mxu0 0.0
    %4335 = vmatprep.subr.mxu0 0.0
    %4336 = vmatpush1.xpose.msra.mxu0 0.0
    %4337 = vmatprep.subr.mxu0 0.0
    %4338 = vmatpush1.xpose.msra.mxu0 0.0
    %4339 = vmatprep.subr.mxu0 0.0
    %4340 = vmatpush1.xpose.msra.mxu0 0.0
    %4341 = vmatprep.subr.mxu0 0.0
    %4342 = vmatpush1.xpose.msra.mxu0 0.0
    %4343 = vmatprep.subr.mxu0 0.0
    %4344 = vmatpush1.xpose.msra.mxu0 0.0
    %4345 = vmatprep.subr.mxu0 0.0
    %4346 = vmatpush1.xpose.msra.mxu0 0.0
    %4347 = vmatprep.subr.mxu0 0.0
    %4348 = vmatpush1.xpose.msra.mxu0 0.0
    %4349 = vmatprep.subr.mxu0 0.0
    %4350 = vmatpush1.xpose.msra.mxu0 0.0
    %4351 = vmatprep.subr.mxu0 0.0
    %4352 = vmatpush1.xpose.msra.mxu0 0.0
    %4353 = vmatprep.subr.mxu0 0.0
    %4354 = vmatpush1.xpose.msra.mxu0 0.0
    %4355 = vmatprep.subr.mxu0 0.0
    %4356 = vmatpush1.xpose.msra.mxu0 0.0
    %4357 = vmatprep.subr.mxu0 0.0
    %4358 = vmatpush1.xpose.msra.mxu0 0.0
    %4359 = vmatprep.subr.mxu0 0.0
    %4360 = vmatpush1.xpose.msra.mxu0 0.0
    %4361 = vmatprep.subr.mxu0 0.0
    %4362 = vmatpush1.xpose.msra.mxu0 0.0
    %4363 = vmatprep.subr.mxu0 0.0
    %4364 = vmatpush1.xpose.msra.mxu0 0.0
    %4365 = vmatprep.subr.mxu0 0.0
    %4366 = vmatpush1.xpose.msra.mxu0 0.0
    %4367 = vmatprep.mubr.f32.mxu0 0.0
    %4368 = vmatmul.mubr.f32.gmra.mrb[0].mxu0 %v4302
    %v4369 = vpop.f32.mrb[0].mxu0
    %v4370 = vadd.f32 0.0, %v4369
    %v4371 = vpop.f32.mrb[0].mxu0
    %4372 = vdwg.mxu0
    %4373 = vst [vmem:[#allocation7 + $0x5] sm:$0x1] %v3984
    %4374 = vst [vmem:[#allocation9 + $0x5] sm:$0x1] %v4302
    %4375 = vrot.lane.b32.xlu0 %v3784, 104
    %v4376 = vpop.permute.xlu0 %4375
    %4378 = vst.msk [vmem:[#allocation10 + $0x5] sm:$0x1] %vm456, %v4376
    %4379 = vst.msk [vmem:[#allocation12 + $0x5] sm:$0x1] %vm456, %v4370
    %v4380 = vld [vmem:[#allocation2 + $0x6] sm:$0x1]
    %v4381 = vpack.c.bf16 %v4370, %v4370
    %v4383 = vsel %vm178, %v4381, 0
    %4385 = vmatprep.subr.bf16.mxu0 0
    %4386 = vmatpush1.bf16.msra.mxu0 %v175
    %4387 = vmatprep.subr.bf16.mxu0 0
    %4388 = vmatpush1.bf16.msra.mxu0 %v183
    %4389 = vmatprep.subr.bf16.mxu0 0
    %4390 = vmatpush1.bf16.msra.mxu0 0
    %4391 = vmatprep.subr.bf16.mxu0 0
    %4392 = vmatpush1.bf16.msra.mxu0 0
    %4393 = vmatprep.subr.bf16.mxu0 0
    %4394 = vmatpush1.bf16.msra.mxu0 0
    %4395 = vmatprep.subr.bf16.mxu0 0
    %4396 = vmatpush1.bf16.msra.mxu0 0
    %4397 = vmatprep.subr.bf16.mxu0 0
    %4398 = vmatpush1.bf16.msra.mxu0 0
    %4399 = vmatprep.subr.bf16.mxu0 0
    %4400 = vmatpush1.bf16.msra.mxu0 0
    %4401 = vmatprep.subr.bf16.mxu0 0
    %4402 = vmatpush1.bf16.msra.mxu0 0
    %4403 = vmatprep.subr.bf16.mxu0 0
    %4404 = vmatpush1.bf16.msra.mxu0 0
    %4405 = vmatprep.subr.bf16.mxu0 0
    %4406 = vmatpush1.bf16.msra.mxu0 0
    %4407 = vmatprep.subr.bf16.mxu0 0
    %4408 = vmatpush1.bf16.msra.mxu0 0
    %4409 = vmatprep.subr.bf16.mxu0 0
    %4410 = vmatpush1.bf16.msra.mxu0 0
    %4411 = vmatprep.subr.bf16.mxu0 0
    %4412 = vmatpush1.bf16.msra.mxu0 0
    %4413 = vmatprep.subr.bf16.mxu0 0
    %4414 = vmatpush1.bf16.msra.mxu0 0
    %4415 = vmatprep.subr.bf16.mxu0 0
    %4416 = vmatpush1.bf16.msra.mxu0 0
    %4417 = vmatprep.mubr.bf16.mxu0 0
    %4418 = vmatmul.mubr.bf16.gmra.mrb[0].mxu0 %v4383
    %v4419 = vpop.f32.mrb[0].mxu0
    %v4420 = vadd.f32 0.0, %v4419
    %v4421 = vpop.f32.mrb[0].mxu0
    %v4422 = vpop.f32.mrb[0].mxu0
    %v4423 = vpop.f32.mrb[0].mxu0
    %4424 = vdwg.mxu0
    %v4425 = vadd.f32 %v4380, %v4420
    %v4426 = vxor.u32 %v4425, 2147483648
    %v4427 = vmul.f32 %v4426, 1.442695
    %v4428 = vpow.pop %v4427
    %v4429 = vadd.f32 %v4428, 1.0
    %v4430 = vrcp.pop %v4429
    %v4431 = vmul.f32 1.0, %v4430
    %v4432 = vpack.c.bf16 %v4431, %v4431
    %4433 = vmatprep.subr.bf16.mxu0 0
    %4434 = vmatpush1.bf16.msra.mxu0 %v265
    %4435 = vmatprep.subr.bf16.mxu0 0
    %4436 = vmatpush1.bf16.msra.mxu0 %v266
    %4437 = vmatprep.subr.bf16.mxu0 0
    %4438 = vmatpush1.bf16.msra.mxu0 %v267
    %4439 = vmatprep.subr.bf16.mxu0 0
    %4440 = vmatpush1.bf16.msra.mxu0 %v268
    %4441 = vmatprep.subr.bf16.mxu0 0
    %4442 = vmatpush1.bf16.msra.mxu0 %v269
    %4443 = vmatprep.subr.bf16.mxu0 0
    %4444 = vmatpush1.bf16.msra.mxu0 %v270
    %4445 = vmatprep.subr.bf16.mxu0 0
    %4446 = vmatpush1.bf16.msra.mxu0 %v271
    %4447 = vmatprep.subr.bf16.mxu0 0
    %4448 = vmatpush1.bf16.msra.mxu0 %v272
    %4449 = vmatprep.subr.bf16.mxu0 0
    %4450 = vmatpush1.bf16.msra.mxu0 0
    %4451 = vmatprep.subr.bf16.mxu0 0
    %4452 = vmatpush1.bf16.msra.mxu0 0
    %4453 = vmatprep.subr.bf16.mxu0 0
    %4454 = vmatpush1.bf16.msra.mxu0 0
    %4455 = vmatprep.subr.bf16.mxu0 0
    %4456 = vmatpush1.bf16.msra.mxu0 0
    %4457 = vmatprep.subr.bf16.mxu0 0
    %4458 = vmatpush1.bf16.msra.mxu0 0
    %4459 = vmatprep.subr.bf16.mxu0 0
    %4460 = vmatpush1.bf16.msra.mxu0 0
    %4461 = vmatprep.subr.bf16.mxu0 0
    %4462 = vmatpush1.bf16.msra.mxu0 0
    %4463 = vmatprep.subr.bf16.mxu0 0
    %4464 = vmatpush1.bf16.msra.mxu0 0
    %4465 = vmatprep.mubr.bf16.mxu0 0
    %4466 = vmatmul.mubr.bf16.gmra.mrb[0].mxu0 %v4432
    %v4467 = vpop.f32.mrb[0].mxu0
    %v4468 = vadd.f32 %v71, %v4467
    %v4469 = vpop.f32.mrb[0].mxu0
    %v4470 = vpop.f32.mrb[0].mxu0
    %v4471 = vpop.f32.mrb[0].mxu0
    %4472 = vdwg.mxu0
    %v4473 = vtanh.pop %v4468
    %v4474 = vxor.u32 %v4468, 2147483648
    %v4475 = vmul.f32 %v4474, 1.442695
    %v4476 = vpow.pop %v4475
    %v4477 = vadd.f32 %v4476, 1.0
    %v4478 = vrcp.pop %v4477
    %v4479 = vmul.f32 1.0, %v4478
    %v4480 = vmax.f32 %v4468, 0.0
    %vm4481 = vcmp.ne.f32.partialorder %v4468, %v4468
    %v4482 = vadd.f32 %v4468, 0.0
    %v4483 = vand.u32 2147483647, %v4468
    %v4484 = vsub.f32 0.0, %v4483
    %v4485 = vmul.f32 %v4484, 1.442695
    %v4486 = vpow.pop %v4485
    %v4487 = vadd.f32 %v4486, 1.0
    %v4488 = vlog2.pop %v4487
    %v4489 = vmul.f32 %v4488, 0.6931472
    %v4490 = vmul.f32 -0.5, %v4486
    %v4491 = vadd.f32 %v4490, 1.0
    %v4492 = vmul.f32 %v4491, %v4486
    %v4493 = vand.u32 2147483647, %v4486
    %vm4494 = vcmp.lt.f32.partialorder %v4493, 0.0004427343
    %v4495 = vsel %vm4494, %v4492, %v4489
    %v4496 = vadd.f32 %v4480, %v4495
    %v4497 = vsel %vm4481, %v4482, %v4496
    %v4498 = vadd.f32 %v4497, 1.0
    %v4499 = vsel %vm347, %v4468, -inf
    %4500 = vmax.xlane.f32.xlu0 %v4499
    %v4501 = vpop.xlane.xlu0 %4500
    %v4502 = vsub.f32 %v4468, %v4501
    %v4503 = vmul.f32 %v4502, 1.442695
    %v4504 = vpow.pop %v4503
    %4506 = vrot.lane.b32.xlu0 %v4504, 34
    %v4507 = vpop.permute.xlu0 %4506
    %v4509 = vsel %vm358, %v4507, 0.0
    %4510 = vadd.xlane.f32.xlu0 %v4509
    %v4511 = vpop.xlane.xlu0 %4510
    %v4512 = vrcp.pop %v4511
    %v4513 = vmul.f32 %v4504, %v4512
    %4514 = vrot.lane.b32.xlu0 %v4504, 31
    %v4515 = vpop.permute.xlu0 %4514
    %v4517 = vsel %vm358, %v4515, 0.0
    %4518 = vadd.xlane.f32.xlu0 %v4517
    %v4519 = vpop.xlane.xlu0 %4518
    %v4520 = vrcp.pop %v4519
    %v4521 = vmul.f32 %v4504, %v4520
    %4523 = vrot.lane.b32.xlu0 %v4473, 80
    %v4524 = vpop.permute.xlu0 %4523
    %v4525 = vsel %vm178, %v4524, 0
    %4527 = vmatprep.subr.mxu0 0.0
    %4528 = vmatpush1.msra.mxu0 %v4140
    %4529 = vmatprep.subr.mxu0 0.0
    %4530 = vmatpush1.msra.mxu0 %v4141
    %4531 = vmatprep.subr.mxu0 0.0
    %4532 = vmatpush1.msra.mxu0 %v4148
    %4533 = vmatprep.subr.mxu0 0.0
    %4534 = vmatpush1.msra.mxu0 0.0
    %4535 = vmatprep.subr.mxu0 0.0
    %4536 = vmatpush1.msra.mxu0 0.0
    %4537 = vmatprep.subr.mxu0 0.0
    %4538 = vmatpush1.msra.mxu0 0.0
    %4539 = vmatprep.subr.mxu0 0.0
    %4540 = vmatpush1.msra.mxu0 0.0
    %4541 = vmatprep.subr.mxu0 0.0
    %4542 = vmatpush1.msra.mxu0 0.0
    %4543 = vmatprep.subr.mxu0 0.0
    %4544 = vmatpush1.msra.mxu0 0.0
    %4545 = vmatprep.subr.mxu0 0.0
    %4546 = vmatpush1.msra.mxu0 0.0
    %4547 = vmatprep.subr.mxu0 0.0
    %4548 = vmatpush1.msra.mxu0 0.0
    %4549 = vmatprep.subr.mxu0 0.0
    %4550 = vmatpush1.msra.mxu0 0.0
    %4551 = vmatprep.subr.mxu0 0.0
    %4552 = vmatpush1.msra.mxu0 0.0
    %4553 = vmatprep.subr.mxu0 0.0
    %4554 = vmatpush1.msra.mxu0 0.0
    %4555 = vmatprep.subr.mxu0 0.0
    %4556 = vmatpush1.msra.mxu0 0.0
    %4557 = vmatprep.subr.mxu0 0.0
    %4558 = vmatpush1.msra.mxu0 0.0
    %4559 = vmatprep.subr.mxu0 0.0
    %4560 = vmatpush1.msra.mxu0 0.0
    %4561 = vmatprep.subr.mxu0 0.0
    %4562 = vmatpush1.msra.mxu0 0.0
    %4563 = vmatprep.subr.mxu0 0.0
    %4564 = vmatpush1.msra.mxu0 0.0
    %4565 = vmatprep.subr.mxu0 0.0
    %4566 = vmatpush1.msra.mxu0 0.0
    %4567 = vmatprep.subr.mxu0 0.0
    %4568 = vmatpush1.msra.mxu0 0.0
    %4569 = vmatprep.subr.mxu0 0.0
    %4570 = vmatpush1.msra.mxu0 0.0
    %4571 = vmatprep.subr.mxu0 0.0
    %4572 = vmatpush1.msra.mxu0 0.0
    %4573 = vmatprep.subr.mxu0 0.0
    %4574 = vmatpush1.msra.mxu0 0.0
    %4575 = vmatprep.subr.mxu0 0.0
    %4576 = vmatpush1.msra.mxu0 0.0
    %4577 = vmatprep.subr.mxu0 0.0
    %4578 = vmatpush1.msra.mxu0 0.0
    %4579 = vmatprep.subr.mxu0 0.0
    %4580 = vmatpush1.msra.mxu0 0.0
    %4581 = vmatprep.subr.mxu0 0.0
    %4582 = vmatpush1.msra.mxu0 0.0
    %4583 = vmatprep.subr.mxu0 0.0
    %4584 = vmatpush1.msra.mxu0 0.0
    %4585 = vmatprep.subr.mxu0 0.0
    %4586 = vmatpush1.msra.mxu0 0.0
    %4587 = vmatprep.subr.mxu0 0.0
    %4588 = vmatpush1.msra.mxu0 0.0
    %4589 = vmatprep.subr.mxu0 0.0
    %4590 = vmatpush1.msra.mxu0 0.0
    %4591 = vmatprep.mubr.f32.mxu0 0.0
    %4592 = vmatmul.mubr.f32.gmra.mrb[0].mxu0 %v4525
    %v4593 = vpop.f32.mrb[0].mxu0
    %v4594 = vadd.f32 0.0, %v4593
    %v4595 = vpop.f32.mrb[0].mxu0
    %4596 = vdwg.mxu0
    %v4597 = vmul.f32 %v4473, %v4473
    %4599 = vrot.lane.b32.xlu0 %v4597, 80
    %v4600 = vpop.permute.xlu0 %4599
    %v4602 = vsel %vm456, %v4600, 0.0
    %4603 = vadd.xlane.f32.xlu0 %v4602
    %v4604 = vpop.xlane.xlu0 %4603
    %v4605 = vmax.f32 %v4604, 1e-16
    %v4606 = vmul.f32 %v4238, %v4605
    %v4607 = vrsqrt.pop %v4606
    %v4608 = vmul.f32 %v4594, %v4607
    %4610 = vset.pattern.permute.xlu0 88
    %4611 = vperm.xlu0 %4610, %v4497
    %v4612 = vpop.permute.xlu0 %4611
    %v4614 = vmul.f32 %v4612, %v4608
    %v4615 = vsel %vm479, %v4614, -inf
    %4616 = vmax.xlane.f32.xlu0 %v4615
    %v4617 = vpop.xlane.xlu0 %4616
    %v4618 = vsub.f32 %v4614, %v4617
    %v4619 = vmul.f32 %v4618, 1.442695
    %v4620 = vpow.pop %v4619
    %v4621 = vsel %vm479, %v4620, 0.0
    %4622 = vadd.xlane.f32.xlu0 %v4621
    %v4623 = vpop.xlane.xlu0 %4622
    %v4624 = vrcp.pop %v4623
    %v4625 = vmul.f32 %v4620, %v4624
    %4627 = vset.pattern.permute.xlu0 90
    %4628 = vperm.xlu0 %4627, %v4479
    %v4629 = vpop.permute.xlu0 %4628
    %v4631 = vmul.f32 %v4629, %v4625
    %v4632 = vsub.f32 1.0, %v4479
    %4634 = vset.pattern.permute.xlu0 90
    %4635 = vperm.xlu0 %4634, %v4632
    %v4636 = vpop.permute.xlu0 %4635
    %v4638 = vmul.f32 %v4636, %v3984
    %v4639 = vadd.f32 %v4631, %v4638
    %4640 = vrot.lane.b32.xlu0 %v4639, 1
    %v4641 = vpop.permute.xlu0 %4640
    %4643 = vset.pattern.permute.xlu0 94
    %4644 = vperm.xlu0 %4643, %v4513
    %v4645 = vpop.permute.xlu0 %4644
    %v4647 = vmul.f32 %v4645, %v4641
    %4648 = vset.pattern.permute.xlu0 95
    %4649 = vperm.xlu0 %4648, %v4513
    %v4650 = vpop.permute.xlu0 %4649
    %v4652 = vmul.f32 %v4650, %v4639
    %v4653 = vadd.f32 %v4647, %v4652
    %4654 = vrot.lane.b32.xlu0 %v4639, 127
    %v4655 = vpop.permute.xlu0 %4654
    %4656 = vset.pattern.permute.xlu0 96
    %4657 = vperm.xlu0 %4656, %v4513
    %v4658 = vpop.permute.xlu0 %4657
    %v4660 = vmul.f32 %v4658, %v4655
    %v4661 = vadd.f32 %v4653, %v4660
    %v4662 = vadd.f32 %v4661, 1e-16
    %4664 = vset.pattern.permute.xlu0 92
    %4665 = vperm.xlu0 %4664, %v4498
    %v4666 = vpop.permute.xlu0 %4665
    %v4668 = vpow.f32 %v4662, %v4666
    %v4669 = vsel %vm479, %v4668, 0.0
    %4670 = vadd.xlane.f32.xlu0 %v4669
    %v4671 = vpop.xlane.xlu0 %4670
    %v4672 = vrcp.pop %v4671
    %v4673 = vmul.f32 %v4668, %v4672
    %v4674 = vsel %vm166, %v4479, %v4473
    %4675 = vxpose.xlu0.b32.start [1/16] %v4674, 128
    %4676 = vxpose.xlu0.b32.cont [2/16] 0.0, 128
    %4677 = vxpose.xlu0.b32.cont [3/16] 0.0, 128
    %4678 = vxpose.xlu0.b32.cont [4/16] 0.0, 128
    %4679 = vxpose.xlu0.b32.cont [5/16] 0.0, 128
    %4680 = vxpose.xlu0.b32.cont [6/16] 0.0, 128
    %4681 = vxpose.xlu0.b32.cont [7/16] 0.0, 128
    %4682 = vxpose.xlu0.b32.cont [8/16] 0.0, 128
    %4683 = vxpose.xlu0.b32.cont [9/16] 0.0, 128
    %4684 = vxpose.xlu0.b32.cont [10/16] 0.0, 128
    %4685 = vxpose.xlu0.b32.cont [11/16] 0.0, 128
    %4686 = vxpose.xlu0.b32.cont [12/16] 0.0, 128
    %4687 = vxpose.xlu0.b32.cont [13/16] 0.0, 128
    %4688 = vxpose.xlu0.b32.cont [14/16] 0.0, 128
    %4689 = vxpose.xlu0.b32.cont [15/16] 0.0, 128
    %4690 = vxpose.xlu0.b32.end [16/16] 0.0, 128
    %v4691 = vpop.trf.xlu0
    %v4692 = vpop.trf.xlu0
    %v4693 = vpop.trf.xlu0
    %v4694 = vpop.trf.xlu0
    %v4695 = vpop.trf.xlu0
    %v4696 = vpop.trf.xlu0
    %v4697 = vpop.trf.xlu0
    %v4698 = vpop.trf.xlu0
    %v4699 = vpop.trf.xlu0
    %v4700 = vpop.trf.xlu0
    %v4701 = vpop.trf.xlu0
    %v4702 = vpop.trf.xlu0
    %v4703 = vpop.trf.xlu0
    %v4704 = vpop.trf.xlu0
    %v4705 = vpop.trf.xlu0
    %v4706 = vpop.trf.xlu0
    %v4708 = vsel %vm572, %v4691, 0
    %v4711 = vsel %vm572, %v4692, 0
    %v4714 = vsel %vm572, %v4693, 0
    %v4717 = vsel %vm572, %v4694, 0
    %v4720 = vsel %vm572, %v4695, 0
    %v4723 = vsel %vm572, %v4696, 0
    %v4726 = vsel %vm479, %v4673, 0
    %4728 = vmatprep.subr.mxu0 0.0
    %4729 = vmatpush1.msra.mxu0 %v4726
    %4730 = vmatprep.subr.mxu0 0.0
    %4731 = vmatpush1.msra.mxu0 0.0
    %4732 = vmatprep.subr.mxu0 0.0
    %4733 = vmatpush1.msra.mxu0 0.0
    %4734 = vmatprep.subr.mxu0 0.0
    %4735 = vmatpush1.msra.mxu0 0.0
    %4736 = vmatprep.subr.mxu0 0.0
    %4737 = vmatpush1.msra.mxu0 0.0
    %4738 = vmatprep.subr.mxu0 0.0
    %4739 = vmatpush1.msra.mxu0 0.0
    %4740 = vmatprep.subr.mxu0 0.0
    %4741 = vmatpush1.msra.mxu0 0.0
    %4742 = vmatprep.subr.mxu0 0.0
    %4743 = vmatpush1.msra.mxu0 0.0
    %4744 = vmatprep.subr.mxu0 0.0
    %4745 = vmatpush1.msra.mxu0 0.0
    %4746 = vmatprep.subr.mxu0 0.0
    %4747 = vmatpush1.msra.mxu0 0.0
    %4748 = vmatprep.subr.mxu0 0.0
    %4749 = vmatpush1.msra.mxu0 0.0
    %4750 = vmatprep.subr.mxu0 0.0
    %4751 = vmatpush1.msra.mxu0 0.0
    %4752 = vmatprep.subr.mxu0 0.0
    %4753 = vmatpush1.msra.mxu0 0.0
    %4754 = vmatprep.subr.mxu0 0.0
    %4755 = vmatpush1.msra.mxu0 0.0
    %4756 = vmatprep.subr.mxu0 0.0
    %4757 = vmatpush1.msra.mxu0 0.0
    %4758 = vmatprep.subr.mxu0 0.0
    %4759 = vmatpush1.msra.mxu0 0.0
    %4760 = vmatprep.subr.mxu0 0.0
    %4761 = vmatpush1.msra.mxu0 0.0
    %4762 = vmatprep.subr.mxu0 0.0
    %4763 = vmatpush1.msra.mxu0 0.0
    %4764 = vmatprep.subr.mxu0 0.0
    %4765 = vmatpush1.msra.mxu0 0.0
    %4766 = vmatprep.subr.mxu0 0.0
    %4767 = vmatpush1.msra.mxu0 0.0
    %4768 = vmatprep.subr.mxu0 0.0
    %4769 = vmatpush1.msra.mxu0 0.0
    %4770 = vmatprep.subr.mxu0 0.0
    %4771 = vmatpush1.msra.mxu0 0.0
    %4772 = vmatprep.subr.mxu0 0.0
    %4773 = vmatpush1.msra.mxu0 0.0
    %4774 = vmatprep.subr.mxu0 0.0
    %4775 = vmatpush1.msra.mxu0 0.0
    %4776 = vmatprep.subr.mxu0 0.0
    %4777 = vmatpush1.msra.mxu0 0.0
    %4778 = vmatprep.subr.mxu0 0.0
    %4779 = vmatpush1.msra.mxu0 0.0
    %4780 = vmatprep.subr.mxu0 0.0
    %4781 = vmatpush1.msra.mxu0 0.0
    %4782 = vmatprep.subr.mxu0 0.0
    %4783 = vmatpush1.msra.mxu0 0.0
    %4784 = vmatprep.subr.mxu0 0.0
    %4785 = vmatpush1.msra.mxu0 0.0
    %4786 = vmatprep.subr.mxu0 0.0
    %4787 = vmatpush1.msra.mxu0 0.0
    %4788 = vmatprep.subr.mxu0 0.0
    %4789 = vmatpush1.msra.mxu0 0.0
    %4790 = vmatprep.subr.mxu0 0.0
    %4791 = vmatpush1.msra.mxu0 0.0
    %4792 = vmatprep.mubr.f32.mxu0 0.0
    %4793 = vmatmul.mubr.f32.gmra.mrb[0].mxu0 %v4708
    %v4794 = vpop.f32.mrb[0].mxu0
    %v4795 = vadd.f32 0.0, %v4794
    %v4796 = vpop.f32.mrb[0].mxu0
    %4797 = vmatprep.mubr.f32.mxu0 0.0
    %4798 = vmatmul.mubr.f32.gmra.mrb[0].mxu0 %v4711
    %v4799 = vpop.f32.mrb[0].mxu0
    %v4800 = vadd.f32 0.0, %v4799
    %v4801 = vpop.f32.mrb[0].mxu0
    %4802 = vmatprep.mubr.f32.mxu0 0.0
    %4803 = vmatmul.mubr.f32.gmra.mrb[0].mxu0 %v4714
    %v4804 = vpop.f32.mrb[0].mxu0
    %v4805 = vadd.f32 0.0, %v4804
    %v4806 = vpop.f32.mrb[0].mxu0
    %4807 = vmatprep.mubr.f32.mxu0 0.0
    %4808 = vmatmul.mubr.f32.gmra.mrb[0].mxu0 %v4717
    %v4809 = vpop.f32.mrb[0].mxu0
    %v4810 = vadd.f32 0.0, %v4809
    %v4811 = vpop.f32.mrb[0].mxu0
    %4812 = vmatprep.mubr.f32.mxu0 0.0
    %4813 = vmatmul.mubr.f32.gmra.mrb[0].mxu0 %v4720
    %v4814 = vpop.f32.mrb[0].mxu0
    %v4815 = vadd.f32 0.0, %v4814
    %v4816 = vpop.f32.mrb[0].mxu0
    %4817 = vmatprep.mubr.f32.mxu0 0.0
    %4818 = vmatmul.mubr.f32.gmra.mrb[0].mxu0 %v4723
    %v4819 = vpop.f32.mrb[0].mxu0
    %v4820 = vadd.f32 0.0, %v4819
    %v4821 = vpop.f32.mrb[0].mxu0
    %4822 = vdwg.mxu0
    %v4823 = vsub.f32 1.0, %v4795
    %v4824 = vsub.f32 1.0, %v4800
    %v4825 = vsub.f32 1.0, %v4805
    %v4826 = vmul.f32 %v4140, %v4823
    %v4827 = vmul.f32 %v4141, %v4824
    %v4828 = vmul.f32 %v4142, %v4825
    %v4829 = vadd.f32 %v4826, %v4810
    %v4830 = vadd.f32 %v4827, %v4815
    %v4831 = vadd.f32 %v4828, %v4820
    %4832 = vrot.lane.b32.xlu0 %v4473, 60
    %v4833 = vpop.permute.xlu0 %4832
    %v4834 = vsel %vm178, %v4833, 0
    %v4837 = vsel %vm377, %v4831, 0
    %4839 = vmatprep.subr.mxu0 0.0
    %4840 = vmatpush1.msra.mxu0 %v4829
    %4841 = vmatprep.subr.mxu0 0.0
    %4842 = vmatpush1.msra.mxu0 %v4830
    %4843 = vmatprep.subr.mxu0 0.0
    %4844 = vmatpush1.msra.mxu0 %v4837
    %4845 = vmatprep.subr.mxu0 0.0
    %4846 = vmatpush1.msra.mxu0 0.0
    %4847 = vmatprep.subr.mxu0 0.0
    %4848 = vmatpush1.msra.mxu0 0.0
    %4849 = vmatprep.subr.mxu0 0.0
    %4850 = vmatpush1.msra.mxu0 0.0
    %4851 = vmatprep.subr.mxu0 0.0
    %4852 = vmatpush1.msra.mxu0 0.0
    %4853 = vmatprep.subr.mxu0 0.0
    %4854 = vmatpush1.msra.mxu0 0.0
    %4855 = vmatprep.subr.mxu0 0.0
    %4856 = vmatpush1.msra.mxu0 0.0
    %4857 = vmatprep.subr.mxu0 0.0
    %4858 = vmatpush1.msra.mxu0 0.0
    %4859 = vmatprep.subr.mxu0 0.0
    %4860 = vmatpush1.msra.mxu0 0.0
    %4861 = vmatprep.subr.mxu0 0.0
    %4862 = vmatpush1.msra.mxu0 0.0
    %4863 = vmatprep.subr.mxu0 0.0
    %4864 = vmatpush1.msra.mxu0 0.0
    %4865 = vmatprep.subr.mxu0 0.0
    %4866 = vmatpush1.msra.mxu0 0.0
    %4867 = vmatprep.subr.mxu0 0.0
    %4868 = vmatpush1.msra.mxu0 0.0
    %4869 = vmatprep.subr.mxu0 0.0
    %4870 = vmatpush1.msra.mxu0 0.0
    %4871 = vmatprep.subr.mxu0 0.0
    %4872 = vmatpush1.msra.mxu0 0.0
    %4873 = vmatprep.subr.mxu0 0.0
    %4874 = vmatpush1.msra.mxu0 0.0
    %4875 = vmatprep.subr.mxu0 0.0
    %4876 = vmatpush1.msra.mxu0 0.0
    %4877 = vmatprep.subr.mxu0 0.0
    %4878 = vmatpush1.msra.mxu0 0.0
    %4879 = vmatprep.subr.mxu0 0.0
    %4880 = vmatpush1.msra.mxu0 0.0
    %4881 = vmatprep.subr.mxu0 0.0
    %4882 = vmatpush1.msra.mxu0 0.0
    %4883 = vmatprep.subr.mxu0 0.0
    %4884 = vmatpush1.msra.mxu0 0.0
    %4885 = vmatprep.subr.mxu0 0.0
    %4886 = vmatpush1.msra.mxu0 0.0
    %4887 = vmatprep.subr.mxu0 0.0
    %4888 = vmatpush1.msra.mxu0 0.0
    %4889 = vmatprep.subr.mxu0 0.0
    %4890 = vmatpush1.msra.mxu0 0.0
    %4891 = vmatprep.subr.mxu0 0.0
    %4892 = vmatpush1.msra.mxu0 0.0
    %4893 = vmatprep.subr.mxu0 0.0
    %4894 = vmatpush1.msra.mxu0 0.0
    %4895 = vmatprep.subr.mxu0 0.0
    %4896 = vmatpush1.msra.mxu0 0.0
    %4897 = vmatprep.subr.mxu0 0.0
    %4898 = vmatpush1.msra.mxu0 0.0
    %4899 = vmatprep.subr.mxu0 0.0
    %4900 = vmatpush1.msra.mxu0 0.0
    %4901 = vmatprep.subr.mxu0 0.0
    %4902 = vmatpush1.msra.mxu0 0.0
    %4903 = vmatprep.mubr.f32.mxu0 0.0
    %4904 = vmatmul.mubr.f32.gmra.mrb[0].mxu0 %v4834
    %v4905 = vpop.f32.mrb[0].mxu0
    %v4906 = vadd.f32 0.0, %v4905
    %v4907 = vpop.f32.mrb[0].mxu0
    %4908 = vdwg.mxu0
    %4909 = vrot.lane.b32.xlu0 %v4597, 60
    %v4910 = vpop.permute.xlu0 %4909
    %v4912 = vsel %vm456, %v4910, 0.0
    %4913 = vadd.xlane.f32.xlu0 %v4912
    %v4914 = vpop.xlane.xlu0 %4913
    %v4915 = vmul.f32 %v4829, %v4829
    %v4916 = vmul.f32 %v4830, %v4830
    %v4917 = vmul.f32 %v4831, %v4831
    %v4918 = vadd.f32 %v4915, %v4916
    %v4919 = vsel %vm377, %v4917, 0.0
    %v4920 = vadd.f32 %v4918, %v4919
    %v4921 = vrot.slane %v4920, 4
    %v4922 = vadd.f32 %v4920, %v4921
    %v4923 = vrot.slane %v4922, 2
    %v4924 = vadd.f32 %v4922, %v4923
    %v4925 = vrot.slane %v4924, 1
    %v4926 = vadd.f32 %v4924, %v4925
    %v4927 = vmax.f32 %v4926, 1e-16
    %v4928 = vmax.f32 %v4914, 1e-16
    %v4929 = vmul.f32 %v4927, %v4928
    %v4930 = vrsqrt.pop %v4929
    %v4931 = vmul.f32 %v4906, %v4930
    %4932 = vset.pattern.permute.xlu0 89
    %4933 = vperm.xlu0 %4932, %v4497
    %v4934 = vpop.permute.xlu0 %4933
    %v4936 = vmul.f32 %v4934, %v4931
    %v4937 = vsel %vm479, %v4936, -inf
    %4938 = vmax.xlane.f32.xlu0 %v4937
    %v4939 = vpop.xlane.xlu0 %4938
    %v4940 = vsub.f32 %v4936, %v4939
    %v4941 = vmul.f32 %v4940, 1.442695
    %v4942 = vpow.pop %v4941
    %v4943 = vsel %vm479, %v4942, 0.0
    %4944 = vadd.xlane.f32.xlu0 %v4943
    %v4945 = vpop.xlane.xlu0 %4944
    %v4946 = vrcp.pop %v4945
    %v4947 = vmul.f32 %v4942, %v4946
    %4948 = vset.pattern.permute.xlu0 91
    %4949 = vperm.xlu0 %4948, %v4479
    %v4950 = vpop.permute.xlu0 %4949
    %v4952 = vmul.f32 %v4950, %v4947
    %4953 = vset.pattern.permute.xlu0 91
    %4954 = vperm.xlu0 %4953, %v4632
    %v4955 = vpop.permute.xlu0 %4954
    %v4957 = vmul.f32 %v4955, %v4302
    %v4958 = vadd.f32 %v4952, %v4957
    %4959 = vrot.lane.b32.xlu0 %v4958, 1
    %v4960 = vpop.permute.xlu0 %4959
    %4962 = vset.pattern.permute.xlu0 97
    %4963 = vperm.xlu0 %4962, %v4521
    %v4964 = vpop.permute.xlu0 %4963
    %v4966 = vmul.f32 %v4964, %v4960
    %4967 = vset.pattern.permute.xlu0 98
    %4968 = vperm.xlu0 %4967, %v4521
    %v4969 = vpop.permute.xlu0 %4968
    %v4971 = vmul.f32 %v4969, %v4958
    %v4972 = vadd.f32 %v4966, %v4971
    %4973 = vrot.lane.b32.xlu0 %v4958, 127
    %v4974 = vpop.permute.xlu0 %4973
    %4975 = vset.pattern.permute.xlu0 99
    %4976 = vperm.xlu0 %4975, %v4521
    %v4977 = vpop.permute.xlu0 %4976
    %v4979 = vmul.f32 %v4977, %v4974
    %v4980 = vadd.f32 %v4972, %v4979
    %v4981 = vadd.f32 %v4980, 1e-16
    %4982 = vset.pattern.permute.xlu0 93
    %4983 = vperm.xlu0 %4982, %v4498
    %v4984 = vpop.permute.xlu0 %4983
    %v4986 = vpow.f32 %v4981, %v4984
    %v4987 = vsel %vm479, %v4986, 0.0
    %4988 = vadd.xlane.f32.xlu0 %v4987
    %v4989 = vpop.xlane.xlu0 %4988
    %v4990 = vrcp.pop %v4989
    %v4991 = vmul.f32 %v4986, %v4990
    %4992 = vmatprep.subr.mxu0 0.0
    %4993 = vmatpush1.xpose.msra.mxu0 %v4829
    %4994 = vmatprep.subr.mxu0 0.0
    %4995 = vmatpush1.xpose.msra.mxu0 %v4830
    %4996 = vmatprep.subr.mxu0 0.0
    %4997 = vmatpush1.xpose.msra.mxu0 %v4831
    %4998 = vmatprep.subr.mxu0 0.0
    %4999 = vmatpush1.xpose.msra.mxu0 0.0
    %5000 = vmatprep.subr.mxu0 0.0
    %5001 = vmatpush1.xpose.msra.mxu0 0.0
    %5002 = vmatprep.subr.mxu0 0.0
    %5003 = vmatpush1.xpose.msra.mxu0 0.0
    %5004 = vmatprep.subr.mxu0 0.0
    %5005 = vmatpush1.xpose.msra.mxu0 0.0
    %5006 = vmatprep.subr.mxu0 0.0
    %5007 = vmatpush1.xpose.msra.mxu0 0.0
    %5008 = vmatprep.subr.mxu0 0.0
    %5009 = vmatpush1.xpose.msra.mxu0 0.0
    %5010 = vmatprep.subr.mxu0 0.0
    %5011 = vmatpush1.xpose.msra.mxu0 0.0
    %5012 = vmatprep.subr.mxu0 0.0
    %5013 = vmatpush1.xpose.msra.mxu0 0.0
    %5014 = vmatprep.subr.mxu0 0.0
    %5015 = vmatpush1.xpose.msra.mxu0 0.0
    %5016 = vmatprep.subr.mxu0 0.0
    %5017 = vmatpush1.xpose.msra.mxu0 0.0
    %5018 = vmatprep.subr.mxu0 0.0
    %5019 = vmatpush1.xpose.msra.mxu0 0.0
    %5020 = vmatprep.subr.mxu0 0.0
    %5021 = vmatpush1.xpose.msra.mxu0 0.0
    %5022 = vmatprep.subr.mxu0 0.0
    %5023 = vmatpush1.xpose.msra.mxu0 0.0
    %5024 = vmatprep.subr.mxu0 0.0
    %5025 = vmatpush1.xpose.msra.mxu0 0.0
    %5026 = vmatprep.subr.mxu0 0.0
    %5027 = vmatpush1.xpose.msra.mxu0 0.0
    %5028 = vmatprep.subr.mxu0 0.0
    %5029 = vmatpush1.xpose.msra.mxu0 0.0
    %5030 = vmatprep.subr.mxu0 0.0
    %5031 = vmatpush1.xpose.msra.mxu0 0.0
    %5032 = vmatprep.subr.mxu0 0.0
    %5033 = vmatpush1.xpose.msra.mxu0 0.0
    %5034 = vmatprep.subr.mxu0 0.0
    %5035 = vmatpush1.xpose.msra.mxu0 0.0
    %5036 = vmatprep.subr.mxu0 0.0
    %5037 = vmatpush1.xpose.msra.mxu0 0.0
    %5038 = vmatprep.subr.mxu0 0.0
    %5039 = vmatpush1.xpose.msra.mxu0 0.0
    %5040 = vmatprep.subr.mxu0 0.0
    %5041 = vmatpush1.xpose.msra.mxu0 0.0
    %5042 = vmatprep.subr.mxu0 0.0
    %5043 = vmatpush1.xpose.msra.mxu0 0.0
    %5044 = vmatprep.subr.mxu0 0.0
    %5045 = vmatpush1.xpose.msra.mxu0 0.0
    %5046 = vmatprep.subr.mxu0 0.0
    %5047 = vmatpush1.xpose.msra.mxu0 0.0
    %5048 = vmatprep.subr.mxu0 0.0
    %5049 = vmatpush1.xpose.msra.mxu0 0.0
    %5050 = vmatprep.subr.mxu0 0.0
    %5051 = vmatpush1.xpose.msra.mxu0 0.0
    %5052 = vmatprep.subr.mxu0 0.0
    %5053 = vmatpush1.xpose.msra.mxu0 0.0
    %5054 = vmatprep.subr.mxu0 0.0
    %5055 = vmatpush1.xpose.msra.mxu0 0.0
    %5056 = vmatprep.mubr.f32.mxu0 0.0
    %5057 = vmatmul.mubr.f32.gmra.mrb[0].mxu0 %v4991
    %v5058 = vpop.f32.mrb[0].mxu0
    %v5059 = vadd.f32 0.0, %v5058
    %v5060 = vpop.f32.mrb[0].mxu0
    %5061 = vdwg.mxu0
    %5062 = vst [vmem:[#allocation7 + $0x6] sm:$0x1] %v4673
    %5063 = vst [vmem:[#allocation9 + $0x6] sm:$0x1] %v4991
    %5064 = vrot.lane.b32.xlu0 %v4473, 104
    %v5065 = vpop.permute.xlu0 %5064
    %5067 = vst.msk [vmem:[#allocation10 + $0x6] sm:$0x1] %vm456, %v5065
    %5068 = vst.msk [vmem:[#allocation12 + $0x6] sm:$0x1] %vm456, %v5059
    %v5069 = vld [vmem:[#allocation2 + $0x7] sm:$0x1]
    %v5070 = vpack.c.bf16 %v5059, %v5059
    %v5072 = vsel %vm178, %v5070, 0
    %5074 = vmatprep.subr.bf16.mxu0 0
    %5075 = vmatpush1.bf16.msra.mxu0 %v175
    %5076 = vmatprep.subr.bf16.mxu0 0
    %5077 = vmatpush1.bf16.msra.mxu0 %v183
    %5078 = vmatprep.subr.bf16.mxu0 0
    %5079 = vmatpush1.bf16.msra.mxu0 0
    %5080 = vmatprep.subr.bf16.mxu0 0
    %5081 = vmatpush1.bf16.msra.mxu0 0
    %5082 = vmatprep.subr.bf16.mxu0 0
    %5083 = vmatpush1.bf16.msra.mxu0 0
    %5084 = vmatprep.subr.bf16.mxu0 0
    %5085 = vmatpush1.bf16.msra.mxu0 0
    %5086 = vmatprep.subr.bf16.mxu0 0
    %5087 = vmatpush1.bf16.msra.mxu0 0
    %5088 = vmatprep.subr.bf16.mxu0 0
    %5089 = vmatpush1.bf16.msra.mxu0 0
    %5090 = vmatprep.subr.bf16.mxu0 0
    %5091 = vmatpush1.bf16.msra.mxu0 0
    %5092 = vmatprep.subr.bf16.mxu0 0
    %5093 = vmatpush1.bf16.msra.mxu0 0
    %5094 = vmatprep.subr.bf16.mxu0 0
    %5095 = vmatpush1.bf16.msra.mxu0 0
    %5096 = vmatprep.subr.bf16.mxu0 0
    %5097 = vmatpush1.bf16.msra.mxu0 0
    %5098 = vmatprep.subr.bf16.mxu0 0
    %5099 = vmatpush1.bf16.msra.mxu0 0
    %5100 = vmatprep.subr.bf16.mxu0 0
    %5101 = vmatpush1.bf16.msra.mxu0 0
    %5102 = vmatprep.subr.bf16.mxu0 0
    %5103 = vmatpush1.bf16.msra.mxu0 0
    %5104 = vmatprep.subr.bf16.mxu0 0
    %5105 = vmatpush1.bf16.msra.mxu0 0
    %5106 = vmatprep.mubr.bf16.mxu0 0
    %5107 = vmatmul.mubr.bf16.gmra.mrb[0].mxu0 %v5072
    %v5108 = vpop.f32.mrb[0].mxu0
    %v5109 = vadd.f32 0.0, %v5108
    %v5110 = vpop.f32.mrb[0].mxu0
    %v5111 = vpop.f32.mrb[0].mxu0
    %v5112 = vpop.f32.mrb[0].mxu0
    %5113 = vdwg.mxu0
    %v5114 = vadd.f32 %v5069, %v5109
    %v5115 = vxor.u32 %v5114, 2147483648
    %v5116 = vmul.f32 %v5115, 1.442695
    %v5117 = vpow.pop %v5116
    %v5118 = vadd.f32 %v5117, 1.0
    %v5119 = vrcp.pop %v5118
    %v5120 = vmul.f32 1.0, %v5119
    %v5121 = vpack.c.bf16 %v5120, %v5120
    %5122 = vmatprep.subr.bf16.mxu0 0
    %5123 = vmatpush1.bf16.msra.mxu0 %v265
    %5124 = vmatprep.subr.bf16.mxu0 0
    %5125 = vmatpush1.bf16.msra.mxu0 %v266
    %5126 = vmatprep.subr.bf16.mxu0 0
    %5127 = vmatpush1.bf16.msra.mxu0 %v267
    %5128 = vmatprep.subr.bf16.mxu0 0
    %5129 = vmatpush1.bf16.msra.mxu0 %v268
    %5130 = vmatprep.subr.bf16.mxu0 0
    %5131 = vmatpush1.bf16.msra.mxu0 %v269
    %5132 = vmatprep.subr.bf16.mxu0 0
    %5133 = vmatpush1.bf16.msra.mxu0 %v270
    %5134 = vmatprep.subr.bf16.mxu0 0
    %5135 = vmatpush1.bf16.msra.mxu0 %v271
    %5136 = vmatprep.subr.bf16.mxu0 0
    %5137 = vmatpush1.bf16.msra.mxu0 %v272
    %5138 = vmatprep.subr.bf16.mxu0 0
    %5139 = vmatpush1.bf16.msra.mxu0 0
    %5140 = vmatprep.subr.bf16.mxu0 0
    %5141 = vmatpush1.bf16.msra.mxu0 0
    %5142 = vmatprep.subr.bf16.mxu0 0
    %5143 = vmatpush1.bf16.msra.mxu0 0
    %5144 = vmatprep.subr.bf16.mxu0 0
    %5145 = vmatpush1.bf16.msra.mxu0 0
    %5146 = vmatprep.subr.bf16.mxu0 0
    %5147 = vmatpush1.bf16.msra.mxu0 0
    %5148 = vmatprep.subr.bf16.mxu0 0
    %5149 = vmatpush1.bf16.msra.mxu0 0
    %5150 = vmatprep.subr.bf16.mxu0 0
    %5151 = vmatpush1.bf16.msra.mxu0 0
    %5152 = vmatprep.subr.bf16.mxu0 0
    %5153 = vmatpush1.bf16.msra.mxu0 0
    %5154 = vmatprep.mubr.bf16.mxu0 0
    %5155 = vmatmul.mubr.bf16.gmra.mrb[0].mxu0 %v5121
    %v5156 = vpop.f32.mrb[0].mxu0
    %v5157 = vadd.f32 %v71, %v5156
    %v5158 = vpop.f32.mrb[0].mxu0
    %v5159 = vpop.f32.mrb[0].mxu0
    %v5160 = vpop.f32.mrb[0].mxu0
    %5161 = vdwg.mxu0
    %v5162 = vtanh.pop %v5157
    %v5163 = vxor.u32 %v5157, 2147483648
    %v5164 = vmul.f32 %v5163, 1.442695
    %v5165 = vpow.pop %v5164
    %v5166 = vadd.f32 %v5165, 1.0
    %v5167 = vrcp.pop %v5166
    %v5168 = vmul.f32 1.0, %v5167
    %v5169 = vmax.f32 %v5157, 0.0
    %vm5170 = vcmp.ne.f32.partialorder %v5157, %v5157
    %v5171 = vadd.f32 %v5157, 0.0
    %v5172 = vand.u32 2147483647, %v5157
    %v5173 = vsub.f32 0.0, %v5172
    %v5174 = vmul.f32 %v5173, 1.442695
    %v5175 = vpow.pop %v5174
    %v5176 = vadd.f32 %v5175, 1.0
    %v5177 = vlog2.pop %v5176
    %v5178 = vmul.f32 %v5177, 0.6931472
    %v5179 = vmul.f32 -0.5, %v5175
    %v5180 = vadd.f32 %v5179, 1.0
    %v5181 = vmul.f32 %v5180, %v5175
    %v5182 = vand.u32 2147483647, %v5175
    %vm5183 = vcmp.lt.f32.partialorder %v5182, 0.0004427343
    %v5184 = vsel %vm5183, %v5181, %v5178
    %v5185 = vadd.f32 %v5169, %v5184
    %v5186 = vsel %vm5170, %v5171, %v5185
    %v5187 = vadd.f32 %v5186, 1.0
    %v5188 = vsel %vm347, %v5157, -inf
    %5189 = vmax.xlane.f32.xlu0 %v5188
    %v5190 = vpop.xlane.xlu0 %5189
    %v5191 = vsub.f32 %v5157, %v5190
    %v5192 = vmul.f32 %v5191, 1.442695
    %v5193 = vpow.pop %v5192
    %5195 = vrot.lane.b32.xlu0 %v5193, 34
    %v5196 = vpop.permute.xlu0 %5195
    %v5198 = vsel %vm358, %v5196, 0.0
    %5199 = vadd.xlane.f32.xlu0 %v5198
    %v5200 = vpop.xlane.xlu0 %5199
    %v5201 = vrcp.pop %v5200
    %v5202 = vmul.f32 %v5193, %v5201
    %5203 = vrot.lane.b32.xlu0 %v5193, 31
    %v5204 = vpop.permute.xlu0 %5203
    %v5206 = vsel %vm358, %v5204, 0.0
    %5207 = vadd.xlane.f32.xlu0 %v5206
    %v5208 = vpop.xlane.xlu0 %5207
    %v5209 = vrcp.pop %v5208
    %v5210 = vmul.f32 %v5193, %v5209
    %5212 = vrot.lane.b32.xlu0 %v5162, 80
    %v5213 = vpop.permute.xlu0 %5212
    %v5214 = vsel %vm178, %v5213, 0
    %5216 = vmatprep.subr.mxu0 0.0
    %5217 = vmatpush1.msra.mxu0 %v4829
    %5218 = vmatprep.subr.mxu0 0.0
    %5219 = vmatpush1.msra.mxu0 %v4830
    %5220 = vmatprep.subr.mxu0 0.0
    %5221 = vmatpush1.msra.mxu0 %v4837
    %5222 = vmatprep.subr.mxu0 0.0
    %5223 = vmatpush1.msra.mxu0 0.0
    %5224 = vmatprep.subr.mxu0 0.0
    %5225 = vmatpush1.msra.mxu0 0.0
    %5226 = vmatprep.subr.mxu0 0.0
    %5227 = vmatpush1.msra.mxu0 0.0
    %5228 = vmatprep.subr.mxu0 0.0
    %5229 = vmatpush1.msra.mxu0 0.0
    %5230 = vmatprep.subr.mxu0 0.0
    %5231 = vmatpush1.msra.mxu0 0.0
    %5232 = vmatprep.subr.mxu0 0.0
    %5233 = vmatpush1.msra.mxu0 0.0
    %5234 = vmatprep.subr.mxu0 0.0
    %5235 = vmatpush1.msra.mxu0 0.0
    %5236 = vmatprep.subr.mxu0 0.0
    %5237 = vmatpush1.msra.mxu0 0.0
    %5238 = vmatprep.subr.mxu0 0.0
    %5239 = vmatpush1.msra.mxu0 0.0
    %5240 = vmatprep.subr.mxu0 0.0
    %5241 = vmatpush1.msra.mxu0 0.0
    %5242 = vmatprep.subr.mxu0 0.0
    %5243 = vmatpush1.msra.mxu0 0.0
    %5244 = vmatprep.subr.mxu0 0.0
    %5245 = vmatpush1.msra.mxu0 0.0
    %5246 = vmatprep.subr.mxu0 0.0
    %5247 = vmatpush1.msra.mxu0 0.0
    %5248 = vmatprep.subr.mxu0 0.0
    %5249 = vmatpush1.msra.mxu0 0.0
    %5250 = vmatprep.subr.mxu0 0.0
    %5251 = vmatpush1.msra.mxu0 0.0
    %5252 = vmatprep.subr.mxu0 0.0
    %5253 = vmatpush1.msra.mxu0 0.0
    %5254 = vmatprep.subr.mxu0 0.0
    %5255 = vmatpush1.msra.mxu0 0.0
    %5256 = vmatprep.subr.mxu0 0.0
    %5257 = vmatpush1.msra.mxu0 0.0
    %5258 = vmatprep.subr.mxu0 0.0
    %5259 = vmatpush1.msra.mxu0 0.0
    %5260 = vmatprep.subr.mxu0 0.0
    %5261 = vmatpush1.msra.mxu0 0.0
    %5262 = vmatprep.subr.mxu0 0.0
    %5263 = vmatpush1.msra.mxu0 0.0
    %5264 = vmatprep.subr.mxu0 0.0
    %5265 = vmatpush1.msra.mxu0 0.0
    %5266 = vmatprep.subr.mxu0 0.0
    %5267 = vmatpush1.msra.mxu0 0.0
    %5268 = vmatprep.subr.mxu0 0.0
    %5269 = vmatpush1.msra.mxu0 0.0
    %5270 = vmatprep.subr.mxu0 0.0
    %5271 = vmatpush1.msra.mxu0 0.0
    %5272 = vmatprep.subr.mxu0 0.0
    %5273 = vmatpush1.msra.mxu0 0.0
    %5274 = vmatprep.subr.mxu0 0.0
    %5275 = vmatpush1.msra.mxu0 0.0
    %5276 = vmatprep.subr.mxu0 0.0
    %5277 = vmatpush1.msra.mxu0 0.0
    %5278 = vmatprep.subr.mxu0 0.0
    %5279 = vmatpush1.msra.mxu0 0.0
    %5280 = vmatprep.mubr.f32.mxu0 0.0
    %5281 = vmatmul.mubr.f32.gmra.mrb[0].mxu0 %v5214
    %v5282 = vpop.f32.mrb[0].mxu0
    %v5283 = vadd.f32 0.0, %v5282
    %v5284 = vpop.f32.mrb[0].mxu0
    %5285 = vdwg.mxu0
    %v5286 = vmul.f32 %v5162, %v5162
    %5288 = vrot.lane.b32.xlu0 %v5286, 80
    %v5289 = vpop.permute.xlu0 %5288
    %v5291 = vsel %vm456, %v5289, 0.0
    %5292 = vadd.xlane.f32.xlu0 %v5291
    %v5293 = vpop.xlane.xlu0 %5292
    %v5294 = vmax.f32 %v5293, 1e-16
    %v5295 = vmul.f32 %v4927, %v5294
    %v5296 = vrsqrt.pop %v5295
    %v5297 = vmul.f32 %v5283, %v5296
    %5299 = vset.pattern.permute.xlu0 88
    %5300 = vperm.xlu0 %5299, %v5186
    %v5301 = vpop.permute.xlu0 %5300
    %v5303 = vmul.f32 %v5301, %v5297
    %v5304 = vsel %vm479, %v5303, -inf
    %5305 = vmax.xlane.f32.xlu0 %v5304
    %v5306 = vpop.xlane.xlu0 %5305
    %v5307 = vsub.f32 %v5303, %v5306
    %v5308 = vmul.f32 %v5307, 1.442695
    %v5309 = vpow.pop %v5308
    %v5310 = vsel %vm479, %v5309, 0.0
    %5311 = vadd.xlane.f32.xlu0 %v5310
    %v5312 = vpop.xlane.xlu0 %5311
    %v5313 = vrcp.pop %v5312
    %v5314 = vmul.f32 %v5309, %v5313
    %5316 = vset.pattern.permute.xlu0 90
    %5317 = vperm.xlu0 %5316, %v5168
    %v5318 = vpop.permute.xlu0 %5317
    %v5320 = vmul.f32 %v5318, %v5314
    %v5321 = vsub.f32 1.0, %v5168
    %5323 = vset.pattern.permute.xlu0 90
    %5324 = vperm.xlu0 %5323, %v5321
    %v5325 = vpop.permute.xlu0 %5324
    %v5327 = vmul.f32 %v5325, %v4673
    %v5328 = vadd.f32 %v5320, %v5327
    %5329 = vrot.lane.b32.xlu0 %v5328, 1
    %v5330 = vpop.permute.xlu0 %5329
    %5332 = vset.pattern.permute.xlu0 94
    %5333 = vperm.xlu0 %5332, %v5202
    %v5334 = vpop.permute.xlu0 %5333
    %v5336 = vmul.f32 %v5334, %v5330
    %5337 = vset.pattern.permute.xlu0 95
    %5338 = vperm.xlu0 %5337, %v5202
    %v5339 = vpop.permute.xlu0 %5338
    %v5341 = vmul.f32 %v5339, %v5328
    %v5342 = vadd.f32 %v5336, %v5341
    %5343 = vrot.lane.b32.xlu0 %v5328, 127
    %v5344 = vpop.permute.xlu0 %5343
    %5345 = vset.pattern.permute.xlu0 96
    %5346 = vperm.xlu0 %5345, %v5202
    %v5347 = vpop.permute.xlu0 %5346
    %v5349 = vmul.f32 %v5347, %v5344
    %v5350 = vadd.f32 %v5342, %v5349
    %v5351 = vadd.f32 %v5350, 1e-16
    %5353 = vset.pattern.permute.xlu0 92
    %5354 = vperm.xlu0 %5353, %v5187
    %v5355 = vpop.permute.xlu0 %5354
    %v5357 = vpow.f32 %v5351, %v5355
    %v5358 = vsel %vm479, %v5357, 0.0
    %5359 = vadd.xlane.f32.xlu0 %v5358
    %v5360 = vpop.xlane.xlu0 %5359
    %v5361 = vrcp.pop %v5360
    %v5362 = vmul.f32 %v5357, %v5361
    %v5363 = vsel %vm166, %v5168, %v5162
    %5364 = vxpose.xlu0.b32.start [1/16] %v5363, 128
    %5365 = vxpose.xlu0.b32.cont [2/16] 0.0, 128
    %5366 = vxpose.xlu0.b32.cont [3/16] 0.0, 128
    %5367 = vxpose.xlu0.b32.cont [4/16] 0.0, 128
    %5368 = vxpose.xlu0.b32.cont [5/16] 0.0, 128
    %5369 = vxpose.xlu0.b32.cont [6/16] 0.0, 128
    %5370 = vxpose.xlu0.b32.cont [7/16] 0.0, 128
    %5371 = vxpose.xlu0.b32.cont [8/16] 0.0, 128
    %5372 = vxpose.xlu0.b32.cont [9/16] 0.0, 128
    %5373 = vxpose.xlu0.b32.cont [10/16] 0.0, 128
    %5374 = vxpose.xlu0.b32.cont [11/16] 0.0, 128
    %5375 = vxpose.xlu0.b32.cont [12/16] 0.0, 128
    %5376 = vxpose.xlu0.b32.cont [13/16] 0.0, 128
    %5377 = vxpose.xlu0.b32.cont [14/16] 0.0, 128
    %5378 = vxpose.xlu0.b32.cont [15/16] 0.0, 128
    %5379 = vxpose.xlu0.b32.end [16/16] 0.0, 128
    %v5380 = vpop.trf.xlu0
    %v5381 = vpop.trf.xlu0
    %v5382 = vpop.trf.xlu0
    %v5383 = vpop.trf.xlu0
    %v5384 = vpop.trf.xlu0
    %v5385 = vpop.trf.xlu0
    %v5386 = vpop.trf.xlu0
    %v5387 = vpop.trf.xlu0
    %v5388 = vpop.trf.xlu0
    %v5389 = vpop.trf.xlu0
    %v5390 = vpop.trf.xlu0
    %v5391 = vpop.trf.xlu0
    %v5392 = vpop.trf.xlu0
    %v5393 = vpop.trf.xlu0
    %v5394 = vpop.trf.xlu0
    %v5395 = vpop.trf.xlu0
    %v5397 = vsel %vm572, %v5380, 0
    %v5400 = vsel %vm572, %v5381, 0
    %v5403 = vsel %vm572, %v5382, 0
    %v5406 = vsel %vm572, %v5383, 0
    %v5409 = vsel %vm572, %v5384, 0
    %v5412 = vsel %vm572, %v5385, 0
    %v5415 = vsel %vm479, %v5362, 0
    %5417 = vmatprep.subr.mxu0 0.0
    %5418 = vmatpush1.msra.mxu0 %v5415
    %5419 = vmatprep.subr.mxu0 0.0
    %5420 = vmatpush1.msra.mxu0 0.0
    %5421 = vmatprep.subr.mxu0 0.0
    %5422 = vmatpush1.msra.mxu0 0.0
    %5423 = vmatprep.subr.mxu0 0.0
    %5424 = vmatpush1.msra.mxu0 0.0
    %5425 = vmatprep.subr.mxu0 0.0
    %5426 = vmatpush1.msra.mxu0 0.0
    %5427 = vmatprep.subr.mxu0 0.0
    %5428 = vmatpush1.msra.mxu0 0.0
    %5429 = vmatprep.subr.mxu0 0.0
    %5430 = vmatpush1.msra.mxu0 0.0
    %5431 = vmatprep.subr.mxu0 0.0
    %5432 = vmatpush1.msra.mxu0 0.0
    %5433 = vmatprep.subr.mxu0 0.0
    %5434 = vmatpush1.msra.mxu0 0.0
    %5435 = vmatprep.subr.mxu0 0.0
    %5436 = vmatpush1.msra.mxu0 0.0
    %5437 = vmatprep.subr.mxu0 0.0
    %5438 = vmatpush1.msra.mxu0 0.0
    %5439 = vmatprep.subr.mxu0 0.0
    %5440 = vmatpush1.msra.mxu0 0.0
    %5441 = vmatprep.subr.mxu0 0.0
    %5442 = vmatpush1.msra.mxu0 0.0
    %5443 = vmatprep.subr.mxu0 0.0
    %5444 = vmatpush1.msra.mxu0 0.0
    %5445 = vmatprep.subr.mxu0 0.0
    %5446 = vmatpush1.msra.mxu0 0.0
    %5447 = vmatprep.subr.mxu0 0.0
    %5448 = vmatpush1.msra.mxu0 0.0
    %5449 = vmatprep.subr.mxu0 0.0
    %5450 = vmatpush1.msra.mxu0 0.0
    %5451 = vmatprep.subr.mxu0 0.0
    %5452 = vmatpush1.msra.mxu0 0.0
    %5453 = vmatprep.subr.mxu0 0.0
    %5454 = vmatpush1.msra.mxu0 0.0
    %5455 = vmatprep.subr.mxu0 0.0
    %5456 = vmatpush1.msra.mxu0 0.0
    %5457 = vmatprep.subr.mxu0 0.0
    %5458 = vmatpush1.msra.mxu0 0.0
    %5459 = vmatprep.subr.mxu0 0.0
    %5460 = vmatpush1.msra.mxu0 0.0
    %5461 = vmatprep.subr.mxu0 0.0
    %5462 = vmatpush1.msra.mxu0 0.0
    %5463 = vmatprep.subr.mxu0 0.0
    %5464 = vmatpush1.msra.mxu0 0.0
    %5465 = vmatprep.subr.mxu0 0.0
    %5466 = vmatpush1.msra.mxu0 0.0
    %5467 = vmatprep.subr.mxu0 0.0
    %5468 = vmatpush1.msra.mxu0 0.0
    %5469 = vmatprep.subr.mxu0 0.0
    %5470 = vmatpush1.msra.mxu0 0.0
    %5471 = vmatprep.subr.mxu0 0.0
    %5472 = vmatpush1.msra.mxu0 0.0
    %5473 = vmatprep.subr.mxu0 0.0
    %5474 = vmatpush1.msra.mxu0 0.0
    %5475 = vmatprep.subr.mxu0 0.0
    %5476 = vmatpush1.msra.mxu0 0.0
    %5477 = vmatprep.subr.mxu0 0.0
    %5478 = vmatpush1.msra.mxu0 0.0
    %5479 = vmatprep.subr.mxu0 0.0
    %5480 = vmatpush1.msra.mxu0 0.0
    %5481 = vmatprep.mubr.f32.mxu0 0.0
    %5482 = vmatmul.mubr.f32.gmra.mrb[0].mxu0 %v5397
    %v5483 = vpop.f32.mrb[0].mxu0
    %v5484 = vadd.f32 0.0, %v5483
    %v5485 = vpop.f32.mrb[0].mxu0
    %5486 = vmatprep.mubr.f32.mxu0 0.0
    %5487 = vmatmul.mubr.f32.gmra.mrb[0].mxu0 %v5400
    %v5488 = vpop.f32.mrb[0].mxu0
    %v5489 = vadd.f32 0.0, %v5488
    %v5490 = vpop.f32.mrb[0].mxu0
    %5491 = vmatprep.mubr.f32.mxu0 0.0
    %5492 = vmatmul.mubr.f32.gmra.mrb[0].mxu0 %v5403
    %v5493 = vpop.f32.mrb[0].mxu0
    %v5494 = vadd.f32 0.0, %v5493
    %v5495 = vpop.f32.mrb[0].mxu0
    %5496 = vmatprep.mubr.f32.mxu0 0.0
    %5497 = vmatmul.mubr.f32.gmra.mrb[0].mxu0 %v5406
    %v5498 = vpop.f32.mrb[0].mxu0
    %v5499 = vadd.f32 0.0, %v5498
    %v5500 = vpop.f32.mrb[0].mxu0
    %5501 = vmatprep.mubr.f32.mxu0 0.0
    %5502 = vmatmul.mubr.f32.gmra.mrb[0].mxu0 %v5409
    %v5503 = vpop.f32.mrb[0].mxu0
    %v5504 = vadd.f32 0.0, %v5503
    %v5505 = vpop.f32.mrb[0].mxu0
    %5506 = vmatprep.mubr.f32.mxu0 0.0
    %5507 = vmatmul.mubr.f32.gmra.mrb[0].mxu0 %v5412
    %v5508 = vpop.f32.mrb[0].mxu0
    %v5509 = vadd.f32 0.0, %v5508
    %v5510 = vpop.f32.mrb[0].mxu0
    %5511 = vdwg.mxu0
    %v5512 = vsub.f32 1.0, %v5484
    %v5513 = vsub.f32 1.0, %v5489
    %v5514 = vsub.f32 1.0, %v5494
    %v5515 = vmul.f32 %v4829, %v5512
    %v5516 = vmul.f32 %v4830, %v5513
    %v5517 = vmul.f32 %v4831, %v5514
    %v5518 = vadd.f32 %v5515, %v5499
    %v5519 = vadd.f32 %v5516, %v5504
    %v5520 = vadd.f32 %v5517, %v5509
    %5521 = vrot.lane.b32.xlu0 %v5162, 60
    %v5522 = vpop.permute.xlu0 %5521
    %v5523 = vsel %vm178, %v5522, 0
    %v5526 = vsel %vm377, %v5520, 0
    %5528 = vmatprep.subr.mxu0 0.0
    %5529 = vmatpush1.msra.mxu0 %v5518
    %5530 = vmatprep.subr.mxu0 0.0
    %5531 = vmatpush1.msra.mxu0 %v5519
    %5532 = vmatprep.subr.mxu0 0.0
    %5533 = vmatpush1.msra.mxu0 %v5526
    %5534 = vmatprep.subr.mxu0 0.0
    %5535 = vmatpush1.msra.mxu0 0.0
    %5536 = vmatprep.subr.mxu0 0.0
    %5537 = vmatpush1.msra.mxu0 0.0
    %5538 = vmatprep.subr.mxu0 0.0
    %5539 = vmatpush1.msra.mxu0 0.0
    %5540 = vmatprep.subr.mxu0 0.0
    %5541 = vmatpush1.msra.mxu0 0.0
    %5542 = vmatprep.subr.mxu0 0.0
    %5543 = vmatpush1.msra.mxu0 0.0
    %5544 = vmatprep.subr.mxu0 0.0
    %5545 = vmatpush1.msra.mxu0 0.0
    %5546 = vmatprep.subr.mxu0 0.0
    %5547 = vmatpush1.msra.mxu0 0.0
    %5548 = vmatprep.subr.mxu0 0.0
    %5549 = vmatpush1.msra.mxu0 0.0
    %5550 = vmatprep.subr.mxu0 0.0
    %5551 = vmatpush1.msra.mxu0 0.0
    %5552 = vmatprep.subr.mxu0 0.0
    %5553 = vmatpush1.msra.mxu0 0.0
    %5554 = vmatprep.subr.mxu0 0.0
    %5555 = vmatpush1.msra.mxu0 0.0
    %5556 = vmatprep.subr.mxu0 0.0
    %5557 = vmatpush1.msra.mxu0 0.0
    %5558 = vmatprep.subr.mxu0 0.0
    %5559 = vmatpush1.msra.mxu0 0.0
    %5560 = vmatprep.subr.mxu0 0.0
    %5561 = vmatpush1.msra.mxu0 0.0
    %5562 = vmatprep.subr.mxu0 0.0
    %5563 = vmatpush1.msra.mxu0 0.0
    %5564 = vmatprep.subr.mxu0 0.0
    %5565 = vmatpush1.msra.mxu0 0.0
    %5566 = vmatprep.subr.mxu0 0.0
    %5567 = vmatpush1.msra.mxu0 0.0
    %5568 = vmatprep.subr.mxu0 0.0
    %5569 = vmatpush1.msra.mxu0 0.0
    %5570 = vmatprep.subr.mxu0 0.0
    %5571 = vmatpush1.msra.mxu0 0.0
    %5572 = vmatprep.subr.mxu0 0.0
    %5573 = vmatpush1.msra.mxu0 0.0
    %5574 = vmatprep.subr.mxu0 0.0
    %5575 = vmatpush1.msra.mxu0 0.0
    %5576 = vmatprep.subr.mxu0 0.0
    %5577 = vmatpush1.msra.mxu0 0.0
    %5578 = vmatprep.subr.mxu0 0.0
    %5579 = vmatpush1.msra.mxu0 0.0
    %5580 = vmatprep.subr.mxu0 0.0
    %5581 = vmatpush1.msra.mxu0 0.0
    %5582 = vmatprep.subr.mxu0 0.0
    %5583 = vmatpush1.msra.mxu0 0.0
    %5584 = vmatprep.subr.mxu0 0.0
    %5585 = vmatpush1.msra.mxu0 0.0
    %5586 = vmatprep.subr.mxu0 0.0
    %5587 = vmatpush1.msra.mxu0 0.0
    %5588 = vmatprep.subr.mxu0 0.0
    %5589 = vmatpush1.msra.mxu0 0.0
    %5590 = vmatprep.subr.mxu0 0.0
    %5591 = vmatpush1.msra.mxu0 0.0
    %5592 = vmatprep.mubr.f32.mxu0 0.0
    %5593 = vmatmul.mubr.f32.gmra.mrb[0].mxu0 %v5523
    %v5594 = vpop.f32.mrb[0].mxu0
    %v5595 = vadd.f32 0.0, %v5594
    %v5596 = vpop.f32.mrb[0].mxu0
    %5597 = vdwg.mxu0
    %5598 = vrot.lane.b32.xlu0 %v5286, 60
    %v5599 = vpop.permute.xlu0 %5598
    %v5601 = vsel %vm456, %v5599, 0.0
    %5602 = vadd.xlane.f32.xlu0 %v5601
    %v5603 = vpop.xlane.xlu0 %5602
    %v5604 = vmul.f32 %v5518, %v5518
    %v5605 = vmul.f32 %v5519, %v5519
    %v5606 = vmul.f32 %v5520, %v5520
    %v5607 = vadd.f32 %v5604, %v5605
    %v5608 = vsel %vm377, %v5606, 0.0
    %v5609 = vadd.f32 %v5607, %v5608
    %v5610 = vrot.slane %v5609, 4
    %v5611 = vadd.f32 %v5609, %v5610
    %v5612 = vrot.slane %v5611, 2
    %v5613 = vadd.f32 %v5611, %v5612
    %v5614 = vrot.slane %v5613, 1
    %v5615 = vadd.f32 %v5613, %v5614
    %v5616 = vmax.f32 %v5615, 1e-16
    %v5617 = vmax.f32 %v5603, 1e-16
    %v5618 = vmul.f32 %v5616, %v5617
    %v5619 = vrsqrt.pop %v5618
    %v5620 = vmul.f32 %v5595, %v5619
    %5621 = vset.pattern.permute.xlu0 89
    %5622 = vperm.xlu0 %5621, %v5186
    %v5623 = vpop.permute.xlu0 %5622
    %v5625 = vmul.f32 %v5623, %v5620
    %v5626 = vsel %vm479, %v5625, -inf
    %5627 = vmax.xlane.f32.xlu0 %v5626
    %v5628 = vpop.xlane.xlu0 %5627
    %v5629 = vsub.f32 %v5625, %v5628
    %v5630 = vmul.f32 %v5629, 1.442695
    %v5631 = vpow.pop %v5630
    %v5632 = vsel %vm479, %v5631, 0.0
    %5633 = vadd.xlane.f32.xlu0 %v5632
    %v5634 = vpop.xlane.xlu0 %5633
    %v5635 = vrcp.pop %v5634
    %v5636 = vmul.f32 %v5631, %v5635
    %5637 = vset.pattern.permute.xlu0 91
    %5638 = vperm.xlu0 %5637, %v5168
    %v5639 = vpop.permute.xlu0 %5638
    %v5641 = vmul.f32 %v5639, %v5636
    %5642 = vset.pattern.permute.xlu0 91
    %5643 = vperm.xlu0 %5642, %v5321
    %v5644 = vpop.permute.xlu0 %5643
    %v5646 = vmul.f32 %v5644, %v4991
    %v5647 = vadd.f32 %v5641, %v5646
    %5648 = vrot.lane.b32.xlu0 %v5647, 1
    %v5649 = vpop.permute.xlu0 %5648
    %5651 = vset.pattern.permute.xlu0 97
    %5652 = vperm.xlu0 %5651, %v5210
    %v5653 = vpop.permute.xlu0 %5652
    %v5655 = vmul.f32 %v5653, %v5649
    %5656 = vset.pattern.permute.xlu0 98
    %5657 = vperm.xlu0 %5656, %v5210
    %v5658 = vpop.permute.xlu0 %5657
    %v5660 = vmul.f32 %v5658, %v5647
    %v5661 = vadd.f32 %v5655, %v5660
    %5662 = vrot.lane.b32.xlu0 %v5647, 127
    %v5663 = vpop.permute.xlu0 %5662
    %5664 = vset.pattern.permute.xlu0 99
    %5665 = vperm.xlu0 %5664, %v5210
    %v5666 = vpop.permute.xlu0 %5665
    %v5668 = vmul.f32 %v5666, %v5663
    %v5669 = vadd.f32 %v5661, %v5668
    %v5670 = vadd.f32 %v5669, 1e-16
    %5671 = vset.pattern.permute.xlu0 93
    %5672 = vperm.xlu0 %5671, %v5187
    %v5673 = vpop.permute.xlu0 %5672
    %v5675 = vpow.f32 %v5670, %v5673
    %v5676 = vsel %vm479, %v5675, 0.0
    %5677 = vadd.xlane.f32.xlu0 %v5676
    %v5678 = vpop.xlane.xlu0 %5677
    %v5679 = vrcp.pop %v5678
    %v5680 = vmul.f32 %v5675, %v5679
    %5681 = vmatprep.subr.mxu0 0.0
    %5682 = vmatpush1.xpose.msra.mxu0 %v5518
    %5683 = vmatprep.subr.mxu0 0.0
    %5684 = vmatpush1.xpose.msra.mxu0 %v5519
    %5685 = vmatprep.subr.mxu0 0.0
    %5686 = vmatpush1.xpose.msra.mxu0 %v5520
    %5687 = vmatprep.subr.mxu0 0.0
    %5688 = vmatpush1.xpose.msra.mxu0 0.0
    %5689 = vmatprep.subr.mxu0 0.0
    %5690 = vmatpush1.xpose.msra.mxu0 0.0
    %5691 = vmatprep.subr.mxu0 0.0
    %5692 = vmatpush1.xpose.msra.mxu0 0.0
    %5693 = vmatprep.subr.mxu0 0.0
    %5694 = vmatpush1.xpose.msra.mxu0 0.0
    %5695 = vmatprep.subr.mxu0 0.0
    %5696 = vmatpush1.xpose.msra.mxu0 0.0
    %5697 = vmatprep.subr.mxu0 0.0
    %5698 = vmatpush1.xpose.msra.mxu0 0.0
    %5699 = vmatprep.subr.mxu0 0.0
    %5700 = vmatpush1.xpose.msra.mxu0 0.0
    %5701 = vmatprep.subr.mxu0 0.0
    %5702 = vmatpush1.xpose.msra.mxu0 0.0
    %5703 = vmatprep.subr.mxu0 0.0
    %5704 = vmatpush1.xpose.msra.mxu0 0.0
    %5705 = vmatprep.subr.mxu0 0.0
    %5706 = vmatpush1.xpose.msra.mxu0 0.0
    %5707 = vmatprep.subr.mxu0 0.0
    %5708 = vmatpush1.xpose.msra.mxu0 0.0
    %5709 = vmatprep.subr.mxu0 0.0
    %5710 = vmatpush1.xpose.msra.mxu0 0.0
    %5711 = vmatprep.subr.mxu0 0.0
    %5712 = vmatpush1.xpose.msra.mxu0 0.0
    %5713 = vmatprep.subr.mxu0 0.0
    %5714 = vmatpush1.xpose.msra.mxu0 0.0
    %5715 = vmatprep.subr.mxu0 0.0
    %5716 = vmatpush1.xpose.msra.mxu0 0.0
    %5717 = vmatprep.subr.mxu0 0.0
    %5718 = vmatpush1.xpose.msra.mxu0 0.0
    %5719 = vmatprep.subr.mxu0 0.0
    %5720 = vmatpush1.xpose.msra.mxu0 0.0
    %5721 = vmatprep.subr.mxu0 0.0
    %5722 = vmatpush1.xpose.msra.mxu0 0.0
    %5723 = vmatprep.subr.mxu0 0.0
    %5724 = vmatpush1.xpose.msra.mxu0 0.0
    %5725 = vmatprep.subr.mxu0 0.0
    %5726 = vmatpush1.xpose.msra.mxu0 0.0
    %5727 = vmatprep.subr.mxu0 0.0
    %5728 = vmatpush1.xpose.msra.mxu0 0.0
    %5729 = vmatprep.subr.mxu0 0.0
    %5730 = vmatpush1.xpose.msra.mxu0 0.0
    %5731 = vmatprep.subr.mxu0 0.0
    %5732 = vmatpush1.xpose.msra.mxu0 0.0
    %5733 = vmatprep.subr.mxu0 0.0
    %5734 = vmatpush1.xpose.msra.mxu0 0.0
    %5735 = vmatprep.subr.mxu0 0.0
    %5736 = vmatpush1.xpose.msra.mxu0 0.0
    %5737 = vmatprep.subr.mxu0 0.0
    %5738 = vmatpush1.xpose.msra.mxu0 0.0
    %5739 = vmatprep.subr.mxu0 0.0
    %5740 = vmatpush1.xpose.msra.mxu0 0.0
    %5741 = vmatprep.subr.mxu0 0.0
    %5742 = vmatpush1.xpose.msra.mxu0 0.0
    %5743 = vmatprep.subr.mxu0 0.0
    %5744 = vmatpush1.xpose.msra.mxu0 0.0
    %5745 = vmatprep.mubr.f32.mxu0 0.0
    %5746 = vmatmul.mubr.f32.gmra.mrb[0].mxu0 %v5680
    %v5747 = vpop.f32.mrb[0].mxu0
    %v5748 = vadd.f32 0.0, %v5747
    %v5749 = vpop.f32.mrb[0].mxu0
    %5750 = vdwg.mxu0
    %5751 = vst [vmem:[#allocation7 + $0x7] sm:$0x1] %v5362
    %5752 = vst [vmem:[#allocation9 + $0x7] sm:$0x1] %v5680
    %5753 = vrot.lane.b32.xlu0 %v5162, 104
    %v5754 = vpop.permute.xlu0 %5753
    %5756 = vst.msk [vmem:[#allocation10 + $0x7] sm:$0x1] %vm456, %v5754
    %5757 = vst.msk [vmem:[#allocation12 + $0x7] sm:$0x1] %vm456, %v5748
    %v5758 = vld [vmem:[#allocation12] sm:$0xff]
    %v5759 = vld [vmem:[%s6] sm:$0xff]
    %v5760 = vld [vmem:[%s6 + $0x8] sm:$0xff]
    %v5761 = vld [vmem:[%s6 + $0x10] sm:$0xf]
    %v5762 = vld [vmem:[%s7] sm:$0x1]
    %v5764 = vlaneseq
    %v5765 = vshrl.u32 %v5764, 7
    %v5766 = vsub.s32 0, %v5765
    %v5767 = vrot.slane %v5762, %v5766
    %v5770 = vsel %vm178, %v5758, 0
    %v5773 = vsel %vm377, %v5761, 0
    %5775 = vmatprep.subr.mxu0 0.0
    %5776 = vmatpush1.msra.mxu0 %v5759
    %5777 = vmatprep.subr.mxu0 0.0
    %5778 = vmatpush1.msra.mxu0 %v5760
    %5779 = vmatprep.subr.mxu0 0.0
    %5780 = vmatpush1.msra.mxu0 %v5773
    %5781 = vmatprep.subr.mxu0 0.0
    %5782 = vmatpush1.msra.mxu0 0.0
    %5783 = vmatprep.subr.mxu0 0.0
    %5784 = vmatpush1.msra.mxu0 0.0
    %5785 = vmatprep.subr.mxu0 0.0
    %5786 = vmatpush1.msra.mxu0 0.0
    %5787 = vmatprep.subr.mxu0 0.0
    %5788 = vmatpush1.msra.mxu0 0.0
    %5789 = vmatprep.subr.mxu0 0.0
    %5790 = vmatpush1.msra.mxu0 0.0
    %5791 = vmatprep.subr.mxu0 0.0
    %5792 = vmatpush1.msra.mxu0 0.0
    %5793 = vmatprep.subr.mxu0 0.0
    %5794 = vmatpush1.msra.mxu0 0.0
    %5795 = vmatprep.subr.mxu0 0.0
    %5796 = vmatpush1.msra.mxu0 0.0
    %5797 = vmatprep.subr.mxu0 0.0
    %5798 = vmatpush1.msra.mxu0 0.0
    %5799 = vmatprep.subr.mxu0 0.0
    %5800 = vmatpush1.msra.mxu0 0.0
    %5801 = vmatprep.subr.mxu0 0.0
    %5802 = vmatpush1.msra.mxu0 0.0
    %5803 = vmatprep.subr.mxu0 0.0
    %5804 = vmatpush1.msra.mxu0 0.0
    %5805 = vmatprep.subr.mxu0 0.0
    %5806 = vmatpush1.msra.mxu0 0.0
    %5807 = vmatprep.subr.mxu0 0.0
    %5808 = vmatpush1.msra.mxu0 0.0
    %5809 = vmatprep.subr.mxu0 0.0
    %5810 = vmatpush1.msra.mxu0 0.0
    %5811 = vmatprep.subr.mxu0 0.0
    %5812 = vmatpush1.msra.mxu0 0.0
    %5813 = vmatprep.subr.mxu0 0.0
    %5814 = vmatpush1.msra.mxu0 0.0
    %5815 = vmatprep.subr.mxu0 0.0
    %5816 = vmatpush1.msra.mxu0 0.0
    %5817 = vmatprep.subr.mxu0 0.0
    %5818 = vmatpush1.msra.mxu0 0.0
    %5819 = vmatprep.subr.mxu0 0.0
    %5820 = vmatpush1.msra.mxu0 0.0
    %5821 = vmatprep.subr.mxu0 0.0
    %5822 = vmatpush1.msra.mxu0 0.0
    %5823 = vmatprep.subr.mxu0 0.0
    %5824 = vmatpush1.msra.mxu0 0.0
    %5825 = vmatprep.subr.mxu0 0.0
    %5826 = vmatpush1.msra.mxu0 0.0
    %5827 = vmatprep.subr.mxu0 0.0
    %5828 = vmatpush1.msra.mxu0 0.0
    %5829 = vmatprep.subr.mxu0 0.0
    %5830 = vmatpush1.msra.mxu0 0.0
    %5831 = vmatprep.subr.mxu0 0.0
    %5832 = vmatpush1.msra.mxu0 0.0
    %5833 = vmatprep.subr.mxu0 0.0
    %5834 = vmatpush1.msra.mxu0 0.0
    %5835 = vmatprep.subr.mxu0 0.0
    %5836 = vmatpush1.msra.mxu0 0.0
    %5837 = vmatprep.subr.mxu0 0.0
    %5838 = vmatpush1.msra.mxu0 0.0
    %5839 = vmatprep.mubr.f32.mxu0 0.0
    %5840 = vmatmul.mubr.f32.gmra.mrb[0].mxu0 %v5770
    %v5841 = vpop.f32.mrb[0].mxu0
    %v5842 = vadd.f32 %v5767, %v5841
    %v5843 = vpop.f32.mrb[0].mxu0
    %5844 = vdwg.mxu0
    %v5845 = vmax.f32 %v5842, 0.0
    %v5846 = vmin.f32 %v5845, 1.0
    %5847 = vst.msk [vmem:[#allocation6] sm:$0xff] %vm82, %v5846
    // Predicated region
    $region38: #{ntm_forward.1} parent=1 // pred_check
      _
    $region39: #{ntm_forward.1} parent=1 // pred_check_branch
      %5849 = sbr.rel (0) target = $region41
    $region40: #{ntm_forward.1} parent=1 // pred_region
      %s5851 = ssub.s32 128, 128
      %5852 = vsyncadd [#allocation5], %s5851
      %s5854 = sshll.u32 [#allocation6], 4
      %s5855 = int_to_ptr.vmem [resolvable:$true] %s5854
      %5857 = dma.vmem_to_hbm [thread:$0]  %s5855, 128, %s8, [#allocation5]
    $region41: #{ntm_forward.1} parent=1 // pred_fallthru
      _
    // Predicated region
    $region42: #{ntm_forward.1} parent=1 // pred_check
      _
    $region43: #{ntm_forward.1} parent=1 // pred_check_branch
      %5859 = sbr.rel (0) target = $region45
    $region44: #{ntm_forward.1} parent=1 // pred_region
      %s5861 = ssub.s32 128, 128
      %5862 = vsyncadd [#allocation8], %s5861
      %s5864 = sshll.u32 [#allocation7], 4
      %s5865 = int_to_ptr.vmem [resolvable:$true] %s5864
      %5867 = dma.vmem_to_hbm [thread:$0]  %s5865, 128, %s9, [#allocation8]
    $region45: #{ntm_forward.1} parent=1 // pred_fallthru
      _
    // Predicated region
    $region46: #{ntm_forward.1} parent=1 // pred_check
      _
    $region47: #{ntm_forward.1} parent=1 // pred_check_branch
      %5869 = sbr.rel (0) target = $region49
    $region48: #{ntm_forward.1} parent=1 // pred_region
      %s5871 = ssub.s32 128, 128
      %5872 = vsyncadd [#allocation8], %s5871
      %s5874 = sshll.u32 [#allocation9], 4
      %s5875 = int_to_ptr.vmem [resolvable:$true] %s5874
      %5877 = dma.vmem_to_hbm [thread:$0]  %s5875, 128, %s10, [#allocation8]
    $region49: #{ntm_forward.1} parent=1 // pred_fallthru
      _
    // Predicated region
    $region50: #{ntm_forward.1} parent=1 // pred_check
      _
    $region51: #{ntm_forward.1} parent=1 // pred_check_branch
      %5879 = sbr.rel (0) target = $region53
    $region52: #{ntm_forward.1} parent=1 // pred_region
      %s5881 = ssub.s32 128, 128
      %5882 = vsyncadd [#allocation11], %s5881
      %s5884 = sshll.u32 [#allocation10], 4
      %s5885 = int_to_ptr.vmem [resolvable:$true] %s5884
      %5887 = dma.vmem_to_hbm [thread:$0]  %s5885, 128, %s11, [#allocation11]
    $region53: #{ntm_forward.1} parent=1 // pred_fallthru
      _
    // Predicated region
    $region54: #{ntm_forward.1} parent=1 // pred_check
      _
    $region55: #{ntm_forward.1} parent=1 // pred_check_branch
      %5889 = sbr.rel (0) target = $region57
    $region56: #{ntm_forward.1} parent=1 // pred_region
      %s5891 = ssub.s32 128, 128
      %5892 = vsyncadd [#allocation11], %s5891
      %s5894 = sshll.u32 [#allocation12], 4
      %s5895 = int_to_ptr.vmem [resolvable:$true] %s5894
      %5897 = dma.vmem_to_hbm [thread:$0]  %s5895, 128, %s12, [#allocation11]
    $region57: #{ntm_forward.1} parent=1 // pred_fallthru
      _
    // Predicated region
    $region58: #{ntm_forward.1} parent=1 // pred_check
      _
    $region59: #{ntm_forward.1} parent=1 // pred_check_branch
      %5899 = sbr.rel (0) target = $region61
    $region60: #{ntm_forward.1} parent=1 // pred_region
      %5900 = dma.done [#allocation5], 128
    $region61: #{ntm_forward.1} parent=1 // pred_fallthru
      _
    // Predicated region
    $region62: #{ntm_forward.1} parent=1 // pred_check
      _
    $region63: #{ntm_forward.1} parent=1 // pred_check_branch
      %5902 = sbr.rel (0) target = $region65
    $region64: #{ntm_forward.1} parent=1 // pred_region
      %5903 = dma.done [#allocation8], 128
    $region65: #{ntm_forward.1} parent=1 // pred_fallthru
      _
    // Predicated region
    $region66: #{ntm_forward.1} parent=1 // pred_check
      _
    $region67: #{ntm_forward.1} parent=1 // pred_check_branch
      %5905 = sbr.rel (0) target = $region69
    $region68: #{ntm_forward.1} parent=1 // pred_region
      %5906 = dma.done [#allocation8], 128
    $region69: #{ntm_forward.1} parent=1 // pred_fallthru
      _
    // Predicated region
    $region70: #{ntm_forward.1} parent=1 // pred_check
      _
    $region71: #{ntm_forward.1} parent=1 // pred_check_branch
      %5908 = sbr.rel (0) target = $region73
    $region72: #{ntm_forward.1} parent=1 // pred_region
      %5909 = dma.done [#allocation11], 128
    $region73: #{ntm_forward.1} parent=1 // pred_fallthru
      _
    // Predicated region
    $region74: #{ntm_forward.1} parent=1 // pred_check
      _
    $region75: #{ntm_forward.1} parent=1 // pred_check_branch
      %5911 = sbr.rel (0) target = $region77
    $region76: #{ntm_forward.1} parent=1 // pred_region
      %5912 = dma.done [#allocation11], 128
    $region77: #{ntm_forward.1} parent=1 // pred_fallthru
      _
    %5913 = vsyncpa [#allocation4], 1
    %5914 = vsyncpa [#allocation5], 1
    %5915 = vsyncpa [#allocation8], 1
    %5916 = vsyncpa [#allocation11], 1

</llo_original>
